<compile_context>
chip_gen: v5e
topology: v5e:2x2
jax: 0.10.0
libtpu: 0.0.40
codegen_flags: <defaults>
</compile_context>

<pallas_src>
import functools

import jax
import jax.numpy as jnp
import numpy as np
from jax.experimental import pallas as pl
from jax.experimental.pallas import tpu as pltpu

EPS = 1e-5
LANES = 128


def _round_up(x, m):
    return (x + m - 1) // m * m


def _vmem_limit_bytes():
    # Generation-aware scoped-VMEM budget (v7x: 64 MiB physical, v5e/v6e: 128).
    try:
        cap = int(pltpu.get_tpu_info().vmem_capacity_bytes)
    except Exception:
        cap = 64 * 1024 * 1024
    return max(32 * 1024 * 1024, min(cap // 2, 96 * 1024 * 1024))


_VMEM_LIMIT = _vmem_limit_bytes()


# ---------------------------------------------------------------------------
# In-kernel helpers
# ---------------------------------------------------------------------------
def _conv_core(xin, w_ref, *, H, W, WP):
    """3x3 'same' conv on a padded (H+2, WP, CPI) bf16 tile -> (H, W, CPO) f32.

    Kernel rows folded into the contraction dim (K = 3*CPI); kernel columns
    become 3 matmuls whose (H, WP, CPO) f32 results are combined with static
    sublane slices (small live intermediates, low vreg pressure).
    """
    cpi = xin.shape[-1]
    cpo = w_ref.shape[-1]
    lhs = jnp.concatenate([xin[0:H], xin[1:H + 1], xin[2:H + 2]], axis=-1)
    lhs = lhs.reshape(H * WP, 3 * cpi)           # WP % 16 == 0 -> cheap collapse
    acc = None
    for kw in range(3):
        y = jnp.dot(lhs, w_ref[kw], preferred_element_type=jnp.float32)
        y = y.reshape(H, WP, cpo)[:, kw:kw + W, :]
        acc = y if acc is None else acc + y
    return acc


def _emit_stats(acc, stats_ref):
    """Per-block BN partials: stats_ref[(2, CPO)] = [sum, sum_of_squares]."""
    h, w, c = acc.shape
    flat = acc.reshape(h * w, c)
    s1 = jnp.sum(flat, axis=0, keepdims=True)
    s2 = jnp.sum(flat * flat, axis=0, keepdims=True)
    stats_ref[...] = jnp.concatenate([s1, s2], axis=0)


# ---------------------------------------------------------------------------
# Pallas kernels
# ---------------------------------------------------------------------------
def _conv1_kernel(xb_ref, w_ref, out_ref, stats_ref, *, H, W, WP):
    xin = xb_ref[...]                                       # (H+2, WP, CPI) bf16
    acc = _conv_core(xin, w_ref, H=H, W=W, WP=WP)           # (H, W, CPO) f32
    _emit_stats(acc, stats_ref)
    cpo = acc.shape[-1]
    # Re-embed the valid interior into conv2's padded input layout (zero halo
    # ring) so conv2 needs no XLA pass over the activation.
    rows = jnp.concatenate(
        [jnp.zeros((H, 1, cpo), jnp.float32),
         acc,
         jnp.zeros((H, WP - W - 1, cpo), jnp.float32)], axis=1)   # (H, WP, CPO)
    zrow = jnp.zeros((1, WP, cpo), jnp.float32)
    full = jnp.concatenate([zrow, rows, zrow], axis=0)            # (H+2, WP, CPO)
    out_ref[...] = full.astype(out_ref.dtype)


def _conv2_kernel(y1_ref, w_ref, scale_ref, shift_ref, out_ref, stats_ref,
                  *, H, W, WP):
    cpi = y1_ref.shape[-1]
    y = y1_ref[...].astype(jnp.float32)                     # raw conv1 (bf16 in HBM)
    scale = scale_ref[...].reshape(1, 1, cpi)
    shift = shift_ref[...].reshape(1, 1, cpi)
    xin = jnp.maximum(y * scale + shift, 0.0)               # fused bn1 + relu
    # BN(0) = shift != 0, so mask the spatial zero-pad ring back to exact 0.
    row = jax.lax.broadcasted_iota(jnp.int32, (H + 2, WP, cpi), 0)
    col = jax.lax.broadcasted_iota(jnp.int32, (H + 2, WP, cpi), 1)
    valid = (row >= 1) & (row <= H) & (col >= 1) & (col <= W)
    xin = jnp.where(valid, xin, 0.0).astype(jnp.bfloat16)
    acc = _conv_core(xin, w_ref, H=H, W=W, WP=WP)
    _emit_stats(acc, stats_ref)
    out_ref[...] = acc.astype(out_ref.dtype)                # (H, W, CPO) bf16


def _bn2_kernel(y2_ref, xp_ref, scale_ref, shift_ref, out_ref, *, H, W):
    cp = y2_ref.shape[-1]
    scale = scale_ref[...].reshape(1, 1, cp)
    shift = shift_ref[...].reshape(1, 1, cp)
    # Residual read straight from the padded bf16 input tile (no extra copy).
    identity = xp_ref[...][1:1 + H, 1:1 + W, :].astype(jnp.float32)
    y = y2_ref[...].astype(jnp.float32) * scale + shift + identity
    out_ref[...] = jnp.maximum(y, 0.0).astype(out_ref.dtype)


# ---------------------------------------------------------------------------
# pallas_call wrappers
# ---------------------------------------------------------------------------
def _conv_pass1(xp, wf, *, H, W):
    n, hp2, wp, cpi = xp.shape
    cpo = wf.shape[-1]
    kern = functools.partial(_conv1_kernel, H=H, W=W, WP=wp)
    y1pad, st = pl.pallas_call(
        kern,
        grid=(n,),
        in_specs=[
            pl.BlockSpec((None, hp2, wp, cpi), lambda i: (i, 0, 0, 0)),
            pl.BlockSpec((3, 3 * cpi, cpo), lambda i: (0, 0, 0)),   # grid-resident
        ],
        out_specs=[
            pl.BlockSpec((None, hp2, wp, cpo), lambda i: (i, 0, 0, 0)),
            pl.BlockSpec((None, 2, cpo), lambda i: (i, 0, 0)),
        ],
        out_shape=[
            jax.ShapeDtypeStruct((n, hp2, wp, cpo), jnp.bfloat16),
            jax.ShapeDtypeStruct((n, 2, cpo), jnp.float32),
        ],
        compiler_params=pltpu.CompilerParams(
            dimension_semantics=("parallel",),
            vmem_limit_bytes=_VMEM_LIMIT),
    )(xp, wf)
    return y1pad, jnp.sum(st, axis=0)


def _conv_pass2(y1pad, wf, scale, shift, *, H, W):
    n, hp2, wp, cpi = y1pad.shape
    cpo = wf.shape[-1]
    kern = functools.partial(_conv2_kernel, H=H, W=W, WP=wp)
    y2, st = pl.pallas_call(
        kern,
        grid=(n,),
        in_specs=[
            pl.BlockSpec((None, hp2, wp, cpi), lambda i: (i, 0, 0, 0)),
            pl.BlockSpec((3, 3 * cpi, cpo), lambda i: (0, 0, 0)),
            pl.BlockSpec((1, cpi), lambda i: (0, 0)),
            pl.BlockSpec((1, cpi), lambda i: (0, 0)),
        ],
        out_specs=[
            pl.BlockSpec((None, H, W, cpo), lambda i: (i, 0, 0, 0)),
            pl.BlockSpec((None, 2, cpo), lambda i: (i, 0, 0)),
        ],
        out_shape=[
            jax.ShapeDtypeStruct((n, H, W, cpo), jnp.bfloat16),
            jax.ShapeDtypeStruct((n, 2, cpo), jnp.float32),
        ],
        compiler_params=pltpu.CompilerParams(
            dimension_semantics=("parallel",),
            vmem_limit_bytes=_VMEM_LIMIT),
    )(y1pad, wf, scale, shift)
    return y2, jnp.sum(st, axis=0)


def _bn_residual_pass(y2, xp, scale, shift, *, H, W):
    n, _, _, cp = y2.shape
    hp2, wp = xp.shape[1], xp.shape[2]
    kern = functools.partial(_bn2_kernel, H=H, W=W)
    return pl.pallas_call(
        kern,
        grid=(n,),
        in_specs=[
            pl.BlockSpec((None, H, W, cp), lambda i: (i, 0, 0, 0)),
            pl.BlockSpec((None, hp2, wp, cp), lambda i: (i, 0, 0, 0)),
            pl.BlockSpec((1, cp), lambda i: (0, 0)),
            pl.BlockSpec((1, cp), lambda i: (0, 0)),
        ],
        out_specs=pl.BlockSpec((None, H, W, cp), lambda i: (i, 0, 0, 0)),
        out_shape=jax.ShapeDtypeStruct((n, H, W, cp), jnp.float32),
        compiler_params=pltpu.CompilerParams(
            dimension_semantics=("parallel",),
            vmem_limit_bytes=_VMEM_LIMIT),
    )(y2, xp, scale, shift)


# ---------------------------------------------------------------------------
# Plain-XLA glue (tiny layout / parameter prep only)
# ---------------------------------------------------------------------------
def _pad_channels(a, cp):
    c = a.shape[-1]
    if c == cp:
        return a
    return jnp.pad(a, [(0, 0)] * (a.ndim - 1) + [(0, cp - c)])


def _prep_weight(w_hwio, cp):
    """(3,3,Ci,Co) HWIO -> (3, 3*cp, cp) bf16, rows indexed by (kh, ci)."""
    kh, kw, ci, co = w_hwio.shape
    wpad = jnp.pad(w_hwio, ((0, 0), (0, 0), (0, cp - ci), (0, cp - co)))
    wf = jnp.transpose(wpad, (1, 0, 2, 3)).reshape(kw, kh * cp, cp)
    return wf.astype(jnp.bfloat16)


def _scale_shift(stats, gamma, beta, count):
    mean = stats[0:1, :] / count
    # TODO(synk): E[y^2]-mean^2 in f32 can lose precision for very large
    #             batch*spatial counts; fine at these scales.
    var = jnp.maximum(stats[1:2, :] / count - mean * mean, 0.0)
    scale = gamma * jax.lax.rsqrt(var + EPS)
    shift = beta - mean * scale
    return scale, shift


# ---------------------------------------------------------------------------
# BasicBlock forward
# ---------------------------------------------------------------------------
def basic_block_forward(x_nchw, params):
    x = jnp.transpose(x_nchw, (0, 2, 3, 1)).astype(jnp.float32)   # NCHW -> NHWC
    n, h, w, cin = x.shape
    cout = params["w1"].shape[-1]
    cp = _round_up(max(cin, cout, LANES), LANES)    # lane-dense channel padding
    wp = _round_up(w + 2, 16)                       # bf16-tile-aligned padded width
    m = n * h * w

    # Single XLA layout pass over the input: channel pad + spatial halo pad + bf16.
    xp = jnp.pad(_pad_channels(x, cp),
                 ((0, 0), (1, 1), (1, wp - w - 1), (0, 0))).astype(jnp.bfloat16)

    w1f = _prep_weight(params["w1"], cp)
    w2f = _prep_weight(params["w2"], cp)
    g1 = _pad_channels(params["g1"].reshape(1, -1), cp).astype(jnp.float32)
    be1 = _pad_channels(params["be1"].reshape(1, -1), cp).astype(jnp.float32)
    g2 = _pad_channels(params["g2"].reshape(1, -1), cp).astype(jnp.float32)
    be2 = _pad_channels(params["be2"].reshape(1, -1), cp).astype(jnp.float32)
    # NOTE: conv biases b1/b2 are cancelled exactly by the BN (batch-stats)
    #       mean subtraction that follows each conv, so they are not applied.

    # conv1 -> padded bf16 raw output + per-image BN partial stats
    y1pad, st1 = _conv_pass1(xp, w1f, H=h, W=w)
    scale1, shift1 = _scale_shift(st1, g1, be1, m)
    # conv2 with bn1+relu fused into the input path -> bf16 raw output + stats
    y2, st2 = _conv_pass2(y1pad, w2f, scale1, shift1, H=h, W=w)
    scale2, shift2 = _scale_shift(st2, g2, be2, m)
    # bn2 + residual + relu
    outp = _bn_residual_pass(y2, xp, scale2, shift2, H=h, W=w)

    # TODO(synk): stride>1 / identity_downsample path not implemented (module
    #             defaults: stride=1, identity_downsample=None).
    # TODO(synk): very large H*W would need a row-block grid axis with halo
    #             DMA; currently one image per grid step.
    out = outp[:, :, :, :cout]
    return jnp.transpose(out, (0, 3, 1, 2))         # back to NCHW


# ---------------------------------------------------------------------------
# Pure-JAX reference (lax conv, includes the conv bias) for correctness check
# ---------------------------------------------------------------------------
def reference_basic_block(x_nchw, params):
    x = jnp.transpose(x_nchw, (0, 2, 3, 1))

    def conv(inp, wgt, b):
        y = jax.lax.conv_general_dilated(
            inp, wgt, window_strides=(1, 1), padding=((1, 1), (1, 1)),
            dimension_numbers=("NHWC", "HWIO", "NHWC"))
        return y + b

    def bn(y, g, be):
        mean = jnp.mean(y, axis=(0, 1, 2), keepdims=True)
        var = jnp.mean(jnp.square(y - mean), axis=(0, 1, 2), keepdims=True)
        return (y - mean) * jax.lax.rsqrt(var + EPS) * g + be

    out = jnp.maximum(bn(conv(x, params["w1"], params["b1"]),
                         params["g1"], params["be1"]), 0.0)
    out = bn(conv(out, params["w2"], params["b2"]),
             params["g2"], params["be2"]) + x
    out = jnp.maximum(out, 0.0)
    return jnp.transpose(out, (0, 3, 1, 2))


# ---------------------------------------------------------------------------
if __name__ == "__main__":
    N, Cin, Cout, H, W = 2, 4, 4, 16, 16   # stride=1, no downsample => Cin == Cout

    key = jax.random.PRNGKey(0)
    ks = jax.random.split(key, 9)
    params = dict(
        # conv weights stored as (kh, kw, Cin, Cout) (HWIO); a torch state_dict
        # weight (Cout, Cin, 3, 3) would be transposed with .transpose(2, 3, 1, 0).
        w1=0.2 * jax.random.normal(ks[0], (3, 3, Cin, Cout), jnp.float32),
        b1=0.1 * jax.random.normal(ks[1], (Cout,), jnp.float32),
        g1=1.0 + 0.1 * jax.random.normal(ks[2], (Cout,), jnp.float32),
        be1=0.1 * jax.random.normal(ks[3], (Cout,), jnp.float32),
        w2=0.2 * jax.random.normal(ks[4], (3, 3, Cout, Cout), jnp.float32),
        b2=0.1 * jax.random.normal(ks[5], (Cout,), jnp.float32),
        g2=1.0 + 0.1 * jax.random.normal(ks[6], (Cout,), jnp.float32),
        be2=0.1 * jax.random.normal(ks[7], (Cout,), jnp.float32),
    )
    x = jax.random.normal(ks[8], (N, Cin, H, W), jnp.float32)  # NCHW like PyTorch

    fwd = jax.jit(basic_block_forward)
    out = jax.block_until_ready(fwd(x, params))
    assert out.shape == (N, Cout, H, W), out.shape

    ref = jax.block_until_ready(jax.jit(reference_basic_block)(x, params))
    # bf16 MXU operands / bf16 intermediates (f32 accumulate) -> loose tolerance.
    np.testing.assert_allclose(np.asarray(out), np.asarray(ref),
                               rtol=5e-2, atol=6e-2)

    print("KERNEL_OK")
</pallas_src>

<mosaic_0001>
module attributes {stable_mosaic.version = 11 : i64} {
  func.func @_conv1_kernel(%arg0: i32, %arg1: memref<1x18x32x128xbf16, #tpu.memory_space<vmem>>, %arg2: memref<3x384x128xbf16, #tpu.memory_space<vmem>>, %arg3: memref<1x18x32x128xbf16, #tpu.memory_space<vmem>>, %arg4: memref<1x2x128xf32, #tpu.memory_space<vmem>>) attributes {dimension_semantics = [#tpu.dimension_semantics<parallel>], iteration_bounds = array<i64: 2>, scalar_prefetch = 0 : i64, scratch_operands = 0 : i64, tpu.core_type = #tpu.core_type<tc>, window_params = [{transform_indices = @transform_0, window_bounds = array<i64: 1, 18, 32, 128>}, {pipeline_mode = #tpu.pipeline_mode<synchronous>, transform_indices = @transform_1, window_bounds = array<i64: 3, 384, 128>}, {transform_indices = @transform_2, window_bounds = array<i64: 1, 18, 32, 128>}, {transform_indices = @transform_3, window_bounds = array<i64: 1, 2, 128>}]} {
    %c0 = arith.constant 0 : index
    %c0_0 = arith.constant 0 : index
    %c0_1 = arith.constant 0 : index
    %c0_2 = arith.constant 0 : index
    %0 = vector.load %arg1[%c0, %c0_0, %c0_1, %c0_2] : memref<1x18x32x128xbf16, #tpu.memory_space<vmem>>, vector<1x18x32x128xbf16>
    %1 = vector.shape_cast %0 : vector<1x18x32x128xbf16> to vector<18x32x128xbf16>
    %2 = vector.extract_strided_slice %1 {offsets = [0, 0, 0], sizes = [16, 32, 128], strides = [1, 1, 1]} : vector<18x32x128xbf16> to vector<16x32x128xbf16>
    %3 = vector.extract_strided_slice %1 {offsets = [1, 0, 0], sizes = [16, 32, 128], strides = [1, 1, 1]} : vector<18x32x128xbf16> to vector<16x32x128xbf16>
    %4 = vector.extract_strided_slice %1 {offsets = [2, 0, 0], sizes = [16, 32, 128], strides = [1, 1, 1]} : vector<18x32x128xbf16> to vector<16x32x128xbf16>
    %5 = tpu.concatenate %2, %3, %4 in 2 : vector<16x32x128xbf16>, vector<16x32x128xbf16>, vector<16x32x128xbf16> -> vector<16x32x384xbf16>
    %6 = vector.shape_cast %5 : vector<16x32x384xbf16> to vector<512x384xbf16>
    %c0_3 = arith.constant 0 : index
    %c0_4 = arith.constant 0 : index
    %c0_5 = arith.constant 0 : index
    %7 = vector.load %arg2[%c0_3, %c0_4, %c0_5] : memref<3x384x128xbf16, #tpu.memory_space<vmem>>, vector<1x384x128xbf16>
    %8 = vector.shape_cast %7 : vector<1x384x128xbf16> to vector<384x128xbf16>
    %cst = arith.constant dense<0.000000e+00> : vector<512x128xf32>
    %9 = tpu.matmul %6, %8, %cst {dimension_numbers = #tpu.dot_dimension_numbers<[1], [0], [0], [1], [0, 0, 1, 1], [], []>} : vector<512x384xbf16>, vector<384x128xbf16>, vector<512x128xf32> -> vector<512x128xf32>
    %10 = vector.shape_cast %9 : vector<512x128xf32> to vector<16x32x128xf32>
    %11 = vector.extract_strided_slice %10 {offsets = [0, 0, 0], sizes = [16, 16, 128], strides = [1, 1, 1]} : vector<16x32x128xf32> to vector<16x16x128xf32>
    %c1 = arith.constant 1 : index
    %c0_6 = arith.constant 0 : index
    %c0_7 = arith.constant 0 : index
    %12 = vector.load %arg2[%c1, %c0_6, %c0_7] : memref<3x384x128xbf16, #tpu.memory_space<vmem>>, vector<1x384x128xbf16>
    %13 = vector.shape_cast %12 : vector<1x384x128xbf16> to vector<384x128xbf16>
    %cst_8 = arith.constant dense<0.000000e+00> : vector<512x128xf32>
    %14 = tpu.matmul %6, %13, %cst_8 {dimension_numbers = #tpu.dot_dimension_numbers<[1], [0], [0], [1], [0, 0, 1, 1], [], []>} : vector<512x384xbf16>, vector<384x128xbf16>, vector<512x128xf32> -> vector<512x128xf32>
    %15 = vector.shape_cast %14 : vector<512x128xf32> to vector<16x32x128xf32>
    %16 = vector.extract_strided_slice %15 {offsets = [0, 1, 0], sizes = [16, 16, 128], strides = [1, 1, 1]} : vector<16x32x128xf32> to vector<16x16x128xf32>
    %17 = arith.addf %11, %16 : vector<16x16x128xf32>
    %c2 = arith.constant 2 : index
    %c0_9 = arith.constant 0 : index
    %c0_10 = arith.constant 0 : index
    %18 = vector.load %arg2[%c2, %c0_9, %c0_10] : memref<3x384x128xbf16, #tpu.memory_space<vmem>>, vector<1x384x128xbf16>
    %19 = vector.shape_cast %18 : vector<1x384x128xbf16> to vector<384x128xbf16>
    %cst_11 = arith.constant dense<0.000000e+00> : vector<512x128xf32>
    %20 = tpu.matmul %6, %19, %cst_11 {dimension_numbers = #tpu.dot_dimension_numbers<[1], [0], [0], [1], [0, 0, 1, 1], [], []>} : vector<512x384xbf16>, vector<384x128xbf16>, vector<512x128xf32> -> vector<512x128xf32>
    %21 = vector.shape_cast %20 : vector<512x128xf32> to vector<16x32x128xf32>
    %22 = vector.extract_strided_slice %21 {offsets = [0, 2, 0], sizes = [16, 16, 128], strides = [1, 1, 1]} : vector<16x32x128xf32> to vector<16x16x128xf32>
    %23 = arith.addf %17, %22 : vector<16x16x128xf32>
    %24 = vector.shape_cast %23 : vector<16x16x128xf32> to vector<256x128xf32>
    %cst_12 = arith.constant dense<0.000000e+00> : vector<128xf32>
    %25 = vector.multi_reduction <add>, %24, %cst_12 [0] : vector<256x128xf32> to vector<128xf32>
    %26 = vector.shape_cast %25 : vector<128xf32> to vector<1x128xf32>
    %27 = arith.mulf %24, %24 : vector<256x128xf32>
    %cst_13 = arith.constant dense<0.000000e+00> : vector<128xf32>
    %28 = vector.multi_reduction <add>, %27, %cst_13 [0] : vector<256x128xf32> to vector<128xf32>
    %29 = vector.shape_cast %28 : vector<128xf32> to vector<1x128xf32>
    %30 = tpu.concatenate %26, %29 in 0 : vector<1x128xf32>, vector<1x128xf32> -> vector<2x128xf32>
    %c0_14 = arith.constant 0 : index
    %c0_15 = arith.constant 0 : index
    %c0_16 = arith.constant 0 : index
    %31 = vector.load %arg4[%c0_14, %c0_15, %c0_16] : memref<1x2x128xf32, #tpu.memory_space<vmem>>, vector<1x2x128xf32>
    %32 = vector.shape_cast %31 : vector<1x2x128xf32> to vector<2x128xf32>
    %33 = vector.shape_cast %30 : vector<2x128xf32> to vector<1x2x128xf32>
    tpu.vector_store %arg4[%c0_14, %c0_15, %c0_16], %33 {strides = array<i32>} : memref<1x2x128xf32, #tpu.memory_space<vmem>>, vector<1x2x128xf32>,
    %cst_17 = arith.constant 0.000000e+00 : f32
    %34 = vector.broadcast %cst_17 : f32 to vector<16x1x128xf32>
    %cst_18 = arith.constant 0.000000e+00 : f32
    %35 = vector.broadcast %cst_18 : f32 to vector<16x15x128xf32>
    %36 = tpu.concatenate %34, %23, %35 in 1 : vector<16x1x128xf32>, vector<16x16x128xf32>, vector<16x15x128xf32> -> vector<16x32x128xf32>
    %cst_19 = arith.constant 0.000000e+00 : f32
    %37 = vector.broadcast %cst_19 : f32 to vector<1x32x128xf32>
    %38 = tpu.concatenate %37, %36, %37 in 0 : vector<1x32x128xf32>, vector<16x32x128xf32>, vector<1x32x128xf32> -> vector<18x32x128xf32>
    %39 = arith.truncf %38 : vector<18x32x128xf32> to vector<18x32x128xbf16>
    %c0_20 = arith.constant 0 : index
    %c0_21 = arith.constant 0 : index
    %c0_22 = arith.constant 0 : index
    %c0_23 = arith.constant 0 : index
    %40 = vector.load %arg3[%c0_20, %c0_21, %c0_22, %c0_23] : memref<1x18x32x128xbf16, #tpu.memory_space<vmem>>, vector<1x18x32x128xbf16>
    %41 = vector.shape_cast %40 : vector<1x18x32x128xbf16> to vector<18x32x128xbf16>
    %42 = vector.shape_cast %39 : vector<18x32x128xbf16> to vector<1x18x32x128xbf16>
    tpu.vector_store %arg3[%c0_20, %c0_21, %c0_22, %c0_23], %42 {strides = array<i32>} : memref<1x18x32x128xbf16, #tpu.memory_space<vmem>>, vector<1x18x32x128xbf16>,
    return
  }
  func.func @transform_0(%arg0: i32) -> (i32, i32, i32, i32) {
    %c0_i32 = arith.constant 0 : i32
    %c0_i32_0 = arith.constant 0 : i32
    %c0_i32_1 = arith.constant 0 : i32
    %c0_i32_2 = arith.constant 0 : i32
    return %arg0, %c0_i32, %c0_i32_0, %c0_i32_1 : i32, i32, i32, i32
  }
  func.func @transform_1(%arg0: i32) -> (i32, i32, i32) {
    %c0_i32 = arith.constant 0 : i32
    %c0_i32_0 = arith.constant 0 : i32
    %c0_i32_1 = arith.constant 0 : i32
    %c0_i32_2 = arith.constant 0 : i32
    return %c0_i32, %c0_i32_0, %c0_i32_1 : i32, i32, i32
  }
  func.func @transform_2(%arg0: i32) -> (i32, i32, i32, i32) {
    %c0_i32 = arith.constant 0 : i32
    %c0_i32_0 = arith.constant 0 : i32
    %c0_i32_1 = arith.constant 0 : i32
    %c0_i32_2 = arith.constant 0 : i32
    return %arg0, %c0_i32, %c0_i32_0, %c0_i32_1 : i32, i32, i32, i32
  }
  func.func @transform_3(%arg0: i32) -> (i32, i32, i32) {
    %c0_i32 = arith.constant 0 : i32
    %c0_i32_0 = arith.constant 0 : i32
    %c0_i32_1 = arith.constant 0 : i32
    return %arg0, %c0_i32, %c0_i32_0 : i32, i32, i32
  }
}

module attributes {stable_mosaic.version = 11 : i64} {
  func.func @_conv2_kernel(%arg0: i32, %arg1: memref<1x18x32x128xbf16, #tpu.memory_space<vmem>>, %arg2: memref<3x384x128xbf16, #tpu.memory_space<vmem>>, %arg3: memref<1x128xf32, #tpu.memory_space<vmem>>, %arg4: memref<1x128xf32, #tpu.memory_space<vmem>>, %arg5: memref<1x16x16x128xbf16, #tpu.memory_space<vmem>>, %arg6: memref<1x2x128xf32, #tpu.memory_space<vmem>>) attributes {dimension_semantics = [#tpu.dimension_semantics<parallel>], iteration_bounds = array<i64: 2>, scalar_prefetch = 0 : i64, scratch_operands = 0 : i64, tpu.core_type = #tpu.core_type<tc>, window_params = [{transform_indices = @transform_0, window_bounds = array<i64: 1, 18, 32, 128>}, {pipeline_mode = #tpu.pipeline_mode<synchronous>, transform_indices = @transform_1, window_bounds = array<i64: 3, 384, 128>}, {pipeline_mode = #tpu.pipeline_mode<synchronous>, transform_indices = @transform_2, window_bounds = array<i64: 1, 128>}, {pipeline_mode = #tpu.pipeline_mode<synchronous>, transform_indices = @transform_3, window_bounds = array<i64: 1, 128>}, {transform_indices = @transform_4, window_bounds = array<i64: 1, 16, 16, 128>}, {transform_indices = @transform_5, window_bounds = array<i64: 1, 2, 128>}]} {
    %c0 = arith.constant 0 : index
    %c0_0 = arith.constant 0 : index
    %c0_1 = arith.constant 0 : index
    %c0_2 = arith.constant 0 : index
    %0 = vector.load %arg1[%c0, %c0_0, %c0_1, %c0_2] : memref<1x18x32x128xbf16, #tpu.memory_space<vmem>>, vector<1x18x32x128xbf16>
    %1 = vector.shape_cast %0 : vector<1x18x32x128xbf16> to vector<18x32x128xbf16>
    %2 = arith.extf %1 : vector<18x32x128xbf16> to vector<18x32x128xf32>
    %c0_3 = arith.constant 0 : index
    %c0_4 = arith.constant 0 : index
    %3 = vector.load %arg3[%c0_3, %c0_4] : memref<1x128xf32, #tpu.memory_space<vmem>>, vector<1x128xf32>
    %4 = vector.shape_cast %3 : vector<1x128xf32> to vector<1x1x128xf32>
    %c0_5 = arith.constant 0 : index
    %c0_6 = arith.constant 0 : index
    %5 = vector.load %arg4[%c0_5, %c0_6] : memref<1x128xf32, #tpu.memory_space<vmem>>, vector<1x128xf32>
    %6 = vector.shape_cast %5 : vector<1x128xf32> to vector<1x1x128xf32>
    %7 = vector.broadcast %4 : vector<1x1x128xf32> to vector<18x32x128xf32>
    %8 = arith.mulf %2, %7 : vector<18x32x128xf32>
    %9 = vector.broadcast %6 : vector<1x1x128xf32> to vector<18x32x128xf32>
    %10 = arith.addf %8, %9 : vector<18x32x128xf32>
    %cst = arith.constant 0.000000e+00 : f32
    %11 = vector.broadcast %cst : f32 to vector<18x32x128xf32>
    %12 = arith.maximumf %10, %11 : vector<18x32x128xf32>
    %13 = tpu.iota {dimensions = array<i32: 0>} : vector<18x32x128xi32>
    %14 = tpu.iota {dimensions = array<i32: 1>} : vector<18x32x128xi32>
    %c1_i32 = arith.constant 1 : i32
    %15 = vector.broadcast %c1_i32 : i32 to vector<18x32x128xi32>
    %16 = arith.cmpi sge, %13, %15 : vector<18x32x128xi32>
    %c16_i32 = arith.constant 16 : i32
    %17 = vector.broadcast %c16_i32 : i32 to vector<18x32x128xi32>
    %18 = arith.cmpi sle, %13, %17 : vector<18x32x128xi32>
    %19 = arith.andi %16, %18 : vector<18x32x128xi1>
    %c1_i32_7 = arith.constant 1 : i32
    %20 = vector.broadcast %c1_i32_7 : i32 to vector<18x32x128xi32>
    %21 = arith.cmpi sge, %14, %20 : vector<18x32x128xi32>
    %22 = arith.andi %19, %21 : vector<18x32x128xi1>
    %c16_i32_8 = arith.constant 16 : i32
    %23 = vector.broadcast %c16_i32_8 : i32 to vector<18x32x128xi32>
    %24 = arith.cmpi sle, %14, %23 : vector<18x32x128xi32>
    %25 = arith.andi %22, %24 : vector<18x32x128xi1>
    %cst_9 = arith.constant 0.000000e+00 : f32
    %26 = vector.broadcast %cst_9 : f32 to vector<18x32x128xf32>
    %27 = arith.select %25, %12, %26 : vector<18x32x128xi1>, vector<18x32x128xf32>
    %28 = arith.truncf %27 : vector<18x32x128xf32> to vector<18x32x128xbf16>
    %29 = vector.extract_strided_slice %28 {offsets = [0, 0, 0], sizes = [16, 32, 128], strides = [1, 1, 1]} : vector<18x32x128xbf16> to vector<16x32x128xbf16>
    %30 = vector.extract_strided_slice %28 {offsets = [1, 0, 0], sizes = [16, 32, 128], strides = [1, 1, 1]} : vector<18x32x128xbf16> to vector<16x32x128xbf16>
    %31 = vector.extract_strided_slice %28 {offsets = [2, 0, 0], sizes = [16, 32, 128], strides = [1, 1, 1]} : vector<18x32x128xbf16> to vector<16x32x128xbf16>
    %32 = tpu.concatenate %29, %30, %31 in 2 : vector<16x32x128xbf16>, vector<16x32x128xbf16>, vector<16x32x128xbf16> -> vector<16x32x384xbf16>
    %33 = vector.shape_cast %32 : vector<16x32x384xbf16> to vector<512x384xbf16>
    %c0_10 = arith.constant 0 : index
    %c0_11 = arith.constant 0 : index
    %c0_12 = arith.constant 0 : index
    %34 = vector.load %arg2[%c0_10, %c0_11, %c0_12] : memref<3x384x128xbf16, #tpu.memory_space<vmem>>, vector<1x384x128xbf16>
    %35 = vector.shape_cast %34 : vector<1x384x128xbf16> to vector<384x128xbf16>
    %cst_13 = arith.constant dense<0.000000e+00> : vector<512x128xf32>
    %36 = tpu.matmul %33, %35, %cst_13 {dimension_numbers = #tpu.dot_dimension_numbers<[1], [0], [0], [1], [0, 0, 1, 1], [], []>} : vector<512x384xbf16>, vector<384x128xbf16>, vector<512x128xf32> -> vector<512x128xf32>
    %37 = vector.shape_cast %36 : vector<512x128xf32> to vector<16x32x128xf32>
    %38 = vector.extract_strided_slice %37 {offsets = [0, 0, 0], sizes = [16, 16, 128], strides = [1, 1, 1]} : vector<16x32x128xf32> to vector<16x16x128xf32>
    %c1 = arith.constant 1 : index
    %c0_14 = arith.constant 0 : index
    %c0_15 = arith.constant 0 : index
    %39 = vector.load %arg2[%c1, %c0_14, %c0_15] : memref<3x384x128xbf16, #tpu.memory_space<vmem>>, vector<1x384x128xbf16>
    %40 = vector.shape_cast %39 : vector<1x384x128xbf16> to vector<384x128xbf16>
    %cst_16 = arith.constant dense<0.000000e+00> : vector<512x128xf32>
    %41 = tpu.matmul %33, %40, %cst_16 {dimension_numbers = #tpu.dot_dimension_numbers<[1], [0], [0], [1], [0, 0, 1, 1], [], []>} : vector<512x384xbf16>, vector<384x128xbf16>, vector<512x128xf32> -> vector<512x128xf32>
    %42 = vector.shape_cast %41 : vector<512x128xf32> to vector<16x32x128xf32>
    %43 = vector.extract_strided_slice %42 {offsets = [0, 1, 0], sizes = [16, 16, 128], strides = [1, 1, 1]} : vector<16x32x128xf32> to vector<16x16x128xf32>
    %44 = arith.addf %38, %43 : vector<16x16x128xf32>
    %c2 = arith.constant 2 : index
    %c0_17 = arith.constant 0 : index
    %c0_18 = arith.constant 0 : index
    %45 = vector.load %arg2[%c2, %c0_17, %c0_18] : memref<3x384x128xbf16, #tpu.memory_space<vmem>>, vector<1x384x128xbf16>
    %46 = vector.shape_cast %45 : vector<1x384x128xbf16> to vector<384x128xbf16>
    %cst_19 = arith.constant dense<0.000000e+00> : vector<512x128xf32>
    %47 = tpu.matmul %33, %46, %cst_19 {dimension_numbers = #tpu.dot_dimension_numbers<[1], [0], [0], [1], [0, 0, 1, 1], [], []>} : vector<512x384xbf16>, vector<384x128xbf16>, vector<512x128xf32> -> vector<512x128xf32>
    %48 = vector.shape_cast %47 : vector<512x128xf32> to vector<16x32x128xf32>
    %49 = vector.extract_strided_slice %48 {offsets = [0, 2, 0], sizes = [16, 16, 128], strides = [1, 1, 1]} : vector<16x32x128xf32> to vector<16x16x128xf32>
    %50 = arith.addf %44, %49 : vector<16x16x128xf32>
    %51 = vector.shape_cast %50 : vector<16x16x128xf32> to vector<256x128xf32>
    %cst_20 = arith.constant dense<0.000000e+00> : vector<128xf32>
    %52 = vector.multi_reduction <add>, %51, %cst_20 [0] : vector<256x128xf32> to vector<128xf32>
    %53 = vector.shape_cast %52 : vector<128xf32> to vector<1x128xf32>
    %54 = arith.mulf %51, %51 : vector<256x128xf32>
    %cst_21 = arith.constant dense<0.000000e+00> : vector<128xf32>
    %55 = vector.multi_reduction <add>, %54, %cst_21 [0] : vector<256x128xf32> to vector<128xf32>
    %56 = vector.shape_cast %55 : vector<128xf32> to vector<1x128xf32>
    %57 = tpu.concatenate %53, %56 in 0 : vector<1x128xf32>, vector<1x128xf32> -> vector<2x128xf32>
    %c0_22 = arith.constant 0 : index
    %c0_23 = arith.constant 0 : index
    %c0_24 = arith.constant 0 : index
    %58 = vector.load %arg6[%c0_22, %c0_23, %c0_24] : memref<1x2x128xf32, #tpu.memory_space<vmem>>, vector<1x2x128xf32>
    %59 = vector.shape_cast %58 : vector<1x2x128xf32> to vector<2x128xf32>
    %60 = vector.shape_cast %57 : vector<2x128xf32> to vector<1x2x128xf32>
    tpu.vector_store %arg6[%c0_22, %c0_23, %c0_24], %60 {strides = array<i32>} : memref<1x2x128xf32, #tpu.memory_space<vmem>>, vector<1x2x128xf32>,
    %61 = arith.truncf %50 : vector<16x16x128xf32> to vector<16x16x128xbf16>
    %c0_25 = arith.constant 0 : index
    %c0_26 = arith.constant 0 : index
    %c0_27 = arith.constant 0 : index
    %c0_28 = arith.constant 0 : index
    %62 = vector.load %arg5[%c0_25, %c0_26, %c0_27, %c0_28] : memref<1x16x16x128xbf16, #tpu.memory_space<vmem>>, vector<1x16x16x128xbf16>
    %63 = vector.shape_cast %62 : vector<1x16x16x128xbf16> to vector<16x16x128xbf16>
    %64 = vector.shape_cast %61 : vector<16x16x128xbf16> to vector<1x16x16x128xbf16>
    tpu.vector_store %arg5[%c0_25, %c0_26, %c0_27, %c0_28], %64 {strides = array<i32>} : memref<1x16x16x128xbf16, #tpu.memory_space<vmem>>, vector<1x16x16x128xbf16>,
    return
  }
  func.func @transform_0(%arg0: i32) -> (i32, i32, i32, i32) {
    %c0_i32 = arith.constant 0 : i32
    %c0_i32_0 = arith.constant 0 : i32
    %c0_i32_1 = arith.constant 0 : i32
    %c0_i32_2 = arith.constant 0 : i32
    return %arg0, %c0_i32, %c0_i32_0, %c0_i32_1 : i32, i32, i32, i32
  }
  func.func @transform_1(%arg0: i32) -> (i32, i32, i32) {
    %c0_i32 = arith.constant 0 : i32
    %c0_i32_0 = arith.constant 0 : i32
    %c0_i32_1 = arith.constant 0 : i32
    %c0_i32_2 = arith.constant 0 : i32
    return %c0_i32, %c0_i32_0, %c0_i32_1 : i32, i32, i32
  }
  func.func @transform_2(%arg0: i32) -> (i32, i32) {
    %c0_i32 = arith.constant 0 : i32
    %c0_i32_0 = arith.constant 0 : i32
    %c0_i32_1 = arith.constant 0 : i32
    return %c0_i32, %c0_i32_0 : i32, i32
  }
  func.func @transform_3(%arg0: i32) -> (i32, i32) {
    %c0_i32 = arith.constant 0 : i32
    %c0_i32_0 = arith.constant 0 : i32
    %c0_i32_1 = arith.constant 0 : i32
    return %c0_i32, %c0_i32_0 : i32, i32
  }
  func.func @transform_4(%arg0: i32) -> (i32, i32, i32, i32) {
    %c0_i32 = arith.constant 0 : i32
    %c0_i32_0 = arith.constant 0 : i32
    %c0_i32_1 = arith.constant 0 : i32
    %c0_i32_2 = arith.constant 0 : i32
    return %arg0, %c0_i32, %c0_i32_0, %c0_i32_1 : i32, i32, i32, i32
  }
  func.func @transform_5(%arg0: i32) -> (i32, i32, i32) {
    %c0_i32 = arith.constant 0 : i32
    %c0_i32_0 = arith.constant 0 : i32
    %c0_i32_1 = arith.constant 0 : i32
    return %arg0, %c0_i32, %c0_i32_0 : i32, i32, i32
  }
}

module attributes {stable_mosaic.version = 11 : i64} {
  func.func @_bn2_kernel(%arg0: i32, %arg1: memref<1x16x16x128xbf16, #tpu.memory_space<vmem>>, %arg2: memref<1x18x32x128xbf16, #tpu.memory_space<vmem>>, %arg3: memref<1x128xf32, #tpu.memory_space<vmem>>, %arg4: memref<1x128xf32, #tpu.memory_space<vmem>>, %arg5: memref<1x16x16x128xf32, #tpu.memory_space<vmem>>) attributes {dimension_semantics = [#tpu.dimension_semantics<parallel>], iteration_bounds = array<i64: 2>, scalar_prefetch = 0 : i64, scratch_operands = 0 : i64, tpu.core_type = #tpu.core_type<tc>, window_params = [{transform_indices = @transform_0, window_bounds = array<i64: 1, 16, 16, 128>}, {transform_indices = @transform_1, window_bounds = array<i64: 1, 18, 32, 128>}, {pipeline_mode = #tpu.pipeline_mode<synchronous>, transform_indices = @transform_2, window_bounds = array<i64: 1, 128>}, {pipeline_mode = #tpu.pipeline_mode<synchronous>, transform_indices = @transform_3, window_bounds = array<i64: 1, 128>}, {transform_indices = @transform_4, window_bounds = array<i64: 1, 16, 16, 128>}]} {
    %c0 = arith.constant 0 : index
    %c0_0 = arith.constant 0 : index
    %0 = vector.load %arg3[%c0, %c0_0] : memref<1x128xf32, #tpu.memory_space<vmem>>, vector<1x128xf32>
    %1 = vector.shape_cast %0 : vector<1x128xf32> to vector<1x1x128xf32>
    %c0_1 = arith.constant 0 : index
    %c0_2 = arith.constant 0 : index
    %2 = vector.load %arg4[%c0_1, %c0_2] : memref<1x128xf32, #tpu.memory_space<vmem>>, vector<1x128xf32>
    %3 = vector.shape_cast %2 : vector<1x128xf32> to vector<1x1x128xf32>
    %c0_3 = arith.constant 0 : index
    %c0_4 = arith.constant 0 : index
    %c0_5 = arith.constant 0 : index
    %c0_6 = arith.constant 0 : index
    %4 = vector.load %arg2[%c0_3, %c0_4, %c0_5, %c0_6] : memref<1x18x32x128xbf16, #tpu.memory_space<vmem>>, vector<1x18x32x128xbf16>
    %5 = vector.shape_cast %4 : vector<1x18x32x128xbf16> to vector<18x32x128xbf16>
    %6 = vector.extract_strided_slice %5 {offsets = [1, 1, 0], sizes = [16, 16, 128], strides = [1, 1, 1]} : vector<18x32x128xbf16> to vector<16x16x128xbf16>
    %7 = arith.extf %6 : vector<16x16x128xbf16> to vector<16x16x128xf32>
    %c0_7 = arith.constant 0 : index
    %c0_8 = arith.constant 0 : index
    %c0_9 = arith.constant 0 : index
    %c0_10 = arith.constant 0 : index
    %8 = vector.load %arg1[%c0_7, %c0_8, %c0_9, %c0_10] : memref<1x16x16x128xbf16, #tpu.memory_space<vmem>>, vector<1x16x16x128xbf16>
    %9 = vector.shape_cast %8 : vector<1x16x16x128xbf16> to vector<16x16x128xbf16>
    %10 = arith.extf %9 : vector<16x16x128xbf16> to vector<16x16x128xf32>
    %11 = vector.broadcast %1 : vector<1x1x128xf32> to vector<16x16x128xf32>
    %12 = arith.mulf %10, %11 : vector<16x16x128xf32>
    %13 = vector.broadcast %3 : vector<1x1x128xf32> to vector<16x16x128xf32>
    %14 = arith.addf %12, %13 : vector<16x16x128xf32>
    %15 = arith.addf %14, %7 : vector<16x16x128xf32>
    %cst = arith.constant 0.000000e+00 : f32
    %16 = vector.broadcast %cst : f32 to vector<16x16x128xf32>
    %17 = arith.maximumf %15, %16 : vector<16x16x128xf32>
    %c0_11 = arith.constant 0 : index
    %c0_12 = arith.constant 0 : index
    %c0_13 = arith.constant 0 : index
    %c0_14 = arith.constant 0 : index
    %18 = vector.load %arg5[%c0_11, %c0_12, %c0_13, %c0_14] : memref<1x16x16x128xf32, #tpu.memory_space<vmem>>, vector<1x16x16x128xf32>
    %19 = vector.shape_cast %18 : vector<1x16x16x128xf32> to vector<16x16x128xf32>
    %20 = vector.shape_cast %17 : vector<16x16x128xf32> to vector<1x16x16x128xf32>
    tpu.vector_store %arg5[%c0_11, %c0_12, %c0_13, %c0_14], %20 {strides = array<i32>} : memref<1x16x16x128xf32, #tpu.memory_space<vmem>>, vector<1x16x16x128xf32>,
    return
  }
  func.func @transform_0(%arg0: i32) -> (i32, i32, i32, i32) {
    %c0_i32 = arith.constant 0 : i32
    %c0_i32_0 = arith.constant 0 : i32
    %c0_i32_1 = arith.constant 0 : i32
    %c0_i32_2 = arith.constant 0 : i32
    return %arg0, %c0_i32, %c0_i32_0, %c0_i32_1 : i32, i32, i32, i32
  }
  func.func @transform_1(%arg0: i32) -> (i32, i32, i32, i32) {
    %c0_i32 = arith.constant 0 : i32
    %c0_i32_0 = arith.constant 0 : i32
    %c0_i32_1 = arith.constant 0 : i32
    %c0_i32_2 = arith.constant 0 : i32
    return %arg0, %c0_i32, %c0_i32_0, %c0_i32_1 : i32, i32, i32, i32
  }
  func.func @transform_2(%arg0: i32) -> (i32, i32) {
    %c0_i32 = arith.constant 0 : i32
    %c0_i32_0 = arith.constant 0 : i32
    %c0_i32_1 = arith.constant 0 : i32
    return %c0_i32, %c0_i32_0 : i32, i32
  }
  func.func @transform_3(%arg0: i32) -> (i32, i32) {
    %c0_i32 = arith.constant 0 : i32
    %c0_i32_0 = arith.constant 0 : i32
    %c0_i32_1 = arith.constant 0 : i32
    return %c0_i32, %c0_i32_0 : i32, i32
  }
  func.func @transform_4(%arg0: i32) -> (i32, i32, i32, i32) {
    %c0_i32 = arith.constant 0 : i32
    %c0_i32_0 = arith.constant 0 : i32
    %c0_i32_1 = arith.constant 0 : i32
    %c0_i32_2 = arith.constant 0 : i32
    return %arg0, %c0_i32, %c0_i32_0, %c0_i32_1 : i32, i32, i32, i32
  }
}

</mosaic_0001>

<llo_original>
// kernel: basic_block_forward.5
$region0: #{basic_block_forward.5}
  #allocation0 [shape = 'u32[]', space=smem, size = 0x4, offset = 0x4, fixed_abs, tag = 'smem constant byte address 0x4 - core index']
  #allocation1 [shape = 'u32[72,128]{1,0:T(1,128)}', space=vmem, size = 0x9000, scoped, tag = 'internal scratch']
  %s0 = inlined_call_operand.vmem [shape: bf16[2,16,16,128], index: 0, kind: input, shape index: {}]
  %s1 = inlined_call_operand.vmem [shape: bf16[2,18,32,128], index: 1, kind: input, shape index: {}]
  %s2 = inlined_call_operand.vmem [shape: f32[1,128], index: 2, kind: input, shape index: {}]
  %s3 = inlined_call_operand.vmem [shape: f32[1,128], index: 3, kind: input, shape index: {}]
  %s4 = inlined_call_operand.vmem [shape: f32[2,16,16,128], index: 4, kind: output, shape index: {}]
  %s5 = sld [smem:[#allocation0]]
  $region49: #{basic_block_forward.5} parent=0
    _
  %s7 = ssub.s32 1, %s5
  %s8 = scalar_select 0, %s7, %s5
  loop: start=0, step=1, limit=4
  $region2: #{basic_block_forward.5} parent=0 // loop_pre_header
    _
  $region3: #{basic_block_forward.5} parent=0 // loop_header
    %s10 = sphi 0, %s14
    %p11 = scmp.ge.s32.totalorder %s10, 4
    %s20 = sphi 0, %s22
    %s23 = sphi 0, %s20
    %s24 = sphi 0, %s23
    %s40 = sphi 0, %s24
    %s46 = sphi 0, %s48
    %s49 = sphi 0, %s46
    %s50 = sphi 0, %s49
    %s66 = sphi 0, %s50
    %s70 = sphi 0, %s70
    %s72 = sphi 0, %s70
    %s73 = sphi 0, %s72
    %s87 = sphi 0, %s73
    %s91 = sphi 0, %s91
    %s93 = sphi 0, %s91
    %s94 = sphi 0, %s93
    %s108 = sphi 0, %s94
    %s114 = sphi 0, %s116
    %s117 = sphi 0, %s114
    %s118 = sphi 0, %s117
    %s134 = sphi 0, %s118
  $region4: #{basic_block_forward.5} parent=0 // loop_header_branch
    %13 = sbr.rel (%p11) target = $region8
  $region5: #{basic_block_forward.5} parent=0 // loop_body
    %s15 = ssub.s32 %s10, 1
    %s16 = ssub.s32 %s10, 2
    %s17 = sadd.s32 %s10, 1
    %s18 = ssub.s32 %s10, %s17
    %p19 = scmp.eq.s32.totalorder %s18, 0
    %s21 = sadd.s32 %s20, 1
    %s22 = scalar_select %p19, %s20, %s21
    %p25 = pneg %p19
    %p26 = scmp.eq.s32.totalorder %s10, 1
    %p27 = por %p25, %p26
    %p28 = scmp.ne.s32.totalorder %s20, %s23
    %p29 = scmp.eq.s32.totalorder %s10, 0
    %p30 = por %p28, %p29
    %p31 = scmp.ne.s32.totalorder %s20, %s23
    %p32 = scmp.eq.s32.totalorder %s15, 1
    %p33 = por %p31, %p32
    %p34 = scmp.ne.s32.totalorder %s23, %s24
    %p35 = scmp.eq.s32.totalorder %s15, 0
    %p36 = por %p34, %p35
    %p37 = scmp.ne.s32.totalorder %s23, %s24
    %p38 = scmp.eq.s32.totalorder %s16, 1
    %p39 = por %p37, %p38
    %p41 = scmp.ne.s32.totalorder %s24, %s40
    %p42 = scmp.eq.s32.totalorder %s16, 0
    %p43 = por %p41, %p42
    %s44 = ssub.s32 %s10, %s17
    %p45 = scmp.eq.s32.totalorder %s44, 0
    %s47 = sadd.s32 %s46, 1
    %s48 = scalar_select %p45, %s46, %s47
    %p51 = pneg %p45
    %p52 = scmp.eq.s32.totalorder %s10, 1
    %p53 = por %p51, %p52
    %p54 = scmp.ne.s32.totalorder %s46, %s49
    %p55 = scmp.eq.s32.totalorder %s10, 0
    %p56 = por %p54, %p55
    %p57 = scmp.ne.s32.totalorder %s46, %s49
    %p58 = scmp.eq.s32.totalorder %s15, 1
    %p59 = por %p57, %p58
    %p60 = scmp.ne.s32.totalorder %s49, %s50
    %p61 = scmp.eq.s32.totalorder %s15, 0
    %p62 = por %p60, %p61
    %p63 = scmp.ne.s32.totalorder %s49, %s50
    %p64 = scmp.eq.s32.totalorder %s16, 1
    %p65 = por %p63, %p64
    %p67 = scmp.ne.s32.totalorder %s50, %s66
    %p68 = scmp.eq.s32.totalorder %s16, 0
    %p69 = por %p67, %p68
    %s71 = sadd.s32 %s70, 1
    %p74 = scmp.eq.s32.totalorder %s10, 1
    %p75 = scmp.ne.s32.totalorder %s70, %s72
    %p76 = scmp.eq.s32.totalorder %s10, 0
    %p77 = por %p75, %p76
    %p78 = scmp.ne.s32.totalorder %s70, %s72
    %p79 = scmp.eq.s32.totalorder %s15, 1
    %p80 = por %p78, %p79
    %p81 = scmp.ne.s32.totalorder %s72, %s73
    %p82 = scmp.eq.s32.totalorder %s15, 0
    %p83 = por %p81, %p82
    %p84 = scmp.ne.s32.totalorder %s72, %s73
    %p85 = scmp.eq.s32.totalorder %s16, 1
    %p86 = por %p84, %p85
    %p88 = scmp.ne.s32.totalorder %s73, %s87
    %p89 = scmp.eq.s32.totalorder %s16, 0
    %p90 = por %p88, %p89
    %s92 = sadd.s32 %s91, 1
    %p95 = scmp.eq.s32.totalorder %s10, 1
    %p96 = scmp.ne.s32.totalorder %s91, %s93
    %p97 = scmp.eq.s32.totalorder %s10, 0
    %p98 = por %p96, %p97
    %p99 = scmp.ne.s32.totalorder %s91, %s93
    %p100 = scmp.eq.s32.totalorder %s15, 1
    %p101 = por %p99, %p100
    %p102 = scmp.ne.s32.totalorder %s93, %s94
    %p103 = scmp.eq.s32.totalorder %s15, 0
    %p104 = por %p102, %p103
    %p105 = scmp.ne.s32.totalorder %s93, %s94
    %p106 = scmp.eq.s32.totalorder %s16, 1
    %p107 = por %p105, %p106
    %p109 = scmp.ne.s32.totalorder %s94, %s108
    %p110 = scmp.eq.s32.totalorder %s16, 0
    %p111 = por %p109, %p110
    %s112 = ssub.s32 %s10, %s17
    %p113 = scmp.eq.s32.totalorder %s112, 0
    %s115 = sadd.s32 %s114, 1
    %s116 = scalar_select %p113, %s114, %s115
    %p119 = pneg %p113
    %p120 = scmp.eq.s32.totalorder %s10, 1
    %p121 = por %p119, %p120
    %p122 = scmp.ne.s32.totalorder %s114, %s117
    %p123 = scmp.eq.s32.totalorder %s10, 0
    %p124 = por %p122, %p123
    %p125 = scmp.ne.s32.totalorder %s114, %s117
    %p126 = scmp.eq.s32.totalorder %s15, 1
    %p127 = por %p125, %p126
    %p128 = scmp.ne.s32.totalorder %s117, %s118
    %p129 = scmp.eq.s32.totalorder %s15, 0
    %p130 = por %p128, %p129
    %p131 = scmp.ne.s32.totalorder %s117, %s118
    %p132 = scmp.eq.s32.totalorder %s16, 1
    %p133 = por %p131, %p132
    %p135 = scmp.ne.s32.totalorder %s118, %s134
    %p136 = scmp.eq.s32.totalorder %s16, 0
    %p137 = por %p135, %p136
    %p138 = scmp.le.s32.totalorder 1, %s10
    %p139 = scmp.lt.s32.totalorder %s10, 3
    %p140 = pnand %p138, %p139
    %p141 = pneg %p140
    // Predicated region
    $region9: #{basic_block_forward.5} parent=5 // pred_check
      _
    $region10: #{basic_block_forward.5} parent=5 // pred_check_branch
      %143 = sbr.rel (%p140) target = $region12
    $region11: #{basic_block_forward.5} parent=5 // pred_region
      %s144 = ssub.s32 %s10, 1
      // Predicated region
      $region13: #{basic_block_forward.5} parent=11 // pred_check
        %p145 = pneg %p83
      $region14: #{basic_block_forward.5} parent=11 // pred_check_branch
        %147 = sbr.rel (%p145) target = $region16
      $region15: #{basic_block_forward.5} parent=11 // pred_region
        _
      $region16: #{basic_block_forward.5} parent=11 // pred_fallthru
        _
      // Predicated region
      $region17: #{basic_block_forward.5} parent=11 // pred_check
        %p148 = pneg %p104
      $region18: #{basic_block_forward.5} parent=11 // pred_check_branch
        %150 = sbr.rel (%p148) target = $region20
      $region19: #{basic_block_forward.5} parent=11 // pred_region
        _
      $region20: #{basic_block_forward.5} parent=11 // pred_fallthru
        _
    $region12: #{basic_block_forward.5} parent=5 // pred_fallthru
      _
    %p151 = scmp.lt.s32.totalorder %s10, 2
    // Predicated region
    $region21: #{basic_block_forward.5} parent=5 // pred_check
      %p152 = pneg %p151
    $region22: #{basic_block_forward.5} parent=5 // pred_check_branch
      %154 = sbr.rel (%p152) target = $region24
    $region23: #{basic_block_forward.5} parent=5 // pred_region
      // Predicated region
      $region25: #{basic_block_forward.5} parent=23 // pred_check
        %p155 = pneg %p30
      $region26: #{basic_block_forward.5} parent=23 // pred_check_branch
        %157 = sbr.rel (%p155) target = $region28
      $region27: #{basic_block_forward.5} parent=23 // pred_region
        %p158 = scmp.lt.s32.totalorder %s10, 1
        %s159 = scalar_select %p158, %s10, 1
        %s160 = smul.addr %s159, 32
        %s161 = smul.addr %s160, 4
        %s162 = scalar_lea.vmem %s0, %s161
      $region28: #{basic_block_forward.5} parent=23 // pred_fallthru
        _
      // Predicated region
      $region29: #{basic_block_forward.5} parent=23 // pred_check
        %p163 = pneg %p56
      $region30: #{basic_block_forward.5} parent=23 // pred_check_branch
        %165 = sbr.rel (%p163) target = $region32
      $region31: #{basic_block_forward.5} parent=23 // pred_region
        %p166 = scmp.lt.s32.totalorder %s10, 1
        %s167 = scalar_select %p166, %s10, 1
        %s168 = smul.addr %s167, 72
        %s169 = smul.addr %s168, 4
        %s170 = scalar_lea.vmem %s1, %s169
      $region32: #{basic_block_forward.5} parent=23 // pred_fallthru
        _
    $region24: #{basic_block_forward.5} parent=5 // pred_fallthru
      _
    %p171 = scmp.le.s32.totalorder 1, %s10
    %p172 = scmp.lt.s32.totalorder %s10, 3
    %p173 = pnand %p171, %p172
    %p174 = pneg %p173
    // Predicated region
    $region33: #{basic_block_forward.5} parent=5 // pred_check
      _
    $region34: #{basic_block_forward.5} parent=5 // pred_check_branch
      %176 = sbr.rel (%p173) target = $region36
    $region35: #{basic_block_forward.5} parent=5 // pred_region
      %s177 = ssub.s32 %s10, 1
      %p178 = scmp.lt.s32.totalorder %s15, 1
      %s179 = scalar_select %p178, %s15, 1
      %s180 = smul.addr %s179, 32
      %s181 = smul.addr %s180, 4
      %s182 = scalar_lea.vmem %s0, %s181
      %p183 = pneg %p36
      %p184 = pneg %p33
      %p185 = scmp.lt.s32.totalorder %s15, 1
      %s186 = scalar_select %p185, %s15, 1
      %s187 = smul.addr %s186, 72
      %s188 = smul.addr %s187, 4
      %s189 = scalar_lea.vmem %s1, %s188
      %p190 = pneg %p62
      %p191 = pneg %p59
      %p192 = pneg %p83
      %p193 = pneg %p80
      %p194 = pneg %p104
      %p195 = pneg %p101
      %p196 = pneg %p130
      %p197 = pneg %p127
      %p198 = scmp.lt.s32.totalorder %s15, 1
      %s199 = scalar_select %p198, %s15, 1
      %s200 = smul.addr %s199, 32
      %s201 = smul.addr %s200, 8
      %s202 = scalar_lea.vmem %s4, %s201
      %p203 = scmp.lt.s32.totalorder %s15, 1
      %s204 = scalar_select %p203, %s15, 1
      %s205 = smul.addr %s204, 32
      %s206 = smul.addr %s205, 4
      %s207 = scalar_lea.vmem %s0, %s206
      %p208 = scmp.lt.s32.totalorder %s15, 1
      %s209 = scalar_select %p208, %s15, 1
      %s210 = smul.addr %s209, 72
      %s211 = smul.addr %s210, 4
      %s212 = scalar_lea.vmem %s1, %s211
      %p213 = scmp.lt.s32.totalorder %s15, 1
      %s214 = scalar_select %p213, %s15, 1
      %s215 = smul.addr %s214, 32
      %s216 = smul.addr %s215, 8
      %s217 = scalar_lea.vmem %s4, %s216
      %v218 = vld [vmem:[%s2] sm:$0x1]
      %v219 = vld [vmem:[%s3] sm:$0x1]
      %v220 = vld [vmem:[%s212 + $0x10] sm:$0xf]
      %v221 = vld [vmem:[%s212 + $0x14] sm:$0xf]
      %v222 = vld [vmem:[%s212 + $0x18] sm:$0xf]
      %v223 = vld [vmem:[%s212 + $0x20] sm:$0xf]
      %v224 = vld [vmem:[%s212 + $0x24] sm:$0xf]
      %v225 = vld [vmem:[%s212 + $0x28] sm:$0xf]
      %v226 = vld [vmem:[%s212 + $0x30] sm:$0xf]
      %v227 = vld [vmem:[%s212 + $0x34] sm:$0xf]
      %v228 = vld [vmem:[%s212 + $0x38] sm:$0xf]
      %v229 = vld [vmem:[%s212 + $0x40] sm:$0xf]
      %v230 = vld [vmem:[%s212 + $0x44] sm:$0xf]
      %v231 = vld [vmem:[%s212 + $0x48] sm:$0xf]
      %v232 = vld [vmem:[%s212 + $0x50] sm:$0xf]
      %v233 = vld [vmem:[%s212 + $0x54] sm:$0xf]
      %v234 = vld [vmem:[%s212 + $0x58] sm:$0xf]
      %v235 = vld [vmem:[%s212 + $0x60] sm:$0xf]
      %v236 = vld [vmem:[%s212 + $0x64] sm:$0xf]
      %v237 = vld [vmem:[%s212 + $0x68] sm:$0xf]
      %v238 = vld [vmem:[%s212 + $0x70] sm:$0xf]
      %v239 = vld [vmem:[%s212 + $0x74] sm:$0xf]
      %v240 = vld [vmem:[%s212 + $0x78] sm:$0xf]
      %v241 = vld [vmem:[%s212 + $0x80] sm:$0xf]
      %v242 = vld [vmem:[%s212 + $0x84] sm:$0xf]
      %v243 = vld [vmem:[%s212 + $0x88] sm:$0xf]
      %v244 = vld [vmem:[%s212 + $0x90] sm:$0xf]
      %v245 = vld [vmem:[%s212 + $0x94] sm:$0xf]
      %v246 = vld [vmem:[%s212 + $0x98] sm:$0xf]
      %v247 = vld [vmem:[%s212 + $0xa0] sm:$0xf]
      %v248 = vld [vmem:[%s212 + $0xa4] sm:$0xf]
      %v249 = vld [vmem:[%s212 + $0xa8] sm:$0xf]
      %v250 = vld [vmem:[%s212 + $0xb0] sm:$0xf]
      %v251 = vld [vmem:[%s212 + $0xb4] sm:$0xf]
      %v252 = vld [vmem:[%s212 + $0xb8] sm:$0xf]
      %v253 = vld [vmem:[%s212 + $0xc0] sm:$0xf]
      %v254 = vld [vmem:[%s212 + $0xc4] sm:$0xf]
      %v255 = vld [vmem:[%s212 + $0xc8] sm:$0xf]
      %v256 = vld [vmem:[%s212 + $0xd0] sm:$0xf]
      %v257 = vld [vmem:[%s212 + $0xd4] sm:$0xf]
      %v258 = vld [vmem:[%s212 + $0xd8] sm:$0xf]
      %v259 = vld [vmem:[%s212 + $0xe0] sm:$0xf]
      %v260 = vld [vmem:[%s212 + $0xe4] sm:$0xf]
      %v261 = vld [vmem:[%s212 + $0xe8] sm:$0xf]
      %v262 = vld [vmem:[%s212 + $0xf0] sm:$0xf]
      %v263 = vld [vmem:[%s212 + $0xf4] sm:$0xf]
      %v264 = vld [vmem:[%s212 + $0xf8] sm:$0xf]
      %v265 = vld [vmem:[%s212 + $0x100] sm:$0xf]
      %v266 = vld [vmem:[%s212 + $0x104] sm:$0xf]
      %v267 = vld [vmem:[%s212 + $0x108] sm:$0xf]
      %v268 = vunpack.c.l.bf16 %v220
      %v269 = vunpack.c.l.bf16 %v221
      %v270 = vunpack.c.l.bf16 %v222
      %v271 = vunpack.c.l.bf16 %v223
      %v272 = vunpack.c.l.bf16 %v224
      %v273 = vunpack.c.l.bf16 %v225
      %v274 = vunpack.c.l.bf16 %v226
      %v275 = vunpack.c.l.bf16 %v227
      %v276 = vunpack.c.l.bf16 %v228
      %v277 = vunpack.c.l.bf16 %v229
      %v278 = vunpack.c.l.bf16 %v230
      %v279 = vunpack.c.l.bf16 %v231
      %v280 = vunpack.c.l.bf16 %v232
      %v281 = vunpack.c.l.bf16 %v233
      %v282 = vunpack.c.l.bf16 %v234
      %v283 = vunpack.c.l.bf16 %v235
      %v284 = vunpack.c.l.bf16 %v236
      %v285 = vunpack.c.l.bf16 %v237
      %v286 = vunpack.c.l.bf16 %v238
      %v287 = vunpack.c.l.bf16 %v239
      %v288 = vunpack.c.l.bf16 %v240
      %v289 = vunpack.c.l.bf16 %v241
      %v290 = vunpack.c.l.bf16 %v242
      %v291 = vunpack.c.l.bf16 %v243
      %v292 = vunpack.c.l.bf16 %v244
      %v293 = vunpack.c.l.bf16 %v245
      %v294 = vunpack.c.l.bf16 %v246
      %v295 = vunpack.c.l.bf16 %v247
      %v296 = vunpack.c.l.bf16 %v248
      %v297 = vunpack.c.l.bf16 %v249
      %v298 = vunpack.c.l.bf16 %v250
      %v299 = vunpack.c.l.bf16 %v251
      %v300 = vunpack.c.l.bf16 %v252
      %v301 = vunpack.c.l.bf16 %v253
      %v302 = vunpack.c.l.bf16 %v254
      %v303 = vunpack.c.l.bf16 %v255
      %v304 = vunpack.c.l.bf16 %v256
      %v305 = vunpack.c.l.bf16 %v257
      %v306 = vunpack.c.l.bf16 %v258
      %v307 = vunpack.c.l.bf16 %v259
      %v308 = vunpack.c.l.bf16 %v260
      %v309 = vunpack.c.l.bf16 %v261
      %v310 = vunpack.c.l.bf16 %v262
      %v311 = vunpack.c.l.bf16 %v263
      %v312 = vunpack.c.l.bf16 %v264
      %v313 = vunpack.c.l.bf16 %v265
      %v314 = vunpack.c.l.bf16 %v266
      %v315 = vunpack.c.l.bf16 %v267
      %v316 = vld [vmem:[%s207] sm:$0xf]
      %v317 = vld [vmem:[%s207 + $0x4] sm:$0xf]
      %v318 = vld [vmem:[%s207 + $0x8] sm:$0xf]
      %v319 = vld [vmem:[%s207 + $0xc] sm:$0xf]
      %v320 = vld [vmem:[%s207 + $0x10] sm:$0xf]
      %v321 = vld [vmem:[%s207 + $0x14] sm:$0xf]
      %v322 = vld [vmem:[%s207 + $0x18] sm:$0xf]
      %v323 = vld [vmem:[%s207 + $0x1c] sm:$0xf]
      %v324 = vld [vmem:[%s207 + $0x20] sm:$0xf]
      %v325 = vld [vmem:[%s207 + $0x24] sm:$0xf]
      %v326 = vld [vmem:[%s207 + $0x28] sm:$0xf]
      %v327 = vld [vmem:[%s207 + $0x2c] sm:$0xf]
      %v328 = vld [vmem:[%s207 + $0x30] sm:$0xf]
      %v329 = vld [vmem:[%s207 + $0x34] sm:$0xf]
      %v330 = vld [vmem:[%s207 + $0x38] sm:$0xf]
      %v331 = vld [vmem:[%s207 + $0x3c] sm:$0xf]
      %v332 = vld [vmem:[%s207 + $0x40] sm:$0xf]
      %v333 = vld [vmem:[%s207 + $0x44] sm:$0xf]
      %v334 = vld [vmem:[%s207 + $0x48] sm:$0xf]
      %v335 = vld [vmem:[%s207 + $0x4c] sm:$0xf]
      %v336 = vld [vmem:[%s207 + $0x50] sm:$0xf]
      %v337 = vld [vmem:[%s207 + $0x54] sm:$0xf]
      %v338 = vld [vmem:[%s207 + $0x58] sm:$0xf]
      %v339 = vld [vmem:[%s207 + $0x5c] sm:$0xf]
      %v340 = vld [vmem:[%s207 + $0x60] sm:$0xf]
      %v341 = vld [vmem:[%s207 + $0x64] sm:$0xf]
      %v342 = vld [vmem:[%s207 + $0x68] sm:$0xf]
      %v343 = vld [vmem:[%s207 + $0x6c] sm:$0xf]
      %v344 = vld [vmem:[%s207 + $0x70] sm:$0xf]
      %v345 = vld [vmem:[%s207 + $0x74] sm:$0xf]
      %v346 = vld [vmem:[%s207 + $0x78] sm:$0xf]
      %v347 = vld [vmem:[%s207 + $0x7c] sm:$0xf]
      %v348 = vunpack.c.l.bf16 %v316
      %v349 = vunpack.c.l.bf16 %v317
      %v350 = vunpack.c.l.bf16 %v318
      %v351 = vunpack.c.l.bf16 %v319
      %v352 = vunpack.c.l.bf16 %v320
      %v353 = vunpack.c.l.bf16 %v321
      %v354 = vunpack.c.l.bf16 %v322
      %v355 = vunpack.c.l.bf16 %v323
      %v356 = vunpack.c.l.bf16 %v324
      %v357 = vunpack.c.l.bf16 %v325
      %v358 = vunpack.c.l.bf16 %v326
      %v359 = vunpack.c.l.bf16 %v327
      %v360 = vunpack.c.l.bf16 %v328
      %v361 = vunpack.c.l.bf16 %v329
      %v362 = vunpack.c.l.bf16 %v330
      %v363 = vunpack.c.l.bf16 %v331
      %v364 = vunpack.c.l.bf16 %v332
      %v365 = vunpack.c.l.bf16 %v333
      %v366 = vunpack.c.l.bf16 %v334
      %v367 = vunpack.c.l.bf16 %v335
      %v368 = vunpack.c.l.bf16 %v336
      %v369 = vunpack.c.l.bf16 %v337
      %v370 = vunpack.c.l.bf16 %v338
      %v371 = vunpack.c.l.bf16 %v339
      %v372 = vunpack.c.l.bf16 %v340
      %v373 = vunpack.c.l.bf16 %v341
      %v374 = vunpack.c.l.bf16 %v342
      %v375 = vunpack.c.l.bf16 %v343
      %v376 = vunpack.c.l.bf16 %v344
      %v377 = vunpack.c.l.bf16 %v345
      %v378 = vunpack.c.l.bf16 %v346
      %v379 = vunpack.c.l.bf16 %v347
      %v381 = vperm.slane %v218, 0
      %v383 = vmul.f32 %v348, %v381
      %v384 = vmul.f32 %v349, %v381
      %v385 = vmul.f32 %v350, %v381
      %v386 = vmul.f32 %v351, %v381
      %v387 = vmul.f32 %v352, %v381
      %v388 = vmul.f32 %v353, %v381
      %v389 = vmul.f32 %v354, %v381
      %v390 = vmul.f32 %v355, %v381
      %v391 = vmul.f32 %v356, %v381
      %v392 = vmul.f32 %v357, %v381
      %v393 = vmul.f32 %v358, %v381
      %v394 = vmul.f32 %v359, %v381
      %v395 = vmul.f32 %v360, %v381
      %v396 = vmul.f32 %v361, %v381
      %v397 = vmul.f32 %v362, %v381
      %v398 = vmul.f32 %v363, %v381
      %v399 = vmul.f32 %v364, %v381
      %v400 = vmul.f32 %v365, %v381
      %v401 = vmul.f32 %v366, %v381
      %v402 = vmul.f32 %v367, %v381
      %v403 = vmul.f32 %v368, %v381
      %v404 = vmul.f32 %v369, %v381
      %v405 = vmul.f32 %v370, %v381
      %v406 = vmul.f32 %v371, %v381
      %v407 = vmul.f32 %v372, %v381
      %v408 = vmul.f32 %v373, %v381
      %v409 = vmul.f32 %v374, %v381
      %v410 = vmul.f32 %v375, %v381
      %v411 = vmul.f32 %v376, %v381
      %v412 = vmul.f32 %v377, %v381
      %v413 = vmul.f32 %v378, %v381
      %v414 = vmul.f32 %v379, %v381
      %v416 = vperm.slane %v219, 0
      %v418 = vadd.f32 %v383, %v416
      %v419 = vadd.f32 %v384, %v416
      %v420 = vadd.f32 %v385, %v416
      %v421 = vadd.f32 %v386, %v416
      %v422 = vadd.f32 %v387, %v416
      %v423 = vadd.f32 %v388, %v416
      %v424 = vadd.f32 %v389, %v416
      %v425 = vadd.f32 %v390, %v416
      %v426 = vadd.f32 %v391, %v416
      %v427 = vadd.f32 %v392, %v416
      %v428 = vadd.f32 %v393, %v416
      %v429 = vadd.f32 %v394, %v416
      %v430 = vadd.f32 %v395, %v416
      %v431 = vadd.f32 %v396, %v416
      %v432 = vadd.f32 %v397, %v416
      %v433 = vadd.f32 %v398, %v416
      %v434 = vadd.f32 %v399, %v416
      %v435 = vadd.f32 %v400, %v416
      %v436 = vadd.f32 %v401, %v416
      %v437 = vadd.f32 %v402, %v416
      %v438 = vadd.f32 %v403, %v416
      %v439 = vadd.f32 %v404, %v416
      %v440 = vadd.f32 %v405, %v416
      %v441 = vadd.f32 %v406, %v416
      %v442 = vadd.f32 %v407, %v416
      %v443 = vadd.f32 %v408, %v416
      %v444 = vadd.f32 %v409, %v416
      %v445 = vadd.f32 %v410, %v416
      %v446 = vadd.f32 %v411, %v416
      %v447 = vadd.f32 %v412, %v416
      %v448 = vadd.f32 %v413, %v416
      %v449 = vadd.f32 %v414, %v416
      %vm498 = vcmask 1046528
      %v499 = vrot.slane %v268, 1
      %v500 = vrot.slane %v269, 1
      %v501 = vsel %vm498, %v499, %v500
      %v502 = vrot.slane %v270, 1
      %v503 = vsel %vm498, %v500, %v502
      %v504 = vrot.slane %v271, 1
      %v505 = vrot.slane %v272, 1
      %v506 = vsel %vm498, %v504, %v505
      %v507 = vrot.slane %v273, 1
      %v508 = vsel %vm498, %v505, %v507
      %v509 = vrot.slane %v274, 1
      %v510 = vrot.slane %v275, 1
      %v511 = vsel %vm498, %v509, %v510
      %v512 = vrot.slane %v276, 1
      %v513 = vsel %vm498, %v510, %v512
      %v514 = vrot.slane %v277, 1
      %v515 = vrot.slane %v278, 1
      %v516 = vsel %vm498, %v514, %v515
      %v517 = vrot.slane %v279, 1
      %v518 = vsel %vm498, %v515, %v517
      %v519 = vrot.slane %v280, 1
      %v520 = vrot.slane %v281, 1
      %v521 = vsel %vm498, %v519, %v520
      %v522 = vrot.slane %v282, 1
      %v523 = vsel %vm498, %v520, %v522
      %v524 = vrot.slane %v283, 1
      %v525 = vrot.slane %v284, 1
      %v526 = vsel %vm498, %v524, %v525
      %v527 = vrot.slane %v285, 1
      %v528 = vsel %vm498, %v525, %v527
      %v529 = vrot.slane %v286, 1
      %v530 = vrot.slane %v287, 1
      %v531 = vsel %vm498, %v529, %v530
      %v532 = vrot.slane %v288, 1
      %v533 = vsel %vm498, %v530, %v532
      %v534 = vrot.slane %v289, 1
      %v535 = vrot.slane %v290, 1
      %v536 = vsel %vm498, %v534, %v535
      %v537 = vrot.slane %v291, 1
      %v538 = vsel %vm498, %v535, %v537
      %v539 = vrot.slane %v292, 1
      %v540 = vrot.slane %v293, 1
      %v541 = vsel %vm498, %v539, %v540
      %v542 = vrot.slane %v294, 1
      %v543 = vsel %vm498, %v540, %v542
      %v544 = vrot.slane %v295, 1
      %v545 = vrot.slane %v296, 1
      %v546 = vsel %vm498, %v544, %v545
      %v547 = vrot.slane %v297, 1
      %v548 = vsel %vm498, %v545, %v547
      %v549 = vrot.slane %v298, 1
      %v550 = vrot.slane %v299, 1
      %v551 = vsel %vm498, %v549, %v550
      %v552 = vrot.slane %v300, 1
      %v553 = vsel %vm498, %v550, %v552
      %v554 = vrot.slane %v301, 1
      %v555 = vrot.slane %v302, 1
      %v556 = vsel %vm498, %v554, %v555
      %v557 = vrot.slane %v303, 1
      %v558 = vsel %vm498, %v555, %v557
      %v559 = vrot.slane %v304, 1
      %v560 = vrot.slane %v305, 1
      %v561 = vsel %vm498, %v559, %v560
      %v562 = vrot.slane %v306, 1
      %v563 = vsel %vm498, %v560, %v562
      %v564 = vrot.slane %v307, 1
      %v565 = vrot.slane %v308, 1
      %v566 = vsel %vm498, %v564, %v565
      %v567 = vrot.slane %v309, 1
      %v568 = vsel %vm498, %v565, %v567
      %v569 = vrot.slane %v310, 1
      %v570 = vrot.slane %v311, 1
      %v571 = vsel %vm498, %v569, %v570
      %v572 = vrot.slane %v312, 1
      %v573 = vsel %vm498, %v570, %v572
      %v574 = vrot.slane %v313, 1
      %v575 = vrot.slane %v314, 1
      %v576 = vsel %vm498, %v574, %v575
      %v577 = vrot.slane %v315, 1
      %v578 = vsel %vm498, %v575, %v577
      %v611 = vadd.f32 %v418, %v501
      %v612 = vadd.f32 %v419, %v503
      %v613 = vadd.f32 %v420, %v506
      %v614 = vadd.f32 %v421, %v508
      %v615 = vadd.f32 %v422, %v511
      %v616 = vadd.f32 %v423, %v513
      %v617 = vadd.f32 %v424, %v516
      %v618 = vadd.f32 %v425, %v518
      %v619 = vadd.f32 %v426, %v521
      %v620 = vadd.f32 %v427, %v523
      %v621 = vadd.f32 %v428, %v526
      %v622 = vadd.f32 %v429, %v528
      %v623 = vadd.f32 %v430, %v531
      %v624 = vadd.f32 %v431, %v533
      %v625 = vadd.f32 %v432, %v536
      %v626 = vadd.f32 %v433, %v538
      %v627 = vadd.f32 %v434, %v541
      %v628 = vadd.f32 %v435, %v543
      %v629 = vadd.f32 %v436, %v546
      %v630 = vadd.f32 %v437, %v548
      %v631 = vadd.f32 %v438, %v551
      %v632 = vadd.f32 %v439, %v553
      %v633 = vadd.f32 %v440, %v556
      %v634 = vadd.f32 %v441, %v558
      %v635 = vadd.f32 %v442, %v561
      %v636 = vadd.f32 %v443, %v563
      %v637 = vadd.f32 %v444, %v566
      %v638 = vadd.f32 %v445, %v568
      %v639 = vadd.f32 %v446, %v571
      %v640 = vadd.f32 %v447, %v573
      %v641 = vadd.f32 %v448, %v576
      %v642 = vadd.f32 %v449, %v578
      %v643 = vmax.f32 %v611, 0.0
      %v644 = vmax.f32 %v612, 0.0
      %v645 = vmax.f32 %v613, 0.0
      %v646 = vmax.f32 %v614, 0.0
      %v647 = vmax.f32 %v615, 0.0
      %v648 = vmax.f32 %v616, 0.0
      %v649 = vmax.f32 %v617, 0.0
      %v650 = vmax.f32 %v618, 0.0
      %v651 = vmax.f32 %v619, 0.0
      %v652 = vmax.f32 %v620, 0.0
      %v653 = vmax.f32 %v621, 0.0
      %v654 = vmax.f32 %v622, 0.0
      %v655 = vmax.f32 %v623, 0.0
      %v656 = vmax.f32 %v624, 0.0
      %v657 = vmax.f32 %v625, 0.0
      %v658 = vmax.f32 %v626, 0.0
      %v659 = vmax.f32 %v627, 0.0
      %v660 = vmax.f32 %v628, 0.0
      %v661 = vmax.f32 %v629, 0.0
      %v662 = vmax.f32 %v630, 0.0
      %v663 = vmax.f32 %v631, 0.0
      %v664 = vmax.f32 %v632, 0.0
      %v665 = vmax.f32 %v633, 0.0
      %v666 = vmax.f32 %v634, 0.0
      %v667 = vmax.f32 %v635, 0.0
      %v668 = vmax.f32 %v636, 0.0
      %v669 = vmax.f32 %v637, 0.0
      %v670 = vmax.f32 %v638, 0.0
      %v671 = vmax.f32 %v639, 0.0
      %v672 = vmax.f32 %v640, 0.0
      %v673 = vmax.f32 %v641, 0.0
      %v674 = vmax.f32 %v642, 0.0
      %675 = vst [vmem:[%s217] sm:$0xff] %v643
      %676 = vst [vmem:[%s217 + $0x8] sm:$0xff] %v644
      %677 = vst [vmem:[%s217 + $0x10] sm:$0xff] %v645
      %678 = vst [vmem:[%s217 + $0x18] sm:$0xff] %v646
      %679 = vst [vmem:[%s217 + $0x20] sm:$0xff] %v647
      %680 = vst [vmem:[%s217 + $0x28] sm:$0xff] %v648
      %681 = vst [vmem:[%s217 + $0x30] sm:$0xff] %v649
      %682 = vst [vmem:[%s217 + $0x38] sm:$0xff] %v650
      %683 = vst [vmem:[%s217 + $0x40] sm:$0xff] %v651
      %684 = vst [vmem:[%s217 + $0x48] sm:$0xff] %v652
      %685 = vst [vmem:[%s217 + $0x50] sm:$0xff] %v653
      %686 = vst [vmem:[%s217 + $0x58] sm:$0xff] %v654
      %687 = vst [vmem:[%s217 + $0x60] sm:$0xff] %v655
      %688 = vst [vmem:[%s217 + $0x68] sm:$0xff] %v656
      %689 = vst [vmem:[%s217 + $0x70] sm:$0xff] %v657
      %690 = vst [vmem:[%s217 + $0x78] sm:$0xff] %v658
      %691 = vst [vmem:[%s217 + $0x80] sm:$0xff] %v659
      %692 = vst [vmem:[%s217 + $0x88] sm:$0xff] %v660
      %693 = vst [vmem:[%s217 + $0x90] sm:$0xff] %v661
      %694 = vst [vmem:[%s217 + $0x98] sm:$0xff] %v662
      %695 = vst [vmem:[%s217 + $0xa0] sm:$0xff] %v663
      %696 = vst [vmem:[%s217 + $0xa8] sm:$0xff] %v664
      %697 = vst [vmem:[%s217 + $0xb0] sm:$0xff] %v665
      %698 = vst [vmem:[%s217 + $0xb8] sm:$0xff] %v666
      %699 = vst [vmem:[%s217 + $0xc0] sm:$0xff] %v667
      %700 = vst [vmem:[%s217 + $0xc8] sm:$0xff] %v668
      %701 = vst [vmem:[%s217 + $0xd0] sm:$0xff] %v669
      %702 = vst [vmem:[%s217 + $0xd8] sm:$0xff] %v670
      %703 = vst [vmem:[%s217 + $0xe0] sm:$0xff] %v671
      %704 = vst [vmem:[%s217 + $0xe8] sm:$0xff] %v672
      %705 = vst [vmem:[%s217 + $0xf0] sm:$0xff] %v673
      %706 = vst [vmem:[%s217 + $0xf8] sm:$0xff] %v674
      %p707 = scmp.lt.s32.totalorder %s15, 1
      %s708 = scalar_select %p707, %s15, 1
      %s709 = smul.addr %s708, 32
      %s710 = smul.addr %s709, 8
      %s711 = scalar_lea.vmem %s4, %s710
      // Predicated region
      $region37: #{basic_block_forward.5} parent=35 // pred_check
        %p712 = pneg %p127
      $region38: #{basic_block_forward.5} parent=35 // pred_check_branch
        %714 = sbr.rel (%p712) target = $region40
      $region39: #{basic_block_forward.5} parent=35 // pred_region
        _
      $region40: #{basic_block_forward.5} parent=35 // pred_fallthru
        _
    $region36: #{basic_block_forward.5} parent=5 // pred_fallthru
      _
    %p715 = scmp.le.s32.totalorder 2, %s10
    // Predicated region
    $region41: #{basic_block_forward.5} parent=5 // pred_check
      %p716 = pneg %p715
    $region42: #{basic_block_forward.5} parent=5 // pred_check_branch
      %718 = sbr.rel (%p716) target = $region44
    $region43: #{basic_block_forward.5} parent=5 // pred_region
      %s719 = ssub.s32 %s10, 2
      // Predicated region
      $region45: #{basic_block_forward.5} parent=43 // pred_check
        %p720 = pneg %p133
      $region46: #{basic_block_forward.5} parent=43 // pred_check_branch
        %722 = sbr.rel (%p720) target = $region48
      $region47: #{basic_block_forward.5} parent=43 // pred_region
        %p723 = scmp.lt.s32.totalorder %s16, 1
        %s724 = scalar_select %p723, %s16, 1
        %s725 = smul.addr %s724, 32
        %s726 = smul.addr %s725, 8
        %s727 = scalar_lea.vmem %s4, %s726
      $region48: #{basic_block_forward.5} parent=43 // pred_fallthru
        _
    $region44: #{basic_block_forward.5} parent=5 // pred_fallthru
      _
  $region6: #{basic_block_forward.5} parent=0 // loop_footer
    %s14 = sadd.s32 1, %s10
  $region7: #{basic_block_forward.5} parent=0 // loop_footer_branch
    %9 = sbr.rel target = $region3
  $region8: #{basic_block_forward.5} parent=0 // loop_exit
    _

// kernel: basic_block_forward.3
$region0: #{basic_block_forward.3}
  #allocation0 [shape = 'u32[]', space=smem, size = 0x4, offset = 0x4, fixed_abs, tag = 'smem constant byte address 0x4 - core index']
  #allocation1 [shape = 'u32[72,128]{1,0:T(1,128)}', space=vmem, size = 0x9000, scoped, tag = 'internal scratch']
  %s0 = inlined_call_operand.vmem [shape: bf16[2,18,32,128], index: 0, kind: input, shape index: {}]
  %s1 = inlined_call_operand.vmem [shape: bf16[3,384,128], index: 1, kind: input, shape index: {}]
  %s2 = inlined_call_operand.vmem [shape: bf16[2,18,32,128], index: 2, kind: output, shape index: {0}]
  %s3 = inlined_call_operand.vmem [shape: f32[2,2,128], index: 3, kind: output, shape index: {1}]
  %4 = xla_tuple %s2, %s3
  %s5 = sld [smem:[#allocation0]]
  $region49: #{basic_block_forward.3} parent=0
    _
  %s7 = ssub.s32 1, %s5
  %s8 = scalar_select 0, %s7, %s5
  loop: start=0, step=1, limit=4
  $region2: #{basic_block_forward.3} parent=0 // loop_pre_header
    _
  $region3: #{basic_block_forward.3} parent=0 // loop_header
    %s10 = sphi 0, %s14
    %p11 = scmp.ge.s32.totalorder %s10, 4
    %s20 = sphi 0, %s22
    %s23 = sphi 0, %s20
    %s24 = sphi 0, %s23
    %s40 = sphi 0, %s24
    %s44 = sphi 0, %s44
    %s46 = sphi 0, %s44
    %s47 = sphi 0, %s46
    %s61 = sphi 0, %s47
    %s67 = sphi 0, %s69
    %s70 = sphi 0, %s67
    %s71 = sphi 0, %s70
    %s87 = sphi 0, %s71
    %s93 = sphi 0, %s95
    %s96 = sphi 0, %s93
    %s97 = sphi 0, %s96
    %s113 = sphi 0, %s97
  $region4: #{basic_block_forward.3} parent=0 // loop_header_branch
    %13 = sbr.rel (%p11) target = $region8
  $region5: #{basic_block_forward.3} parent=0 // loop_body
    %s15 = ssub.s32 %s10, 1
    %s16 = ssub.s32 %s10, 2
    %s17 = sadd.s32 %s10, 1
    %s18 = ssub.s32 %s10, %s17
    %p19 = scmp.eq.s32.totalorder %s18, 0
    %s21 = sadd.s32 %s20, 1
    %s22 = scalar_select %p19, %s20, %s21
    %p25 = pneg %p19
    %p26 = scmp.eq.s32.totalorder %s10, 1
    %p27 = por %p25, %p26
    %p28 = scmp.ne.s32.totalorder %s20, %s23
    %p29 = scmp.eq.s32.totalorder %s10, 0
    %p30 = por %p28, %p29
    %p31 = scmp.ne.s32.totalorder %s20, %s23
    %p32 = scmp.eq.s32.totalorder %s15, 1
    %p33 = por %p31, %p32
    %p34 = scmp.ne.s32.totalorder %s23, %s24
    %p35 = scmp.eq.s32.totalorder %s15, 0
    %p36 = por %p34, %p35
    %p37 = scmp.ne.s32.totalorder %s23, %s24
    %p38 = scmp.eq.s32.totalorder %s16, 1
    %p39 = por %p37, %p38
    %p41 = scmp.ne.s32.totalorder %s24, %s40
    %p42 = scmp.eq.s32.totalorder %s16, 0
    %p43 = por %p41, %p42
    %s45 = sadd.s32 %s44, 1
    %p48 = scmp.eq.s32.totalorder %s10, 1
    %p49 = scmp.ne.s32.totalorder %s44, %s46
    %p50 = scmp.eq.s32.totalorder %s10, 0
    %p51 = por %p49, %p50
    %p52 = scmp.ne.s32.totalorder %s44, %s46
    %p53 = scmp.eq.s32.totalorder %s15, 1
    %p54 = por %p52, %p53
    %p55 = scmp.ne.s32.totalorder %s46, %s47
    %p56 = scmp.eq.s32.totalorder %s15, 0
    %p57 = por %p55, %p56
    %p58 = scmp.ne.s32.totalorder %s46, %s47
    %p59 = scmp.eq.s32.totalorder %s16, 1
    %p60 = por %p58, %p59
    %p62 = scmp.ne.s32.totalorder %s47, %s61
    %p63 = scmp.eq.s32.totalorder %s16, 0
    %p64 = por %p62, %p63
    %s65 = ssub.s32 %s10, %s17
    %p66 = scmp.eq.s32.totalorder %s65, 0
    %s68 = sadd.s32 %s67, 1
    %s69 = scalar_select %p66, %s67, %s68
    %p72 = pneg %p66
    %p73 = scmp.eq.s32.totalorder %s10, 1
    %p74 = por %p72, %p73
    %p75 = scmp.ne.s32.totalorder %s67, %s70
    %p76 = scmp.eq.s32.totalorder %s10, 0
    %p77 = por %p75, %p76
    %p78 = scmp.ne.s32.totalorder %s67, %s70
    %p79 = scmp.eq.s32.totalorder %s15, 1
    %p80 = por %p78, %p79
    %p81 = scmp.ne.s32.totalorder %s70, %s71
    %p82 = scmp.eq.s32.totalorder %s15, 0
    %p83 = por %p81, %p82
    %p84 = scmp.ne.s32.totalorder %s70, %s71
    %p85 = scmp.eq.s32.totalorder %s16, 1
    %p86 = por %p84, %p85
    %p88 = scmp.ne.s32.totalorder %s71, %s87
    %p89 = scmp.eq.s32.totalorder %s16, 0
    %p90 = por %p88, %p89
    %s91 = ssub.s32 %s10, %s17
    %p92 = scmp.eq.s32.totalorder %s91, 0
    %s94 = sadd.s32 %s93, 1
    %s95 = scalar_select %p92, %s93, %s94
    %p98 = pneg %p92
    %p99 = scmp.eq.s32.totalorder %s10, 1
    %p100 = por %p98, %p99
    %p101 = scmp.ne.s32.totalorder %s93, %s96
    %p102 = scmp.eq.s32.totalorder %s10, 0
    %p103 = por %p101, %p102
    %p104 = scmp.ne.s32.totalorder %s93, %s96
    %p105 = scmp.eq.s32.totalorder %s15, 1
    %p106 = por %p104, %p105
    %p107 = scmp.ne.s32.totalorder %s96, %s97
    %p108 = scmp.eq.s32.totalorder %s15, 0
    %p109 = por %p107, %p108
    %p110 = scmp.ne.s32.totalorder %s96, %s97
    %p111 = scmp.eq.s32.totalorder %s16, 1
    %p112 = por %p110, %p111
    %p114 = scmp.ne.s32.totalorder %s97, %s113
    %p115 = scmp.eq.s32.totalorder %s16, 0
    %p116 = por %p114, %p115
    %p117 = scmp.le.s32.totalorder 1, %s10
    %p118 = scmp.lt.s32.totalorder %s10, 3
    %p119 = pnand %p117, %p118
    %p120 = pneg %p119
    // Predicated region
    $region9: #{basic_block_forward.3} parent=5 // pred_check
      _
    $region10: #{basic_block_forward.3} parent=5 // pred_check_branch
      %122 = sbr.rel (%p119) target = $region12
    $region11: #{basic_block_forward.3} parent=5 // pred_region
      %s123 = ssub.s32 %s10, 1
      // Predicated region
      $region13: #{basic_block_forward.3} parent=11 // pred_check
        %p124 = pneg %p57
      $region14: #{basic_block_forward.3} parent=11 // pred_check_branch
        %126 = sbr.rel (%p124) target = $region16
      $region15: #{basic_block_forward.3} parent=11 // pred_region
        _
      $region16: #{basic_block_forward.3} parent=11 // pred_fallthru
        _
    $region12: #{basic_block_forward.3} parent=5 // pred_fallthru
      _
    %p127 = scmp.lt.s32.totalorder %s10, 2
    // Predicated region
    $region17: #{basic_block_forward.3} parent=5 // pred_check
      %p128 = pneg %p127
    $region18: #{basic_block_forward.3} parent=5 // pred_check_branch
      %130 = sbr.rel (%p128) target = $region20
    $region19: #{basic_block_forward.3} parent=5 // pred_region
      // Predicated region
      $region21: #{basic_block_forward.3} parent=19 // pred_check
        %p131 = pneg %p30
      $region22: #{basic_block_forward.3} parent=19 // pred_check_branch
        %133 = sbr.rel (%p131) target = $region24
      $region23: #{basic_block_forward.3} parent=19 // pred_region
        %p134 = scmp.lt.s32.totalorder %s10, 1
        %s135 = scalar_select %p134, %s10, 1
        %s136 = smul.addr %s135, 72
        %s137 = smul.addr %s136, 4
        %s138 = scalar_lea.vmem %s0, %s137
      $region24: #{basic_block_forward.3} parent=19 // pred_fallthru
        _
    $region20: #{basic_block_forward.3} parent=5 // pred_fallthru
      _
    %p139 = scmp.le.s32.totalorder 1, %s10
    %p140 = scmp.lt.s32.totalorder %s10, 3
    %p141 = pnand %p139, %p140
    %p142 = pneg %p141
    // Predicated region
    $region25: #{basic_block_forward.3} parent=5 // pred_check
      _
    $region26: #{basic_block_forward.3} parent=5 // pred_check_branch
      %144 = sbr.rel (%p141) target = $region28
    $region27: #{basic_block_forward.3} parent=5 // pred_region
      %s145 = ssub.s32 %s10, 1
      %p146 = scmp.lt.s32.totalorder %s15, 1
      %s147 = scalar_select %p146, %s15, 1
      %s148 = smul.addr %s147, 72
      %s149 = smul.addr %s148, 4
      %s150 = scalar_lea.vmem %s0, %s149
      %p151 = pneg %p36
      %p152 = pneg %p33
      %p153 = pneg %p57
      %p154 = pneg %p54
      %p155 = pneg %p83
      %p156 = pneg %p80
      %p157 = scmp.lt.s32.totalorder %s15, 1
      %s158 = scalar_select %p157, %s15, 1
      %s159 = smul.addr %s158, 72
      %s160 = smul.addr %s159, 4
      %s161 = scalar_lea.vmem %s2, %s160
      %p162 = pneg %p109
      %p163 = pneg %p106
      %p164 = scmp.lt.s32.totalorder %s15, 1
      %s165 = scalar_select %p164, %s15, 1
      %s166 = smul.addr %s165, 2
      %s167 = scalar_lea.vmem %s3, %s166
      %p168 = scmp.lt.s32.totalorder %s15, 1
      %s169 = scalar_select %p168, %s15, 1
      %s170 = smul.addr %s169, 72
      %s171 = smul.addr %s170, 4
      %s172 = scalar_lea.vmem %s0, %s171
      %p173 = scmp.lt.s32.totalorder %s15, 1
      %s174 = scalar_select %p173, %s15, 1
      %s175 = smul.addr %s174, 72
      %s176 = smul.addr %s175, 4
      %s177 = scalar_lea.vmem %s2, %s176
      %p178 = scmp.lt.s32.totalorder %s15, 1
      %s179 = scalar_select %p178, %s15, 1
      %s180 = smul.addr %s179, 2
      %s181 = scalar_lea.vmem %s3, %s180
      %v182 = vld [vmem:[%s172] sm:$0xf]
      %v183 = vld [vmem:[%s172 + $0x4] sm:$0xf]
      %v184 = vld [vmem:[%s172 + $0x8] sm:$0xf]
      %v185 = vld [vmem:[%s172 + $0xc] sm:$0xf]
      %v186 = vld [vmem:[%s172 + $0x10] sm:$0xf]
      %v187 = vld [vmem:[%s172 + $0x14] sm:$0xf]
      %v188 = vld [vmem:[%s172 + $0x18] sm:$0xf]
      %v189 = vld [vmem:[%s172 + $0x1c] sm:$0xf]
      %v190 = vld [vmem:[%s172 + $0x20] sm:$0xf]
      %v191 = vld [vmem:[%s172 + $0x24] sm:$0xf]
      %v192 = vld [vmem:[%s172 + $0x28] sm:$0xf]
      %v193 = vld [vmem:[%s172 + $0x2c] sm:$0xf]
      %v194 = vld [vmem:[%s172 + $0x30] sm:$0xf]
      %v195 = vld [vmem:[%s172 + $0x34] sm:$0xf]
      %v196 = vld [vmem:[%s172 + $0x38] sm:$0xf]
      %v197 = vld [vmem:[%s172 + $0x3c] sm:$0xf]
      %v198 = vld [vmem:[%s172 + $0x40] sm:$0xf]
      %v199 = vld [vmem:[%s172 + $0x44] sm:$0xf]
      %v200 = vld [vmem:[%s172 + $0x48] sm:$0xf]
      %v201 = vld [vmem:[%s172 + $0x4c] sm:$0xf]
      %v202 = vld [vmem:[%s172 + $0x50] sm:$0xf]
      %v203 = vld [vmem:[%s172 + $0x54] sm:$0xf]
      %v204 = vld [vmem:[%s172 + $0x58] sm:$0xf]
      %v205 = vld [vmem:[%s172 + $0x5c] sm:$0xf]
      %v206 = vld [vmem:[%s172 + $0x60] sm:$0xf]
      %v207 = vld [vmem:[%s172 + $0x64] sm:$0xf]
      %v208 = vld [vmem:[%s172 + $0x68] sm:$0xf]
      %v209 = vld [vmem:[%s172 + $0x6c] sm:$0xf]
      %v210 = vld [vmem:[%s172 + $0x70] sm:$0xf]
      %v211 = vld [vmem:[%s172 + $0x74] sm:$0xf]
      %v212 = vld [vmem:[%s172 + $0x78] sm:$0xf]
      %v213 = vld [vmem:[%s172 + $0x7c] sm:$0xf]
      %v214 = vld [vmem:[%s172 + $0x80] sm:$0xf]
      %v215 = vld [vmem:[%s172 + $0x84] sm:$0xf]
      %v216 = vld [vmem:[%s172 + $0x88] sm:$0xf]
      %v217 = vld [vmem:[%s172 + $0x8c] sm:$0xf]
      %v218 = vld [vmem:[%s172 + $0x90] sm:$0xf]
      %v219 = vld [vmem:[%s172 + $0x94] sm:$0xf]
      %v220 = vld [vmem:[%s172 + $0x98] sm:$0xf]
      %v221 = vld [vmem:[%s172 + $0x9c] sm:$0xf]
      %v222 = vld [vmem:[%s172 + $0xa0] sm:$0xf]
      %v223 = vld [vmem:[%s172 + $0xa4] sm:$0xf]
      %v224 = vld [vmem:[%s172 + $0xa8] sm:$0xf]
      %v225 = vld [vmem:[%s172 + $0xac] sm:$0xf]
      %v226 = vld [vmem:[%s172 + $0xb0] sm:$0xf]
      %v227 = vld [vmem:[%s172 + $0xb4] sm:$0xf]
      %v228 = vld [vmem:[%s172 + $0xb8] sm:$0xf]
      %v229 = vld [vmem:[%s172 + $0xbc] sm:$0xf]
      %v230 = vld [vmem:[%s172 + $0xc0] sm:$0xf]
      %v231 = vld [vmem:[%s172 + $0xc4] sm:$0xf]
      %v232 = vld [vmem:[%s172 + $0xc8] sm:$0xf]
      %v233 = vld [vmem:[%s172 + $0xcc] sm:$0xf]
      %v234 = vld [vmem:[%s172 + $0xd0] sm:$0xf]
      %v235 = vld [vmem:[%s172 + $0xd4] sm:$0xf]
      %v236 = vld [vmem:[%s172 + $0xd8] sm:$0xf]
      %v237 = vld [vmem:[%s172 + $0xdc] sm:$0xf]
      %v238 = vld [vmem:[%s172 + $0xe0] sm:$0xf]
      %v239 = vld [vmem:[%s172 + $0xe4] sm:$0xf]
      %v240 = vld [vmem:[%s172 + $0xe8] sm:$0xf]
      %v241 = vld [vmem:[%s172 + $0xec] sm:$0xf]
      %v242 = vld [vmem:[%s172 + $0xf0] sm:$0xf]
      %v243 = vld [vmem:[%s172 + $0xf4] sm:$0xf]
      %v244 = vld [vmem:[%s172 + $0xf8] sm:$0xf]
      %v245 = vld [vmem:[%s172 + $0xfc] sm:$0xf]
      %v246 = vld [vmem:[%s172 + $0x100] sm:$0xf]
      %v247 = vld [vmem:[%s172 + $0x104] sm:$0xf]
      %v248 = vld [vmem:[%s172 + $0x108] sm:$0xf]
      %v249 = vld [vmem:[%s172 + $0x10c] sm:$0xf]
      %v250 = vld [vmem:[%s172 + $0x110] sm:$0xf]
      %v251 = vld [vmem:[%s172 + $0x114] sm:$0xf]
      %v252 = vld [vmem:[%s172 + $0x118] sm:$0xf]
      %v253 = vld [vmem:[%s172 + $0x11c] sm:$0xf]
      %v318 = vunpack.c.l.b16 %v182
      %v319 = vunpack.c.l.b16 %v183
      %v320 = vunpack.c.l.b16 %v184
      %v321 = vunpack.c.l.b16 %v185
      %v322 = vunpack.c.l.b16 %v186
      %v323 = vunpack.c.l.b16 %v187
      %v324 = vunpack.c.l.b16 %v188
      %v325 = vunpack.c.l.b16 %v189
      %v326 = vunpack.c.l.b16 %v190
      %v327 = vunpack.c.l.b16 %v191
      %v328 = vunpack.c.l.b16 %v192
      %v329 = vunpack.c.l.b16 %v193
      %v330 = vunpack.c.l.b16 %v194
      %v331 = vunpack.c.l.b16 %v195
      %v332 = vunpack.c.l.b16 %v196
      %v333 = vunpack.c.l.b16 %v197
      %v334 = vunpack.c.l.b16 %v198
      %v335 = vunpack.c.l.b16 %v199
      %v336 = vunpack.c.l.b16 %v200
      %v337 = vunpack.c.l.b16 %v201
      %v338 = vunpack.c.l.b16 %v202
      %v339 = vunpack.c.l.b16 %v203
      %v340 = vunpack.c.l.b16 %v204
      %v341 = vunpack.c.l.b16 %v205
      %v342 = vunpack.c.l.b16 %v206
      %v343 = vunpack.c.l.b16 %v207
      %v344 = vunpack.c.l.b16 %v208
      %v345 = vunpack.c.l.b16 %v209
      %v346 = vunpack.c.l.b16 %v210
      %v347 = vunpack.c.l.b16 %v211
      %v348 = vunpack.c.l.b16 %v212
      %v349 = vunpack.c.l.b16 %v213
      %v350 = vunpack.c.l.b16 %v214
      %v351 = vunpack.c.l.b16 %v215
      %v352 = vunpack.c.l.b16 %v216
      %v353 = vunpack.c.l.b16 %v217
      %v354 = vunpack.c.l.b16 %v218
      %v355 = vunpack.c.l.b16 %v219
      %v356 = vunpack.c.l.b16 %v220
      %v357 = vunpack.c.l.b16 %v221
      %v358 = vunpack.c.l.b16 %v222
      %v359 = vunpack.c.l.b16 %v223
      %v360 = vunpack.c.l.b16 %v224
      %v361 = vunpack.c.l.b16 %v225
      %v362 = vunpack.c.l.b16 %v226
      %v363 = vunpack.c.l.b16 %v227
      %v364 = vunpack.c.l.b16 %v228
      %v365 = vunpack.c.l.b16 %v229
      %v366 = vunpack.c.l.b16 %v230
      %v367 = vunpack.c.l.b16 %v231
      %v368 = vunpack.c.l.b16 %v232
      %v369 = vunpack.c.l.b16 %v233
      %v370 = vunpack.c.l.b16 %v234
      %v371 = vunpack.c.l.b16 %v235
      %v372 = vunpack.c.l.b16 %v236
      %v373 = vunpack.c.l.b16 %v237
      %v374 = vunpack.c.l.b16 %v238
      %v375 = vunpack.c.l.b16 %v239
      %v376 = vunpack.c.l.b16 %v240
      %v377 = vunpack.c.l.b16 %v241
      %v378 = vunpack.c.l.b16 %v242
      %v379 = vunpack.c.l.b16 %v243
      %v380 = vunpack.c.l.b16 %v244
      %v381 = vunpack.c.l.b16 %v245
      %v382 = vpack.c.b16 %v319, %v318
      %v383 = vpack.c.b16 %v321, %v320
      %v384 = vpack.c.b16 %v323, %v322
      %v385 = vpack.c.b16 %v325, %v324
      %v386 = vpack.c.b16 %v327, %v326
      %v387 = vpack.c.b16 %v329, %v328
      %v388 = vpack.c.b16 %v331, %v330
      %v389 = vpack.c.b16 %v333, %v332
      %v390 = vpack.c.b16 %v335, %v334
      %v391 = vpack.c.b16 %v337, %v336
      %v392 = vpack.c.b16 %v339, %v338
      %v393 = vpack.c.b16 %v341, %v340
      %v394 = vpack.c.b16 %v343, %v342
      %v395 = vpack.c.b16 %v345, %v344
      %v396 = vpack.c.b16 %v347, %v346
      %v397 = vpack.c.b16 %v349, %v348
      %v398 = vpack.c.b16 %v351, %v350
      %v399 = vpack.c.b16 %v353, %v352
      %v400 = vpack.c.b16 %v355, %v354
      %v401 = vpack.c.b16 %v357, %v356
      %v402 = vpack.c.b16 %v359, %v358
      %v403 = vpack.c.b16 %v361, %v360
      %v404 = vpack.c.b16 %v363, %v362
      %v405 = vpack.c.b16 %v365, %v364
      %v406 = vpack.c.b16 %v367, %v366
      %v407 = vpack.c.b16 %v369, %v368
      %v408 = vpack.c.b16 %v371, %v370
      %v409 = vpack.c.b16 %v373, %v372
      %v410 = vpack.c.b16 %v375, %v374
      %v411 = vpack.c.b16 %v377, %v376
      %v412 = vpack.c.b16 %v379, %v378
      %v413 = vpack.c.b16 %v381, %v380
      %v450 = vunpack.c.l.b16 %v246
      %v451 = vunpack.c.l.b16 %v247
      %v452 = vunpack.c.l.b16 %v248
      %v453 = vunpack.c.l.b16 %v249
      %v454 = vpack.c.b16 %v451, %v450
      %v455 = vpack.c.b16 %v453, %v452
      %v462 = vunpack.c.l.b16 %v250
      %v463 = vunpack.c.l.b16 %v251
      %v464 = vunpack.c.l.b16 %v252
      %v465 = vunpack.c.l.b16 %v253
      %v466 = vpack.c.b16 %v463, %v462
      %v467 = vpack.c.b16 %v465, %v464
      %v470 = vld [vmem:[%s1] sm:$0xf]
      %v471 = vld [vmem:[%s1 + $0x4] sm:$0xf]
      %v472 = vld [vmem:[%s1 + $0x8] sm:$0xf]
      %v473 = vld [vmem:[%s1 + $0xc] sm:$0xf]
      %v474 = vld [vmem:[%s1 + $0x10] sm:$0xf]
      %v475 = vld [vmem:[%s1 + $0x14] sm:$0xf]
      %v476 = vld [vmem:[%s1 + $0x18] sm:$0xf]
      %v477 = vld [vmem:[%s1 + $0x1c] sm:$0xf]
      %v478 = vld [vmem:[%s1 + $0x20] sm:$0xf]
      %v479 = vld [vmem:[%s1 + $0x24] sm:$0xf]
      %v480 = vld [vmem:[%s1 + $0x28] sm:$0xf]
      %v481 = vld [vmem:[%s1 + $0x2c] sm:$0xf]
      %v482 = vld [vmem:[%s1 + $0x30] sm:$0xf]
      %v483 = vld [vmem:[%s1 + $0x34] sm:$0xf]
      %v484 = vld [vmem:[%s1 + $0x38] sm:$0xf]
      %v485 = vld [vmem:[%s1 + $0x3c] sm:$0xf]
      %v486 = vld [vmem:[%s1 + $0x40] sm:$0xf]
      %v487 = vld [vmem:[%s1 + $0x44] sm:$0xf]
      %v488 = vld [vmem:[%s1 + $0x48] sm:$0xf]
      %v489 = vld [vmem:[%s1 + $0x4c] sm:$0xf]
      %v490 = vld [vmem:[%s1 + $0x50] sm:$0xf]
      %v491 = vld [vmem:[%s1 + $0x54] sm:$0xf]
      %v492 = vld [vmem:[%s1 + $0x58] sm:$0xf]
      %v493 = vld [vmem:[%s1 + $0x5c] sm:$0xf]
      %v494 = vld [vmem:[%s1 + $0x60] sm:$0xf]
      %v495 = vld [vmem:[%s1 + $0x64] sm:$0xf]
      %v496 = vld [vmem:[%s1 + $0x68] sm:$0xf]
      %v497 = vld [vmem:[%s1 + $0x6c] sm:$0xf]
      %v498 = vld [vmem:[%s1 + $0x70] sm:$0xf]
      %v499 = vld [vmem:[%s1 + $0x74] sm:$0xf]
      %v500 = vld [vmem:[%s1 + $0x78] sm:$0xf]
      %v501 = vld [vmem:[%s1 + $0x7c] sm:$0xf]
      %v502 = vld [vmem:[%s1 + $0x80] sm:$0xf]
      %v503 = vld [vmem:[%s1 + $0x84] sm:$0xf]
      %v504 = vld [vmem:[%s1 + $0x88] sm:$0xf]
      %v505 = vld [vmem:[%s1 + $0x8c] sm:$0xf]
      %v506 = vld [vmem:[%s1 + $0x90] sm:$0xf]
      %v507 = vld [vmem:[%s1 + $0x94] sm:$0xf]
      %v508 = vld [vmem:[%s1 + $0x98] sm:$0xf]
      %v509 = vld [vmem:[%s1 + $0x9c] sm:$0xf]
      %v510 = vld [vmem:[%s1 + $0xa0] sm:$0xf]
      %v511 = vld [vmem:[%s1 + $0xa4] sm:$0xf]
      %v512 = vld [vmem:[%s1 + $0xa8] sm:$0xf]
      %v513 = vld [vmem:[%s1 + $0xac] sm:$0xf]
      %v514 = vld [vmem:[%s1 + $0xb0] sm:$0xf]
      %v515 = vld [vmem:[%s1 + $0xb4] sm:$0xf]
      %v516 = vld [vmem:[%s1 + $0xb8] sm:$0xf]
      %v517 = vld [vmem:[%s1 + $0xbc] sm:$0xf]
      %v566 = vunpack.c.l.b16 %v470
      %v567 = vunpack.c.l.b16 %v471
      %v568 = vunpack.c.l.b16 %v472
      %v569 = vunpack.c.l.b16 %v473
      %v570 = vunpack.c.l.b16 %v474
      %v571 = vunpack.c.l.b16 %v475
      %v572 = vunpack.c.l.b16 %v476
      %v573 = vunpack.c.l.b16 %v477
      %v574 = vunpack.c.l.b16 %v478
      %v575 = vunpack.c.l.b16 %v479
      %v576 = vunpack.c.l.b16 %v480
      %v577 = vunpack.c.l.b16 %v481
      %v578 = vunpack.c.l.b16 %v482
      %v579 = vunpack.c.l.b16 %v483
      %v580 = vunpack.c.l.b16 %v484
      %v581 = vunpack.c.l.b16 %v485
      %v582 = vunpack.c.l.b16 %v486
      %v583 = vunpack.c.l.b16 %v487
      %v584 = vunpack.c.l.b16 %v488
      %v585 = vunpack.c.l.b16 %v489
      %v586 = vunpack.c.l.b16 %v490
      %v587 = vunpack.c.l.b16 %v491
      %v588 = vunpack.c.l.b16 %v492
      %v589 = vunpack.c.l.b16 %v493
      %v590 = vunpack.c.l.b16 %v494
      %v591 = vunpack.c.l.b16 %v495
      %v592 = vunpack.c.l.b16 %v496
      %v593 = vunpack.c.l.b16 %v497
      %v594 = vunpack.c.l.b16 %v498
      %v595 = vunpack.c.l.b16 %v499
      %v596 = vunpack.c.l.b16 %v500
      %v597 = vunpack.c.l.b16 %v501
      %v598 = vunpack.c.l.b16 %v502
      %v599 = vunpack.c.l.b16 %v503
      %v600 = vunpack.c.l.b16 %v504
      %v601 = vunpack.c.l.b16 %v505
      %v602 = vunpack.c.l.b16 %v506
      %v603 = vunpack.c.l.b16 %v507
      %v604 = vunpack.c.l.b16 %v508
      %v605 = vunpack.c.l.b16 %v509
      %v606 = vunpack.c.l.b16 %v510
      %v607 = vunpack.c.l.b16 %v511
      %v608 = vunpack.c.l.b16 %v512
      %v609 = vunpack.c.l.b16 %v513
      %v610 = vunpack.c.l.b16 %v514
      %v611 = vunpack.c.l.b16 %v515
      %v612 = vunpack.c.l.b16 %v516
      %v613 = vunpack.c.l.b16 %v517
      %v614 = vpack.c.b16 %v567, %v566
      %v615 = vpack.c.b16 %v569, %v568
      %v616 = vpack.c.b16 %v571, %v570
      %v617 = vpack.c.b16 %v573, %v572
      %v618 = vpack.c.b16 %v575, %v574
      %v619 = vpack.c.b16 %v577, %v576
      %v620 = vpack.c.b16 %v579, %v578
      %v621 = vpack.c.b16 %v581, %v580
      %v622 = vpack.c.b16 %v583, %v582
      %v623 = vpack.c.b16 %v585, %v584
      %v624 = vpack.c.b16 %v587, %v586
      %v625 = vpack.c.b16 %v589, %v588
      %v626 = vpack.c.b16 %v591, %v590
      %v627 = vpack.c.b16 %v593, %v592
      %v628 = vpack.c.b16 %v595, %v594
      %v629 = vpack.c.b16 %v597, %v596
      %v630 = vpack.c.b16 %v599, %v598
      %v631 = vpack.c.b16 %v601, %v600
      %v632 = vpack.c.b16 %v603, %v602
      %v633 = vpack.c.b16 %v605, %v604
      %v634 = vpack.c.b16 %v607, %v606
      %v635 = vpack.c.b16 %v609, %v608
      %v636 = vpack.c.b16 %v611, %v610
      %v637 = vpack.c.b16 %v613, %v612
      %662 = vmatpush.bf16.msra.mxu0 %v621
      %663 = vmatpush.bf16.msra.mxu0 %v620
      %664 = vmatpush.bf16.msra.mxu0 %v619
      %665 = vmatpush.bf16.msra.mxu0 %v618
      %666 = vmatpush.bf16.msra.mxu0 %v617
      %667 = vmatpush.bf16.msra.mxu0 %v616
      %668 = vmatpush.bf16.msra.mxu0 %v615
      %669 = vmatpush.bf16.msra.mxu0 %v614
      %670 = vmatmul.bf16.gmra.mxu0 %v382
      %v671 = vpop.f32.mrf.mxu0
      %v672 = vadd.f32 0.0, %v671
      %v673 = vpop.f32.mrf.mxu0
      %v674 = vadd.f32 0.0, %v673
      %675 = vmatmul.bf16.gmra.mxu0 %v383
      %v676 = vpop.f32.mrf.mxu0
      %v677 = vpop.f32.mrf.mxu0
      %678 = vmatmul.bf16.gmra.mxu0 %v384
      %v679 = vpop.f32.mrf.mxu0
      %v680 = vadd.f32 0.0, %v679
      %v681 = vpop.f32.mrf.mxu0
      %v682 = vadd.f32 0.0, %v681
      %683 = vmatmul.bf16.gmra.mxu0 %v385
      %v684 = vpop.f32.mrf.mxu0
      %v685 = vpop.f32.mrf.mxu0
      %686 = vmatmul.bf16.gmra.mxu0 %v386
      %v687 = vpop.f32.mrf.mxu0
      %v688 = vadd.f32 0.0, %v687
      %v689 = vpop.f32.mrf.mxu0
      %v690 = vadd.f32 0.0, %v689
      %691 = vmatmul.bf16.gmra.mxu0 %v387
      %v692 = vpop.f32.mrf.mxu0
      %v693 = vpop.f32.mrf.mxu0
      %694 = vmatmul.bf16.gmra.mxu0 %v388
      %v695 = vpop.f32.mrf.mxu0
      %v696 = vadd.f32 0.0, %v695
      %v697 = vpop.f32.mrf.mxu0
      %v698 = vadd.f32 0.0, %v697
      %699 = vmatmul.bf16.gmra.mxu0 %v389
      %v700 = vpop.f32.mrf.mxu0
      %v701 = vpop.f32.mrf.mxu0
      %702 = vmatmul.bf16.gmra.mxu0 %v390
      %v703 = vpop.f32.mrf.mxu0
      %v704 = vadd.f32 0.0, %v703
      %v705 = vpop.f32.mrf.mxu0
      %v706 = vadd.f32 0.0, %v705
      %707 = vmatmul.bf16.gmra.mxu0 %v391
      %v708 = vpop.f32.mrf.mxu0
      %v709 = vpop.f32.mrf.mxu0
      %710 = vmatmul.bf16.gmra.mxu0 %v392
      %v711 = vpop.f32.mrf.mxu0
      %v712 = vadd.f32 0.0, %v711
      %v713 = vpop.f32.mrf.mxu0
      %v714 = vadd.f32 0.0, %v713
      %715 = vmatmul.bf16.gmra.mxu0 %v393
      %v716 = vpop.f32.mrf.mxu0
      %v717 = vpop.f32.mrf.mxu0
      %718 = vmatmul.bf16.gmra.mxu0 %v394
      %v719 = vpop.f32.mrf.mxu0
      %v720 = vadd.f32 0.0, %v719
      %v721 = vpop.f32.mrf.mxu0
      %v722 = vadd.f32 0.0, %v721
      %723 = vmatmul.bf16.gmra.mxu0 %v395
      %v724 = vpop.f32.mrf.mxu0
      %v725 = vpop.f32.mrf.mxu0
      %726 = vmatmul.bf16.gmra.mxu0 %v396
      %v727 = vpop.f32.mrf.mxu0
      %v728 = vadd.f32 0.0, %v727
      %v729 = vpop.f32.mrf.mxu0
      %v730 = vadd.f32 0.0, %v729
      %731 = vmatmul.bf16.gmra.mxu0 %v397
      %v732 = vpop.f32.mrf.mxu0
      %v733 = vpop.f32.mrf.mxu0
      %734 = vmatmul.bf16.gmra.mxu0 %v398
      %v735 = vpop.f32.mrf.mxu0
      %v736 = vadd.f32 0.0, %v735
      %v737 = vpop.f32.mrf.mxu0
      %v738 = vadd.f32 0.0, %v737
      %739 = vmatmul.bf16.gmra.mxu0 %v399
      %v740 = vpop.f32.mrf.mxu0
      %v741 = vpop.f32.mrf.mxu0
      %742 = vmatmul.bf16.gmra.mxu0 %v400
      %v743 = vpop.f32.mrf.mxu0
      %v744 = vadd.f32 0.0, %v743
      %v745 = vpop.f32.mrf.mxu0
      %v746 = vadd.f32 0.0, %v745
      %747 = vmatmul.bf16.gmra.mxu0 %v401
      %v748 = vpop.f32.mrf.mxu0
      %v749 = vpop.f32.mrf.mxu0
      %750 = vmatmul.bf16.gmra.mxu0 %v402
      %v751 = vpop.f32.mrf.mxu0
      %v752 = vadd.f32 0.0, %v751
      %v753 = vpop.f32.mrf.mxu0
      %v754 = vadd.f32 0.0, %v753
      %755 = vmatmul.bf16.gmra.mxu0 %v403
      %v756 = vpop.f32.mrf.mxu0
      %v757 = vpop.f32.mrf.mxu0
      %758 = vmatmul.bf16.gmra.mxu0 %v404
      %v759 = vpop.f32.mrf.mxu0
      %v760 = vadd.f32 0.0, %v759
      %v761 = vpop.f32.mrf.mxu0
      %v762 = vadd.f32 0.0, %v761
      %763 = vmatmul.bf16.gmra.mxu0 %v405
      %v764 = vpop.f32.mrf.mxu0
      %v765 = vpop.f32.mrf.mxu0
      %766 = vmatmul.bf16.gmra.mxu0 %v406
      %v767 = vpop.f32.mrf.mxu0
      %v768 = vadd.f32 0.0, %v767
      %v769 = vpop.f32.mrf.mxu0
      %v770 = vadd.f32 0.0, %v769
      %771 = vmatmul.bf16.gmra.mxu0 %v407
      %v772 = vpop.f32.mrf.mxu0
      %v773 = vpop.f32.mrf.mxu0
      %774 = vmatmul.bf16.gmra.mxu0 %v408
      %v775 = vpop.f32.mrf.mxu0
      %v776 = vadd.f32 0.0, %v775
      %v777 = vpop.f32.mrf.mxu0
      %v778 = vadd.f32 0.0, %v777
      %779 = vmatmul.bf16.gmra.mxu0 %v409
      %v780 = vpop.f32.mrf.mxu0
      %v781 = vpop.f32.mrf.mxu0
      %782 = vmatmul.bf16.gmra.mxu0 %v410
      %v783 = vpop.f32.mrf.mxu0
      %v784 = vadd.f32 0.0, %v783
      %v785 = vpop.f32.mrf.mxu0
      %v786 = vadd.f32 0.0, %v785
      %787 = vmatmul.bf16.gmra.mxu0 %v411
      %v788 = vpop.f32.mrf.mxu0
      %v789 = vpop.f32.mrf.mxu0
      %790 = vmatmul.bf16.gmra.mxu0 %v412
      %v791 = vpop.f32.mrf.mxu0
      %v792 = vadd.f32 0.0, %v791
      %v793 = vpop.f32.mrf.mxu0
      %v794 = vadd.f32 0.0, %v793
      %795 = vmatmul.bf16.gmra.mxu0 %v413
      %v796 = vpop.f32.mrf.mxu0
      %v797 = vpop.f32.mrf.mxu0
      %798 = vdwg.mxu0
      %799 = vmatpush.bf16.msra.mxu0 %v629
      %800 = vmatpush.bf16.msra.mxu0 %v628
      %801 = vmatpush.bf16.msra.mxu0 %v627
      %802 = vmatpush.bf16.msra.mxu0 %v626
      %803 = vmatpush.bf16.msra.mxu0 %v625
      %804 = vmatpush.bf16.msra.mxu0 %v624
      %805 = vmatpush.bf16.msra.mxu0 %v623
      %806 = vmatpush.bf16.msra.mxu0 %v622
      %807 = vmatmul.bf16.gmra.mxu0 %v384
      %v808 = vpop.f32.mrf.mxu0
      %v809 = vadd.f32 %v672, %v808
      %v810 = vpop.f32.mrf.mxu0
      %v811 = vadd.f32 %v674, %v810
      %812 = vmatmul.bf16.gmra.mxu0 %v385
      %v813 = vpop.f32.mrf.mxu0
      %v814 = vpop.f32.mrf.mxu0
      %815 = vmatmul.bf16.gmra.mxu0 %v386
      %v816 = vpop.f32.mrf.mxu0
      %v817 = vadd.f32 %v680, %v816
      %v818 = vpop.f32.mrf.mxu0
      %v819 = vadd.f32 %v682, %v818
      %820 = vmatmul.bf16.gmra.mxu0 %v387
      %v821 = vpop.f32.mrf.mxu0
      %v822 = vpop.f32.mrf.mxu0
      %823 = vmatmul.bf16.gmra.mxu0 %v388
      %v824 = vpop.f32.mrf.mxu0
      %v825 = vadd.f32 %v688, %v824
      %v826 = vpop.f32.mrf.mxu0
      %v827 = vadd.f32 %v690, %v826
      %828 = vmatmul.bf16.gmra.mxu0 %v389
      %v829 = vpop.f32.mrf.mxu0
      %v830 = vpop.f32.mrf.mxu0
      %831 = vmatmul.bf16.gmra.mxu0 %v390
      %v832 = vpop.f32.mrf.mxu0
      %v833 = vadd.f32 %v696, %v832
      %v834 = vpop.f32.mrf.mxu0
      %v835 = vadd.f32 %v698, %v834
      %836 = vmatmul.bf16.gmra.mxu0 %v391
      %v837 = vpop.f32.mrf.mxu0
      %v838 = vpop.f32.mrf.mxu0
      %839 = vmatmul.bf16.gmra.mxu0 %v392
      %v840 = vpop.f32.mrf.mxu0
      %v841 = vadd.f32 %v704, %v840
      %v842 = vpop.f32.mrf.mxu0
      %v843 = vadd.f32 %v706, %v842
      %844 = vmatmul.bf16.gmra.mxu0 %v393
      %v845 = vpop.f32.mrf.mxu0
      %v846 = vpop.f32.mrf.mxu0
      %847 = vmatmul.bf16.gmra.mxu0 %v394
      %v848 = vpop.f32.mrf.mxu0
      %v849 = vadd.f32 %v712, %v848
      %v850 = vpop.f32.mrf.mxu0
      %v851 = vadd.f32 %v714, %v850
      %852 = vmatmul.bf16.gmra.mxu0 %v395
      %v853 = vpop.f32.mrf.mxu0
      %v854 = vpop.f32.mrf.mxu0
      %855 = vmatmul.bf16.gmra.mxu0 %v396
      %v856 = vpop.f32.mrf.mxu0
      %v857 = vadd.f32 %v720, %v856
      %v858 = vpop.f32.mrf.mxu0
      %v859 = vadd.f32 %v722, %v858
      %860 = vmatmul.bf16.gmra.mxu0 %v397
      %v861 = vpop.f32.mrf.mxu0
      %v862 = vpop.f32.mrf.mxu0
      %863 = vmatmul.bf16.gmra.mxu0 %v398
      %v864 = vpop.f32.mrf.mxu0
      %v865 = vadd.f32 %v728, %v864
      %v866 = vpop.f32.mrf.mxu0
      %v867 = vadd.f32 %v730, %v866
      %868 = vmatmul.bf16.gmra.mxu0 %v399
      %v869 = vpop.f32.mrf.mxu0
      %v870 = vpop.f32.mrf.mxu0
      %871 = vmatmul.bf16.gmra.mxu0 %v400
      %v872 = vpop.f32.mrf.mxu0
      %v873 = vadd.f32 %v736, %v872
      %v874 = vpop.f32.mrf.mxu0
      %v875 = vadd.f32 %v738, %v874
      %876 = vmatmul.bf16.gmra.mxu0 %v401
      %v877 = vpop.f32.mrf.mxu0
      %v878 = vpop.f32.mrf.mxu0
      %879 = vmatmul.bf16.gmra.mxu0 %v402
      %v880 = vpop.f32.mrf.mxu0
      %v881 = vadd.f32 %v744, %v880
      %v882 = vpop.f32.mrf.mxu0
      %v883 = vadd.f32 %v746, %v882
      %884 = vmatmul.bf16.gmra.mxu0 %v403
      %v885 = vpop.f32.mrf.mxu0
      %v886 = vpop.f32.mrf.mxu0
      %887 = vmatmul.bf16.gmra.mxu0 %v404
      %v888 = vpop.f32.mrf.mxu0
      %v889 = vadd.f32 %v752, %v888
      %v890 = vpop.f32.mrf.mxu0
      %v891 = vadd.f32 %v754, %v890
      %892 = vmatmul.bf16.gmra.mxu0 %v405
      %v893 = vpop.f32.mrf.mxu0
      %v894 = vpop.f32.mrf.mxu0
      %895 = vmatmul.bf16.gmra.mxu0 %v406
      %v896 = vpop.f32.mrf.mxu0
      %v897 = vadd.f32 %v760, %v896
      %v898 = vpop.f32.mrf.mxu0
      %v899 = vadd.f32 %v762, %v898
      %900 = vmatmul.bf16.gmra.mxu0 %v407
      %v901 = vpop.f32.mrf.mxu0
      %v902 = vpop.f32.mrf.mxu0
      %903 = vmatmul.bf16.gmra.mxu0 %v408
      %v904 = vpop.f32.mrf.mxu0
      %v905 = vadd.f32 %v768, %v904
      %v906 = vpop.f32.mrf.mxu0
      %v907 = vadd.f32 %v770, %v906
      %908 = vmatmul.bf16.gmra.mxu0 %v409
      %v909 = vpop.f32.mrf.mxu0
      %v910 = vpop.f32.mrf.mxu0
      %911 = vmatmul.bf16.gmra.mxu0 %v410
      %v912 = vpop.f32.mrf.mxu0
      %v913 = vadd.f32 %v776, %v912
      %v914 = vpop.f32.mrf.mxu0
      %v915 = vadd.f32 %v778, %v914
      %916 = vmatmul.bf16.gmra.mxu0 %v411
      %v917 = vpop.f32.mrf.mxu0
      %v918 = vpop.f32.mrf.mxu0
      %919 = vmatmul.bf16.gmra.mxu0 %v412
      %v920 = vpop.f32.mrf.mxu0
      %v921 = vadd.f32 %v784, %v920
      %v922 = vpop.f32.mrf.mxu0
      %v923 = vadd.f32 %v786, %v922
      %924 = vmatmul.bf16.gmra.mxu0 %v413
      %v925 = vpop.f32.mrf.mxu0
      %v926 = vpop.f32.mrf.mxu0
      %927 = vmatmul.bf16.gmra.mxu0 %v454
      %v928 = vpop.f32.mrf.mxu0
      %v929 = vadd.f32 %v792, %v928
      %v930 = vpop.f32.mrf.mxu0
      %v931 = vadd.f32 %v794, %v930
      %932 = vmatmul.bf16.gmra.mxu0 %v455
      %v933 = vpop.f32.mrf.mxu0
      %v934 = vpop.f32.mrf.mxu0
      %935 = vdwg.mxu0
      %936 = vmatpush.bf16.msra.mxu0 %v637
      %937 = vmatpush.bf16.msra.mxu0 %v636
      %938 = vmatpush.bf16.msra.mxu0 %v635
      %939 = vmatpush.bf16.msra.mxu0 %v634
      %940 = vmatpush.bf16.msra.mxu0 %v633
      %941 = vmatpush.bf16.msra.mxu0 %v632
      %942 = vmatpush.bf16.msra.mxu0 %v631
      %943 = vmatpush.bf16.msra.mxu0 %v630
      %944 = vmatmul.bf16.gmra.mxu0 %v386
      %v945 = vpop.f32.mrf.mxu0
      %v946 = vadd.f32 %v809, %v945
      %v947 = vpop.f32.mrf.mxu0
      %v948 = vadd.f32 %v811, %v947
      %949 = vmatmul.bf16.gmra.mxu0 %v387
      %v950 = vpop.f32.mrf.mxu0
      %v951 = vpop.f32.mrf.mxu0
      %952 = vmatmul.bf16.gmra.mxu0 %v388
      %v953 = vpop.f32.mrf.mxu0
      %v954 = vadd.f32 %v817, %v953
      %v955 = vpop.f32.mrf.mxu0
      %v956 = vadd.f32 %v819, %v955
      %957 = vmatmul.bf16.gmra.mxu0 %v389
      %v958 = vpop.f32.mrf.mxu0
      %v959 = vpop.f32.mrf.mxu0
      %960 = vmatmul.bf16.gmra.mxu0 %v390
      %v961 = vpop.f32.mrf.mxu0
      %v962 = vadd.f32 %v825, %v961
      %v963 = vpop.f32.mrf.mxu0
      %v964 = vadd.f32 %v827, %v963
      %965 = vmatmul.bf16.gmra.mxu0 %v391
      %v966 = vpop.f32.mrf.mxu0
      %v967 = vpop.f32.mrf.mxu0
      %968 = vmatmul.bf16.gmra.mxu0 %v392
      %v969 = vpop.f32.mrf.mxu0
      %v970 = vadd.f32 %v833, %v969
      %v971 = vpop.f32.mrf.mxu0
      %v972 = vadd.f32 %v835, %v971
      %973 = vmatmul.bf16.gmra.mxu0 %v393
      %v974 = vpop.f32.mrf.mxu0
      %v975 = vpop.f32.mrf.mxu0
      %976 = vmatmul.bf16.gmra.mxu0 %v394
      %v977 = vpop.f32.mrf.mxu0
      %v978 = vadd.f32 %v841, %v977
      %v979 = vpop.f32.mrf.mxu0
      %v980 = vadd.f32 %v843, %v979
      %981 = vmatmul.bf16.gmra.mxu0 %v395
      %v982 = vpop.f32.mrf.mxu0
      %v983 = vpop.f32.mrf.mxu0
      %984 = vmatmul.bf16.gmra.mxu0 %v396
      %v985 = vpop.f32.mrf.mxu0
      %v986 = vadd.f32 %v849, %v985
      %v987 = vpop.f32.mrf.mxu0
      %v988 = vadd.f32 %v851, %v987
      %989 = vmatmul.bf16.gmra.mxu0 %v397
      %v990 = vpop.f32.mrf.mxu0
      %v991 = vpop.f32.mrf.mxu0
      %992 = vmatmul.bf16.gmra.mxu0 %v398
      %v993 = vpop.f32.mrf.mxu0
      %v994 = vadd.f32 %v857, %v993
      %v995 = vpop.f32.mrf.mxu0
      %v996 = vadd.f32 %v859, %v995
      %997 = vmatmul.bf16.gmra.mxu0 %v399
      %v998 = vpop.f32.mrf.mxu0
      %v999 = vpop.f32.mrf.mxu0
      %1000 = vmatmul.bf16.gmra.mxu0 %v400
      %v1001 = vpop.f32.mrf.mxu0
      %v1002 = vadd.f32 %v865, %v1001
      %v1003 = vpop.f32.mrf.mxu0
      %v1004 = vadd.f32 %v867, %v1003
      %1005 = vmatmul.bf16.gmra.mxu0 %v401
      %v1006 = vpop.f32.mrf.mxu0
      %v1007 = vpop.f32.mrf.mxu0
      %1008 = vmatmul.bf16.gmra.mxu0 %v402
      %v1009 = vpop.f32.mrf.mxu0
      %v1010 = vadd.f32 %v873, %v1009
      %v1011 = vpop.f32.mrf.mxu0
      %v1012 = vadd.f32 %v875, %v1011
      %1013 = vmatmul.bf16.gmra.mxu0 %v403
      %v1014 = vpop.f32.mrf.mxu0
      %v1015 = vpop.f32.mrf.mxu0
      %1016 = vmatmul.bf16.gmra.mxu0 %v404
      %v1017 = vpop.f32.mrf.mxu0
      %v1018 = vadd.f32 %v881, %v1017
      %v1019 = vpop.f32.mrf.mxu0
      %v1020 = vadd.f32 %v883, %v1019
      %1021 = vmatmul.bf16.gmra.mxu0 %v405
      %v1022 = vpop.f32.mrf.mxu0
      %v1023 = vpop.f32.mrf.mxu0
      %1024 = vmatmul.bf16.gmra.mxu0 %v406
      %v1025 = vpop.f32.mrf.mxu0
      %v1026 = vadd.f32 %v889, %v1025
      %v1027 = vpop.f32.mrf.mxu0
      %v1028 = vadd.f32 %v891, %v1027
      %1029 = vmatmul.bf16.gmra.mxu0 %v407
      %v1030 = vpop.f32.mrf.mxu0
      %v1031 = vpop.f32.mrf.mxu0
      %1032 = vmatmul.bf16.gmra.mxu0 %v408
      %v1033 = vpop.f32.mrf.mxu0
      %v1034 = vadd.f32 %v897, %v1033
      %v1035 = vpop.f32.mrf.mxu0
      %v1036 = vadd.f32 %v899, %v1035
      %1037 = vmatmul.bf16.gmra.mxu0 %v409
      %v1038 = vpop.f32.mrf.mxu0
      %v1039 = vpop.f32.mrf.mxu0
      %1040 = vmatmul.bf16.gmra.mxu0 %v410
      %v1041 = vpop.f32.mrf.mxu0
      %v1042 = vadd.f32 %v905, %v1041
      %v1043 = vpop.f32.mrf.mxu0
      %v1044 = vadd.f32 %v907, %v1043
      %1045 = vmatmul.bf16.gmra.mxu0 %v411
      %v1046 = vpop.f32.mrf.mxu0
      %v1047 = vpop.f32.mrf.mxu0
      %1048 = vmatmul.bf16.gmra.mxu0 %v412
      %v1049 = vpop.f32.mrf.mxu0
      %v1050 = vadd.f32 %v913, %v1049
      %v1051 = vpop.f32.mrf.mxu0
      %v1052 = vadd.f32 %v915, %v1051
      %1053 = vmatmul.bf16.gmra.mxu0 %v413
      %v1054 = vpop.f32.mrf.mxu0
      %v1055 = vpop.f32.mrf.mxu0
      %1056 = vmatmul.bf16.gmra.mxu0 %v454
      %v1057 = vpop.f32.mrf.mxu0
      %v1058 = vadd.f32 %v921, %v1057
      %v1059 = vpop.f32.mrf.mxu0
      %v1060 = vadd.f32 %v923, %v1059
      %1061 = vmatmul.bf16.gmra.mxu0 %v455
      %v1062 = vpop.f32.mrf.mxu0
      %v1063 = vpop.f32.mrf.mxu0
      %1064 = vmatmul.bf16.gmra.mxu0 %v466
      %v1065 = vpop.f32.mrf.mxu0
      %v1066 = vadd.f32 %v929, %v1065
      %v1067 = vpop.f32.mrf.mxu0
      %v1068 = vadd.f32 %v931, %v1067
      %1069 = vmatmul.bf16.gmra.mxu0 %v467
      %v1070 = vpop.f32.mrf.mxu0
      %v1071 = vpop.f32.mrf.mxu0
      %1072 = vdwg.mxu0
      %s1073 = scalar_lea.vmem %s1, 192
      %v1074 = vld [vmem:[%s1073] sm:$0xf]
      %v1075 = vld [vmem:[%s1073 + $0x4] sm:$0xf]
      %v1076 = vld [vmem:[%s1073 + $0x8] sm:$0xf]
      %v1077 = vld [vmem:[%s1073 + $0xc] sm:$0xf]
      %v1078 = vld [vmem:[%s1073 + $0x10] sm:$0xf]
      %v1079 = vld [vmem:[%s1073 + $0x14] sm:$0xf]
      %v1080 = vld [vmem:[%s1073 + $0x18] sm:$0xf]
      %v1081 = vld [vmem:[%s1073 + $0x1c] sm:$0xf]
      %v1082 = vld [vmem:[%s1073 + $0x20] sm:$0xf]
      %v1083 = vld [vmem:[%s1073 + $0x24] sm:$0xf]
      %v1084 = vld [vmem:[%s1073 + $0x28] sm:$0xf]
      %v1085 = vld [vmem:[%s1073 + $0x2c] sm:$0xf]
      %v1086 = vld [vmem:[%s1073 + $0x30] sm:$0xf]
      %v1087 = vld [vmem:[%s1073 + $0x34] sm:$0xf]
      %v1088 = vld [vmem:[%s1073 + $0x38] sm:$0xf]
      %v1089 = vld [vmem:[%s1073 + $0x3c] sm:$0xf]
      %v1090 = vld [vmem:[%s1073 + $0x40] sm:$0xf]
      %v1091 = vld [vmem:[%s1073 + $0x44] sm:$0xf]
      %v1092 = vld [vmem:[%s1073 + $0x48] sm:$0xf]
      %v1093 = vld [vmem:[%s1073 + $0x4c] sm:$0xf]
      %v1094 = vld [vmem:[%s1073 + $0x50] sm:$0xf]
      %v1095 = vld [vmem:[%s1073 + $0x54] sm:$0xf]
      %v1096 = vld [vmem:[%s1073 + $0x58] sm:$0xf]
      %v1097 = vld [vmem:[%s1073 + $0x5c] sm:$0xf]
      %v1098 = vld [vmem:[%s1073 + $0x60] sm:$0xf]
      %v1099 = vld [vmem:[%s1073 + $0x64] sm:$0xf]
      %v1100 = vld [vmem:[%s1073 + $0x68] sm:$0xf]
      %v1101 = vld [vmem:[%s1073 + $0x6c] sm:$0xf]
      %v1102 = vld [vmem:[%s1073 + $0x70] sm:$0xf]
      %v1103 = vld [vmem:[%s1073 + $0x74] sm:$0xf]
      %v1104 = vld [vmem:[%s1073 + $0x78] sm:$0xf]
      %v1105 = vld [vmem:[%s1073 + $0x7c] sm:$0xf]
      %v1106 = vld [vmem:[%s1073 + $0x80] sm:$0xf]
      %v1107 = vld [vmem:[%s1073 + $0x84] sm:$0xf]
      %v1108 = vld [vmem:[%s1073 + $0x88] sm:$0xf]
      %v1109 = vld [vmem:[%s1073 + $0x8c] sm:$0xf]
      %v1110 = vld [vmem:[%s1073 + $0x90] sm:$0xf]
      %v1111 = vld [vmem:[%s1073 + $0x94] sm:$0xf]
      %v1112 = vld [vmem:[%s1073 + $0x98] sm:$0xf]
      %v1113 = vld [vmem:[%s1073 + $0x9c] sm:$0xf]
      %v1114 = vld [vmem:[%s1073 + $0xa0] sm:$0xf]
      %v1115 = vld [vmem:[%s1073 + $0xa4] sm:$0xf]
      %v1116 = vld [vmem:[%s1073 + $0xa8] sm:$0xf]
      %v1117 = vld [vmem:[%s1073 + $0xac] sm:$0xf]
      %v1118 = vld [vmem:[%s1073 + $0xb0] sm:$0xf]
      %v1119 = vld [vmem:[%s1073 + $0xb4] sm:$0xf]
      %v1120 = vld [vmem:[%s1073 + $0xb8] sm:$0xf]
      %v1121 = vld [vmem:[%s1073 + $0xbc] sm:$0xf]
      %v1170 = vunpack.c.l.b16 %v1074
      %v1171 = vunpack.c.l.b16 %v1075
      %v1172 = vunpack.c.l.b16 %v1076
      %v1173 = vunpack.c.l.b16 %v1077
      %v1174 = vunpack.c.l.b16 %v1078
      %v1175 = vunpack.c.l.b16 %v1079
      %v1176 = vunpack.c.l.b16 %v1080
      %v1177 = vunpack.c.l.b16 %v1081
      %v1178 = vunpack.c.l.b16 %v1082
      %v1179 = vunpack.c.l.b16 %v1083
      %v1180 = vunpack.c.l.b16 %v1084
      %v1181 = vunpack.c.l.b16 %v1085
      %v1182 = vunpack.c.l.b16 %v1086
      %v1183 = vunpack.c.l.b16 %v1087
      %v1184 = vunpack.c.l.b16 %v1088
      %v1185 = vunpack.c.l.b16 %v1089
      %v1186 = vunpack.c.l.b16 %v1090
      %v1187 = vunpack.c.l.b16 %v1091
      %v1188 = vunpack.c.l.b16 %v1092
      %v1189 = vunpack.c.l.b16 %v1093
      %v1190 = vunpack.c.l.b16 %v1094
      %v1191 = vunpack.c.l.b16 %v1095
      %v1192 = vunpack.c.l.b16 %v1096
      %v1193 = vunpack.c.l.b16 %v1097
      %v1194 = vunpack.c.l.b16 %v1098
      %v1195 = vunpack.c.l.b16 %v1099
      %v1196 = vunpack.c.l.b16 %v1100
      %v1197 = vunpack.c.l.b16 %v1101
      %v1198 = vunpack.c.l.b16 %v1102
      %v1199 = vunpack.c.l.b16 %v1103
      %v1200 = vunpack.c.l.b16 %v1104
      %v1201 = vunpack.c.l.b16 %v1105
      %v1202 = vunpack.c.l.b16 %v1106
      %v1203 = vunpack.c.l.b16 %v1107
      %v1204 = vunpack.c.l.b16 %v1108
      %v1205 = vunpack.c.l.b16 %v1109
      %v1206 = vunpack.c.l.b16 %v1110
      %v1207 = vunpack.c.l.b16 %v1111
      %v1208 = vunpack.c.l.b16 %v1112
      %v1209 = vunpack.c.l.b16 %v1113
      %v1210 = vunpack.c.l.b16 %v1114
      %v1211 = vunpack.c.l.b16 %v1115
      %v1212 = vunpack.c.l.b16 %v1116
      %v1213 = vunpack.c.l.b16 %v1117
      %v1214 = vunpack.c.l.b16 %v1118
      %v1215 = vunpack.c.l.b16 %v1119
      %v1216 = vunpack.c.l.b16 %v1120
      %v1217 = vunpack.c.l.b16 %v1121
      %v1218 = vpack.c.b16 %v1171, %v1170
      %v1219 = vpack.c.b16 %v1173, %v1172
      %v1220 = vpack.c.b16 %v1175, %v1174
      %v1221 = vpack.c.b16 %v1177, %v1176
      %v1222 = vpack.c.b16 %v1179, %v1178
      %v1223 = vpack.c.b16 %v1181, %v1180
      %v1224 = vpack.c.b16 %v1183, %v1182
      %v1225 = vpack.c.b16 %v1185, %v1184
      %v1226 = vpack.c.b16 %v1187, %v1186
      %v1227 = vpack.c.b16 %v1189, %v1188
      %v1228 = vpack.c.b16 %v1191, %v1190
      %v1229 = vpack.c.b16 %v1193, %v1192
      %v1230 = vpack.c.b16 %v1195, %v1194
      %v1231 = vpack.c.b16 %v1197, %v1196
      %v1232 = vpack.c.b16 %v1199, %v1198
      %v1233 = vpack.c.b16 %v1201, %v1200
      %v1234 = vpack.c.b16 %v1203, %v1202
      %v1235 = vpack.c.b16 %v1205, %v1204
      %v1236 = vpack.c.b16 %v1207, %v1206
      %v1237 = vpack.c.b16 %v1209, %v1208
      %v1238 = vpack.c.b16 %v1211, %v1210
      %v1239 = vpack.c.b16 %v1213, %v1212
      %v1240 = vpack.c.b16 %v1215, %v1214
      %v1241 = vpack.c.b16 %v1217, %v1216
      %1266 = vmatpush.bf16.msra.mxu0 %v1225
      %1267 = vmatpush.bf16.msra.mxu0 %v1224
      %1268 = vmatpush.bf16.msra.mxu0 %v1223
      %1269 = vmatpush.bf16.msra.mxu0 %v1222
      %1270 = vmatpush.bf16.msra.mxu0 %v1221
      %1271 = vmatpush.bf16.msra.mxu0 %v1220
      %1272 = vmatpush.bf16.msra.mxu0 %v1219
      %1273 = vmatpush.bf16.msra.mxu0 %v1218
      %1274 = vmatmul.bf16.gmra.mxu0 %v382
      %v1275 = vpop.f32.mrf.mxu0
      %v1276 = vadd.f32 0.0, %v1275
      %v1277 = vpop.f32.mrf.mxu0
      %v1278 = vadd.f32 0.0, %v1277
      %1279 = vmatmul.bf16.gmra.mxu0 %v383
      %v1280 = vpop.f32.mrf.mxu0
      %v1281 = vadd.f32 0.0, %v1280
      %v1282 = vpop.f32.mrf.mxu0
      %1283 = vmatmul.bf16.gmra.mxu0 %v384
      %v1284 = vpop.f32.mrf.mxu0
      %v1285 = vadd.f32 0.0, %v1284
      %v1286 = vpop.f32.mrf.mxu0
      %v1287 = vadd.f32 0.0, %v1286
      %1288 = vmatmul.bf16.gmra.mxu0 %v385
      %v1289 = vpop.f32.mrf.mxu0
      %v1290 = vadd.f32 0.0, %v1289
      %v1291 = vpop.f32.mrf.mxu0
      %1292 = vmatmul.bf16.gmra.mxu0 %v386
      %v1293 = vpop.f32.mrf.mxu0
      %v1294 = vadd.f32 0.0, %v1293
      %v1295 = vpop.f32.mrf.mxu0
      %v1296 = vadd.f32 0.0, %v1295
      %1297 = vmatmul.bf16.gmra.mxu0 %v387
      %v1298 = vpop.f32.mrf.mxu0
      %v1299 = vadd.f32 0.0, %v1298
      %v1300 = vpop.f32.mrf.mxu0
      %1301 = vmatmul.bf16.gmra.mxu0 %v388
      %v1302 = vpop.f32.mrf.mxu0
      %v1303 = vadd.f32 0.0, %v1302
      %v1304 = vpop.f32.mrf.mxu0
      %v1305 = vadd.f32 0.0, %v1304
      %1306 = vmatmul.bf16.gmra.mxu0 %v389
      %v1307 = vpop.f32.mrf.mxu0
      %v1308 = vadd.f32 0.0, %v1307
      %v1309 = vpop.f32.mrf.mxu0
      %1310 = vmatmul.bf16.gmra.mxu0 %v390
      %v1311 = vpop.f32.mrf.mxu0
      %v1312 = vadd.f32 0.0, %v1311
      %v1313 = vpop.f32.mrf.mxu0
      %v1314 = vadd.f32 0.0, %v1313
      %1315 = vmatmul.bf16.gmra.mxu0 %v391
      %v1316 = vpop.f32.mrf.mxu0
      %v1317 = vadd.f32 0.0, %v1316
      %v1318 = vpop.f32.mrf.mxu0
      %1319 = vmatmul.bf16.gmra.mxu0 %v392
      %v1320 = vpop.f32.mrf.mxu0
      %v1321 = vadd.f32 0.0, %v1320
      %v1322 = vpop.f32.mrf.mxu0
      %v1323 = vadd.f32 0.0, %v1322
      %1324 = vmatmul.bf16.gmra.mxu0 %v393
      %v1325 = vpop.f32.mrf.mxu0
      %v1326 = vadd.f32 0.0, %v1325
      %v1327 = vpop.f32.mrf.mxu0
      %1328 = vmatmul.bf16.gmra.mxu0 %v394
      %v1329 = vpop.f32.mrf.mxu0
      %v1330 = vadd.f32 0.0, %v1329
      %v1331 = vpop.f32.mrf.mxu0
      %v1332 = vadd.f32 0.0, %v1331
      %1333 = vmatmul.bf16.gmra.mxu0 %v395
      %v1334 = vpop.f32.mrf.mxu0
      %v1335 = vadd.f32 0.0, %v1334
      %v1336 = vpop.f32.mrf.mxu0
      %1337 = vmatmul.bf16.gmra.mxu0 %v396
      %v1338 = vpop.f32.mrf.mxu0
      %v1339 = vadd.f32 0.0, %v1338
      %v1340 = vpop.f32.mrf.mxu0
      %v1341 = vadd.f32 0.0, %v1340
      %1342 = vmatmul.bf16.gmra.mxu0 %v397
      %v1343 = vpop.f32.mrf.mxu0
      %v1344 = vadd.f32 0.0, %v1343
      %v1345 = vpop.f32.mrf.mxu0
      %1346 = vmatmul.bf16.gmra.mxu0 %v398
      %v1347 = vpop.f32.mrf.mxu0
      %v1348 = vadd.f32 0.0, %v1347
      %v1349 = vpop.f32.mrf.mxu0
      %v1350 = vadd.f32 0.0, %v1349
      %1351 = vmatmul.bf16.gmra.mxu0 %v399
      %v1352 = vpop.f32.mrf.mxu0
      %v1353 = vadd.f32 0.0, %v1352
      %v1354 = vpop.f32.mrf.mxu0
      %1355 = vmatmul.bf16.gmra.mxu0 %v400
      %v1356 = vpop.f32.mrf.mxu0
      %v1357 = vadd.f32 0.0, %v1356
      %v1358 = vpop.f32.mrf.mxu0
      %v1359 = vadd.f32 0.0, %v1358
      %1360 = vmatmul.bf16.gmra.mxu0 %v401
      %v1361 = vpop.f32.mrf.mxu0
      %v1362 = vadd.f32 0.0, %v1361
      %v1363 = vpop.f32.mrf.mxu0
      %1364 = vmatmul.bf16.gmra.mxu0 %v402
      %v1365 = vpop.f32.mrf.mxu0
      %v1366 = vadd.f32 0.0, %v1365
      %v1367 = vpop.f32.mrf.mxu0
      %v1368 = vadd.f32 0.0, %v1367
      %1369 = vmatmul.bf16.gmra.mxu0 %v403
      %v1370 = vpop.f32.mrf.mxu0
      %v1371 = vadd.f32 0.0, %v1370
      %v1372 = vpop.f32.mrf.mxu0
      %1373 = vmatmul.bf16.gmra.mxu0 %v404
      %v1374 = vpop.f32.mrf.mxu0
      %v1375 = vadd.f32 0.0, %v1374
      %v1376 = vpop.f32.mrf.mxu0
      %v1377 = vadd.f32 0.0, %v1376
      %1378 = vmatmul.bf16.gmra.mxu0 %v405
      %v1379 = vpop.f32.mrf.mxu0
      %v1380 = vadd.f32 0.0, %v1379
      %v1381 = vpop.f32.mrf.mxu0
      %1382 = vmatmul.bf16.gmra.mxu0 %v406
      %v1383 = vpop.f32.mrf.mxu0
      %v1384 = vadd.f32 0.0, %v1383
      %v1385 = vpop.f32.mrf.mxu0
      %v1386 = vadd.f32 0.0, %v1385
      %1387 = vmatmul.bf16.gmra.mxu0 %v407
      %v1388 = vpop.f32.mrf.mxu0
      %v1389 = vadd.f32 0.0, %v1388
      %v1390 = vpop.f32.mrf.mxu0
      %1391 = vmatmul.bf16.gmra.mxu0 %v408
      %v1392 = vpop.f32.mrf.mxu0
      %v1393 = vadd.f32 0.0, %v1392
      %v1394 = vpop.f32.mrf.mxu0
      %v1395 = vadd.f32 0.0, %v1394
      %1396 = vmatmul.bf16.gmra.mxu0 %v409
      %v1397 = vpop.f32.mrf.mxu0
      %v1398 = vadd.f32 0.0, %v1397
      %v1399 = vpop.f32.mrf.mxu0
      %1400 = vmatmul.bf16.gmra.mxu0 %v410
      %v1401 = vpop.f32.mrf.mxu0
      %v1402 = vadd.f32 0.0, %v1401
      %v1403 = vpop.f32.mrf.mxu0
      %v1404 = vadd.f32 0.0, %v1403
      %1405 = vmatmul.bf16.gmra.mxu0 %v411
      %v1406 = vpop.f32.mrf.mxu0
      %v1407 = vadd.f32 0.0, %v1406
      %v1408 = vpop.f32.mrf.mxu0
      %1409 = vmatmul.bf16.gmra.mxu0 %v412
      %v1410 = vpop.f32.mrf.mxu0
      %v1411 = vadd.f32 0.0, %v1410
      %v1412 = vpop.f32.mrf.mxu0
      %v1413 = vadd.f32 0.0, %v1412
      %1414 = vmatmul.bf16.gmra.mxu0 %v413
      %v1415 = vpop.f32.mrf.mxu0
      %v1416 = vadd.f32 0.0, %v1415
      %v1417 = vpop.f32.mrf.mxu0
      %1418 = vdwg.mxu0
      %1419 = vmatpush.bf16.msra.mxu0 %v1233
      %1420 = vmatpush.bf16.msra.mxu0 %v1232
      %1421 = vmatpush.bf16.msra.mxu0 %v1231
      %1422 = vmatpush.bf16.msra.mxu0 %v1230
      %1423 = vmatpush.bf16.msra.mxu0 %v1229
      %1424 = vmatpush.bf16.msra.mxu0 %v1228
      %1425 = vmatpush.bf16.msra.mxu0 %v1227
      %1426 = vmatpush.bf16.msra.mxu0 %v1226
      %1427 = vmatmul.bf16.gmra.mxu0 %v384
      %v1428 = vpop.f32.mrf.mxu0
      %v1429 = vadd.f32 %v1276, %v1428
      %v1430 = vpop.f32.mrf.mxu0
      %v1431 = vadd.f32 %v1278, %v1430
      %1432 = vmatmul.bf16.gmra.mxu0 %v385
      %v1433 = vpop.f32.mrf.mxu0
      %v1434 = vadd.f32 %v1281, %v1433
      %v1435 = vpop.f32.mrf.mxu0
      %1436 = vmatmul.bf16.gmra.mxu0 %v386
      %v1437 = vpop.f32.mrf.mxu0
      %v1438 = vadd.f32 %v1285, %v1437
      %v1439 = vpop.f32.mrf.mxu0
      %v1440 = vadd.f32 %v1287, %v1439
      %1441 = vmatmul.bf16.gmra.mxu0 %v387
      %v1442 = vpop.f32.mrf.mxu0
      %v1443 = vadd.f32 %v1290, %v1442
      %v1444 = vpop.f32.mrf.mxu0
      %1445 = vmatmul.bf16.gmra.mxu0 %v388
      %v1446 = vpop.f32.mrf.mxu0
      %v1447 = vadd.f32 %v1294, %v1446
      %v1448 = vpop.f32.mrf.mxu0
      %v1449 = vadd.f32 %v1296, %v1448
      %1450 = vmatmul.bf16.gmra.mxu0 %v389
      %v1451 = vpop.f32.mrf.mxu0
      %v1452 = vadd.f32 %v1299, %v1451
      %v1453 = vpop.f32.mrf.mxu0
      %1454 = vmatmul.bf16.gmra.mxu0 %v390
      %v1455 = vpop.f32.mrf.mxu0
      %v1456 = vadd.f32 %v1303, %v1455
      %v1457 = vpop.f32.mrf.mxu0
      %v1458 = vadd.f32 %v1305, %v1457
      %1459 = vmatmul.bf16.gmra.mxu0 %v391
      %v1460 = vpop.f32.mrf.mxu0
      %v1461 = vadd.f32 %v1308, %v1460
      %v1462 = vpop.f32.mrf.mxu0
      %1463 = vmatmul.bf16.gmra.mxu0 %v392
      %v1464 = vpop.f32.mrf.mxu0
      %v1465 = vadd.f32 %v1312, %v1464
      %v1466 = vpop.f32.mrf.mxu0
      %v1467 = vadd.f32 %v1314, %v1466
      %1468 = vmatmul.bf16.gmra.mxu0 %v393
      %v1469 = vpop.f32.mrf.mxu0
      %v1470 = vadd.f32 %v1317, %v1469
      %v1471 = vpop.f32.mrf.mxu0
      %1472 = vmatmul.bf16.gmra.mxu0 %v394
      %v1473 = vpop.f32.mrf.mxu0
      %v1474 = vadd.f32 %v1321, %v1473
      %v1475 = vpop.f32.mrf.mxu0
      %v1476 = vadd.f32 %v1323, %v1475
      %1477 = vmatmul.bf16.gmra.mxu0 %v395
      %v1478 = vpop.f32.mrf.mxu0
      %v1479 = vadd.f32 %v1326, %v1478
      %v1480 = vpop.f32.mrf.mxu0
      %1481 = vmatmul.bf16.gmra.mxu0 %v396
      %v1482 = vpop.f32.mrf.mxu0
      %v1483 = vadd.f32 %v1330, %v1482
      %v1484 = vpop.f32.mrf.mxu0
      %v1485 = vadd.f32 %v1332, %v1484
      %1486 = vmatmul.bf16.gmra.mxu0 %v397
      %v1487 = vpop.f32.mrf.mxu0
      %v1488 = vadd.f32 %v1335, %v1487
      %v1489 = vpop.f32.mrf.mxu0
      %1490 = vmatmul.bf16.gmra.mxu0 %v398
      %v1491 = vpop.f32.mrf.mxu0
      %v1492 = vadd.f32 %v1339, %v1491
      %v1493 = vpop.f32.mrf.mxu0
      %v1494 = vadd.f32 %v1341, %v1493
      %1495 = vmatmul.bf16.gmra.mxu0 %v399
      %v1496 = vpop.f32.mrf.mxu0
      %v1497 = vadd.f32 %v1344, %v1496
      %v1498 = vpop.f32.mrf.mxu0
      %1499 = vmatmul.bf16.gmra.mxu0 %v400
      %v1500 = vpop.f32.mrf.mxu0
      %v1501 = vadd.f32 %v1348, %v1500
      %v1502 = vpop.f32.mrf.mxu0
      %v1503 = vadd.f32 %v1350, %v1502
      %1504 = vmatmul.bf16.gmra.mxu0 %v401
      %v1505 = vpop.f32.mrf.mxu0
      %v1506 = vadd.f32 %v1353, %v1505
      %v1507 = vpop.f32.mrf.mxu0
      %1508 = vmatmul.bf16.gmra.mxu0 %v402
      %v1509 = vpop.f32.mrf.mxu0
      %v1510 = vadd.f32 %v1357, %v1509
      %v1511 = vpop.f32.mrf.mxu0
      %v1512 = vadd.f32 %v1359, %v1511
      %1513 = vmatmul.bf16.gmra.mxu0 %v403
      %v1514 = vpop.f32.mrf.mxu0
      %v1515 = vadd.f32 %v1362, %v1514
      %v1516 = vpop.f32.mrf.mxu0
      %1517 = vmatmul.bf16.gmra.mxu0 %v404
      %v1518 = vpop.f32.mrf.mxu0
      %v1519 = vadd.f32 %v1366, %v1518
      %v1520 = vpop.f32.mrf.mxu0
      %v1521 = vadd.f32 %v1368, %v1520
      %1522 = vmatmul.bf16.gmra.mxu0 %v405
      %v1523 = vpop.f32.mrf.mxu0
      %v1524 = vadd.f32 %v1371, %v1523
      %v1525 = vpop.f32.mrf.mxu0
      %1526 = vmatmul.bf16.gmra.mxu0 %v406
      %v1527 = vpop.f32.mrf.mxu0
      %v1528 = vadd.f32 %v1375, %v1527
      %v1529 = vpop.f32.mrf.mxu0
      %v1530 = vadd.f32 %v1377, %v1529
      %1531 = vmatmul.bf16.gmra.mxu0 %v407
      %v1532 = vpop.f32.mrf.mxu0
      %v1533 = vadd.f32 %v1380, %v1532
      %v1534 = vpop.f32.mrf.mxu0
      %1535 = vmatmul.bf16.gmra.mxu0 %v408
      %v1536 = vpop.f32.mrf.mxu0
      %v1537 = vadd.f32 %v1384, %v1536
      %v1538 = vpop.f32.mrf.mxu0
      %v1539 = vadd.f32 %v1386, %v1538
      %1540 = vmatmul.bf16.gmra.mxu0 %v409
      %v1541 = vpop.f32.mrf.mxu0
      %v1542 = vadd.f32 %v1389, %v1541
      %v1543 = vpop.f32.mrf.mxu0
      %1544 = vmatmul.bf16.gmra.mxu0 %v410
      %v1545 = vpop.f32.mrf.mxu0
      %v1546 = vadd.f32 %v1393, %v1545
      %v1547 = vpop.f32.mrf.mxu0
      %v1548 = vadd.f32 %v1395, %v1547
      %1549 = vmatmul.bf16.gmra.mxu0 %v411
      %v1550 = vpop.f32.mrf.mxu0
      %v1551 = vadd.f32 %v1398, %v1550
      %v1552 = vpop.f32.mrf.mxu0
      %1553 = vmatmul.bf16.gmra.mxu0 %v412
      %v1554 = vpop.f32.mrf.mxu0
      %v1555 = vadd.f32 %v1402, %v1554
      %v1556 = vpop.f32.mrf.mxu0
      %v1557 = vadd.f32 %v1404, %v1556
      %1558 = vmatmul.bf16.gmra.mxu0 %v413
      %v1559 = vpop.f32.mrf.mxu0
      %v1560 = vadd.f32 %v1407, %v1559
      %v1561 = vpop.f32.mrf.mxu0
      %1562 = vmatmul.bf16.gmra.mxu0 %v454
      %v1563 = vpop.f32.mrf.mxu0
      %v1564 = vadd.f32 %v1411, %v1563
      %v1565 = vpop.f32.mrf.mxu0
      %v1566 = vadd.f32 %v1413, %v1565
      %1567 = vmatmul.bf16.gmra.mxu0 %v455
      %v1568 = vpop.f32.mrf.mxu0
      %v1569 = vadd.f32 %v1416, %v1568
      %v1570 = vpop.f32.mrf.mxu0
      %1571 = vdwg.mxu0
      %1572 = vmatpush.bf16.msra.mxu0 %v1241
      %1573 = vmatpush.bf16.msra.mxu0 %v1240
      %1574 = vmatpush.bf16.msra.mxu0 %v1239
      %1575 = vmatpush.bf16.msra.mxu0 %v1238
      %1576 = vmatpush.bf16.msra.mxu0 %v1237
      %1577 = vmatpush.bf16.msra.mxu0 %v1236
      %1578 = vmatpush.bf16.msra.mxu0 %v1235
      %1579 = vmatpush.bf16.msra.mxu0 %v1234
      %1580 = vmatmul.bf16.gmra.mxu0 %v386
      %v1581 = vpop.f32.mrf.mxu0
      %v1582 = vadd.f32 %v1429, %v1581
      %v1583 = vpop.f32.mrf.mxu0
      %v1584 = vadd.f32 %v1431, %v1583
      %1585 = vmatmul.bf16.gmra.mxu0 %v387
      %v1586 = vpop.f32.mrf.mxu0
      %v1587 = vadd.f32 %v1434, %v1586
      %v1588 = vpop.f32.mrf.mxu0
      %1589 = vmatmul.bf16.gmra.mxu0 %v388
      %v1590 = vpop.f32.mrf.mxu0
      %v1591 = vadd.f32 %v1438, %v1590
      %v1592 = vpop.f32.mrf.mxu0
      %v1593 = vadd.f32 %v1440, %v1592
      %1594 = vmatmul.bf16.gmra.mxu0 %v389
      %v1595 = vpop.f32.mrf.mxu0
      %v1596 = vadd.f32 %v1443, %v1595
      %v1597 = vpop.f32.mrf.mxu0
      %1598 = vmatmul.bf16.gmra.mxu0 %v390
      %v1599 = vpop.f32.mrf.mxu0
      %v1600 = vadd.f32 %v1447, %v1599
      %v1601 = vpop.f32.mrf.mxu0
      %v1602 = vadd.f32 %v1449, %v1601
      %1603 = vmatmul.bf16.gmra.mxu0 %v391
      %v1604 = vpop.f32.mrf.mxu0
      %v1605 = vadd.f32 %v1452, %v1604
      %v1606 = vpop.f32.mrf.mxu0
      %1607 = vmatmul.bf16.gmra.mxu0 %v392
      %v1608 = vpop.f32.mrf.mxu0
      %v1609 = vadd.f32 %v1456, %v1608
      %v1610 = vpop.f32.mrf.mxu0
      %v1611 = vadd.f32 %v1458, %v1610
      %1612 = vmatmul.bf16.gmra.mxu0 %v393
      %v1613 = vpop.f32.mrf.mxu0
      %v1614 = vadd.f32 %v1461, %v1613
      %v1615 = vpop.f32.mrf.mxu0
      %1616 = vmatmul.bf16.gmra.mxu0 %v394
      %v1617 = vpop.f32.mrf.mxu0
      %v1618 = vadd.f32 %v1465, %v1617
      %v1619 = vpop.f32.mrf.mxu0
      %v1620 = vadd.f32 %v1467, %v1619
      %1621 = vmatmul.bf16.gmra.mxu0 %v395
      %v1622 = vpop.f32.mrf.mxu0
      %v1623 = vadd.f32 %v1470, %v1622
      %v1624 = vpop.f32.mrf.mxu0
      %1625 = vmatmul.bf16.gmra.mxu0 %v396
      %v1626 = vpop.f32.mrf.mxu0
      %v1627 = vadd.f32 %v1474, %v1626
      %v1628 = vpop.f32.mrf.mxu0
      %v1629 = vadd.f32 %v1476, %v1628
      %1630 = vmatmul.bf16.gmra.mxu0 %v397
      %v1631 = vpop.f32.mrf.mxu0
      %v1632 = vadd.f32 %v1479, %v1631
      %v1633 = vpop.f32.mrf.mxu0
      %1634 = vmatmul.bf16.gmra.mxu0 %v398
      %v1635 = vpop.f32.mrf.mxu0
      %v1636 = vadd.f32 %v1483, %v1635
      %v1637 = vpop.f32.mrf.mxu0
      %v1638 = vadd.f32 %v1485, %v1637
      %1639 = vmatmul.bf16.gmra.mxu0 %v399
      %v1640 = vpop.f32.mrf.mxu0
      %v1641 = vadd.f32 %v1488, %v1640
      %v1642 = vpop.f32.mrf.mxu0
      %1643 = vmatmul.bf16.gmra.mxu0 %v400
      %v1644 = vpop.f32.mrf.mxu0
      %v1645 = vadd.f32 %v1492, %v1644
      %v1646 = vpop.f32.mrf.mxu0
      %v1647 = vadd.f32 %v1494, %v1646
      %1648 = vmatmul.bf16.gmra.mxu0 %v401
      %v1649 = vpop.f32.mrf.mxu0
      %v1650 = vadd.f32 %v1497, %v1649
      %v1651 = vpop.f32.mrf.mxu0
      %1652 = vmatmul.bf16.gmra.mxu0 %v402
      %v1653 = vpop.f32.mrf.mxu0
      %v1654 = vadd.f32 %v1501, %v1653
      %v1655 = vpop.f32.mrf.mxu0
      %v1656 = vadd.f32 %v1503, %v1655
      %1657 = vmatmul.bf16.gmra.mxu0 %v403
      %v1658 = vpop.f32.mrf.mxu0
      %v1659 = vadd.f32 %v1506, %v1658
      %v1660 = vpop.f32.mrf.mxu0
      %1661 = vmatmul.bf16.gmra.mxu0 %v404
      %v1662 = vpop.f32.mrf.mxu0
      %v1663 = vadd.f32 %v1510, %v1662
      %v1664 = vpop.f32.mrf.mxu0
      %v1665 = vadd.f32 %v1512, %v1664
      %1666 = vmatmul.bf16.gmra.mxu0 %v405
      %v1667 = vpop.f32.mrf.mxu0
      %v1668 = vadd.f32 %v1515, %v1667
      %v1669 = vpop.f32.mrf.mxu0
      %1670 = vmatmul.bf16.gmra.mxu0 %v406
      %v1671 = vpop.f32.mrf.mxu0
      %v1672 = vadd.f32 %v1519, %v1671
      %v1673 = vpop.f32.mrf.mxu0
      %v1674 = vadd.f32 %v1521, %v1673
      %1675 = vmatmul.bf16.gmra.mxu0 %v407
      %v1676 = vpop.f32.mrf.mxu0
      %v1677 = vadd.f32 %v1524, %v1676
      %v1678 = vpop.f32.mrf.mxu0
      %1679 = vmatmul.bf16.gmra.mxu0 %v408
      %v1680 = vpop.f32.mrf.mxu0
      %v1681 = vadd.f32 %v1528, %v1680
      %v1682 = vpop.f32.mrf.mxu0
      %v1683 = vadd.f32 %v1530, %v1682
      %1684 = vmatmul.bf16.gmra.mxu0 %v409
      %v1685 = vpop.f32.mrf.mxu0
      %v1686 = vadd.f32 %v1533, %v1685
      %v1687 = vpop.f32.mrf.mxu0
      %1688 = vmatmul.bf16.gmra.mxu0 %v410
      %v1689 = vpop.f32.mrf.mxu0
      %v1690 = vadd.f32 %v1537, %v1689
      %v1691 = vpop.f32.mrf.mxu0
      %v1692 = vadd.f32 %v1539, %v1691
      %1693 = vmatmul.bf16.gmra.mxu0 %v411
      %v1694 = vpop.f32.mrf.mxu0
      %v1695 = vadd.f32 %v1542, %v1694
      %v1696 = vpop.f32.mrf.mxu0
      %1697 = vmatmul.bf16.gmra.mxu0 %v412
      %v1698 = vpop.f32.mrf.mxu0
      %v1699 = vadd.f32 %v1546, %v1698
      %v1700 = vpop.f32.mrf.mxu0
      %v1701 = vadd.f32 %v1548, %v1700
      %1702 = vmatmul.bf16.gmra.mxu0 %v413
      %v1703 = vpop.f32.mrf.mxu0
      %v1704 = vadd.f32 %v1551, %v1703
      %v1705 = vpop.f32.mrf.mxu0
      %1706 = vmatmul.bf16.gmra.mxu0 %v454
      %v1707 = vpop.f32.mrf.mxu0
      %v1708 = vadd.f32 %v1555, %v1707
      %v1709 = vpop.f32.mrf.mxu0
      %v1710 = vadd.f32 %v1557, %v1709
      %1711 = vmatmul.bf16.gmra.mxu0 %v455
      %v1712 = vpop.f32.mrf.mxu0
      %v1713 = vadd.f32 %v1560, %v1712
      %v1714 = vpop.f32.mrf.mxu0
      %1715 = vmatmul.bf16.gmra.mxu0 %v466
      %v1716 = vpop.f32.mrf.mxu0
      %v1717 = vadd.f32 %v1564, %v1716
      %v1718 = vpop.f32.mrf.mxu0
      %v1719 = vadd.f32 %v1566, %v1718
      %1720 = vmatmul.bf16.gmra.mxu0 %v467
      %v1721 = vpop.f32.mrf.mxu0
      %v1722 = vadd.f32 %v1569, %v1721
      %v1723 = vpop.f32.mrf.mxu0
      %1724 = vdwg.mxu0
      %vm1773 = vcmask 1046528
      %v1774 = vrot.slane %v1582, 1
      %v1775 = vrot.slane %v1584, 1
      %v1776 = vsel %vm1773, %v1774, %v1775
      %v1777 = vrot.slane %v1587, 1
      %v1778 = vsel %vm1773, %v1775, %v1777
      %v1779 = vrot.slane %v1591, 1
      %v1780 = vrot.slane %v1593, 1
      %v1781 = vsel %vm1773, %v1779, %v1780
      %v1782 = vrot.slane %v1596, 1
      %v1783 = vsel %vm1773, %v1780, %v1782
      %v1784 = vrot.slane %v1600, 1
      %v1785 = vrot.slane %v1602, 1
      %v1786 = vsel %vm1773, %v1784, %v1785
      %v1787 = vrot.slane %v1605, 1
      %v1788 = vsel %vm1773, %v1785, %v1787
      %v1789 = vrot.slane %v1609, 1
      %v1790 = vrot.slane %v1611, 1
      %v1791 = vsel %vm1773, %v1789, %v1790
      %v1792 = vrot.slane %v1614, 1
      %v1793 = vsel %vm1773, %v1790, %v1792
      %v1794 = vrot.slane %v1618, 1
      %v1795 = vrot.slane %v1620, 1
      %v1796 = vsel %vm1773, %v1794, %v1795
      %v1797 = vrot.slane %v1623, 1
      %v1798 = vsel %vm1773, %v1795, %v1797
      %v1799 = vrot.slane %v1627, 1
      %v1800 = vrot.slane %v1629, 1
      %v1801 = vsel %vm1773, %v1799, %v1800
      %v1802 = vrot.slane %v1632, 1
      %v1803 = vsel %vm1773, %v1800, %v1802
      %v1804 = vrot.slane %v1636, 1
      %v1805 = vrot.slane %v1638, 1
      %v1806 = vsel %vm1773, %v1804, %v1805
      %v1807 = vrot.slane %v1641, 1
      %v1808 = vsel %vm1773, %v1805, %v1807
      %v1809 = vrot.slane %v1645, 1
      %v1810 = vrot.slane %v1647, 1
      %v1811 = vsel %vm1773, %v1809, %v1810
      %v1812 = vrot.slane %v1650, 1
      %v1813 = vsel %vm1773, %v1810, %v1812
      %v1814 = vrot.slane %v1654, 1
      %v1815 = vrot.slane %v1656, 1
      %v1816 = vsel %vm1773, %v1814, %v1815
      %v1817 = vrot.slane %v1659, 1
      %v1818 = vsel %vm1773, %v1815, %v1817
      %v1819 = vrot.slane %v1663, 1
      %v1820 = vrot.slane %v1665, 1
      %v1821 = vsel %vm1773, %v1819, %v1820
      %v1822 = vrot.slane %v1668, 1
      %v1823 = vsel %vm1773, %v1820, %v1822
      %v1824 = vrot.slane %v1672, 1
      %v1825 = vrot.slane %v1674, 1
      %v1826 = vsel %vm1773, %v1824, %v1825
      %v1827 = vrot.slane %v1677, 1
      %v1828 = vsel %vm1773, %v1825, %v1827
      %v1829 = vrot.slane %v1681, 1
      %v1830 = vrot.slane %v1683, 1
      %v1831 = vsel %vm1773, %v1829, %v1830
      %v1832 = vrot.slane %v1686, 1
      %v1833 = vsel %vm1773, %v1830, %v1832
      %v1834 = vrot.slane %v1690, 1
      %v1835 = vrot.slane %v1692, 1
      %v1836 = vsel %vm1773, %v1834, %v1835
      %v1837 = vrot.slane %v1695, 1
      %v1838 = vsel %vm1773, %v1835, %v1837
      %v1839 = vrot.slane %v1699, 1
      %v1840 = vrot.slane %v1701, 1
      %v1841 = vsel %vm1773, %v1839, %v1840
      %v1842 = vrot.slane %v1704, 1
      %v1843 = vsel %vm1773, %v1840, %v1842
      %v1844 = vrot.slane %v1708, 1
      %v1845 = vrot.slane %v1710, 1
      %v1846 = vsel %vm1773, %v1844, %v1845
      %v1847 = vrot.slane %v1713, 1
      %v1848 = vsel %vm1773, %v1845, %v1847
      %v1849 = vrot.slane %v1717, 1
      %v1850 = vrot.slane %v1719, 1
      %v1851 = vsel %vm1773, %v1849, %v1850
      %v1852 = vrot.slane %v1722, 1
      %v1853 = vsel %vm1773, %v1850, %v1852
      %v1886 = vadd.f32 %v946, %v1776
      %v1887 = vadd.f32 %v948, %v1778
      %v1888 = vadd.f32 %v954, %v1781
      %v1889 = vadd.f32 %v956, %v1783
      %v1890 = vadd.f32 %v962, %v1786
      %v1891 = vadd.f32 %v964, %v1788
      %v1892 = vadd.f32 %v970, %v1791
      %v1893 = vadd.f32 %v972, %v1793
      %v1894 = vadd.f32 %v978, %v1796
      %v1895 = vadd.f32 %v980, %v1798
      %v1896 = vadd.f32 %v986, %v1801
      %v1897 = vadd.f32 %v988, %v1803
      %v1898 = vadd.f32 %v994, %v1806
      %v1899 = vadd.f32 %v996, %v1808
      %v1900 = vadd.f32 %v1002, %v1811
      %v1901 = vadd.f32 %v1004, %v1813
      %v1902 = vadd.f32 %v1010, %v1816
      %v1903 = vadd.f32 %v1012, %v1818
      %v1904 = vadd.f32 %v1018, %v1821
      %v1905 = vadd.f32 %v1020, %v1823
      %v1906 = vadd.f32 %v1026, %v1826
      %v1907 = vadd.f32 %v1028, %v1828
      %v1908 = vadd.f32 %v1034, %v1831
      %v1909 = vadd.f32 %v1036, %v1833
      %v1910 = vadd.f32 %v1042, %v1836
      %v1911 = vadd.f32 %v1044, %v1838
      %v1912 = vadd.f32 %v1050, %v1841
      %v1913 = vadd.f32 %v1052, %v1843
      %v1914 = vadd.f32 %v1058, %v1846
      %v1915 = vadd.f32 %v1060, %v1848
      %v1916 = vadd.f32 %v1066, %v1851
      %v1917 = vadd.f32 %v1068, %v1853
      %s1918 = scalar_lea.vmem %s1, 384
      %v1919 = vld [vmem:[%s1918] sm:$0xf]
      %v1920 = vld [vmem:[%s1918 + $0x4] sm:$0xf]
      %v1921 = vld [vmem:[%s1918 + $0x8] sm:$0xf]
      %v1922 = vld [vmem:[%s1918 + $0xc] sm:$0xf]
      %v1923 = vld [vmem:[%s1918 + $0x10] sm:$0xf]
      %v1924 = vld [vmem:[%s1918 + $0x14] sm:$0xf]
      %v1925 = vld [vmem:[%s1918 + $0x18] sm:$0xf]
      %v1926 = vld [vmem:[%s1918 + $0x1c] sm:$0xf]
      %v1927 = vld [vmem:[%s1918 + $0x20] sm:$0xf]
      %v1928 = vld [vmem:[%s1918 + $0x24] sm:$0xf]
      %v1929 = vld [vmem:[%s1918 + $0x28] sm:$0xf]
      %v1930 = vld [vmem:[%s1918 + $0x2c] sm:$0xf]
      %v1931 = vld [vmem:[%s1918 + $0x30] sm:$0xf]
      %v1932 = vld [vmem:[%s1918 + $0x34] sm:$0xf]
      %v1933 = vld [vmem:[%s1918 + $0x38] sm:$0xf]
      %v1934 = vld [vmem:[%s1918 + $0x3c] sm:$0xf]
      %v1935 = vld [vmem:[%s1918 + $0x40] sm:$0xf]
      %v1936 = vld [vmem:[%s1918 + $0x44] sm:$0xf]
      %v1937 = vld [vmem:[%s1918 + $0x48] sm:$0xf]
      %v1938 = vld [vmem:[%s1918 + $0x4c] sm:$0xf]
      %v1939 = vld [vmem:[%s1918 + $0x50] sm:$0xf]
      %v1940 = vld [vmem:[%s1918 + $0x54] sm:$0xf]
      %v1941 = vld [vmem:[%s1918 + $0x58] sm:$0xf]
      %v1942 = vld [vmem:[%s1918 + $0x5c] sm:$0xf]
      %v1943 = vld [vmem:[%s1918 + $0x60] sm:$0xf]
      %v1944 = vld [vmem:[%s1918 + $0x64] sm:$0xf]
      %v1945 = vld [vmem:[%s1918 + $0x68] sm:$0xf]
      %v1946 = vld [vmem:[%s1918 + $0x6c] sm:$0xf]
      %v1947 = vld [vmem:[%s1918 + $0x70] sm:$0xf]
      %v1948 = vld [vmem:[%s1918 + $0x74] sm:$0xf]
      %v1949 = vld [vmem:[%s1918 + $0x78] sm:$0xf]
      %v1950 = vld [vmem:[%s1918 + $0x7c] sm:$0xf]
      %v1951 = vld [vmem:[%s1918 + $0x80] sm:$0xf]
      %v1952 = vld [vmem:[%s1918 + $0x84] sm:$0xf]
      %v1953 = vld [vmem:[%s1918 + $0x88] sm:$0xf]
      %v1954 = vld [vmem:[%s1918 + $0x8c] sm:$0xf]
      %v1955 = vld [vmem:[%s1918 + $0x90] sm:$0xf]
      %v1956 = vld [vmem:[%s1918 + $0x94] sm:$0xf]
      %v1957 = vld [vmem:[%s1918 + $0x98] sm:$0xf]
      %v1958 = vld [vmem:[%s1918 + $0x9c] sm:$0xf]
      %v1959 = vld [vmem:[%s1918 + $0xa0] sm:$0xf]
      %v1960 = vld [vmem:[%s1918 + $0xa4] sm:$0xf]
      %v1961 = vld [vmem:[%s1918 + $0xa8] sm:$0xf]
      %v1962 = vld [vmem:[%s1918 + $0xac] sm:$0xf]
      %v1963 = vld [vmem:[%s1918 + $0xb0] sm:$0xf]
      %v1964 = vld [vmem:[%s1918 + $0xb4] sm:$0xf]
      %v1965 = vld [vmem:[%s1918 + $0xb8] sm:$0xf]
      %v1966 = vld [vmem:[%s1918 + $0xbc] sm:$0xf]
      %v2015 = vunpack.c.l.b16 %v1919
      %v2016 = vunpack.c.l.b16 %v1920
      %v2017 = vunpack.c.l.b16 %v1921
      %v2018 = vunpack.c.l.b16 %v1922
      %v2019 = vunpack.c.l.b16 %v1923
      %v2020 = vunpack.c.l.b16 %v1924
      %v2021 = vunpack.c.l.b16 %v1925
      %v2022 = vunpack.c.l.b16 %v1926
      %v2023 = vunpack.c.l.b16 %v1927
      %v2024 = vunpack.c.l.b16 %v1928
      %v2025 = vunpack.c.l.b16 %v1929
      %v2026 = vunpack.c.l.b16 %v1930
      %v2027 = vunpack.c.l.b16 %v1931
      %v2028 = vunpack.c.l.b16 %v1932
      %v2029 = vunpack.c.l.b16 %v1933
      %v2030 = vunpack.c.l.b16 %v1934
      %v2031 = vunpack.c.l.b16 %v1935
      %v2032 = vunpack.c.l.b16 %v1936
      %v2033 = vunpack.c.l.b16 %v1937
      %v2034 = vunpack.c.l.b16 %v1938
      %v2035 = vunpack.c.l.b16 %v1939
      %v2036 = vunpack.c.l.b16 %v1940
      %v2037 = vunpack.c.l.b16 %v1941
      %v2038 = vunpack.c.l.b16 %v1942
      %v2039 = vunpack.c.l.b16 %v1943
      %v2040 = vunpack.c.l.b16 %v1944
      %v2041 = vunpack.c.l.b16 %v1945
      %v2042 = vunpack.c.l.b16 %v1946
      %v2043 = vunpack.c.l.b16 %v1947
      %v2044 = vunpack.c.l.b16 %v1948
      %v2045 = vunpack.c.l.b16 %v1949
      %v2046 = vunpack.c.l.b16 %v1950
      %v2047 = vunpack.c.l.b16 %v1951
      %v2048 = vunpack.c.l.b16 %v1952
      %v2049 = vunpack.c.l.b16 %v1953
      %v2050 = vunpack.c.l.b16 %v1954
      %v2051 = vunpack.c.l.b16 %v1955
      %v2052 = vunpack.c.l.b16 %v1956
      %v2053 = vunpack.c.l.b16 %v1957
      %v2054 = vunpack.c.l.b16 %v1958
      %v2055 = vunpack.c.l.b16 %v1959
      %v2056 = vunpack.c.l.b16 %v1960
      %v2057 = vunpack.c.l.b16 %v1961
      %v2058 = vunpack.c.l.b16 %v1962
      %v2059 = vunpack.c.l.b16 %v1963
      %v2060 = vunpack.c.l.b16 %v1964
      %v2061 = vunpack.c.l.b16 %v1965
      %v2062 = vunpack.c.l.b16 %v1966
      %v2063 = vpack.c.b16 %v2016, %v2015
      %v2064 = vpack.c.b16 %v2018, %v2017
      %v2065 = vpack.c.b16 %v2020, %v2019
      %v2066 = vpack.c.b16 %v2022, %v2021
      %v2067 = vpack.c.b16 %v2024, %v2023
      %v2068 = vpack.c.b16 %v2026, %v2025
      %v2069 = vpack.c.b16 %v2028, %v2027
      %v2070 = vpack.c.b16 %v2030, %v2029
      %v2071 = vpack.c.b16 %v2032, %v2031
      %v2072 = vpack.c.b16 %v2034, %v2033
      %v2073 = vpack.c.b16 %v2036, %v2035
      %v2074 = vpack.c.b16 %v2038, %v2037
      %v2075 = vpack.c.b16 %v2040, %v2039
      %v2076 = vpack.c.b16 %v2042, %v2041
      %v2077 = vpack.c.b16 %v2044, %v2043
      %v2078 = vpack.c.b16 %v2046, %v2045
      %v2079 = vpack.c.b16 %v2048, %v2047
      %v2080 = vpack.c.b16 %v2050, %v2049
      %v2081 = vpack.c.b16 %v2052, %v2051
      %v2082 = vpack.c.b16 %v2054, %v2053
      %v2083 = vpack.c.b16 %v2056, %v2055
      %v2084 = vpack.c.b16 %v2058, %v2057
      %v2085 = vpack.c.b16 %v2060, %v2059
      %v2086 = vpack.c.b16 %v2062, %v2061
      %2111 = vmatpush.bf16.msra.mxu0 %v2070
      %2112 = vmatpush.bf16.msra.mxu0 %v2069
      %2113 = vmatpush.bf16.msra.mxu0 %v2068
      %2114 = vmatpush.bf16.msra.mxu0 %v2067
      %2115 = vmatpush.bf16.msra.mxu0 %v2066
      %2116 = vmatpush.bf16.msra.mxu0 %v2065
      %2117 = vmatpush.bf16.msra.mxu0 %v2064
      %2118 = vmatpush.bf16.msra.mxu0 %v2063
      %2119 = vmatmul.bf16.gmra.mxu0 %v382
      %v2120 = vpop.f32.mrf.mxu0
      %v2121 = vadd.f32 0.0, %v2120
      %v2122 = vpop.f32.mrf.mxu0
      %v2123 = vadd.f32 0.0, %v2122
      %2124 = vmatmul.bf16.gmra.mxu0 %v383
      %v2125 = vpop.f32.mrf.mxu0
      %v2126 = vadd.f32 0.0, %v2125
      %v2127 = vpop.f32.mrf.mxu0
      %2128 = vmatmul.bf16.gmra.mxu0 %v384
      %v2129 = vpop.f32.mrf.mxu0
      %v2130 = vadd.f32 0.0, %v2129
      %v2131 = vpop.f32.mrf.mxu0
      %v2132 = vadd.f32 0.0, %v2131
      %2133 = vmatmul.bf16.gmra.mxu0 %v385
      %v2134 = vpop.f32.mrf.mxu0
      %v2135 = vadd.f32 0.0, %v2134
      %v2136 = vpop.f32.mrf.mxu0
      %2137 = vmatmul.bf16.gmra.mxu0 %v386
      %v2138 = vpop.f32.mrf.mxu0
      %v2139 = vadd.f32 0.0, %v2138
      %v2140 = vpop.f32.mrf.mxu0
      %v2141 = vadd.f32 0.0, %v2140
      %2142 = vmatmul.bf16.gmra.mxu0 %v387
      %v2143 = vpop.f32.mrf.mxu0
      %v2144 = vadd.f32 0.0, %v2143
      %v2145 = vpop.f32.mrf.mxu0
      %2146 = vmatmul.bf16.gmra.mxu0 %v388
      %v2147 = vpop.f32.mrf.mxu0
      %v2148 = vadd.f32 0.0, %v2147
      %v2149 = vpop.f32.mrf.mxu0
      %v2150 = vadd.f32 0.0, %v2149
      %2151 = vmatmul.bf16.gmra.mxu0 %v389
      %v2152 = vpop.f32.mrf.mxu0
      %v2153 = vadd.f32 0.0, %v2152
      %v2154 = vpop.f32.mrf.mxu0
      %2155 = vmatmul.bf16.gmra.mxu0 %v390
      %v2156 = vpop.f32.mrf.mxu0
      %v2157 = vadd.f32 0.0, %v2156
      %v2158 = vpop.f32.mrf.mxu0
      %v2159 = vadd.f32 0.0, %v2158
      %2160 = vmatmul.bf16.gmra.mxu0 %v391
      %v2161 = vpop.f32.mrf.mxu0
      %v2162 = vadd.f32 0.0, %v2161
      %v2163 = vpop.f32.mrf.mxu0
      %2164 = vmatmul.bf16.gmra.mxu0 %v392
      %v2165 = vpop.f32.mrf.mxu0
      %v2166 = vadd.f32 0.0, %v2165
      %v2167 = vpop.f32.mrf.mxu0
      %v2168 = vadd.f32 0.0, %v2167
      %2169 = vmatmul.bf16.gmra.mxu0 %v393
      %v2170 = vpop.f32.mrf.mxu0
      %v2171 = vadd.f32 0.0, %v2170
      %v2172 = vpop.f32.mrf.mxu0
      %2173 = vmatmul.bf16.gmra.mxu0 %v394
      %v2174 = vpop.f32.mrf.mxu0
      %v2175 = vadd.f32 0.0, %v2174
      %v2176 = vpop.f32.mrf.mxu0
      %v2177 = vadd.f32 0.0, %v2176
      %2178 = vmatmul.bf16.gmra.mxu0 %v395
      %v2179 = vpop.f32.mrf.mxu0
      %v2180 = vadd.f32 0.0, %v2179
      %v2181 = vpop.f32.mrf.mxu0
      %2182 = vmatmul.bf16.gmra.mxu0 %v396
      %v2183 = vpop.f32.mrf.mxu0
      %v2184 = vadd.f32 0.0, %v2183
      %v2185 = vpop.f32.mrf.mxu0
      %v2186 = vadd.f32 0.0, %v2185
      %2187 = vmatmul.bf16.gmra.mxu0 %v397
      %v2188 = vpop.f32.mrf.mxu0
      %v2189 = vadd.f32 0.0, %v2188
      %v2190 = vpop.f32.mrf.mxu0
      %2191 = vmatmul.bf16.gmra.mxu0 %v398
      %v2192 = vpop.f32.mrf.mxu0
      %v2193 = vadd.f32 0.0, %v2192
      %v2194 = vpop.f32.mrf.mxu0
      %v2195 = vadd.f32 0.0, %v2194
      %2196 = vmatmul.bf16.gmra.mxu0 %v399
      %v2197 = vpop.f32.mrf.mxu0
      %v2198 = vadd.f32 0.0, %v2197
      %v2199 = vpop.f32.mrf.mxu0
      %2200 = vmatmul.bf16.gmra.mxu0 %v400
      %v2201 = vpop.f32.mrf.mxu0
      %v2202 = vadd.f32 0.0, %v2201
      %v2203 = vpop.f32.mrf.mxu0
      %v2204 = vadd.f32 0.0, %v2203
      %2205 = vmatmul.bf16.gmra.mxu0 %v401
      %v2206 = vpop.f32.mrf.mxu0
      %v2207 = vadd.f32 0.0, %v2206
      %v2208 = vpop.f32.mrf.mxu0
      %2209 = vmatmul.bf16.gmra.mxu0 %v402
      %v2210 = vpop.f32.mrf.mxu0
      %v2211 = vadd.f32 0.0, %v2210
      %v2212 = vpop.f32.mrf.mxu0
      %v2213 = vadd.f32 0.0, %v2212
      %2214 = vmatmul.bf16.gmra.mxu0 %v403
      %v2215 = vpop.f32.mrf.mxu0
      %v2216 = vadd.f32 0.0, %v2215
      %v2217 = vpop.f32.mrf.mxu0
      %2218 = vmatmul.bf16.gmra.mxu0 %v404
      %v2219 = vpop.f32.mrf.mxu0
      %v2220 = vadd.f32 0.0, %v2219
      %v2221 = vpop.f32.mrf.mxu0
      %v2222 = vadd.f32 0.0, %v2221
      %2223 = vmatmul.bf16.gmra.mxu0 %v405
      %v2224 = vpop.f32.mrf.mxu0
      %v2225 = vadd.f32 0.0, %v2224
      %v2226 = vpop.f32.mrf.mxu0
      %2227 = vmatmul.bf16.gmra.mxu0 %v406
      %v2228 = vpop.f32.mrf.mxu0
      %v2229 = vadd.f32 0.0, %v2228
      %v2230 = vpop.f32.mrf.mxu0
      %v2231 = vadd.f32 0.0, %v2230
      %2232 = vmatmul.bf16.gmra.mxu0 %v407
      %v2233 = vpop.f32.mrf.mxu0
      %v2234 = vadd.f32 0.0, %v2233
      %v2235 = vpop.f32.mrf.mxu0
      %2236 = vmatmul.bf16.gmra.mxu0 %v408
      %v2237 = vpop.f32.mrf.mxu0
      %v2238 = vadd.f32 0.0, %v2237
      %v2239 = vpop.f32.mrf.mxu0
      %v2240 = vadd.f32 0.0, %v2239
      %2241 = vmatmul.bf16.gmra.mxu0 %v409
      %v2242 = vpop.f32.mrf.mxu0
      %v2243 = vadd.f32 0.0, %v2242
      %v2244 = vpop.f32.mrf.mxu0
      %2245 = vmatmul.bf16.gmra.mxu0 %v410
      %v2246 = vpop.f32.mrf.mxu0
      %v2247 = vadd.f32 0.0, %v2246
      %v2248 = vpop.f32.mrf.mxu0
      %v2249 = vadd.f32 0.0, %v2248
      %2250 = vmatmul.bf16.gmra.mxu0 %v411
      %v2251 = vpop.f32.mrf.mxu0
      %v2252 = vadd.f32 0.0, %v2251
      %v2253 = vpop.f32.mrf.mxu0
      %2254 = vmatmul.bf16.gmra.mxu0 %v412
      %v2255 = vpop.f32.mrf.mxu0
      %v2256 = vadd.f32 0.0, %v2255
      %v2257 = vpop.f32.mrf.mxu0
      %v2258 = vadd.f32 0.0, %v2257
      %2259 = vmatmul.bf16.gmra.mxu0 %v413
      %v2260 = vpop.f32.mrf.mxu0
      %v2261 = vadd.f32 0.0, %v2260
      %v2262 = vpop.f32.mrf.mxu0
      %2263 = vdwg.mxu0
      %2264 = vmatpush.bf16.msra.mxu0 %v2078
      %2265 = vmatpush.bf16.msra.mxu0 %v2077
      %2266 = vmatpush.bf16.msra.mxu0 %v2076
      %2267 = vmatpush.bf16.msra.mxu0 %v2075
      %2268 = vmatpush.bf16.msra.mxu0 %v2074
      %2269 = vmatpush.bf16.msra.mxu0 %v2073
      %2270 = vmatpush.bf16.msra.mxu0 %v2072
      %2271 = vmatpush.bf16.msra.mxu0 %v2071
      %2272 = vmatmul.bf16.gmra.mxu0 %v384
      %v2273 = vpop.f32.mrf.mxu0
      %v2274 = vadd.f32 %v2121, %v2273
      %v2275 = vpop.f32.mrf.mxu0
      %v2276 = vadd.f32 %v2123, %v2275
      %2277 = vmatmul.bf16.gmra.mxu0 %v385
      %v2278 = vpop.f32.mrf.mxu0
      %v2279 = vadd.f32 %v2126, %v2278
      %v2280 = vpop.f32.mrf.mxu0
      %2281 = vmatmul.bf16.gmra.mxu0 %v386
      %v2282 = vpop.f32.mrf.mxu0
      %v2283 = vadd.f32 %v2130, %v2282
      %v2284 = vpop.f32.mrf.mxu0
      %v2285 = vadd.f32 %v2132, %v2284
      %2286 = vmatmul.bf16.gmra.mxu0 %v387
      %v2287 = vpop.f32.mrf.mxu0
      %v2288 = vadd.f32 %v2135, %v2287
      %v2289 = vpop.f32.mrf.mxu0
      %2290 = vmatmul.bf16.gmra.mxu0 %v388
      %v2291 = vpop.f32.mrf.mxu0
      %v2292 = vadd.f32 %v2139, %v2291
      %v2293 = vpop.f32.mrf.mxu0
      %v2294 = vadd.f32 %v2141, %v2293
      %2295 = vmatmul.bf16.gmra.mxu0 %v389
      %v2296 = vpop.f32.mrf.mxu0
      %v2297 = vadd.f32 %v2144, %v2296
      %v2298 = vpop.f32.mrf.mxu0
      %2299 = vmatmul.bf16.gmra.mxu0 %v390
      %v2300 = vpop.f32.mrf.mxu0
      %v2301 = vadd.f32 %v2148, %v2300
      %v2302 = vpop.f32.mrf.mxu0
      %v2303 = vadd.f32 %v2150, %v2302
      %2304 = vmatmul.bf16.gmra.mxu0 %v391
      %v2305 = vpop.f32.mrf.mxu0
      %v2306 = vadd.f32 %v2153, %v2305
      %v2307 = vpop.f32.mrf.mxu0
      %2308 = vmatmul.bf16.gmra.mxu0 %v392
      %v2309 = vpop.f32.mrf.mxu0
      %v2310 = vadd.f32 %v2157, %v2309
      %v2311 = vpop.f32.mrf.mxu0
      %v2312 = vadd.f32 %v2159, %v2311
      %2313 = vmatmul.bf16.gmra.mxu0 %v393
      %v2314 = vpop.f32.mrf.mxu0
      %v2315 = vadd.f32 %v2162, %v2314
      %v2316 = vpop.f32.mrf.mxu0
      %2317 = vmatmul.bf16.gmra.mxu0 %v394
      %v2318 = vpop.f32.mrf.mxu0
      %v2319 = vadd.f32 %v2166, %v2318
      %v2320 = vpop.f32.mrf.mxu0
      %v2321 = vadd.f32 %v2168, %v2320
      %2322 = vmatmul.bf16.gmra.mxu0 %v395
      %v2323 = vpop.f32.mrf.mxu0
      %v2324 = vadd.f32 %v2171, %v2323
      %v2325 = vpop.f32.mrf.mxu0
      %2326 = vmatmul.bf16.gmra.mxu0 %v396
      %v2327 = vpop.f32.mrf.mxu0
      %v2328 = vadd.f32 %v2175, %v2327
      %v2329 = vpop.f32.mrf.mxu0
      %v2330 = vadd.f32 %v2177, %v2329
      %2331 = vmatmul.bf16.gmra.mxu0 %v397
      %v2332 = vpop.f32.mrf.mxu0
      %v2333 = vadd.f32 %v2180, %v2332
      %v2334 = vpop.f32.mrf.mxu0
      %2335 = vmatmul.bf16.gmra.mxu0 %v398
      %v2336 = vpop.f32.mrf.mxu0
      %v2337 = vadd.f32 %v2184, %v2336
      %v2338 = vpop.f32.mrf.mxu0
      %v2339 = vadd.f32 %v2186, %v2338
      %2340 = vmatmul.bf16.gmra.mxu0 %v399
      %v2341 = vpop.f32.mrf.mxu0
      %v2342 = vadd.f32 %v2189, %v2341
      %v2343 = vpop.f32.mrf.mxu0
      %2344 = vmatmul.bf16.gmra.mxu0 %v400
      %v2345 = vpop.f32.mrf.mxu0
      %v2346 = vadd.f32 %v2193, %v2345
      %v2347 = vpop.f32.mrf.mxu0
      %v2348 = vadd.f32 %v2195, %v2347
      %2349 = vmatmul.bf16.gmra.mxu0 %v401
      %v2350 = vpop.f32.mrf.mxu0
      %v2351 = vadd.f32 %v2198, %v2350
      %v2352 = vpop.f32.mrf.mxu0
      %2353 = vmatmul.bf16.gmra.mxu0 %v402
      %v2354 = vpop.f32.mrf.mxu0
      %v2355 = vadd.f32 %v2202, %v2354
      %v2356 = vpop.f32.mrf.mxu0
      %v2357 = vadd.f32 %v2204, %v2356
      %2358 = vmatmul.bf16.gmra.mxu0 %v403
      %v2359 = vpop.f32.mrf.mxu0
      %v2360 = vadd.f32 %v2207, %v2359
      %v2361 = vpop.f32.mrf.mxu0
      %2362 = vmatmul.bf16.gmra.mxu0 %v404
      %v2363 = vpop.f32.mrf.mxu0
      %v2364 = vadd.f32 %v2211, %v2363
      %v2365 = vpop.f32.mrf.mxu0
      %v2366 = vadd.f32 %v2213, %v2365
      %2367 = vmatmul.bf16.gmra.mxu0 %v405
      %v2368 = vpop.f32.mrf.mxu0
      %v2369 = vadd.f32 %v2216, %v2368
      %v2370 = vpop.f32.mrf.mxu0
      %2371 = vmatmul.bf16.gmra.mxu0 %v406
      %v2372 = vpop.f32.mrf.mxu0
      %v2373 = vadd.f32 %v2220, %v2372
      %v2374 = vpop.f32.mrf.mxu0
      %v2375 = vadd.f32 %v2222, %v2374
      %2376 = vmatmul.bf16.gmra.mxu0 %v407
      %v2377 = vpop.f32.mrf.mxu0
      %v2378 = vadd.f32 %v2225, %v2377
      %v2379 = vpop.f32.mrf.mxu0
      %2380 = vmatmul.bf16.gmra.mxu0 %v408
      %v2381 = vpop.f32.mrf.mxu0
      %v2382 = vadd.f32 %v2229, %v2381
      %v2383 = vpop.f32.mrf.mxu0
      %v2384 = vadd.f32 %v2231, %v2383
      %2385 = vmatmul.bf16.gmra.mxu0 %v409
      %v2386 = vpop.f32.mrf.mxu0
      %v2387 = vadd.f32 %v2234, %v2386
      %v2388 = vpop.f32.mrf.mxu0
      %2389 = vmatmul.bf16.gmra.mxu0 %v410
      %v2390 = vpop.f32.mrf.mxu0
      %v2391 = vadd.f32 %v2238, %v2390
      %v2392 = vpop.f32.mrf.mxu0
      %v2393 = vadd.f32 %v2240, %v2392
      %2394 = vmatmul.bf16.gmra.mxu0 %v411
      %v2395 = vpop.f32.mrf.mxu0
      %v2396 = vadd.f32 %v2243, %v2395
      %v2397 = vpop.f32.mrf.mxu0
      %2398 = vmatmul.bf16.gmra.mxu0 %v412
      %v2399 = vpop.f32.mrf.mxu0
      %v2400 = vadd.f32 %v2247, %v2399
      %v2401 = vpop.f32.mrf.mxu0
      %v2402 = vadd.f32 %v2249, %v2401
      %2403 = vmatmul.bf16.gmra.mxu0 %v413
      %v2404 = vpop.f32.mrf.mxu0
      %v2405 = vadd.f32 %v2252, %v2404
      %v2406 = vpop.f32.mrf.mxu0
      %2407 = vmatmul.bf16.gmra.mxu0 %v454
      %v2408 = vpop.f32.mrf.mxu0
      %v2409 = vadd.f32 %v2256, %v2408
      %v2410 = vpop.f32.mrf.mxu0
      %v2411 = vadd.f32 %v2258, %v2410
      %2412 = vmatmul.bf16.gmra.mxu0 %v455
      %v2413 = vpop.f32.mrf.mxu0
      %v2414 = vadd.f32 %v2261, %v2413
      %v2415 = vpop.f32.mrf.mxu0
      %2416 = vdwg.mxu0
      %2417 = vmatpush.bf16.msra.mxu0 %v2086
      %2418 = vmatpush.bf16.msra.mxu0 %v2085
      %2419 = vmatpush.bf16.msra.mxu0 %v2084
      %2420 = vmatpush.bf16.msra.mxu0 %v2083
      %2421 = vmatpush.bf16.msra.mxu0 %v2082
      %2422 = vmatpush.bf16.msra.mxu0 %v2081
      %2423 = vmatpush.bf16.msra.mxu0 %v2080
      %2424 = vmatpush.bf16.msra.mxu0 %v2079
      %2425 = vmatmul.bf16.gmra.mxu0 %v386
      %v2426 = vpop.f32.mrf.mxu0
      %v2427 = vadd.f32 %v2274, %v2426
      %v2428 = vpop.f32.mrf.mxu0
      %v2429 = vadd.f32 %v2276, %v2428
      %2430 = vmatmul.bf16.gmra.mxu0 %v387
      %v2431 = vpop.f32.mrf.mxu0
      %v2432 = vadd.f32 %v2279, %v2431
      %v2433 = vpop.f32.mrf.mxu0
      %2434 = vmatmul.bf16.gmra.mxu0 %v388
      %v2435 = vpop.f32.mrf.mxu0
      %v2436 = vadd.f32 %v2283, %v2435
      %v2437 = vpop.f32.mrf.mxu0
      %v2438 = vadd.f32 %v2285, %v2437
      %2439 = vmatmul.bf16.gmra.mxu0 %v389
      %v2440 = vpop.f32.mrf.mxu0
      %v2441 = vadd.f32 %v2288, %v2440
      %v2442 = vpop.f32.mrf.mxu0
      %2443 = vmatmul.bf16.gmra.mxu0 %v390
      %v2444 = vpop.f32.mrf.mxu0
      %v2445 = vadd.f32 %v2292, %v2444
      %v2446 = vpop.f32.mrf.mxu0
      %v2447 = vadd.f32 %v2294, %v2446
      %2448 = vmatmul.bf16.gmra.mxu0 %v391
      %v2449 = vpop.f32.mrf.mxu0
      %v2450 = vadd.f32 %v2297, %v2449
      %v2451 = vpop.f32.mrf.mxu0
      %2452 = vmatmul.bf16.gmra.mxu0 %v392
      %v2453 = vpop.f32.mrf.mxu0
      %v2454 = vadd.f32 %v2301, %v2453
      %v2455 = vpop.f32.mrf.mxu0
      %v2456 = vadd.f32 %v2303, %v2455
      %2457 = vmatmul.bf16.gmra.mxu0 %v393
      %v2458 = vpop.f32.mrf.mxu0
      %v2459 = vadd.f32 %v2306, %v2458
      %v2460 = vpop.f32.mrf.mxu0
      %2461 = vmatmul.bf16.gmra.mxu0 %v394
      %v2462 = vpop.f32.mrf.mxu0
      %v2463 = vadd.f32 %v2310, %v2462
      %v2464 = vpop.f32.mrf.mxu0
      %v2465 = vadd.f32 %v2312, %v2464
      %2466 = vmatmul.bf16.gmra.mxu0 %v395
      %v2467 = vpop.f32.mrf.mxu0
      %v2468 = vadd.f32 %v2315, %v2467
      %v2469 = vpop.f32.mrf.mxu0
      %2470 = vmatmul.bf16.gmra.mxu0 %v396
      %v2471 = vpop.f32.mrf.mxu0
      %v2472 = vadd.f32 %v2319, %v2471
      %v2473 = vpop.f32.mrf.mxu0
      %v2474 = vadd.f32 %v2321, %v2473
      %2475 = vmatmul.bf16.gmra.mxu0 %v397
      %v2476 = vpop.f32.mrf.mxu0
      %v2477 = vadd.f32 %v2324, %v2476
      %v2478 = vpop.f32.mrf.mxu0
      %2479 = vmatmul.bf16.gmra.mxu0 %v398
      %v2480 = vpop.f32.mrf.mxu0
      %v2481 = vadd.f32 %v2328, %v2480
      %v2482 = vpop.f32.mrf.mxu0
      %v2483 = vadd.f32 %v2330, %v2482
      %2484 = vmatmul.bf16.gmra.mxu0 %v399
      %v2485 = vpop.f32.mrf.mxu0
      %v2486 = vadd.f32 %v2333, %v2485
      %v2487 = vpop.f32.mrf.mxu0
      %2488 = vmatmul.bf16.gmra.mxu0 %v400
      %v2489 = vpop.f32.mrf.mxu0
      %v2490 = vadd.f32 %v2337, %v2489
      %v2491 = vpop.f32.mrf.mxu0
      %v2492 = vadd.f32 %v2339, %v2491
      %2493 = vmatmul.bf16.gmra.mxu0 %v401
      %v2494 = vpop.f32.mrf.mxu0
      %v2495 = vadd.f32 %v2342, %v2494
      %v2496 = vpop.f32.mrf.mxu0
      %2497 = vmatmul.bf16.gmra.mxu0 %v402
      %v2498 = vpop.f32.mrf.mxu0
      %v2499 = vadd.f32 %v2346, %v2498
      %v2500 = vpop.f32.mrf.mxu0
      %v2501 = vadd.f32 %v2348, %v2500
      %2502 = vmatmul.bf16.gmra.mxu0 %v403
      %v2503 = vpop.f32.mrf.mxu0
      %v2504 = vadd.f32 %v2351, %v2503
      %v2505 = vpop.f32.mrf.mxu0
      %2506 = vmatmul.bf16.gmra.mxu0 %v404
      %v2507 = vpop.f32.mrf.mxu0
      %v2508 = vadd.f32 %v2355, %v2507
      %v2509 = vpop.f32.mrf.mxu0
      %v2510 = vadd.f32 %v2357, %v2509
      %2511 = vmatmul.bf16.gmra.mxu0 %v405
      %v2512 = vpop.f32.mrf.mxu0
      %v2513 = vadd.f32 %v2360, %v2512
      %v2514 = vpop.f32.mrf.mxu0
      %2515 = vmatmul.bf16.gmra.mxu0 %v406
      %v2516 = vpop.f32.mrf.mxu0
      %v2517 = vadd.f32 %v2364, %v2516
      %v2518 = vpop.f32.mrf.mxu0
      %v2519 = vadd.f32 %v2366, %v2518
      %2520 = vmatmul.bf16.gmra.mxu0 %v407
      %v2521 = vpop.f32.mrf.mxu0
      %v2522 = vadd.f32 %v2369, %v2521
      %v2523 = vpop.f32.mrf.mxu0
      %2524 = vmatmul.bf16.gmra.mxu0 %v408
      %v2525 = vpop.f32.mrf.mxu0
      %v2526 = vadd.f32 %v2373, %v2525
      %v2527 = vpop.f32.mrf.mxu0
      %v2528 = vadd.f32 %v2375, %v2527
      %2529 = vmatmul.bf16.gmra.mxu0 %v409
      %v2530 = vpop.f32.mrf.mxu0
      %v2531 = vadd.f32 %v2378, %v2530
      %v2532 = vpop.f32.mrf.mxu0
      %2533 = vmatmul.bf16.gmra.mxu0 %v410
      %v2534 = vpop.f32.mrf.mxu0
      %v2535 = vadd.f32 %v2382, %v2534
      %v2536 = vpop.f32.mrf.mxu0
      %v2537 = vadd.f32 %v2384, %v2536
      %2538 = vmatmul.bf16.gmra.mxu0 %v411
      %v2539 = vpop.f32.mrf.mxu0
      %v2540 = vadd.f32 %v2387, %v2539
      %v2541 = vpop.f32.mrf.mxu0
      %2542 = vmatmul.bf16.gmra.mxu0 %v412
      %v2543 = vpop.f32.mrf.mxu0
      %v2544 = vadd.f32 %v2391, %v2543
      %v2545 = vpop.f32.mrf.mxu0
      %v2546 = vadd.f32 %v2393, %v2545
      %2547 = vmatmul.bf16.gmra.mxu0 %v413
      %v2548 = vpop.f32.mrf.mxu0
      %v2549 = vadd.f32 %v2396, %v2548
      %v2550 = vpop.f32.mrf.mxu0
      %2551 = vmatmul.bf16.gmra.mxu0 %v454
      %v2552 = vpop.f32.mrf.mxu0
      %v2553 = vadd.f32 %v2400, %v2552
      %v2554 = vpop.f32.mrf.mxu0
      %v2555 = vadd.f32 %v2402, %v2554
      %2556 = vmatmul.bf16.gmra.mxu0 %v455
      %v2557 = vpop.f32.mrf.mxu0
      %v2558 = vadd.f32 %v2405, %v2557
      %v2559 = vpop.f32.mrf.mxu0
      %2560 = vmatmul.bf16.gmra.mxu0 %v466
      %v2561 = vpop.f32.mrf.mxu0
      %v2562 = vadd.f32 %v2409, %v2561
      %v2563 = vpop.f32.mrf.mxu0
      %v2564 = vadd.f32 %v2411, %v2563
      %2565 = vmatmul.bf16.gmra.mxu0 %v467
      %v2566 = vpop.f32.mrf.mxu0
      %v2567 = vadd.f32 %v2414, %v2566
      %v2568 = vpop.f32.mrf.mxu0
      %2569 = vdwg.mxu0
      %vm2618 = vcmask 1045504
      %v2619 = vrot.slane %v2427, 2
      %v2620 = vrot.slane %v2429, 2
      %v2621 = vsel %vm2618, %v2619, %v2620
      %v2622 = vrot.slane %v2432, 2
      %v2623 = vsel %vm2618, %v2620, %v2622
      %v2624 = vrot.slane %v2436, 2
      %v2625 = vrot.slane %v2438, 2
      %v2626 = vsel %vm2618, %v2624, %v2625
      %v2627 = vrot.slane %v2441, 2
      %v2628 = vsel %vm2618, %v2625, %v2627
      %v2629 = vrot.slane %v2445, 2
      %v2630 = vrot.slane %v2447, 2
      %v2631 = vsel %vm2618, %v2629, %v2630
      %v2632 = vrot.slane %v2450, 2
      %v2633 = vsel %vm2618, %v2630, %v2632
      %v2634 = vrot.slane %v2454, 2
      %v2635 = vrot.slane %v2456, 2
      %v2636 = vsel %vm2618, %v2634, %v2635
      %v2637 = vrot.slane %v2459, 2
      %v2638 = vsel %vm2618, %v2635, %v2637
      %v2639 = vrot.slane %v2463, 2
      %v2640 = vrot.slane %v2465, 2
      %v2641 = vsel %vm2618, %v2639, %v2640
      %v2642 = vrot.slane %v2468, 2
      %v2643 = vsel %vm2618, %v2640, %v2642
      %v2644 = vrot.slane %v2472, 2
      %v2645 = vrot.slane %v2474, 2
      %v2646 = vsel %vm2618, %v2644, %v2645
      %v2647 = vrot.slane %v2477, 2
      %v2648 = vsel %vm2618, %v2645, %v2647
      %v2649 = vrot.slane %v2481, 2
      %v2650 = vrot.slane %v2483, 2
      %v2651 = vsel %vm2618, %v2649, %v2650
      %v2652 = vrot.slane %v2486, 2
      %v2653 = vsel %vm2618, %v2650, %v2652
      %v2654 = vrot.slane %v2490, 2
      %v2655 = vrot.slane %v2492, 2
      %v2656 = vsel %vm2618, %v2654, %v2655
      %v2657 = vrot.slane %v2495, 2
      %v2658 = vsel %vm2618, %v2655, %v2657
      %v2659 = vrot.slane %v2499, 2
      %v2660 = vrot.slane %v2501, 2
      %v2661 = vsel %vm2618, %v2659, %v2660
      %v2662 = vrot.slane %v2504, 2
      %v2663 = vsel %vm2618, %v2660, %v2662
      %v2664 = vrot.slane %v2508, 2
      %v2665 = vrot.slane %v2510, 2
      %v2666 = vsel %vm2618, %v2664, %v2665
      %v2667 = vrot.slane %v2513, 2
      %v2668 = vsel %vm2618, %v2665, %v2667
      %v2669 = vrot.slane %v2517, 2
      %v2670 = vrot.slane %v2519, 2
      %v2671 = vsel %vm2618, %v2669, %v2670
      %v2672 = vrot.slane %v2522, 2
      %v2673 = vsel %vm2618, %v2670, %v2672
      %v2674 = vrot.slane %v2526, 2
      %v2675 = vrot.slane %v2528, 2
      %v2676 = vsel %vm2618, %v2674, %v2675
      %v2677 = vrot.slane %v2531, 2
      %v2678 = vsel %vm2618, %v2675, %v2677
      %v2679 = vrot.slane %v2535, 2
      %v2680 = vrot.slane %v2537, 2
      %v2681 = vsel %vm2618, %v2679, %v2680
      %v2682 = vrot.slane %v2540, 2
      %v2683 = vsel %vm2618, %v2680, %v2682
      %v2684 = vrot.slane %v2544, 2
      %v2685 = vrot.slane %v2546, 2
      %v2686 = vsel %vm2618, %v2684, %v2685
      %v2687 = vrot.slane %v2549, 2
      %v2688 = vsel %vm2618, %v2685, %v2687
      %v2689 = vrot.slane %v2553, 2
      %v2690 = vrot.slane %v2555, 2
      %v2691 = vsel %vm2618, %v2689, %v2690
      %v2692 = vrot.slane %v2558, 2
      %v2693 = vsel %vm2618, %v2690, %v2692
      %v2694 = vrot.slane %v2562, 2
      %v2695 = vrot.slane %v2564, 2
      %v2696 = vsel %vm2618, %v2694, %v2695
      %v2697 = vrot.slane %v2567, 2
      %v2698 = vsel %vm2618, %v2695, %v2697
      %v2731 = vadd.f32 %v1886, %v2621
      %v2732 = vadd.f32 %v1887, %v2623
      %v2733 = vadd.f32 %v1888, %v2626
      %v2734 = vadd.f32 %v1889, %v2628
      %v2735 = vadd.f32 %v1890, %v2631
      %v2736 = vadd.f32 %v1891, %v2633
      %v2737 = vadd.f32 %v1892, %v2636
      %v2738 = vadd.f32 %v1893, %v2638
      %v2739 = vadd.f32 %v1894, %v2641
      %v2740 = vadd.f32 %v1895, %v2643
      %v2741 = vadd.f32 %v1896, %v2646
      %v2742 = vadd.f32 %v1897, %v2648
      %v2743 = vadd.f32 %v1898, %v2651
      %v2744 = vadd.f32 %v1899, %v2653
      %v2745 = vadd.f32 %v1900, %v2656
      %v2746 = vadd.f32 %v1901, %v2658
      %v2747 = vadd.f32 %v1902, %v2661
      %v2748 = vadd.f32 %v1903, %v2663
      %v2749 = vadd.f32 %v1904, %v2666
      %v2750 = vadd.f32 %v1905, %v2668
      %v2751 = vadd.f32 %v1906, %v2671
      %v2752 = vadd.f32 %v1907, %v2673
      %v2753 = vadd.f32 %v1908, %v2676
      %v2754 = vadd.f32 %v1909, %v2678
      %v2755 = vadd.f32 %v1910, %v2681
      %v2756 = vadd.f32 %v1911, %v2683
      %v2757 = vadd.f32 %v1912, %v2686
      %v2758 = vadd.f32 %v1913, %v2688
      %v2759 = vadd.f32 %v1914, %v2691
      %v2760 = vadd.f32 %v1915, %v2693
      %v2761 = vadd.f32 %v1916, %v2696
      %v2762 = vadd.f32 %v1917, %v2698
      %v2763 = vadd.f32 %v2731, %v2732
      %v2764 = vadd.f32 %v2763, %v2733
      %v2765 = vadd.f32 %v2764, %v2734
      %v2766 = vadd.f32 %v2765, %v2735
      %v2767 = vadd.f32 %v2766, %v2736
      %v2768 = vadd.f32 %v2767, %v2737
      %v2769 = vadd.f32 %v2768, %v2738
      %v2770 = vadd.f32 %v2769, %v2739
      %v2771 = vadd.f32 %v2770, %v2740
      %v2772 = vadd.f32 %v2771, %v2741
      %v2773 = vadd.f32 %v2772, %v2742
      %v2774 = vadd.f32 %v2773, %v2743
      %v2775 = vadd.f32 %v2774, %v2744
      %v2776 = vadd.f32 %v2775, %v2745
      %v2777 = vadd.f32 %v2776, %v2746
      %v2778 = vadd.f32 %v2777, %v2747
      %v2779 = vadd.f32 %v2778, %v2748
      %v2780 = vadd.f32 %v2779, %v2749
      %v2781 = vadd.f32 %v2780, %v2750
      %v2782 = vadd.f32 %v2781, %v2751
      %v2783 = vadd.f32 %v2782, %v2752
      %v2784 = vadd.f32 %v2783, %v2753
      %v2785 = vadd.f32 %v2784, %v2754
      %v2786 = vadd.f32 %v2785, %v2755
      %v2787 = vadd.f32 %v2786, %v2756
      %v2788 = vadd.f32 %v2787, %v2757
      %v2789 = vadd.f32 %v2788, %v2758
      %v2790 = vadd.f32 %v2789, %v2759
      %v2791 = vadd.f32 %v2790, %v2760
      %v2792 = vadd.f32 %v2791, %v2761
      %v2793 = vadd.f32 %v2792, %v2762
      %v2794 = vrot.slane %v2793, 4
      %v2795 = vadd.f32 %v2793, %v2794
      %v2796 = vrot.slane %v2795, 2
      %v2797 = vadd.f32 %v2795, %v2796
      %v2798 = vrot.slane %v2797, 1
      %v2799 = vadd.f32 %v2797, %v2798
      %v2800 = vmul.f32 %v2731, %v2731
      %v2801 = vmul.f32 %v2732, %v2732
      %v2802 = vmul.f32 %v2733, %v2733
      %v2803 = vmul.f32 %v2734, %v2734
      %v2804 = vmul.f32 %v2735, %v2735
      %v2805 = vmul.f32 %v2736, %v2736
      %v2806 = vmul.f32 %v2737, %v2737
      %v2807 = vmul.f32 %v2738, %v2738
      %v2808 = vmul.f32 %v2739, %v2739
      %v2809 = vmul.f32 %v2740, %v2740
      %v2810 = vmul.f32 %v2741, %v2741
      %v2811 = vmul.f32 %v2742, %v2742
      %v2812 = vmul.f32 %v2743, %v2743
      %v2813 = vmul.f32 %v2744, %v2744
      %v2814 = vmul.f32 %v2745, %v2745
      %v2815 = vmul.f32 %v2746, %v2746
      %v2816 = vmul.f32 %v2747, %v2747
      %v2817 = vmul.f32 %v2748, %v2748
      %v2818 = vmul.f32 %v2749, %v2749
      %v2819 = vmul.f32 %v2750, %v2750
      %v2820 = vmul.f32 %v2751, %v2751
      %v2821 = vmul.f32 %v2752, %v2752
      %v2822 = vmul.f32 %v2753, %v2753
      %v2823 = vmul.f32 %v2754, %v2754
      %v2824 = vmul.f32 %v2755, %v2755
      %v2825 = vmul.f32 %v2756, %v2756
      %v2826 = vmul.f32 %v2757, %v2757
      %v2827 = vmul.f32 %v2758, %v2758
      %v2828 = vmul.f32 %v2759, %v2759
      %v2829 = vmul.f32 %v2760, %v2760
      %v2830 = vmul.f32 %v2761, %v2761
      %v2831 = vmul.f32 %v2762, %v2762
      %v2832 = vadd.f32 %v2800, %v2801
      %v2833 = vadd.f32 %v2832, %v2802
      %v2834 = vadd.f32 %v2833, %v2803
      %v2835 = vadd.f32 %v2834, %v2804
      %v2836 = vadd.f32 %v2835, %v2805
      %v2837 = vadd.f32 %v2836, %v2806
      %v2838 = vadd.f32 %v2837, %v2807
      %v2839 = vadd.f32 %v2838, %v2808
      %v2840 = vadd.f32 %v2839, %v2809
      %v2841 = vadd.f32 %v2840, %v2810
      %v2842 = vadd.f32 %v2841, %v2811
      %v2843 = vadd.f32 %v2842, %v2812
      %v2844 = vadd.f32 %v2843, %v2813
      %v2845 = vadd.f32 %v2844, %v2814
      %v2846 = vadd.f32 %v2845, %v2815
      %v2847 = vadd.f32 %v2846, %v2816
      %v2848 = vadd.f32 %v2847, %v2817
      %v2849 = vadd.f32 %v2848, %v2818
      %v2850 = vadd.f32 %v2849, %v2819
      %v2851 = vadd.f32 %v2850, %v2820
      %v2852 = vadd.f32 %v2851, %v2821
      %v2853 = vadd.f32 %v2852, %v2822
      %v2854 = vadd.f32 %v2853, %v2823
      %v2855 = vadd.f32 %v2854, %v2824
      %v2856 = vadd.f32 %v2855, %v2825
      %v2857 = vadd.f32 %v2856, %v2826
      %v2858 = vadd.f32 %v2857, %v2827
      %v2859 = vadd.f32 %v2858, %v2828
      %v2860 = vadd.f32 %v2859, %v2829
      %v2861 = vadd.f32 %v2860, %v2830
      %v2862 = vadd.f32 %v2861, %v2831
      %v2863 = vrot.slane %v2862, 4
      %v2864 = vadd.f32 %v2862, %v2863
      %v2865 = vrot.slane %v2864, 2
      %v2866 = vadd.f32 %v2864, %v2865
      %v2867 = vrot.slane %v2866, 1
      %v2868 = vadd.f32 %v2866, %v2867
      %vm2869 = vcmask 1040384
      %v2870 = vsel %vm2869, %v2799, %v2868
      %2871 = vst [vmem:[%s181] sm:$0x3] %v2870
      %v2904 = vrot.slane %v2731, 7
      %v2905 = vrot.slane %v2732, 7
      %v2906 = vsel %vm2869, %v2904, %v2905
      %v2907 = vrot.slane %v2733, 7
      %v2908 = vrot.slane %v2734, 7
      %v2909 = vsel %vm2869, %v2907, %v2908
      %v2910 = vrot.slane %v2735, 7
      %v2911 = vrot.slane %v2736, 7
      %v2912 = vsel %vm2869, %v2910, %v2911
      %v2913 = vrot.slane %v2737, 7
      %v2914 = vrot.slane %v2738, 7
      %v2915 = vsel %vm2869, %v2913, %v2914
      %v2916 = vrot.slane %v2739, 7
      %v2917 = vrot.slane %v2740, 7
      %v2918 = vsel %vm2869, %v2916, %v2917
      %v2919 = vrot.slane %v2741, 7
      %v2920 = vrot.slane %v2742, 7
      %v2921 = vsel %vm2869, %v2919, %v2920
      %v2922 = vrot.slane %v2743, 7
      %v2923 = vrot.slane %v2744, 7
      %v2924 = vsel %vm2869, %v2922, %v2923
      %v2925 = vrot.slane %v2745, 7
      %v2926 = vrot.slane %v2746, 7
      %v2927 = vsel %vm2869, %v2925, %v2926
      %v2928 = vrot.slane %v2747, 7
      %v2929 = vrot.slane %v2748, 7
      %v2930 = vsel %vm2869, %v2928, %v2929
      %v2931 = vrot.slane %v2749, 7
      %v2932 = vrot.slane %v2750, 7
      %v2933 = vsel %vm2869, %v2931, %v2932
      %v2934 = vrot.slane %v2751, 7
      %v2935 = vrot.slane %v2752, 7
      %v2936 = vsel %vm2869, %v2934, %v2935
      %v2937 = vrot.slane %v2753, 7
      %v2938 = vrot.slane %v2754, 7
      %v2939 = vsel %vm2869, %v2937, %v2938
      %v2940 = vrot.slane %v2755, 7
      %v2941 = vrot.slane %v2756, 7
      %v2942 = vsel %vm2869, %v2940, %v2941
      %v2943 = vrot.slane %v2757, 7
      %v2944 = vrot.slane %v2758, 7
      %v2945 = vsel %vm2869, %v2943, %v2944
      %v2946 = vrot.slane %v2759, 7
      %v2947 = vrot.slane %v2760, 7
      %v2948 = vsel %vm2869, %v2946, %v2947
      %v2949 = vrot.slane %v2761, 7
      %v2950 = vrot.slane %v2762, 7
      %v2951 = vsel %vm2869, %v2949, %v2950
      %v3000 = vsel %vm2869, 0.0, %v2904
      %v3001 = vsel %vm2869, 0.0, %v2907
      %v3002 = vsel %vm2869, 0.0, %v2910
      %v3003 = vsel %vm2869, 0.0, %v2913
      %v3004 = vsel %vm2869, 0.0, %v2916
      %v3005 = vsel %vm2869, 0.0, %v2919
      %v3006 = vsel %vm2869, 0.0, %v2922
      %v3007 = vsel %vm2869, 0.0, %v2925
      %v3008 = vsel %vm2869, 0.0, %v2928
      %v3009 = vsel %vm2869, 0.0, %v2931
      %v3010 = vsel %vm2869, 0.0, %v2934
      %v3011 = vsel %vm2869, 0.0, %v2937
      %v3012 = vsel %vm2869, 0.0, %v2940
      %v3013 = vsel %vm2869, 0.0, %v2943
      %v3014 = vsel %vm2869, 0.0, %v2946
      %v3015 = vsel %vm2869, 0.0, %v2949
      %v3016 = vsel %vm2869, %v2905, 0.0
      %v3017 = vsel %vm2869, %v2908, 0.0
      %v3018 = vsel %vm2869, %v2911, 0.0
      %v3019 = vsel %vm2869, %v2914, 0.0
      %v3020 = vsel %vm2869, %v2917, 0.0
      %v3021 = vsel %vm2869, %v2920, 0.0
      %v3022 = vsel %vm2869, %v2923, 0.0
      %v3023 = vsel %vm2869, %v2926, 0.0
      %v3024 = vsel %vm2869, %v2929, 0.0
      %v3025 = vsel %vm2869, %v2932, 0.0
      %v3026 = vsel %vm2869, %v2935, 0.0
      %v3027 = vsel %vm2869, %v2938, 0.0
      %v3028 = vsel %vm2869, %v2941, 0.0
      %v3029 = vsel %vm2869, %v2944, 0.0
      %v3030 = vsel %vm2869, %v2947, 0.0
      %v3031 = vsel %vm2869, %v2950, 0.0
      %v3032 = vpack.c.bf16 0.0, 0.0
      %v3033 = vpack.c.bf16 %v3000, %v3000
      %v3034 = vpack.c.bf16 %v2906, %v2906
      %v3035 = vpack.c.bf16 %v3016, %v3016
      %v3036 = vpack.c.bf16 %v3001, %v3001
      %v3037 = vpack.c.bf16 %v2909, %v2909
      %v3038 = vpack.c.bf16 %v3017, %v3017
      %v3039 = vpack.c.bf16 %v3002, %v3002
      %v3040 = vpack.c.bf16 %v2912, %v2912
      %v3041 = vpack.c.bf16 %v3018, %v3018
      %v3042 = vpack.c.bf16 %v3003, %v3003
      %v3043 = vpack.c.bf16 %v2915, %v2915
      %v3044 = vpack.c.bf16 %v3019, %v3019
      %v3045 = vpack.c.bf16 %v3004, %v3004
      %v3046 = vpack.c.bf16 %v2918, %v2918
      %v3047 = vpack.c.bf16 %v3020, %v3020
      %v3048 = vpack.c.bf16 %v3005, %v3005
      %v3049 = vpack.c.bf16 %v2921, %v2921
      %v3050 = vpack.c.bf16 %v3021, %v3021
      %v3051 = vpack.c.bf16 %v3006, %v3006
      %v3052 = vpack.c.bf16 %v2924, %v2924
      %v3053 = vpack.c.bf16 %v3022, %v3022
      %v3054 = vpack.c.bf16 %v3007, %v3007
      %v3055 = vpack.c.bf16 %v2927, %v2927
      %v3056 = vpack.c.bf16 %v3023, %v3023
      %v3057 = vpack.c.bf16 %v3008, %v3008
      %v3058 = vpack.c.bf16 %v2930, %v2930
      %v3059 = vpack.c.bf16 %v3024, %v3024
      %v3060 = vpack.c.bf16 %v3009, %v3009
      %v3061 = vpack.c.bf16 %v2933, %v2933
      %v3062 = vpack.c.bf16 %v3025, %v3025
      %v3063 = vpack.c.bf16 %v3010, %v3010
      %v3064 = vpack.c.bf16 %v2936, %v2936
      %v3065 = vpack.c.bf16 %v3026, %v3026
      %v3066 = vpack.c.bf16 %v3011, %v3011
      %v3067 = vpack.c.bf16 %v2939, %v2939
      %v3068 = vpack.c.bf16 %v3027, %v3027
      %v3069 = vpack.c.bf16 %v3012, %v3012
      %v3070 = vpack.c.bf16 %v2942, %v2942
      %v3071 = vpack.c.bf16 %v3028, %v3028
      %v3072 = vpack.c.bf16 %v3013, %v3013
      %v3073 = vpack.c.bf16 %v2945, %v2945
      %v3074 = vpack.c.bf16 %v3029, %v3029
      %v3075 = vpack.c.bf16 %v3014, %v3014
      %v3076 = vpack.c.bf16 %v2948, %v2948
      %v3077 = vpack.c.bf16 %v3030, %v3030
      %v3078 = vpack.c.bf16 %v3015, %v3015
      %v3079 = vpack.c.bf16 %v2951, %v2951
      %v3080 = vpack.c.bf16 %v3031, %v3031
      %3081 = vst [vmem:[%s177] sm:$0xf] %v3032
      %3082 = vst [vmem:[%s177 + $0x4] sm:$0xf] %v3032
      %3083 = vst [vmem:[%s177 + $0x8] sm:$0xf] %v3032
      %3084 = vst [vmem:[%s177 + $0xc] sm:$0xf] %v3032
      %3085 = vst [vmem:[%s177 + $0x10] sm:$0xf] %v3033
      %3086 = vst [vmem:[%s177 + $0x14] sm:$0xf] %v3034
      %3087 = vst [vmem:[%s177 + $0x18] sm:$0xf] %v3035
      %3088 = vst [vmem:[%s177 + $0x1c] sm:$0xf] %v3032
      %3089 = vst [vmem:[%s177 + $0x20] sm:$0xf] %v3036
      %3090 = vst [vmem:[%s177 + $0x24] sm:$0xf] %v3037
      %3091 = vst [vmem:[%s177 + $0x28] sm:$0xf] %v3038
      %3092 = vst [vmem:[%s177 + $0x2c] sm:$0xf] %v3032
      %3093 = vst [vmem:[%s177 + $0x30] sm:$0xf] %v3039
      %3094 = vst [vmem:[%s177 + $0x34] sm:$0xf] %v3040
      %3095 = vst [vmem:[%s177 + $0x38] sm:$0xf] %v3041
      %3096 = vst [vmem:[%s177 + $0x3c] sm:$0xf] %v3032
      %3097 = vst [vmem:[%s177 + $0x40] sm:$0xf] %v3042
      %3098 = vst [vmem:[%s177 + $0x44] sm:$0xf] %v3043
      %3099 = vst [vmem:[%s177 + $0x48] sm:$0xf] %v3044
      %3100 = vst [vmem:[%s177 + $0x4c] sm:$0xf] %v3032
      %3101 = vst [vmem:[%s177 + $0x50] sm:$0xf] %v3045
      %3102 = vst [vmem:[%s177 + $0x54] sm:$0xf] %v3046
      %3103 = vst [vmem:[%s177 + $0x58] sm:$0xf] %v3047
      %3104 = vst [vmem:[%s177 + $0x5c] sm:$0xf] %v3032
      %3105 = vst [vmem:[%s177 + $0x60] sm:$0xf] %v3048
      %3106 = vst [vmem:[%s177 + $0x64] sm:$0xf] %v3049
      %3107 = vst [vmem:[%s177 + $0x68] sm:$0xf] %v3050
      %3108 = vst [vmem:[%s177 + $0x6c] sm:$0xf] %v3032
      %3109 = vst [vmem:[%s177 + $0x70] sm:$0xf] %v3051
      %3110 = vst [vmem:[%s177 + $0x74] sm:$0xf] %v3052
      %3111 = vst [vmem:[%s177 + $0x78] sm:$0xf] %v3053
      %3112 = vst [vmem:[%s177 + $0x7c] sm:$0xf] %v3032
      %3113 = vst [vmem:[%s177 + $0x80] sm:$0xf] %v3054
      %3114 = vst [vmem:[%s177 + $0x84] sm:$0xf] %v3055
      %3115 = vst [vmem:[%s177 + $0x88] sm:$0xf] %v3056
      %3116 = vst [vmem:[%s177 + $0x8c] sm:$0xf] %v3032
      %3117 = vst [vmem:[%s177 + $0x90] sm:$0xf] %v3057
      %3118 = vst [vmem:[%s177 + $0x94] sm:$0xf] %v3058
      %3119 = vst [vmem:[%s177 + $0x98] sm:$0xf] %v3059
      %3120 = vst [vmem:[%s177 + $0x9c] sm:$0xf] %v3032
      %3121 = vst [vmem:[%s177 + $0xa0] sm:$0xf] %v3060
      %3122 = vst [vmem:[%s177 + $0xa4] sm:$0xf] %v3061
      %3123 = vst [vmem:[%s177 + $0xa8] sm:$0xf] %v3062
      %3124 = vst [vmem:[%s177 + $0xac] sm:$0xf] %v3032
      %3125 = vst [vmem:[%s177 + $0xb0] sm:$0xf] %v3063
      %3126 = vst [vmem:[%s177 + $0xb4] sm:$0xf] %v3064
      %3127 = vst [vmem:[%s177 + $0xb8] sm:$0xf] %v3065
      %3128 = vst [vmem:[%s177 + $0xbc] sm:$0xf] %v3032
      %3129 = vst [vmem:[%s177 + $0xc0] sm:$0xf] %v3066
      %3130 = vst [vmem:[%s177 + $0xc4] sm:$0xf] %v3067
      %3131 = vst [vmem:[%s177 + $0xc8] sm:$0xf] %v3068
      %3132 = vst [vmem:[%s177 + $0xcc] sm:$0xf] %v3032
      %3133 = vst [vmem:[%s177 + $0xd0] sm:$0xf] %v3069
      %3134 = vst [vmem:[%s177 + $0xd4] sm:$0xf] %v3070
      %3135 = vst [vmem:[%s177 + $0xd8] sm:$0xf] %v3071
      %3136 = vst [vmem:[%s177 + $0xdc] sm:$0xf] %v3032
      %3137 = vst [vmem:[%s177 + $0xe0] sm:$0xf] %v3072
      %3138 = vst [vmem:[%s177 + $0xe4] sm:$0xf] %v3073
      %3139 = vst [vmem:[%s177 + $0xe8] sm:$0xf] %v3074
      %3140 = vst [vmem:[%s177 + $0xec] sm:$0xf] %v3032
      %3141 = vst [vmem:[%s177 + $0xf0] sm:$0xf] %v3075
      %3142 = vst [vmem:[%s177 + $0xf4] sm:$0xf] %v3076
      %3143 = vst [vmem:[%s177 + $0xf8] sm:$0xf] %v3077
      %3144 = vst [vmem:[%s177 + $0xfc] sm:$0xf] %v3032
      %3145 = vst [vmem:[%s177 + $0x100] sm:$0xf] %v3078
      %3146 = vst [vmem:[%s177 + $0x104] sm:$0xf] %v3079
      %3147 = vst [vmem:[%s177 + $0x108] sm:$0xf] %v3080
      %3148 = vst [vmem:[%s177 + $0x10c] sm:$0xf] %v3032
      %3149 = vst [vmem:[%s177 + $0x110] sm:$0xf] %v3032
      %3150 = vst [vmem:[%s177 + $0x114] sm:$0xf] %v3032
      %3151 = vst [vmem:[%s177 + $0x118] sm:$0xf] %v3032
      %3152 = vst [vmem:[%s177 + $0x11c] sm:$0xf] %v3032
      %p3153 = scmp.lt.s32.totalorder %s15, 1
      %s3154 = scalar_select %p3153, %s15, 1
      %s3155 = smul.addr %s3154, 72
      %s3156 = smul.addr %s3155, 4
      %s3157 = scalar_lea.vmem %s2, %s3156
      %p3158 = scmp.lt.s32.totalorder %s15, 1
      %s3159 = scalar_select %p3158, %s15, 1
      %s3160 = smul.addr %s3159, 2
      %s3161 = scalar_lea.vmem %s3, %s3160
      // Predicated region
      $region29: #{basic_block_forward.3} parent=27 // pred_check
        %p3162 = pneg %p80
      $region30: #{basic_block_forward.3} parent=27 // pred_check_branch
        %3164 = sbr.rel (%p3162) target = $region32
      $region31: #{basic_block_forward.3} parent=27 // pred_region
        _
      $region32: #{basic_block_forward.3} parent=27 // pred_fallthru
        _
      // Predicated region
      $region33: #{basic_block_forward.3} parent=27 // pred_check
        %p3165 = pneg %p106
      $region34: #{basic_block_forward.3} parent=27 // pred_check_branch
        %3167 = sbr.rel (%p3165) target = $region36
      $region35: #{basic_block_forward.3} parent=27 // pred_region
        _
      $region36: #{basic_block_forward.3} parent=27 // pred_fallthru
        _
    $region28: #{basic_block_forward.3} parent=5 // pred_fallthru
      _
    %p3168 = scmp.le.s32.totalorder 2, %s10
    // Predicated region
    $region37: #{basic_block_forward.3} parent=5 // pred_check
      %p3169 = pneg %p3168
    $region38: #{basic_block_forward.3} parent=5 // pred_check_branch
      %3171 = sbr.rel (%p3169) target = $region40
    $region39: #{basic_block_forward.3} parent=5 // pred_region
      %s3172 = ssub.s32 %s10, 2
      // Predicated region
      $region41: #{basic_block_forward.3} parent=39 // pred_check
        %p3173 = pneg %p86
      $region42: #{basic_block_forward.3} parent=39 // pred_check_branch
        %3175 = sbr.rel (%p3173) target = $region44
      $region43: #{basic_block_forward.3} parent=39 // pred_region
        %p3176 = scmp.lt.s32.totalorder %s16, 1
        %s3177 = scalar_select %p3176, %s16, 1
        %s3178 = smul.addr %s3177, 72
        %s3179 = smul.addr %s3178, 4
        %s3180 = scalar_lea.vmem %s2, %s3179
      $region44: #{basic_block_forward.3} parent=39 // pred_fallthru
        _
      // Predicated region
      $region45: #{basic_block_forward.3} parent=39 // pred_check
        %p3181 = pneg %p112
      $region46: #{basic_block_forward.3} parent=39 // pred_check_branch
        %3183 = sbr.rel (%p3181) target = $region48
      $region47: #{basic_block_forward.3} parent=39 // pred_region
        %p3184 = scmp.lt.s32.totalorder %s16, 1
        %s3185 = scalar_select %p3184, %s16, 1
        %s3186 = smul.addr %s3185, 2
        %s3187 = scalar_lea.vmem %s3, %s3186
      $region48: #{basic_block_forward.3} parent=39 // pred_fallthru
        _
    $region40: #{basic_block_forward.3} parent=5 // pred_fallthru
      _
  $region6: #{basic_block_forward.3} parent=0 // loop_footer
    %s14 = sadd.s32 1, %s10
  $region7: #{basic_block_forward.3} parent=0 // loop_footer_branch
    %9 = sbr.rel target = $region3
  $region8: #{basic_block_forward.3} parent=0 // loop_exit
    _

// kernel: basic_block_forward.4
$region0: #{basic_block_forward.4}
  #allocation0 [shape = 'u32[]', space=smem, size = 0x4, offset = 0x4, fixed_abs, tag = 'smem constant byte address 0x4 - core index']
  #allocation1 [shape = 'u32[72,128]{1,0:T(1,128)}', space=vmem, size = 0x9000, scoped, tag = 'internal scratch']
  %s0 = inlined_call_operand.vmem [shape: bf16[2,18,32,128], index: 0, kind: input, shape index: {}]
  %s1 = inlined_call_operand.vmem [shape: bf16[3,384,128], index: 1, kind: input, shape index: {}]
  %s2 = inlined_call_operand.vmem [shape: f32[1,128], index: 2, kind: input, shape index: {}]
  %s3 = inlined_call_operand.vmem [shape: f32[1,128], index: 3, kind: input, shape index: {}]
  %s4 = inlined_call_operand.vmem [shape: bf16[2,16,16,128], index: 4, kind: output, shape index: {0}]
  %s5 = inlined_call_operand.vmem [shape: f32[2,2,128], index: 5, kind: output, shape index: {1}]
  %6 = xla_tuple %s4, %s5
  %s7 = sld [smem:[#allocation0]]
  $region57: #{basic_block_forward.4} parent=0
    _
  %s9 = ssub.s32 1, %s7
  %s10 = scalar_select 0, %s9, %s7
  loop: start=0, step=1, limit=4
  $region2: #{basic_block_forward.4} parent=0 // loop_pre_header
    _
  $region3: #{basic_block_forward.4} parent=0 // loop_header
    %s12 = sphi 0, %s16
    %p13 = scmp.ge.s32.totalorder %s12, 4
    %s22 = sphi 0, %s24
    %s25 = sphi 0, %s22
    %s26 = sphi 0, %s25
    %s42 = sphi 0, %s26
    %s46 = sphi 0, %s46
    %s48 = sphi 0, %s46
    %s49 = sphi 0, %s48
    %s63 = sphi 0, %s49
    %s67 = sphi 0, %s67
    %s69 = sphi 0, %s67
    %s70 = sphi 0, %s69
    %s84 = sphi 0, %s70
    %s88 = sphi 0, %s88
    %s90 = sphi 0, %s88
    %s91 = sphi 0, %s90
    %s105 = sphi 0, %s91
    %s111 = sphi 0, %s113
    %s114 = sphi 0, %s111
    %s115 = sphi 0, %s114
    %s131 = sphi 0, %s115
    %s137 = sphi 0, %s139
    %s140 = sphi 0, %s137
    %s141 = sphi 0, %s140
    %s157 = sphi 0, %s141
  $region4: #{basic_block_forward.4} parent=0 // loop_header_branch
    %15 = sbr.rel (%p13) target = $region8
  $region5: #{basic_block_forward.4} parent=0 // loop_body
    %s17 = ssub.s32 %s12, 1
    %s18 = ssub.s32 %s12, 2
    %s19 = sadd.s32 %s12, 1
    %s20 = ssub.s32 %s12, %s19
    %p21 = scmp.eq.s32.totalorder %s20, 0
    %s23 = sadd.s32 %s22, 1
    %s24 = scalar_select %p21, %s22, %s23
    %p27 = pneg %p21
    %p28 = scmp.eq.s32.totalorder %s12, 1
    %p29 = por %p27, %p28
    %p30 = scmp.ne.s32.totalorder %s22, %s25
    %p31 = scmp.eq.s32.totalorder %s12, 0
    %p32 = por %p30, %p31
    %p33 = scmp.ne.s32.totalorder %s22, %s25
    %p34 = scmp.eq.s32.totalorder %s17, 1
    %p35 = por %p33, %p34
    %p36 = scmp.ne.s32.totalorder %s25, %s26
    %p37 = scmp.eq.s32.totalorder %s17, 0
    %p38 = por %p36, %p37
    %p39 = scmp.ne.s32.totalorder %s25, %s26
    %p40 = scmp.eq.s32.totalorder %s18, 1
    %p41 = por %p39, %p40
    %p43 = scmp.ne.s32.totalorder %s26, %s42
    %p44 = scmp.eq.s32.totalorder %s18, 0
    %p45 = por %p43, %p44
    %s47 = sadd.s32 %s46, 1
    %p50 = scmp.eq.s32.totalorder %s12, 1
    %p51 = scmp.ne.s32.totalorder %s46, %s48
    %p52 = scmp.eq.s32.totalorder %s12, 0
    %p53 = por %p51, %p52
    %p54 = scmp.ne.s32.totalorder %s46, %s48
    %p55 = scmp.eq.s32.totalorder %s17, 1
    %p56 = por %p54, %p55
    %p57 = scmp.ne.s32.totalorder %s48, %s49
    %p58 = scmp.eq.s32.totalorder %s17, 0
    %p59 = por %p57, %p58
    %p60 = scmp.ne.s32.totalorder %s48, %s49
    %p61 = scmp.eq.s32.totalorder %s18, 1
    %p62 = por %p60, %p61
    %p64 = scmp.ne.s32.totalorder %s49, %s63
    %p65 = scmp.eq.s32.totalorder %s18, 0
    %p66 = por %p64, %p65
    %s68 = sadd.s32 %s67, 1
    %p71 = scmp.eq.s32.totalorder %s12, 1
    %p72 = scmp.ne.s32.totalorder %s67, %s69
    %p73 = scmp.eq.s32.totalorder %s12, 0
    %p74 = por %p72, %p73
    %p75 = scmp.ne.s32.totalorder %s67, %s69
    %p76 = scmp.eq.s32.totalorder %s17, 1
    %p77 = por %p75, %p76
    %p78 = scmp.ne.s32.totalorder %s69, %s70
    %p79 = scmp.eq.s32.totalorder %s17, 0
    %p80 = por %p78, %p79
    %p81 = scmp.ne.s32.totalorder %s69, %s70
    %p82 = scmp.eq.s32.totalorder %s18, 1
    %p83 = por %p81, %p82
    %p85 = scmp.ne.s32.totalorder %s70, %s84
    %p86 = scmp.eq.s32.totalorder %s18, 0
    %p87 = por %p85, %p86
    %s89 = sadd.s32 %s88, 1
    %p92 = scmp.eq.s32.totalorder %s12, 1
    %p93 = scmp.ne.s32.totalorder %s88, %s90
    %p94 = scmp.eq.s32.totalorder %s12, 0
    %p95 = por %p93, %p94
    %p96 = scmp.ne.s32.totalorder %s88, %s90
    %p97 = scmp.eq.s32.totalorder %s17, 1
    %p98 = por %p96, %p97
    %p99 = scmp.ne.s32.totalorder %s90, %s91
    %p100 = scmp.eq.s32.totalorder %s17, 0
    %p101 = por %p99, %p100
    %p102 = scmp.ne.s32.totalorder %s90, %s91
    %p103 = scmp.eq.s32.totalorder %s18, 1
    %p104 = por %p102, %p103
    %p106 = scmp.ne.s32.totalorder %s91, %s105
    %p107 = scmp.eq.s32.totalorder %s18, 0
    %p108 = por %p106, %p107
    %s109 = ssub.s32 %s12, %s19
    %p110 = scmp.eq.s32.totalorder %s109, 0
    %s112 = sadd.s32 %s111, 1
    %s113 = scalar_select %p110, %s111, %s112
    %p116 = pneg %p110
    %p117 = scmp.eq.s32.totalorder %s12, 1
    %p118 = por %p116, %p117
    %p119 = scmp.ne.s32.totalorder %s111, %s114
    %p120 = scmp.eq.s32.totalorder %s12, 0
    %p121 = por %p119, %p120
    %p122 = scmp.ne.s32.totalorder %s111, %s114
    %p123 = scmp.eq.s32.totalorder %s17, 1
    %p124 = por %p122, %p123
    %p125 = scmp.ne.s32.totalorder %s114, %s115
    %p126 = scmp.eq.s32.totalorder %s17, 0
    %p127 = por %p125, %p126
    %p128 = scmp.ne.s32.totalorder %s114, %s115
    %p129 = scmp.eq.s32.totalorder %s18, 1
    %p130 = por %p128, %p129
    %p132 = scmp.ne.s32.totalorder %s115, %s131
    %p133 = scmp.eq.s32.totalorder %s18, 0
    %p134 = por %p132, %p133
    %s135 = ssub.s32 %s12, %s19
    %p136 = scmp.eq.s32.totalorder %s135, 0
    %s138 = sadd.s32 %s137, 1
    %s139 = scalar_select %p136, %s137, %s138
    %p142 = pneg %p136
    %p143 = scmp.eq.s32.totalorder %s12, 1
    %p144 = por %p142, %p143
    %p145 = scmp.ne.s32.totalorder %s137, %s140
    %p146 = scmp.eq.s32.totalorder %s12, 0
    %p147 = por %p145, %p146
    %p148 = scmp.ne.s32.totalorder %s137, %s140
    %p149 = scmp.eq.s32.totalorder %s17, 1
    %p150 = por %p148, %p149
    %p151 = scmp.ne.s32.totalorder %s140, %s141
    %p152 = scmp.eq.s32.totalorder %s17, 0
    %p153 = por %p151, %p152
    %p154 = scmp.ne.s32.totalorder %s140, %s141
    %p155 = scmp.eq.s32.totalorder %s18, 1
    %p156 = por %p154, %p155
    %p158 = scmp.ne.s32.totalorder %s141, %s157
    %p159 = scmp.eq.s32.totalorder %s18, 0
    %p160 = por %p158, %p159
    %p161 = scmp.le.s32.totalorder 1, %s12
    %p162 = scmp.lt.s32.totalorder %s12, 3
    %p163 = pnand %p161, %p162
    %p164 = pneg %p163
    // Predicated region
    $region9: #{basic_block_forward.4} parent=5 // pred_check
      _
    $region10: #{basic_block_forward.4} parent=5 // pred_check_branch
      %166 = sbr.rel (%p163) target = $region12
    $region11: #{basic_block_forward.4} parent=5 // pred_region
      %s167 = ssub.s32 %s12, 1
      // Predicated region
      $region13: #{basic_block_forward.4} parent=11 // pred_check
        %p168 = pneg %p59
      $region14: #{basic_block_forward.4} parent=11 // pred_check_branch
        %170 = sbr.rel (%p168) target = $region16
      $region15: #{basic_block_forward.4} parent=11 // pred_region
        _
      $region16: #{basic_block_forward.4} parent=11 // pred_fallthru
        _
      // Predicated region
      $region17: #{basic_block_forward.4} parent=11 // pred_check
        %p171 = pneg %p80
      $region18: #{basic_block_forward.4} parent=11 // pred_check_branch
        %173 = sbr.rel (%p171) target = $region20
      $region19: #{basic_block_forward.4} parent=11 // pred_region
        _
      $region20: #{basic_block_forward.4} parent=11 // pred_fallthru
        _
      // Predicated region
      $region21: #{basic_block_forward.4} parent=11 // pred_check
        %p174 = pneg %p101
      $region22: #{basic_block_forward.4} parent=11 // pred_check_branch
        %176 = sbr.rel (%p174) target = $region24
      $region23: #{basic_block_forward.4} parent=11 // pred_region
        _
      $region24: #{basic_block_forward.4} parent=11 // pred_fallthru
        _
    $region12: #{basic_block_forward.4} parent=5 // pred_fallthru
      _
    %p177 = scmp.lt.s32.totalorder %s12, 2
    // Predicated region
    $region25: #{basic_block_forward.4} parent=5 // pred_check
      %p178 = pneg %p177
    $region26: #{basic_block_forward.4} parent=5 // pred_check_branch
      %180 = sbr.rel (%p178) target = $region28
    $region27: #{basic_block_forward.4} parent=5 // pred_region
      // Predicated region
      $region29: #{basic_block_forward.4} parent=27 // pred_check
        %p181 = pneg %p32
      $region30: #{basic_block_forward.4} parent=27 // pred_check_branch
        %183 = sbr.rel (%p181) target = $region32
      $region31: #{basic_block_forward.4} parent=27 // pred_region
        %p184 = scmp.lt.s32.totalorder %s12, 1
        %s185 = scalar_select %p184, %s12, 1
        %s186 = smul.addr %s185, 72
        %s187 = smul.addr %s186, 4
        %s188 = scalar_lea.vmem %s0, %s187
      $region32: #{basic_block_forward.4} parent=27 // pred_fallthru
        _
    $region28: #{basic_block_forward.4} parent=5 // pred_fallthru
      _
    %p189 = scmp.le.s32.totalorder 1, %s12
    %p190 = scmp.lt.s32.totalorder %s12, 3
    %p191 = pnand %p189, %p190
    %p192 = pneg %p191
    // Predicated region
    $region33: #{basic_block_forward.4} parent=5 // pred_check
      _
    $region34: #{basic_block_forward.4} parent=5 // pred_check_branch
      %194 = sbr.rel (%p191) target = $region36
    $region35: #{basic_block_forward.4} parent=5 // pred_region
      %s195 = ssub.s32 %s12, 1
      %p196 = scmp.lt.s32.totalorder %s17, 1
      %s197 = scalar_select %p196, %s17, 1
      %s198 = smul.addr %s197, 72
      %s199 = smul.addr %s198, 4
      %s200 = scalar_lea.vmem %s0, %s199
      %p201 = pneg %p38
      %p202 = pneg %p35
      %p203 = pneg %p59
      %p204 = pneg %p56
      %p205 = pneg %p80
      %p206 = pneg %p77
      %p207 = pneg %p101
      %p208 = pneg %p98
      %p209 = pneg %p127
      %p210 = pneg %p124
      %p211 = scmp.lt.s32.totalorder %s17, 1
      %s212 = scalar_select %p211, %s17, 1
      %s213 = smul.addr %s212, 32
      %s214 = smul.addr %s213, 4
      %s215 = scalar_lea.vmem %s4, %s214
      %p216 = pneg %p153
      %p217 = pneg %p150
      %p218 = scmp.lt.s32.totalorder %s17, 1
      %s219 = scalar_select %p218, %s17, 1
      %s220 = smul.addr %s219, 2
      %s221 = scalar_lea.vmem %s5, %s220
      %p222 = scmp.lt.s32.totalorder %s17, 1
      %s223 = scalar_select %p222, %s17, 1
      %s224 = smul.addr %s223, 72
      %s225 = smul.addr %s224, 4
      %s226 = scalar_lea.vmem %s0, %s225
      %p227 = scmp.lt.s32.totalorder %s17, 1
      %s228 = scalar_select %p227, %s17, 1
      %s229 = smul.addr %s228, 32
      %s230 = smul.addr %s229, 4
      %s231 = scalar_lea.vmem %s4, %s230
      %p232 = scmp.lt.s32.totalorder %s17, 1
      %s233 = scalar_select %p232, %s17, 1
      %s234 = smul.addr %s233, 2
      %s235 = scalar_lea.vmem %s5, %s234
      %v236 = vld [vmem:[%s226] sm:$0xf]
      %v237 = vld [vmem:[%s226 + $0x4] sm:$0xf]
      %v238 = vld [vmem:[%s226 + $0x8] sm:$0xf]
      %v239 = vld [vmem:[%s226 + $0xc] sm:$0xf]
      %v240 = vld [vmem:[%s226 + $0x10] sm:$0xf]
      %v241 = vld [vmem:[%s226 + $0x14] sm:$0xf]
      %v242 = vld [vmem:[%s226 + $0x18] sm:$0xf]
      %v243 = vld [vmem:[%s226 + $0x1c] sm:$0xf]
      %v244 = vld [vmem:[%s226 + $0x20] sm:$0xf]
      %v245 = vld [vmem:[%s226 + $0x24] sm:$0xf]
      %v246 = vld [vmem:[%s226 + $0x28] sm:$0xf]
      %v247 = vld [vmem:[%s226 + $0x2c] sm:$0xf]
      %v248 = vld [vmem:[%s226 + $0x30] sm:$0xf]
      %v249 = vld [vmem:[%s226 + $0x34] sm:$0xf]
      %v250 = vld [vmem:[%s226 + $0x38] sm:$0xf]
      %v251 = vld [vmem:[%s226 + $0x3c] sm:$0xf]
      %v252 = vld [vmem:[%s226 + $0x40] sm:$0xf]
      %v253 = vld [vmem:[%s226 + $0x44] sm:$0xf]
      %v254 = vld [vmem:[%s226 + $0x48] sm:$0xf]
      %v255 = vld [vmem:[%s226 + $0x4c] sm:$0xf]
      %v256 = vld [vmem:[%s226 + $0x50] sm:$0xf]
      %v257 = vld [vmem:[%s226 + $0x54] sm:$0xf]
      %v258 = vld [vmem:[%s226 + $0x58] sm:$0xf]
      %v259 = vld [vmem:[%s226 + $0x5c] sm:$0xf]
      %v260 = vld [vmem:[%s226 + $0x60] sm:$0xf]
      %v261 = vld [vmem:[%s226 + $0x64] sm:$0xf]
      %v262 = vld [vmem:[%s226 + $0x68] sm:$0xf]
      %v263 = vld [vmem:[%s226 + $0x6c] sm:$0xf]
      %v264 = vld [vmem:[%s226 + $0x70] sm:$0xf]
      %v265 = vld [vmem:[%s226 + $0x74] sm:$0xf]
      %v266 = vld [vmem:[%s226 + $0x78] sm:$0xf]
      %v267 = vld [vmem:[%s226 + $0x7c] sm:$0xf]
      %v268 = vld [vmem:[%s226 + $0x80] sm:$0xf]
      %v269 = vld [vmem:[%s226 + $0x84] sm:$0xf]
      %v270 = vld [vmem:[%s226 + $0x88] sm:$0xf]
      %v271 = vld [vmem:[%s226 + $0x8c] sm:$0xf]
      %v272 = vld [vmem:[%s226 + $0x90] sm:$0xf]
      %v273 = vld [vmem:[%s226 + $0x94] sm:$0xf]
      %v274 = vld [vmem:[%s226 + $0x98] sm:$0xf]
      %v275 = vld [vmem:[%s226 + $0x9c] sm:$0xf]
      %v276 = vld [vmem:[%s226 + $0xa0] sm:$0xf]
      %v277 = vld [vmem:[%s226 + $0xa4] sm:$0xf]
      %v278 = vld [vmem:[%s226 + $0xa8] sm:$0xf]
      %v279 = vld [vmem:[%s226 + $0xac] sm:$0xf]
      %v280 = vld [vmem:[%s226 + $0xb0] sm:$0xf]
      %v281 = vld [vmem:[%s226 + $0xb4] sm:$0xf]
      %v282 = vld [vmem:[%s226 + $0xb8] sm:$0xf]
      %v283 = vld [vmem:[%s226 + $0xbc] sm:$0xf]
      %v284 = vld [vmem:[%s226 + $0xc0] sm:$0xf]
      %v285 = vld [vmem:[%s226 + $0xc4] sm:$0xf]
      %v286 = vld [vmem:[%s226 + $0xc8] sm:$0xf]
      %v287 = vld [vmem:[%s226 + $0xcc] sm:$0xf]
      %v288 = vld [vmem:[%s226 + $0xd0] sm:$0xf]
      %v289 = vld [vmem:[%s226 + $0xd4] sm:$0xf]
      %v290 = vld [vmem:[%s226 + $0xd8] sm:$0xf]
      %v291 = vld [vmem:[%s226 + $0xdc] sm:$0xf]
      %v292 = vld [vmem:[%s226 + $0xe0] sm:$0xf]
      %v293 = vld [vmem:[%s226 + $0xe4] sm:$0xf]
      %v294 = vld [vmem:[%s226 + $0xe8] sm:$0xf]
      %v295 = vld [vmem:[%s226 + $0xec] sm:$0xf]
      %v296 = vld [vmem:[%s226 + $0xf0] sm:$0xf]
      %v297 = vld [vmem:[%s226 + $0xf4] sm:$0xf]
      %v298 = vld [vmem:[%s226 + $0xf8] sm:$0xf]
      %v299 = vld [vmem:[%s226 + $0xfc] sm:$0xf]
      %v300 = vld [vmem:[%s226 + $0x100] sm:$0xf]
      %v301 = vld [vmem:[%s226 + $0x104] sm:$0xf]
      %v302 = vld [vmem:[%s226 + $0x108] sm:$0xf]
      %v303 = vld [vmem:[%s226 + $0x10c] sm:$0xf]
      %v304 = vld [vmem:[%s226 + $0x110] sm:$0xf]
      %v305 = vld [vmem:[%s226 + $0x114] sm:$0xf]
      %v306 = vld [vmem:[%s226 + $0x118] sm:$0xf]
      %v307 = vld [vmem:[%s226 + $0x11c] sm:$0xf]
      %v308 = vunpack.c.l.bf16 %v236
      %v309 = vunpack.c.l.bf16 %v237
      %v310 = vunpack.c.l.bf16 %v238
      %v311 = vunpack.c.l.bf16 %v239
      %v312 = vunpack.c.l.bf16 %v240
      %v313 = vunpack.c.l.bf16 %v241
      %v314 = vunpack.c.l.bf16 %v242
      %v315 = vunpack.c.l.bf16 %v243
      %v316 = vunpack.c.l.bf16 %v244
      %v317 = vunpack.c.l.bf16 %v245
      %v318 = vunpack.c.l.bf16 %v246
      %v319 = vunpack.c.l.bf16 %v247
      %v320 = vunpack.c.l.bf16 %v248
      %v321 = vunpack.c.l.bf16 %v249
      %v322 = vunpack.c.l.bf16 %v250
      %v323 = vunpack.c.l.bf16 %v251
      %v324 = vunpack.c.l.bf16 %v252
      %v325 = vunpack.c.l.bf16 %v253
      %v326 = vunpack.c.l.bf16 %v254
      %v327 = vunpack.c.l.bf16 %v255
      %v328 = vunpack.c.l.bf16 %v256
      %v329 = vunpack.c.l.bf16 %v257
      %v330 = vunpack.c.l.bf16 %v258
      %v331 = vunpack.c.l.bf16 %v259
      %v332 = vunpack.c.l.bf16 %v260
      %v333 = vunpack.c.l.bf16 %v261
      %v334 = vunpack.c.l.bf16 %v262
      %v335 = vunpack.c.l.bf16 %v263
      %v336 = vunpack.c.l.bf16 %v264
      %v337 = vunpack.c.l.bf16 %v265
      %v338 = vunpack.c.l.bf16 %v266
      %v339 = vunpack.c.l.bf16 %v267
      %v340 = vunpack.c.l.bf16 %v268
      %v341 = vunpack.c.l.bf16 %v269
      %v342 = vunpack.c.l.bf16 %v270
      %v343 = vunpack.c.l.bf16 %v271
      %v344 = vunpack.c.l.bf16 %v272
      %v345 = vunpack.c.l.bf16 %v273
      %v346 = vunpack.c.l.bf16 %v274
      %v347 = vunpack.c.l.bf16 %v275
      %v348 = vunpack.c.l.bf16 %v276
      %v349 = vunpack.c.l.bf16 %v277
      %v350 = vunpack.c.l.bf16 %v278
      %v351 = vunpack.c.l.bf16 %v279
      %v352 = vunpack.c.l.bf16 %v280
      %v353 = vunpack.c.l.bf16 %v281
      %v354 = vunpack.c.l.bf16 %v282
      %v355 = vunpack.c.l.bf16 %v283
      %v356 = vunpack.c.l.bf16 %v284
      %v357 = vunpack.c.l.bf16 %v285
      %v358 = vunpack.c.l.bf16 %v286
      %v359 = vunpack.c.l.bf16 %v287
      %v360 = vunpack.c.l.bf16 %v288
      %v361 = vunpack.c.l.bf16 %v289
      %v362 = vunpack.c.l.bf16 %v290
      %v363 = vunpack.c.l.bf16 %v291
      %v364 = vunpack.c.l.bf16 %v292
      %v365 = vunpack.c.l.bf16 %v293
      %v366 = vunpack.c.l.bf16 %v294
      %v367 = vunpack.c.l.bf16 %v295
      %v368 = vunpack.c.l.bf16 %v296
      %v369 = vunpack.c.l.bf16 %v297
      %v370 = vunpack.c.l.bf16 %v298
      %v371 = vunpack.c.l.bf16 %v299
      %v372 = vunpack.c.l.bf16 %v300
      %v373 = vunpack.c.l.bf16 %v301
      %v374 = vunpack.c.l.bf16 %v302
      %v375 = vunpack.c.l.bf16 %v303
      %v376 = vunpack.c.l.bf16 %v304
      %v377 = vunpack.c.l.bf16 %v305
      %v378 = vunpack.c.l.bf16 %v306
      %v379 = vunpack.c.l.bf16 %v307
      %v380 = vld [vmem:[%s2] sm:$0x1]
      %v381 = vld [vmem:[%s3] sm:$0x1]
      %v383 = vperm.slane %v380, 0
      %v385 = vmul.f32 %v308, %v383
      %v386 = vmul.f32 %v309, %v383
      %v387 = vmul.f32 %v310, %v383
      %v388 = vmul.f32 %v311, %v383
      %v389 = vmul.f32 %v312, %v383
      %v390 = vmul.f32 %v313, %v383
      %v391 = vmul.f32 %v314, %v383
      %v392 = vmul.f32 %v315, %v383
      %v393 = vmul.f32 %v316, %v383
      %v394 = vmul.f32 %v317, %v383
      %v395 = vmul.f32 %v318, %v383
      %v396 = vmul.f32 %v319, %v383
      %v397 = vmul.f32 %v320, %v383
      %v398 = vmul.f32 %v321, %v383
      %v399 = vmul.f32 %v322, %v383
      %v400 = vmul.f32 %v323, %v383
      %v401 = vmul.f32 %v324, %v383
      %v402 = vmul.f32 %v325, %v383
      %v403 = vmul.f32 %v326, %v383
      %v404 = vmul.f32 %v327, %v383
      %v405 = vmul.f32 %v328, %v383
      %v406 = vmul.f32 %v329, %v383
      %v407 = vmul.f32 %v330, %v383
      %v408 = vmul.f32 %v331, %v383
      %v409 = vmul.f32 %v332, %v383
      %v410 = vmul.f32 %v333, %v383
      %v411 = vmul.f32 %v334, %v383
      %v412 = vmul.f32 %v335, %v383
      %v413 = vmul.f32 %v336, %v383
      %v414 = vmul.f32 %v337, %v383
      %v415 = vmul.f32 %v338, %v383
      %v416 = vmul.f32 %v339, %v383
      %v417 = vmul.f32 %v340, %v383
      %v418 = vmul.f32 %v341, %v383
      %v419 = vmul.f32 %v342, %v383
      %v420 = vmul.f32 %v343, %v383
      %v421 = vmul.f32 %v344, %v383
      %v422 = vmul.f32 %v345, %v383
      %v423 = vmul.f32 %v346, %v383
      %v424 = vmul.f32 %v347, %v383
      %v425 = vmul.f32 %v348, %v383
      %v426 = vmul.f32 %v349, %v383
      %v427 = vmul.f32 %v350, %v383
      %v428 = vmul.f32 %v351, %v383
      %v429 = vmul.f32 %v352, %v383
      %v430 = vmul.f32 %v353, %v383
      %v431 = vmul.f32 %v354, %v383
      %v432 = vmul.f32 %v355, %v383
      %v433 = vmul.f32 %v356, %v383
      %v434 = vmul.f32 %v357, %v383
      %v435 = vmul.f32 %v358, %v383
      %v436 = vmul.f32 %v359, %v383
      %v437 = vmul.f32 %v360, %v383
      %v438 = vmul.f32 %v361, %v383
      %v439 = vmul.f32 %v362, %v383
      %v440 = vmul.f32 %v363, %v383
      %v441 = vmul.f32 %v364, %v383
      %v442 = vmul.f32 %v365, %v383
      %v443 = vmul.f32 %v366, %v383
      %v444 = vmul.f32 %v367, %v383
      %v445 = vmul.f32 %v368, %v383
      %v446 = vmul.f32 %v369, %v383
      %v447 = vmul.f32 %v370, %v383
      %v448 = vmul.f32 %v371, %v383
      %v449 = vmul.f32 %v372, %v383
      %v450 = vmul.f32 %v373, %v383
      %v451 = vmul.f32 %v374, %v383
      %v452 = vmul.f32 %v375, %v383
      %v453 = vmul.f32 %v376, %v383
      %v454 = vmul.f32 %v377, %v383
      %v455 = vmul.f32 %v378, %v383
      %v456 = vmul.f32 %v379, %v383
      %v458 = vperm.slane %v381, 0
      %v460 = vadd.f32 %v385, %v458
      %v461 = vadd.f32 %v386, %v458
      %v462 = vadd.f32 %v387, %v458
      %v463 = vadd.f32 %v388, %v458
      %v464 = vadd.f32 %v389, %v458
      %v465 = vadd.f32 %v390, %v458
      %v466 = vadd.f32 %v391, %v458
      %v467 = vadd.f32 %v392, %v458
      %v468 = vadd.f32 %v393, %v458
      %v469 = vadd.f32 %v394, %v458
      %v470 = vadd.f32 %v395, %v458
      %v471 = vadd.f32 %v396, %v458
      %v472 = vadd.f32 %v397, %v458
      %v473 = vadd.f32 %v398, %v458
      %v474 = vadd.f32 %v399, %v458
      %v475 = vadd.f32 %v400, %v458
      %v476 = vadd.f32 %v401, %v458
      %v477 = vadd.f32 %v402, %v458
      %v478 = vadd.f32 %v403, %v458
      %v479 = vadd.f32 %v404, %v458
      %v480 = vadd.f32 %v405, %v458
      %v481 = vadd.f32 %v406, %v458
      %v482 = vadd.f32 %v407, %v458
      %v483 = vadd.f32 %v408, %v458
      %v484 = vadd.f32 %v409, %v458
      %v485 = vadd.f32 %v410, %v458
      %v486 = vadd.f32 %v411, %v458
      %v487 = vadd.f32 %v412, %v458
      %v488 = vadd.f32 %v413, %v458
      %v489 = vadd.f32 %v414, %v458
      %v490 = vadd.f32 %v415, %v458
      %v491 = vadd.f32 %v416, %v458
      %v492 = vadd.f32 %v417, %v458
      %v493 = vadd.f32 %v418, %v458
      %v494 = vadd.f32 %v419, %v458
      %v495 = vadd.f32 %v420, %v458
      %v496 = vadd.f32 %v421, %v458
      %v497 = vadd.f32 %v422, %v458
      %v498 = vadd.f32 %v423, %v458
      %v499 = vadd.f32 %v424, %v458
      %v500 = vadd.f32 %v425, %v458
      %v501 = vadd.f32 %v426, %v458
      %v502 = vadd.f32 %v427, %v458
      %v503 = vadd.f32 %v428, %v458
      %v504 = vadd.f32 %v429, %v458
      %v505 = vadd.f32 %v430, %v458
      %v506 = vadd.f32 %v431, %v458
      %v507 = vadd.f32 %v432, %v458
      %v508 = vadd.f32 %v433, %v458
      %v509 = vadd.f32 %v434, %v458
      %v510 = vadd.f32 %v435, %v458
      %v511 = vadd.f32 %v436, %v458
      %v512 = vadd.f32 %v437, %v458
      %v513 = vadd.f32 %v438, %v458
      %v514 = vadd.f32 %v439, %v458
      %v515 = vadd.f32 %v440, %v458
      %v516 = vadd.f32 %v441, %v458
      %v517 = vadd.f32 %v442, %v458
      %v518 = vadd.f32 %v443, %v458
      %v519 = vadd.f32 %v444, %v458
      %v520 = vadd.f32 %v445, %v458
      %v521 = vadd.f32 %v446, %v458
      %v522 = vadd.f32 %v447, %v458
      %v523 = vadd.f32 %v448, %v458
      %v524 = vadd.f32 %v449, %v458
      %v525 = vadd.f32 %v450, %v458
      %v526 = vadd.f32 %v451, %v458
      %v527 = vadd.f32 %v452, %v458
      %v528 = vadd.f32 %v453, %v458
      %v529 = vadd.f32 %v454, %v458
      %v530 = vadd.f32 %v455, %v458
      %v531 = vadd.f32 %v456, %v458
      %v532 = vmax.f32 %v460, 0.0
      %v533 = vmax.f32 %v461, 0.0
      %v534 = vmax.f32 %v462, 0.0
      %v535 = vmax.f32 %v463, 0.0
      %v536 = vmax.f32 %v464, 0.0
      %v537 = vmax.f32 %v465, 0.0
      %v538 = vmax.f32 %v466, 0.0
      %v539 = vmax.f32 %v467, 0.0
      %v540 = vmax.f32 %v468, 0.0
      %v541 = vmax.f32 %v469, 0.0
      %v542 = vmax.f32 %v470, 0.0
      %v543 = vmax.f32 %v471, 0.0
      %v544 = vmax.f32 %v472, 0.0
      %v545 = vmax.f32 %v473, 0.0
      %v546 = vmax.f32 %v474, 0.0
      %v547 = vmax.f32 %v475, 0.0
      %v548 = vmax.f32 %v476, 0.0
      %v549 = vmax.f32 %v477, 0.0
      %v550 = vmax.f32 %v478, 0.0
      %v551 = vmax.f32 %v479, 0.0
      %v552 = vmax.f32 %v480, 0.0
      %v553 = vmax.f32 %v481, 0.0
      %v554 = vmax.f32 %v482, 0.0
      %v555 = vmax.f32 %v483, 0.0
      %v556 = vmax.f32 %v484, 0.0
      %v557 = vmax.f32 %v485, 0.0
      %v558 = vmax.f32 %v486, 0.0
      %v559 = vmax.f32 %v487, 0.0
      %v560 = vmax.f32 %v488, 0.0
      %v561 = vmax.f32 %v489, 0.0
      %v562 = vmax.f32 %v490, 0.0
      %v563 = vmax.f32 %v491, 0.0
      %v564 = vmax.f32 %v492, 0.0
      %v565 = vmax.f32 %v493, 0.0
      %v566 = vmax.f32 %v494, 0.0
      %v567 = vmax.f32 %v495, 0.0
      %v568 = vmax.f32 %v496, 0.0
      %v569 = vmax.f32 %v497, 0.0
      %v570 = vmax.f32 %v498, 0.0
      %v571 = vmax.f32 %v499, 0.0
      %v572 = vmax.f32 %v500, 0.0
      %v573 = vmax.f32 %v501, 0.0
      %v574 = vmax.f32 %v502, 0.0
      %v575 = vmax.f32 %v503, 0.0
      %v576 = vmax.f32 %v504, 0.0
      %v577 = vmax.f32 %v505, 0.0
      %v578 = vmax.f32 %v506, 0.0
      %v579 = vmax.f32 %v507, 0.0
      %v580 = vmax.f32 %v508, 0.0
      %v581 = vmax.f32 %v509, 0.0
      %v582 = vmax.f32 %v510, 0.0
      %v583 = vmax.f32 %v511, 0.0
      %v584 = vmax.f32 %v512, 0.0
      %v585 = vmax.f32 %v513, 0.0
      %v586 = vmax.f32 %v514, 0.0
      %v587 = vmax.f32 %v515, 0.0
      %v588 = vmax.f32 %v516, 0.0
      %v589 = vmax.f32 %v517, 0.0
      %v590 = vmax.f32 %v518, 0.0
      %v591 = vmax.f32 %v519, 0.0
      %v592 = vmax.f32 %v520, 0.0
      %v593 = vmax.f32 %v521, 0.0
      %v594 = vmax.f32 %v522, 0.0
      %v595 = vmax.f32 %v523, 0.0
      %v596 = vmax.f32 %v524, 0.0
      %v597 = vmax.f32 %v525, 0.0
      %v598 = vmax.f32 %v526, 0.0
      %v599 = vmax.f32 %v527, 0.0
      %v600 = vmax.f32 %v528, 0.0
      %v601 = vmax.f32 %v529, 0.0
      %v602 = vmax.f32 %v530, 0.0
      %v603 = vmax.f32 %v531, 0.0
      %v604 = vlaneseq
      %v605 = vshrl.u32 %v604, 7
      %v606 = vadd.s32 %v605, 8
      %v607 = vadd.s32 %v605, 16
      %v608 = vadd.s32 %v605, 24
      %vm609 = vcmp.ge.s32.totalorder %v605, 1
      %vm610 = vcmp.ge.s32.totalorder %v606, 1
      %vm611 = vcmp.ge.s32.totalorder %v607, 1
      %vm612 = vcmp.ge.s32.totalorder %v608, 1
      %vm613 = vmand 0, %vm609
      %vm614 = vmand 0, %vm610
      %vm615 = vmand 0, %vm611
      %vm616 = vmand 0, %vm612
      %vm617 = vmand 1, %vm609
      %vm618 = vmand 1, %vm610
      %vm619 = vmand 1, %vm611
      %vm620 = vmand 1, %vm612
      %vm621 = vcmp.le.s32.totalorder %v605, 16
      %vm622 = vcmp.le.s32.totalorder %v606, 16
      %vm623 = vcmp.le.s32.totalorder %v607, 16
      %vm624 = vcmp.le.s32.totalorder %v608, 16
      %vm625 = vmand %vm613, %vm621
      %vm626 = vmand %vm614, %vm622
      %vm627 = vmand %vm615, %vm623
      %vm628 = vmand %vm616, %vm624
      %vm629 = vmand %vm617, %vm621
      %vm630 = vmand %vm618, %vm622
      %vm631 = vmand %vm619, %vm623
      %vm632 = vmand %vm620, %vm624
      %v633 = vsel %vm625, %v532, 0.0
      %v634 = vsel %vm626, %v533, 0.0
      %v635 = vsel %vm627, %v534, 0.0
      %v636 = vsel %vm628, %v535, 0.0
      %v637 = vsel %vm629, %v536, 0.0
      %v638 = vsel %vm630, %v537, 0.0
      %v639 = vsel %vm631, %v538, 0.0
      %v640 = vsel %vm632, %v539, 0.0
      %v641 = vsel %vm629, %v540, 0.0
      %v642 = vsel %vm630, %v541, 0.0
      %v643 = vsel %vm631, %v542, 0.0
      %v644 = vsel %vm632, %v543, 0.0
      %v645 = vsel %vm629, %v544, 0.0
      %v646 = vsel %vm630, %v545, 0.0
      %v647 = vsel %vm631, %v546, 0.0
      %v648 = vsel %vm632, %v547, 0.0
      %v649 = vsel %vm629, %v548, 0.0
      %v650 = vsel %vm630, %v549, 0.0
      %v651 = vsel %vm631, %v550, 0.0
      %v652 = vsel %vm632, %v551, 0.0
      %v653 = vsel %vm629, %v552, 0.0
      %v654 = vsel %vm630, %v553, 0.0
      %v655 = vsel %vm631, %v554, 0.0
      %v656 = vsel %vm632, %v555, 0.0
      %v657 = vsel %vm629, %v556, 0.0
      %v658 = vsel %vm630, %v557, 0.0
      %v659 = vsel %vm631, %v558, 0.0
      %v660 = vsel %vm632, %v559, 0.0
      %v661 = vsel %vm629, %v560, 0.0
      %v662 = vsel %vm630, %v561, 0.0
      %v663 = vsel %vm631, %v562, 0.0
      %v664 = vsel %vm632, %v563, 0.0
      %v665 = vsel %vm629, %v564, 0.0
      %v666 = vsel %vm630, %v565, 0.0
      %v667 = vsel %vm631, %v566, 0.0
      %v668 = vsel %vm632, %v567, 0.0
      %v669 = vsel %vm629, %v568, 0.0
      %v670 = vsel %vm630, %v569, 0.0
      %v671 = vsel %vm631, %v570, 0.0
      %v672 = vsel %vm632, %v571, 0.0
      %v673 = vsel %vm629, %v572, 0.0
      %v674 = vsel %vm630, %v573, 0.0
      %v675 = vsel %vm631, %v574, 0.0
      %v676 = vsel %vm632, %v575, 0.0
      %v677 = vsel %vm629, %v576, 0.0
      %v678 = vsel %vm630, %v577, 0.0
      %v679 = vsel %vm631, %v578, 0.0
      %v680 = vsel %vm632, %v579, 0.0
      %v681 = vsel %vm629, %v580, 0.0
      %v682 = vsel %vm630, %v581, 0.0
      %v683 = vsel %vm631, %v582, 0.0
      %v684 = vsel %vm632, %v583, 0.0
      %v685 = vsel %vm629, %v584, 0.0
      %v686 = vsel %vm630, %v585, 0.0
      %v687 = vsel %vm631, %v586, 0.0
      %v688 = vsel %vm632, %v587, 0.0
      %v689 = vsel %vm629, %v588, 0.0
      %v690 = vsel %vm630, %v589, 0.0
      %v691 = vsel %vm631, %v590, 0.0
      %v692 = vsel %vm632, %v591, 0.0
      %v693 = vsel %vm629, %v592, 0.0
      %v694 = vsel %vm630, %v593, 0.0
      %v695 = vsel %vm631, %v594, 0.0
      %v696 = vsel %vm632, %v595, 0.0
      %v697 = vsel %vm629, %v596, 0.0
      %v698 = vsel %vm630, %v597, 0.0
      %v699 = vsel %vm631, %v598, 0.0
      %v700 = vsel %vm632, %v599, 0.0
      %v701 = vsel %vm625, %v600, 0.0
      %v702 = vsel %vm626, %v601, 0.0
      %v703 = vsel %vm627, %v602, 0.0
      %v704 = vsel %vm628, %v603, 0.0
      %v705 = vpack.c.bf16 %v633, %v633
      %v706 = vpack.c.bf16 %v634, %v634
      %v707 = vpack.c.bf16 %v635, %v635
      %v708 = vpack.c.bf16 %v636, %v636
      %v709 = vpack.c.bf16 %v637, %v637
      %v710 = vpack.c.bf16 %v638, %v638
      %v711 = vpack.c.bf16 %v639, %v639
      %v712 = vpack.c.bf16 %v640, %v640
      %v713 = vpack.c.bf16 %v641, %v641
      %v714 = vpack.c.bf16 %v642, %v642
      %v715 = vpack.c.bf16 %v643, %v643
      %v716 = vpack.c.bf16 %v644, %v644
      %v717 = vpack.c.bf16 %v645, %v645
      %v718 = vpack.c.bf16 %v646, %v646
      %v719 = vpack.c.bf16 %v647, %v647
      %v720 = vpack.c.bf16 %v648, %v648
      %v721 = vpack.c.bf16 %v649, %v649
      %v722 = vpack.c.bf16 %v650, %v650
      %v723 = vpack.c.bf16 %v651, %v651
      %v724 = vpack.c.bf16 %v652, %v652
      %v725 = vpack.c.bf16 %v653, %v653
      %v726 = vpack.c.bf16 %v654, %v654
      %v727 = vpack.c.bf16 %v655, %v655
      %v728 = vpack.c.bf16 %v656, %v656
      %v729 = vpack.c.bf16 %v657, %v657
      %v730 = vpack.c.bf16 %v658, %v658
      %v731 = vpack.c.bf16 %v659, %v659
      %v732 = vpack.c.bf16 %v660, %v660
      %v733 = vpack.c.bf16 %v661, %v661
      %v734 = vpack.c.bf16 %v662, %v662
      %v735 = vpack.c.bf16 %v663, %v663
      %v736 = vpack.c.bf16 %v664, %v664
      %v737 = vpack.c.bf16 %v665, %v665
      %v738 = vpack.c.bf16 %v666, %v666
      %v739 = vpack.c.bf16 %v667, %v667
      %v740 = vpack.c.bf16 %v668, %v668
      %v741 = vpack.c.bf16 %v669, %v669
      %v742 = vpack.c.bf16 %v670, %v670
      %v743 = vpack.c.bf16 %v671, %v671
      %v744 = vpack.c.bf16 %v672, %v672
      %v745 = vpack.c.bf16 %v673, %v673
      %v746 = vpack.c.bf16 %v674, %v674
      %v747 = vpack.c.bf16 %v675, %v675
      %v748 = vpack.c.bf16 %v676, %v676
      %v749 = vpack.c.bf16 %v677, %v677
      %v750 = vpack.c.bf16 %v678, %v678
      %v751 = vpack.c.bf16 %v679, %v679
      %v752 = vpack.c.bf16 %v680, %v680
      %v753 = vpack.c.bf16 %v681, %v681
      %v754 = vpack.c.bf16 %v682, %v682
      %v755 = vpack.c.bf16 %v683, %v683
      %v756 = vpack.c.bf16 %v684, %v684
      %v757 = vpack.c.bf16 %v685, %v685
      %v758 = vpack.c.bf16 %v686, %v686
      %v759 = vpack.c.bf16 %v687, %v687
      %v760 = vpack.c.bf16 %v688, %v688
      %v761 = vpack.c.bf16 %v689, %v689
      %v762 = vpack.c.bf16 %v690, %v690
      %v763 = vpack.c.bf16 %v691, %v691
      %v764 = vpack.c.bf16 %v692, %v692
      %v765 = vpack.c.bf16 %v693, %v693
      %v766 = vpack.c.bf16 %v694, %v694
      %v767 = vpack.c.bf16 %v695, %v695
      %v768 = vpack.c.bf16 %v696, %v696
      %v769 = vpack.c.bf16 %v697, %v697
      %v770 = vpack.c.bf16 %v698, %v698
      %v771 = vpack.c.bf16 %v699, %v699
      %v772 = vpack.c.bf16 %v700, %v700
      %v773 = vpack.c.bf16 %v701, %v701
      %v774 = vpack.c.bf16 %v702, %v702
      %v775 = vpack.c.bf16 %v703, %v703
      %v776 = vpack.c.bf16 %v704, %v704
      %v841 = vunpack.c.l.b16 %v705
      %v842 = vunpack.c.l.b16 %v706
      %v843 = vunpack.c.l.b16 %v707
      %v844 = vunpack.c.l.b16 %v708
      %v845 = vunpack.c.l.b16 %v709
      %v846 = vunpack.c.l.b16 %v710
      %v847 = vunpack.c.l.b16 %v711
      %v848 = vunpack.c.l.b16 %v712
      %v849 = vunpack.c.l.b16 %v713
      %v850 = vunpack.c.l.b16 %v714
      %v851 = vunpack.c.l.b16 %v715
      %v852 = vunpack.c.l.b16 %v716
      %v853 = vunpack.c.l.b16 %v717
      %v854 = vunpack.c.l.b16 %v718
      %v855 = vunpack.c.l.b16 %v719
      %v856 = vunpack.c.l.b16 %v720
      %v857 = vunpack.c.l.b16 %v721
      %v858 = vunpack.c.l.b16 %v722
      %v859 = vunpack.c.l.b16 %v723
      %v860 = vunpack.c.l.b16 %v724
      %v861 = vunpack.c.l.b16 %v725
      %v862 = vunpack.c.l.b16 %v726
      %v863 = vunpack.c.l.b16 %v727
      %v864 = vunpack.c.l.b16 %v728
      %v865 = vunpack.c.l.b16 %v729
      %v866 = vunpack.c.l.b16 %v730
      %v867 = vunpack.c.l.b16 %v731
      %v868 = vunpack.c.l.b16 %v732
      %v869 = vunpack.c.l.b16 %v733
      %v870 = vunpack.c.l.b16 %v734
      %v871 = vunpack.c.l.b16 %v735
      %v872 = vunpack.c.l.b16 %v736
      %v873 = vunpack.c.l.b16 %v737
      %v874 = vunpack.c.l.b16 %v738
      %v875 = vunpack.c.l.b16 %v739
      %v876 = vunpack.c.l.b16 %v740
      %v877 = vunpack.c.l.b16 %v741
      %v878 = vunpack.c.l.b16 %v742
      %v879 = vunpack.c.l.b16 %v743
      %v880 = vunpack.c.l.b16 %v744
      %v881 = vunpack.c.l.b16 %v745
      %v882 = vunpack.c.l.b16 %v746
      %v883 = vunpack.c.l.b16 %v747
      %v884 = vunpack.c.l.b16 %v748
      %v885 = vunpack.c.l.b16 %v749
      %v886 = vunpack.c.l.b16 %v750
      %v887 = vunpack.c.l.b16 %v751
      %v888 = vunpack.c.l.b16 %v752
      %v889 = vunpack.c.l.b16 %v753
      %v890 = vunpack.c.l.b16 %v754
      %v891 = vunpack.c.l.b16 %v755
      %v892 = vunpack.c.l.b16 %v756
      %v893 = vunpack.c.l.b16 %v757
      %v894 = vunpack.c.l.b16 %v758
      %v895 = vunpack.c.l.b16 %v759
      %v896 = vunpack.c.l.b16 %v760
      %v897 = vunpack.c.l.b16 %v761
      %v898 = vunpack.c.l.b16 %v762
      %v899 = vunpack.c.l.b16 %v763
      %v900 = vunpack.c.l.b16 %v764
      %v901 = vunpack.c.l.b16 %v765
      %v902 = vunpack.c.l.b16 %v766
      %v903 = vunpack.c.l.b16 %v767
      %v904 = vunpack.c.l.b16 %v768
      %v905 = vpack.c.b16 %v842, %v841
      %v906 = vpack.c.b16 %v844, %v843
      %v907 = vpack.c.b16 %v846, %v845
      %v908 = vpack.c.b16 %v848, %v847
      %v909 = vpack.c.b16 %v850, %v849
      %v910 = vpack.c.b16 %v852, %v851
      %v911 = vpack.c.b16 %v854, %v853
      %v912 = vpack.c.b16 %v856, %v855
      %v913 = vpack.c.b16 %v858, %v857
      %v914 = vpack.c.b16 %v860, %v859
      %v915 = vpack.c.b16 %v862, %v861
      %v916 = vpack.c.b16 %v864, %v863
      %v917 = vpack.c.b16 %v866, %v865
      %v918 = vpack.c.b16 %v868, %v867
      %v919 = vpack.c.b16 %v870, %v869
      %v920 = vpack.c.b16 %v872, %v871
      %v921 = vpack.c.b16 %v874, %v873
      %v922 = vpack.c.b16 %v876, %v875
      %v923 = vpack.c.b16 %v878, %v877
      %v924 = vpack.c.b16 %v880, %v879
      %v925 = vpack.c.b16 %v882, %v881
      %v926 = vpack.c.b16 %v884, %v883
      %v927 = vpack.c.b16 %v886, %v885
      %v928 = vpack.c.b16 %v888, %v887
      %v929 = vpack.c.b16 %v890, %v889
      %v930 = vpack.c.b16 %v892, %v891
      %v931 = vpack.c.b16 %v894, %v893
      %v932 = vpack.c.b16 %v896, %v895
      %v933 = vpack.c.b16 %v898, %v897
      %v934 = vpack.c.b16 %v900, %v899
      %v935 = vpack.c.b16 %v902, %v901
      %v936 = vpack.c.b16 %v904, %v903
      %v973 = vunpack.c.l.b16 %v769
      %v974 = vunpack.c.l.b16 %v770
      %v975 = vunpack.c.l.b16 %v771
      %v976 = vunpack.c.l.b16 %v772
      %v977 = vpack.c.b16 %v974, %v973
      %v978 = vpack.c.b16 %v976, %v975
      %v985 = vunpack.c.l.b16 %v773
      %v986 = vunpack.c.l.b16 %v774
      %v987 = vunpack.c.l.b16 %v775
      %v988 = vunpack.c.l.b16 %v776
      %v989 = vpack.c.b16 %v986, %v985
      %v990 = vpack.c.b16 %v988, %v987
      %v993 = vld [vmem:[%s1] sm:$0xf]
      %v994 = vld [vmem:[%s1 + $0x4] sm:$0xf]
      %v995 = vld [vmem:[%s1 + $0x8] sm:$0xf]
      %v996 = vld [vmem:[%s1 + $0xc] sm:$0xf]
      %v997 = vld [vmem:[%s1 + $0x10] sm:$0xf]
      %v998 = vld [vmem:[%s1 + $0x14] sm:$0xf]
      %v999 = vld [vmem:[%s1 + $0x18] sm:$0xf]
      %v1000 = vld [vmem:[%s1 + $0x1c] sm:$0xf]
      %v1001 = vld [vmem:[%s1 + $0x20] sm:$0xf]
      %v1002 = vld [vmem:[%s1 + $0x24] sm:$0xf]
      %v1003 = vld [vmem:[%s1 + $0x28] sm:$0xf]
      %v1004 = vld [vmem:[%s1 + $0x2c] sm:$0xf]
      %v1005 = vld [vmem:[%s1 + $0x30] sm:$0xf]
      %v1006 = vld [vmem:[%s1 + $0x34] sm:$0xf]
      %v1007 = vld [vmem:[%s1 + $0x38] sm:$0xf]
      %v1008 = vld [vmem:[%s1 + $0x3c] sm:$0xf]
      %v1009 = vld [vmem:[%s1 + $0x40] sm:$0xf]
      %v1010 = vld [vmem:[%s1 + $0x44] sm:$0xf]
      %v1011 = vld [vmem:[%s1 + $0x48] sm:$0xf]
      %v1012 = vld [vmem:[%s1 + $0x4c] sm:$0xf]
      %v1013 = vld [vmem:[%s1 + $0x50] sm:$0xf]
      %v1014 = vld [vmem:[%s1 + $0x54] sm:$0xf]
      %v1015 = vld [vmem:[%s1 + $0x58] sm:$0xf]
      %v1016 = vld [vmem:[%s1 + $0x5c] sm:$0xf]
      %v1017 = vld [vmem:[%s1 + $0x60] sm:$0xf]
      %v1018 = vld [vmem:[%s1 + $0x64] sm:$0xf]
      %v1019 = vld [vmem:[%s1 + $0x68] sm:$0xf]
      %v1020 = vld [vmem:[%s1 + $0x6c] sm:$0xf]
      %v1021 = vld [vmem:[%s1 + $0x70] sm:$0xf]
      %v1022 = vld [vmem:[%s1 + $0x74] sm:$0xf]
      %v1023 = vld [vmem:[%s1 + $0x78] sm:$0xf]
      %v1024 = vld [vmem:[%s1 + $0x7c] sm:$0xf]
      %v1025 = vld [vmem:[%s1 + $0x80] sm:$0xf]
      %v1026 = vld [vmem:[%s1 + $0x84] sm:$0xf]
      %v1027 = vld [vmem:[%s1 + $0x88] sm:$0xf]
      %v1028 = vld [vmem:[%s1 + $0x8c] sm:$0xf]
      %v1029 = vld [vmem:[%s1 + $0x90] sm:$0xf]
      %v1030 = vld [vmem:[%s1 + $0x94] sm:$0xf]
      %v1031 = vld [vmem:[%s1 + $0x98] sm:$0xf]
      %v1032 = vld [vmem:[%s1 + $0x9c] sm:$0xf]
      %v1033 = vld [vmem:[%s1 + $0xa0] sm:$0xf]
      %v1034 = vld [vmem:[%s1 + $0xa4] sm:$0xf]
      %v1035 = vld [vmem:[%s1 + $0xa8] sm:$0xf]
      %v1036 = vld [vmem:[%s1 + $0xac] sm:$0xf]
      %v1037 = vld [vmem:[%s1 + $0xb0] sm:$0xf]
      %v1038 = vld [vmem:[%s1 + $0xb4] sm:$0xf]
      %v1039 = vld [vmem:[%s1 + $0xb8] sm:$0xf]
      %v1040 = vld [vmem:[%s1 + $0xbc] sm:$0xf]
      %v1089 = vunpack.c.l.b16 %v993
      %v1090 = vunpack.c.l.b16 %v994
      %v1091 = vunpack.c.l.b16 %v995
      %v1092 = vunpack.c.l.b16 %v996
      %v1093 = vunpack.c.l.b16 %v997
      %v1094 = vunpack.c.l.b16 %v998
      %v1095 = vunpack.c.l.b16 %v999
      %v1096 = vunpack.c.l.b16 %v1000
      %v1097 = vunpack.c.l.b16 %v1001
      %v1098 = vunpack.c.l.b16 %v1002
      %v1099 = vunpack.c.l.b16 %v1003
      %v1100 = vunpack.c.l.b16 %v1004
      %v1101 = vunpack.c.l.b16 %v1005
      %v1102 = vunpack.c.l.b16 %v1006
      %v1103 = vunpack.c.l.b16 %v1007
      %v1104 = vunpack.c.l.b16 %v1008
      %v1105 = vunpack.c.l.b16 %v1009
      %v1106 = vunpack.c.l.b16 %v1010
      %v1107 = vunpack.c.l.b16 %v1011
      %v1108 = vunpack.c.l.b16 %v1012
      %v1109 = vunpack.c.l.b16 %v1013
      %v1110 = vunpack.c.l.b16 %v1014
      %v1111 = vunpack.c.l.b16 %v1015
      %v1112 = vunpack.c.l.b16 %v1016
      %v1113 = vunpack.c.l.b16 %v1017
      %v1114 = vunpack.c.l.b16 %v1018
      %v1115 = vunpack.c.l.b16 %v1019
      %v1116 = vunpack.c.l.b16 %v1020
      %v1117 = vunpack.c.l.b16 %v1021
      %v1118 = vunpack.c.l.b16 %v1022
      %v1119 = vunpack.c.l.b16 %v1023
      %v1120 = vunpack.c.l.b16 %v1024
      %v1121 = vunpack.c.l.b16 %v1025
      %v1122 = vunpack.c.l.b16 %v1026
      %v1123 = vunpack.c.l.b16 %v1027
      %v1124 = vunpack.c.l.b16 %v1028
      %v1125 = vunpack.c.l.b16 %v1029
      %v1126 = vunpack.c.l.b16 %v1030
      %v1127 = vunpack.c.l.b16 %v1031
      %v1128 = vunpack.c.l.b16 %v1032
      %v1129 = vunpack.c.l.b16 %v1033
      %v1130 = vunpack.c.l.b16 %v1034
      %v1131 = vunpack.c.l.b16 %v1035
      %v1132 = vunpack.c.l.b16 %v1036
      %v1133 = vunpack.c.l.b16 %v1037
      %v1134 = vunpack.c.l.b16 %v1038
      %v1135 = vunpack.c.l.b16 %v1039
      %v1136 = vunpack.c.l.b16 %v1040
      %v1137 = vpack.c.b16 %v1090, %v1089
      %v1138 = vpack.c.b16 %v1092, %v1091
      %v1139 = vpack.c.b16 %v1094, %v1093
      %v1140 = vpack.c.b16 %v1096, %v1095
      %v1141 = vpack.c.b16 %v1098, %v1097
      %v1142 = vpack.c.b16 %v1100, %v1099
      %v1143 = vpack.c.b16 %v1102, %v1101
      %v1144 = vpack.c.b16 %v1104, %v1103
      %v1145 = vpack.c.b16 %v1106, %v1105
      %v1146 = vpack.c.b16 %v1108, %v1107
      %v1147 = vpack.c.b16 %v1110, %v1109
      %v1148 = vpack.c.b16 %v1112, %v1111
      %v1149 = vpack.c.b16 %v1114, %v1113
      %v1150 = vpack.c.b16 %v1116, %v1115
      %v1151 = vpack.c.b16 %v1118, %v1117
      %v1152 = vpack.c.b16 %v1120, %v1119
      %v1153 = vpack.c.b16 %v1122, %v1121
      %v1154 = vpack.c.b16 %v1124, %v1123
      %v1155 = vpack.c.b16 %v1126, %v1125
      %v1156 = vpack.c.b16 %v1128, %v1127
      %v1157 = vpack.c.b16 %v1130, %v1129
      %v1158 = vpack.c.b16 %v1132, %v1131
      %v1159 = vpack.c.b16 %v1134, %v1133
      %v1160 = vpack.c.b16 %v1136, %v1135
      %1185 = vmatpush.bf16.msra.mxu0 %v1144
      %1186 = vmatpush.bf16.msra.mxu0 %v1143
      %1187 = vmatpush.bf16.msra.mxu0 %v1142
      %1188 = vmatpush.bf16.msra.mxu0 %v1141
      %1189 = vmatpush.bf16.msra.mxu0 %v1140
      %1190 = vmatpush.bf16.msra.mxu0 %v1139
      %1191 = vmatpush.bf16.msra.mxu0 %v1138
      %1192 = vmatpush.bf16.msra.mxu0 %v1137
      %1193 = vmatmul.bf16.gmra.mxu0 %v905
      %v1194 = vpop.f32.mrf.mxu0
      %v1195 = vadd.f32 0.0, %v1194
      %v1196 = vpop.f32.mrf.mxu0
      %v1197 = vadd.f32 0.0, %v1196
      %1198 = vmatmul.bf16.gmra.mxu0 %v906
      %v1199 = vpop.f32.mrf.mxu0
      %v1200 = vpop.f32.mrf.mxu0
      %1201 = vmatmul.bf16.gmra.mxu0 %v907
      %v1202 = vpop.f32.mrf.mxu0
      %v1203 = vadd.f32 0.0, %v1202
      %v1204 = vpop.f32.mrf.mxu0
      %v1205 = vadd.f32 0.0, %v1204
      %1206 = vmatmul.bf16.gmra.mxu0 %v908
      %v1207 = vpop.f32.mrf.mxu0
      %v1208 = vpop.f32.mrf.mxu0
      %1209 = vmatmul.bf16.gmra.mxu0 %v909
      %v1210 = vpop.f32.mrf.mxu0
      %v1211 = vadd.f32 0.0, %v1210
      %v1212 = vpop.f32.mrf.mxu0
      %v1213 = vadd.f32 0.0, %v1212
      %1214 = vmatmul.bf16.gmra.mxu0 %v910
      %v1215 = vpop.f32.mrf.mxu0
      %v1216 = vpop.f32.mrf.mxu0
      %1217 = vmatmul.bf16.gmra.mxu0 %v911
      %v1218 = vpop.f32.mrf.mxu0
      %v1219 = vadd.f32 0.0, %v1218
      %v1220 = vpop.f32.mrf.mxu0
      %v1221 = vadd.f32 0.0, %v1220
      %1222 = vmatmul.bf16.gmra.mxu0 %v912
      %v1223 = vpop.f32.mrf.mxu0
      %v1224 = vpop.f32.mrf.mxu0
      %1225 = vmatmul.bf16.gmra.mxu0 %v913
      %v1226 = vpop.f32.mrf.mxu0
      %v1227 = vadd.f32 0.0, %v1226
      %v1228 = vpop.f32.mrf.mxu0
      %v1229 = vadd.f32 0.0, %v1228
      %1230 = vmatmul.bf16.gmra.mxu0 %v914
      %v1231 = vpop.f32.mrf.mxu0
      %v1232 = vpop.f32.mrf.mxu0
      %1233 = vmatmul.bf16.gmra.mxu0 %v915
      %v1234 = vpop.f32.mrf.mxu0
      %v1235 = vadd.f32 0.0, %v1234
      %v1236 = vpop.f32.mrf.mxu0
      %v1237 = vadd.f32 0.0, %v1236
      %1238 = vmatmul.bf16.gmra.mxu0 %v916
      %v1239 = vpop.f32.mrf.mxu0
      %v1240 = vpop.f32.mrf.mxu0
      %1241 = vmatmul.bf16.gmra.mxu0 %v917
      %v1242 = vpop.f32.mrf.mxu0
      %v1243 = vadd.f32 0.0, %v1242
      %v1244 = vpop.f32.mrf.mxu0
      %v1245 = vadd.f32 0.0, %v1244
      %1246 = vmatmul.bf16.gmra.mxu0 %v918
      %v1247 = vpop.f32.mrf.mxu0
      %v1248 = vpop.f32.mrf.mxu0
      %1249 = vmatmul.bf16.gmra.mxu0 %v919
      %v1250 = vpop.f32.mrf.mxu0
      %v1251 = vadd.f32 0.0, %v1250
      %v1252 = vpop.f32.mrf.mxu0
      %v1253 = vadd.f32 0.0, %v1252
      %1254 = vmatmul.bf16.gmra.mxu0 %v920
      %v1255 = vpop.f32.mrf.mxu0
      %v1256 = vpop.f32.mrf.mxu0
      %1257 = vmatmul.bf16.gmra.mxu0 %v921
      %v1258 = vpop.f32.mrf.mxu0
      %v1259 = vadd.f32 0.0, %v1258
      %v1260 = vpop.f32.mrf.mxu0
      %v1261 = vadd.f32 0.0, %v1260
      %1262 = vmatmul.bf16.gmra.mxu0 %v922
      %v1263 = vpop.f32.mrf.mxu0
      %v1264 = vpop.f32.mrf.mxu0
      %1265 = vmatmul.bf16.gmra.mxu0 %v923
      %v1266 = vpop.f32.mrf.mxu0
      %v1267 = vadd.f32 0.0, %v1266
      %v1268 = vpop.f32.mrf.mxu0
      %v1269 = vadd.f32 0.0, %v1268
      %1270 = vmatmul.bf16.gmra.mxu0 %v924
      %v1271 = vpop.f32.mrf.mxu0
      %v1272 = vpop.f32.mrf.mxu0
      %1273 = vmatmul.bf16.gmra.mxu0 %v925
      %v1274 = vpop.f32.mrf.mxu0
      %v1275 = vadd.f32 0.0, %v1274
      %v1276 = vpop.f32.mrf.mxu0
      %v1277 = vadd.f32 0.0, %v1276
      %1278 = vmatmul.bf16.gmra.mxu0 %v926
      %v1279 = vpop.f32.mrf.mxu0
      %v1280 = vpop.f32.mrf.mxu0
      %1281 = vmatmul.bf16.gmra.mxu0 %v927
      %v1282 = vpop.f32.mrf.mxu0
      %v1283 = vadd.f32 0.0, %v1282
      %v1284 = vpop.f32.mrf.mxu0
      %v1285 = vadd.f32 0.0, %v1284
      %1286 = vmatmul.bf16.gmra.mxu0 %v928
      %v1287 = vpop.f32.mrf.mxu0
      %v1288 = vpop.f32.mrf.mxu0
      %1289 = vmatmul.bf16.gmra.mxu0 %v929
      %v1290 = vpop.f32.mrf.mxu0
      %v1291 = vadd.f32 0.0, %v1290
      %v1292 = vpop.f32.mrf.mxu0
      %v1293 = vadd.f32 0.0, %v1292
      %1294 = vmatmul.bf16.gmra.mxu0 %v930
      %v1295 = vpop.f32.mrf.mxu0
      %v1296 = vpop.f32.mrf.mxu0
      %1297 = vmatmul.bf16.gmra.mxu0 %v931
      %v1298 = vpop.f32.mrf.mxu0
      %v1299 = vadd.f32 0.0, %v1298
      %v1300 = vpop.f32.mrf.mxu0
      %v1301 = vadd.f32 0.0, %v1300
      %1302 = vmatmul.bf16.gmra.mxu0 %v932
      %v1303 = vpop.f32.mrf.mxu0
      %v1304 = vpop.f32.mrf.mxu0
      %1305 = vmatmul.bf16.gmra.mxu0 %v933
      %v1306 = vpop.f32.mrf.mxu0
      %v1307 = vadd.f32 0.0, %v1306
      %v1308 = vpop.f32.mrf.mxu0
      %v1309 = vadd.f32 0.0, %v1308
      %1310 = vmatmul.bf16.gmra.mxu0 %v934
      %v1311 = vpop.f32.mrf.mxu0
      %v1312 = vpop.f32.mrf.mxu0
      %1313 = vmatmul.bf16.gmra.mxu0 %v935
      %v1314 = vpop.f32.mrf.mxu0
      %v1315 = vadd.f32 0.0, %v1314
      %v1316 = vpop.f32.mrf.mxu0
      %v1317 = vadd.f32 0.0, %v1316
      %1318 = vmatmul.bf16.gmra.mxu0 %v936
      %v1319 = vpop.f32.mrf.mxu0
      %v1320 = vpop.f32.mrf.mxu0
      %1321 = vdwg.mxu0
      %1322 = vmatpush.bf16.msra.mxu0 %v1152
      %1323 = vmatpush.bf16.msra.mxu0 %v1151
      %1324 = vmatpush.bf16.msra.mxu0 %v1150
      %1325 = vmatpush.bf16.msra.mxu0 %v1149
      %1326 = vmatpush.bf16.msra.mxu0 %v1148
      %1327 = vmatpush.bf16.msra.mxu0 %v1147
      %1328 = vmatpush.bf16.msra.mxu0 %v1146
      %1329 = vmatpush.bf16.msra.mxu0 %v1145
      %1330 = vmatmul.bf16.gmra.mxu0 %v907
      %v1331 = vpop.f32.mrf.mxu0
      %v1332 = vadd.f32 %v1195, %v1331
      %v1333 = vpop.f32.mrf.mxu0
      %v1334 = vadd.f32 %v1197, %v1333
      %1335 = vmatmul.bf16.gmra.mxu0 %v908
      %v1336 = vpop.f32.mrf.mxu0
      %v1337 = vpop.f32.mrf.mxu0
      %1338 = vmatmul.bf16.gmra.mxu0 %v909
      %v1339 = vpop.f32.mrf.mxu0
      %v1340 = vadd.f32 %v1203, %v1339
      %v1341 = vpop.f32.mrf.mxu0
      %v1342 = vadd.f32 %v1205, %v1341
      %1343 = vmatmul.bf16.gmra.mxu0 %v910
      %v1344 = vpop.f32.mrf.mxu0
      %v1345 = vpop.f32.mrf.mxu0
      %1346 = vmatmul.bf16.gmra.mxu0 %v911
      %v1347 = vpop.f32.mrf.mxu0
      %v1348 = vadd.f32 %v1211, %v1347
      %v1349 = vpop.f32.mrf.mxu0
      %v1350 = vadd.f32 %v1213, %v1349
      %1351 = vmatmul.bf16.gmra.mxu0 %v912
      %v1352 = vpop.f32.mrf.mxu0
      %v1353 = vpop.f32.mrf.mxu0
      %1354 = vmatmul.bf16.gmra.mxu0 %v913
      %v1355 = vpop.f32.mrf.mxu0
      %v1356 = vadd.f32 %v1219, %v1355
      %v1357 = vpop.f32.mrf.mxu0
      %v1358 = vadd.f32 %v1221, %v1357
      %1359 = vmatmul.bf16.gmra.mxu0 %v914
      %v1360 = vpop.f32.mrf.mxu0
      %v1361 = vpop.f32.mrf.mxu0
      %1362 = vmatmul.bf16.gmra.mxu0 %v915
      %v1363 = vpop.f32.mrf.mxu0
      %v1364 = vadd.f32 %v1227, %v1363
      %v1365 = vpop.f32.mrf.mxu0
      %v1366 = vadd.f32 %v1229, %v1365
      %1367 = vmatmul.bf16.gmra.mxu0 %v916
      %v1368 = vpop.f32.mrf.mxu0
      %v1369 = vpop.f32.mrf.mxu0
      %1370 = vmatmul.bf16.gmra.mxu0 %v917
      %v1371 = vpop.f32.mrf.mxu0
      %v1372 = vadd.f32 %v1235, %v1371
      %v1373 = vpop.f32.mrf.mxu0
      %v1374 = vadd.f32 %v1237, %v1373
      %1375 = vmatmul.bf16.gmra.mxu0 %v918
      %v1376 = vpop.f32.mrf.mxu0
      %v1377 = vpop.f32.mrf.mxu0
      %1378 = vmatmul.bf16.gmra.mxu0 %v919
      %v1379 = vpop.f32.mrf.mxu0
      %v1380 = vadd.f32 %v1243, %v1379
      %v1381 = vpop.f32.mrf.mxu0
      %v1382 = vadd.f32 %v1245, %v1381
      %1383 = vmatmul.bf16.gmra.mxu0 %v920
      %v1384 = vpop.f32.mrf.mxu0
      %v1385 = vpop.f32.mrf.mxu0
      %1386 = vmatmul.bf16.gmra.mxu0 %v921
      %v1387 = vpop.f32.mrf.mxu0
      %v1388 = vadd.f32 %v1251, %v1387
      %v1389 = vpop.f32.mrf.mxu0
      %v1390 = vadd.f32 %v1253, %v1389
      %1391 = vmatmul.bf16.gmra.mxu0 %v922
      %v1392 = vpop.f32.mrf.mxu0
      %v1393 = vpop.f32.mrf.mxu0
      %1394 = vmatmul.bf16.gmra.mxu0 %v923
      %v1395 = vpop.f32.mrf.mxu0
      %v1396 = vadd.f32 %v1259, %v1395
      %v1397 = vpop.f32.mrf.mxu0
      %v1398 = vadd.f32 %v1261, %v1397
      %1399 = vmatmul.bf16.gmra.mxu0 %v924
      %v1400 = vpop.f32.mrf.mxu0
      %v1401 = vpop.f32.mrf.mxu0
      %1402 = vmatmul.bf16.gmra.mxu0 %v925
      %v1403 = vpop.f32.mrf.mxu0
      %v1404 = vadd.f32 %v1267, %v1403
      %v1405 = vpop.f32.mrf.mxu0
      %v1406 = vadd.f32 %v1269, %v1405
      %1407 = vmatmul.bf16.gmra.mxu0 %v926
      %v1408 = vpop.f32.mrf.mxu0
      %v1409 = vpop.f32.mrf.mxu0
      %1410 = vmatmul.bf16.gmra.mxu0 %v927
      %v1411 = vpop.f32.mrf.mxu0
      %v1412 = vadd.f32 %v1275, %v1411
      %v1413 = vpop.f32.mrf.mxu0
      %v1414 = vadd.f32 %v1277, %v1413
      %1415 = vmatmul.bf16.gmra.mxu0 %v928
      %v1416 = vpop.f32.mrf.mxu0
      %v1417 = vpop.f32.mrf.mxu0
      %1418 = vmatmul.bf16.gmra.mxu0 %v929
      %v1419 = vpop.f32.mrf.mxu0
      %v1420 = vadd.f32 %v1283, %v1419
      %v1421 = vpop.f32.mrf.mxu0
      %v1422 = vadd.f32 %v1285, %v1421
      %1423 = vmatmul.bf16.gmra.mxu0 %v930
      %v1424 = vpop.f32.mrf.mxu0
      %v1425 = vpop.f32.mrf.mxu0
      %1426 = vmatmul.bf16.gmra.mxu0 %v931
      %v1427 = vpop.f32.mrf.mxu0
      %v1428 = vadd.f32 %v1291, %v1427
      %v1429 = vpop.f32.mrf.mxu0
      %v1430 = vadd.f32 %v1293, %v1429
      %1431 = vmatmul.bf16.gmra.mxu0 %v932
      %v1432 = vpop.f32.mrf.mxu0
      %v1433 = vpop.f32.mrf.mxu0
      %1434 = vmatmul.bf16.gmra.mxu0 %v933
      %v1435 = vpop.f32.mrf.mxu0
      %v1436 = vadd.f32 %v1299, %v1435
      %v1437 = vpop.f32.mrf.mxu0
      %v1438 = vadd.f32 %v1301, %v1437
      %1439 = vmatmul.bf16.gmra.mxu0 %v934
      %v1440 = vpop.f32.mrf.mxu0
      %v1441 = vpop.f32.mrf.mxu0
      %1442 = vmatmul.bf16.gmra.mxu0 %v935
      %v1443 = vpop.f32.mrf.mxu0
      %v1444 = vadd.f32 %v1307, %v1443
      %v1445 = vpop.f32.mrf.mxu0
      %v1446 = vadd.f32 %v1309, %v1445
      %1447 = vmatmul.bf16.gmra.mxu0 %v936
      %v1448 = vpop.f32.mrf.mxu0
      %v1449 = vpop.f32.mrf.mxu0
      %1450 = vmatmul.bf16.gmra.mxu0 %v977
      %v1451 = vpop.f32.mrf.mxu0
      %v1452 = vadd.f32 %v1315, %v1451
      %v1453 = vpop.f32.mrf.mxu0
      %v1454 = vadd.f32 %v1317, %v1453
      %1455 = vmatmul.bf16.gmra.mxu0 %v978
      %v1456 = vpop.f32.mrf.mxu0
      %v1457 = vpop.f32.mrf.mxu0
      %1458 = vdwg.mxu0
      %1459 = vmatpush.bf16.msra.mxu0 %v1160
      %1460 = vmatpush.bf16.msra.mxu0 %v1159
      %1461 = vmatpush.bf16.msra.mxu0 %v1158
      %1462 = vmatpush.bf16.msra.mxu0 %v1157
      %1463 = vmatpush.bf16.msra.mxu0 %v1156
      %1464 = vmatpush.bf16.msra.mxu0 %v1155
      %1465 = vmatpush.bf16.msra.mxu0 %v1154
      %1466 = vmatpush.bf16.msra.mxu0 %v1153
      %1467 = vmatmul.bf16.gmra.mxu0 %v909
      %v1468 = vpop.f32.mrf.mxu0
      %v1469 = vadd.f32 %v1332, %v1468
      %v1470 = vpop.f32.mrf.mxu0
      %v1471 = vadd.f32 %v1334, %v1470
      %1472 = vmatmul.bf16.gmra.mxu0 %v910
      %v1473 = vpop.f32.mrf.mxu0
      %v1474 = vpop.f32.mrf.mxu0
      %1475 = vmatmul.bf16.gmra.mxu0 %v911
      %v1476 = vpop.f32.mrf.mxu0
      %v1477 = vadd.f32 %v1340, %v1476
      %v1478 = vpop.f32.mrf.mxu0
      %v1479 = vadd.f32 %v1342, %v1478
      %1480 = vmatmul.bf16.gmra.mxu0 %v912
      %v1481 = vpop.f32.mrf.mxu0
      %v1482 = vpop.f32.mrf.mxu0
      %1483 = vmatmul.bf16.gmra.mxu0 %v913
      %v1484 = vpop.f32.mrf.mxu0
      %v1485 = vadd.f32 %v1348, %v1484
      %v1486 = vpop.f32.mrf.mxu0
      %v1487 = vadd.f32 %v1350, %v1486
      %1488 = vmatmul.bf16.gmra.mxu0 %v914
      %v1489 = vpop.f32.mrf.mxu0
      %v1490 = vpop.f32.mrf.mxu0
      %1491 = vmatmul.bf16.gmra.mxu0 %v915
      %v1492 = vpop.f32.mrf.mxu0
      %v1493 = vadd.f32 %v1356, %v1492
      %v1494 = vpop.f32.mrf.mxu0
      %v1495 = vadd.f32 %v1358, %v1494
      %1496 = vmatmul.bf16.gmra.mxu0 %v916
      %v1497 = vpop.f32.mrf.mxu0
      %v1498 = vpop.f32.mrf.mxu0
      %1499 = vmatmul.bf16.gmra.mxu0 %v917
      %v1500 = vpop.f32.mrf.mxu0
      %v1501 = vadd.f32 %v1364, %v1500
      %v1502 = vpop.f32.mrf.mxu0
      %v1503 = vadd.f32 %v1366, %v1502
      %1504 = vmatmul.bf16.gmra.mxu0 %v918
      %v1505 = vpop.f32.mrf.mxu0
      %v1506 = vpop.f32.mrf.mxu0
      %1507 = vmatmul.bf16.gmra.mxu0 %v919
      %v1508 = vpop.f32.mrf.mxu0
      %v1509 = vadd.f32 %v1372, %v1508
      %v1510 = vpop.f32.mrf.mxu0
      %v1511 = vadd.f32 %v1374, %v1510
      %1512 = vmatmul.bf16.gmra.mxu0 %v920
      %v1513 = vpop.f32.mrf.mxu0
      %v1514 = vpop.f32.mrf.mxu0
      %1515 = vmatmul.bf16.gmra.mxu0 %v921
      %v1516 = vpop.f32.mrf.mxu0
      %v1517 = vadd.f32 %v1380, %v1516
      %v1518 = vpop.f32.mrf.mxu0
      %v1519 = vadd.f32 %v1382, %v1518
      %1520 = vmatmul.bf16.gmra.mxu0 %v922
      %v1521 = vpop.f32.mrf.mxu0
      %v1522 = vpop.f32.mrf.mxu0
      %1523 = vmatmul.bf16.gmra.mxu0 %v923
      %v1524 = vpop.f32.mrf.mxu0
      %v1525 = vadd.f32 %v1388, %v1524
      %v1526 = vpop.f32.mrf.mxu0
      %v1527 = vadd.f32 %v1390, %v1526
      %1528 = vmatmul.bf16.gmra.mxu0 %v924
      %v1529 = vpop.f32.mrf.mxu0
      %v1530 = vpop.f32.mrf.mxu0
      %1531 = vmatmul.bf16.gmra.mxu0 %v925
      %v1532 = vpop.f32.mrf.mxu0
      %v1533 = vadd.f32 %v1396, %v1532
      %v1534 = vpop.f32.mrf.mxu0
      %v1535 = vadd.f32 %v1398, %v1534
      %1536 = vmatmul.bf16.gmra.mxu0 %v926
      %v1537 = vpop.f32.mrf.mxu0
      %v1538 = vpop.f32.mrf.mxu0
      %1539 = vmatmul.bf16.gmra.mxu0 %v927
      %v1540 = vpop.f32.mrf.mxu0
      %v1541 = vadd.f32 %v1404, %v1540
      %v1542 = vpop.f32.mrf.mxu0
      %v1543 = vadd.f32 %v1406, %v1542
      %1544 = vmatmul.bf16.gmra.mxu0 %v928
      %v1545 = vpop.f32.mrf.mxu0
      %v1546 = vpop.f32.mrf.mxu0
      %1547 = vmatmul.bf16.gmra.mxu0 %v929
      %v1548 = vpop.f32.mrf.mxu0
      %v1549 = vadd.f32 %v1412, %v1548
      %v1550 = vpop.f32.mrf.mxu0
      %v1551 = vadd.f32 %v1414, %v1550
      %1552 = vmatmul.bf16.gmra.mxu0 %v930
      %v1553 = vpop.f32.mrf.mxu0
      %v1554 = vpop.f32.mrf.mxu0
      %1555 = vmatmul.bf16.gmra.mxu0 %v931
      %v1556 = vpop.f32.mrf.mxu0
      %v1557 = vadd.f32 %v1420, %v1556
      %v1558 = vpop.f32.mrf.mxu0
      %v1559 = vadd.f32 %v1422, %v1558
      %1560 = vmatmul.bf16.gmra.mxu0 %v932
      %v1561 = vpop.f32.mrf.mxu0
      %v1562 = vpop.f32.mrf.mxu0
      %1563 = vmatmul.bf16.gmra.mxu0 %v933
      %v1564 = vpop.f32.mrf.mxu0
      %v1565 = vadd.f32 %v1428, %v1564
      %v1566 = vpop.f32.mrf.mxu0
      %v1567 = vadd.f32 %v1430, %v1566
      %1568 = vmatmul.bf16.gmra.mxu0 %v934
      %v1569 = vpop.f32.mrf.mxu0
      %v1570 = vpop.f32.mrf.mxu0
      %1571 = vmatmul.bf16.gmra.mxu0 %v935
      %v1572 = vpop.f32.mrf.mxu0
      %v1573 = vadd.f32 %v1436, %v1572
      %v1574 = vpop.f32.mrf.mxu0
      %v1575 = vadd.f32 %v1438, %v1574
      %1576 = vmatmul.bf16.gmra.mxu0 %v936
      %v1577 = vpop.f32.mrf.mxu0
      %v1578 = vpop.f32.mrf.mxu0
      %1579 = vmatmul.bf16.gmra.mxu0 %v977
      %v1580 = vpop.f32.mrf.mxu0
      %v1581 = vadd.f32 %v1444, %v1580
      %v1582 = vpop.f32.mrf.mxu0
      %v1583 = vadd.f32 %v1446, %v1582
      %1584 = vmatmul.bf16.gmra.mxu0 %v978
      %v1585 = vpop.f32.mrf.mxu0
      %v1586 = vpop.f32.mrf.mxu0
      %1587 = vmatmul.bf16.gmra.mxu0 %v989
      %v1588 = vpop.f32.mrf.mxu0
      %v1589 = vadd.f32 %v1452, %v1588
      %v1590 = vpop.f32.mrf.mxu0
      %v1591 = vadd.f32 %v1454, %v1590
      %1592 = vmatmul.bf16.gmra.mxu0 %v990
      %v1593 = vpop.f32.mrf.mxu0
      %v1594 = vpop.f32.mrf.mxu0
      %1595 = vdwg.mxu0
      %s1596 = scalar_lea.vmem %s1, 192
      %v1597 = vld [vmem:[%s1596] sm:$0xf]
      %v1598 = vld [vmem:[%s1596 + $0x4] sm:$0xf]
      %v1599 = vld [vmem:[%s1596 + $0x8] sm:$0xf]
      %v1600 = vld [vmem:[%s1596 + $0xc] sm:$0xf]
      %v1601 = vld [vmem:[%s1596 + $0x10] sm:$0xf]
      %v1602 = vld [vmem:[%s1596 + $0x14] sm:$0xf]
      %v1603 = vld [vmem:[%s1596 + $0x18] sm:$0xf]
      %v1604 = vld [vmem:[%s1596 + $0x1c] sm:$0xf]
      %v1605 = vld [vmem:[%s1596 + $0x20] sm:$0xf]
      %v1606 = vld [vmem:[%s1596 + $0x24] sm:$0xf]
      %v1607 = vld [vmem:[%s1596 + $0x28] sm:$0xf]
      %v1608 = vld [vmem:[%s1596 + $0x2c] sm:$0xf]
      %v1609 = vld [vmem:[%s1596 + $0x30] sm:$0xf]
      %v1610 = vld [vmem:[%s1596 + $0x34] sm:$0xf]
      %v1611 = vld [vmem:[%s1596 + $0x38] sm:$0xf]
      %v1612 = vld [vmem:[%s1596 + $0x3c] sm:$0xf]
      %v1613 = vld [vmem:[%s1596 + $0x40] sm:$0xf]
      %v1614 = vld [vmem:[%s1596 + $0x44] sm:$0xf]
      %v1615 = vld [vmem:[%s1596 + $0x48] sm:$0xf]
      %v1616 = vld [vmem:[%s1596 + $0x4c] sm:$0xf]
      %v1617 = vld [vmem:[%s1596 + $0x50] sm:$0xf]
      %v1618 = vld [vmem:[%s1596 + $0x54] sm:$0xf]
      %v1619 = vld [vmem:[%s1596 + $0x58] sm:$0xf]
      %v1620 = vld [vmem:[%s1596 + $0x5c] sm:$0xf]
      %v1621 = vld [vmem:[%s1596 + $0x60] sm:$0xf]
      %v1622 = vld [vmem:[%s1596 + $0x64] sm:$0xf]
      %v1623 = vld [vmem:[%s1596 + $0x68] sm:$0xf]
      %v1624 = vld [vmem:[%s1596 + $0x6c] sm:$0xf]
      %v1625 = vld [vmem:[%s1596 + $0x70] sm:$0xf]
      %v1626 = vld [vmem:[%s1596 + $0x74] sm:$0xf]
      %v1627 = vld [vmem:[%s1596 + $0x78] sm:$0xf]
      %v1628 = vld [vmem:[%s1596 + $0x7c] sm:$0xf]
      %v1629 = vld [vmem:[%s1596 + $0x80] sm:$0xf]
      %v1630 = vld [vmem:[%s1596 + $0x84] sm:$0xf]
      %v1631 = vld [vmem:[%s1596 + $0x88] sm:$0xf]
      %v1632 = vld [vmem:[%s1596 + $0x8c] sm:$0xf]
      %v1633 = vld [vmem:[%s1596 + $0x90] sm:$0xf]
      %v1634 = vld [vmem:[%s1596 + $0x94] sm:$0xf]
      %v1635 = vld [vmem:[%s1596 + $0x98] sm:$0xf]
      %v1636 = vld [vmem:[%s1596 + $0x9c] sm:$0xf]
      %v1637 = vld [vmem:[%s1596 + $0xa0] sm:$0xf]
      %v1638 = vld [vmem:[%s1596 + $0xa4] sm:$0xf]
      %v1639 = vld [vmem:[%s1596 + $0xa8] sm:$0xf]
      %v1640 = vld [vmem:[%s1596 + $0xac] sm:$0xf]
      %v1641 = vld [vmem:[%s1596 + $0xb0] sm:$0xf]
      %v1642 = vld [vmem:[%s1596 + $0xb4] sm:$0xf]
      %v1643 = vld [vmem:[%s1596 + $0xb8] sm:$0xf]
      %v1644 = vld [vmem:[%s1596 + $0xbc] sm:$0xf]
      %v1693 = vunpack.c.l.b16 %v1597
      %v1694 = vunpack.c.l.b16 %v1598
      %v1695 = vunpack.c.l.b16 %v1599
      %v1696 = vunpack.c.l.b16 %v1600
      %v1697 = vunpack.c.l.b16 %v1601
      %v1698 = vunpack.c.l.b16 %v1602
      %v1699 = vunpack.c.l.b16 %v1603
      %v1700 = vunpack.c.l.b16 %v1604
      %v1701 = vunpack.c.l.b16 %v1605
      %v1702 = vunpack.c.l.b16 %v1606
      %v1703 = vunpack.c.l.b16 %v1607
      %v1704 = vunpack.c.l.b16 %v1608
      %v1705 = vunpack.c.l.b16 %v1609
      %v1706 = vunpack.c.l.b16 %v1610
      %v1707 = vunpack.c.l.b16 %v1611
      %v1708 = vunpack.c.l.b16 %v1612
      %v1709 = vunpack.c.l.b16 %v1613
      %v1710 = vunpack.c.l.b16 %v1614
      %v1711 = vunpack.c.l.b16 %v1615
      %v1712 = vunpack.c.l.b16 %v1616
      %v1713 = vunpack.c.l.b16 %v1617
      %v1714 = vunpack.c.l.b16 %v1618
      %v1715 = vunpack.c.l.b16 %v1619
      %v1716 = vunpack.c.l.b16 %v1620
      %v1717 = vunpack.c.l.b16 %v1621
      %v1718 = vunpack.c.l.b16 %v1622
      %v1719 = vunpack.c.l.b16 %v1623
      %v1720 = vunpack.c.l.b16 %v1624
      %v1721 = vunpack.c.l.b16 %v1625
      %v1722 = vunpack.c.l.b16 %v1626
      %v1723 = vunpack.c.l.b16 %v1627
      %v1724 = vunpack.c.l.b16 %v1628
      %v1725 = vunpack.c.l.b16 %v1629
      %v1726 = vunpack.c.l.b16 %v1630
      %v1727 = vunpack.c.l.b16 %v1631
      %v1728 = vunpack.c.l.b16 %v1632
      %v1729 = vunpack.c.l.b16 %v1633
      %v1730 = vunpack.c.l.b16 %v1634
      %v1731 = vunpack.c.l.b16 %v1635
      %v1732 = vunpack.c.l.b16 %v1636
      %v1733 = vunpack.c.l.b16 %v1637
      %v1734 = vunpack.c.l.b16 %v1638
      %v1735 = vunpack.c.l.b16 %v1639
      %v1736 = vunpack.c.l.b16 %v1640
      %v1737 = vunpack.c.l.b16 %v1641
      %v1738 = vunpack.c.l.b16 %v1642
      %v1739 = vunpack.c.l.b16 %v1643
      %v1740 = vunpack.c.l.b16 %v1644
      %v1741 = vpack.c.b16 %v1694, %v1693
      %v1742 = vpack.c.b16 %v1696, %v1695
      %v1743 = vpack.c.b16 %v1698, %v1697
      %v1744 = vpack.c.b16 %v1700, %v1699
      %v1745 = vpack.c.b16 %v1702, %v1701
      %v1746 = vpack.c.b16 %v1704, %v1703
      %v1747 = vpack.c.b16 %v1706, %v1705
      %v1748 = vpack.c.b16 %v1708, %v1707
      %v1749 = vpack.c.b16 %v1710, %v1709
      %v1750 = vpack.c.b16 %v1712, %v1711
      %v1751 = vpack.c.b16 %v1714, %v1713
      %v1752 = vpack.c.b16 %v1716, %v1715
      %v1753 = vpack.c.b16 %v1718, %v1717
      %v1754 = vpack.c.b16 %v1720, %v1719
      %v1755 = vpack.c.b16 %v1722, %v1721
      %v1756 = vpack.c.b16 %v1724, %v1723
      %v1757 = vpack.c.b16 %v1726, %v1725
      %v1758 = vpack.c.b16 %v1728, %v1727
      %v1759 = vpack.c.b16 %v1730, %v1729
      %v1760 = vpack.c.b16 %v1732, %v1731
      %v1761 = vpack.c.b16 %v1734, %v1733
      %v1762 = vpack.c.b16 %v1736, %v1735
      %v1763 = vpack.c.b16 %v1738, %v1737
      %v1764 = vpack.c.b16 %v1740, %v1739
      %1789 = vmatpush.bf16.msra.mxu0 %v1748
      %1790 = vmatpush.bf16.msra.mxu0 %v1747
      %1791 = vmatpush.bf16.msra.mxu0 %v1746
      %1792 = vmatpush.bf16.msra.mxu0 %v1745
      %1793 = vmatpush.bf16.msra.mxu0 %v1744
      %1794 = vmatpush.bf16.msra.mxu0 %v1743
      %1795 = vmatpush.bf16.msra.mxu0 %v1742
      %1796 = vmatpush.bf16.msra.mxu0 %v1741
      %1797 = vmatmul.bf16.gmra.mxu0 %v905
      %v1798 = vpop.f32.mrf.mxu0
      %v1799 = vadd.f32 0.0, %v1798
      %v1800 = vpop.f32.mrf.mxu0
      %v1801 = vadd.f32 0.0, %v1800
      %1802 = vmatmul.bf16.gmra.mxu0 %v906
      %v1803 = vpop.f32.mrf.mxu0
      %v1804 = vadd.f32 0.0, %v1803
      %v1805 = vpop.f32.mrf.mxu0
      %1806 = vmatmul.bf16.gmra.mxu0 %v907
      %v1807 = vpop.f32.mrf.mxu0
      %v1808 = vadd.f32 0.0, %v1807
      %v1809 = vpop.f32.mrf.mxu0
      %v1810 = vadd.f32 0.0, %v1809
      %1811 = vmatmul.bf16.gmra.mxu0 %v908
      %v1812 = vpop.f32.mrf.mxu0
      %v1813 = vadd.f32 0.0, %v1812
      %v1814 = vpop.f32.mrf.mxu0
      %1815 = vmatmul.bf16.gmra.mxu0 %v909
      %v1816 = vpop.f32.mrf.mxu0
      %v1817 = vadd.f32 0.0, %v1816
      %v1818 = vpop.f32.mrf.mxu0
      %v1819 = vadd.f32 0.0, %v1818
      %1820 = vmatmul.bf16.gmra.mxu0 %v910
      %v1821 = vpop.f32.mrf.mxu0
      %v1822 = vadd.f32 0.0, %v1821
      %v1823 = vpop.f32.mrf.mxu0
      %1824 = vmatmul.bf16.gmra.mxu0 %v911
      %v1825 = vpop.f32.mrf.mxu0
      %v1826 = vadd.f32 0.0, %v1825
      %v1827 = vpop.f32.mrf.mxu0
      %v1828 = vadd.f32 0.0, %v1827
      %1829 = vmatmul.bf16.gmra.mxu0 %v912
      %v1830 = vpop.f32.mrf.mxu0
      %v1831 = vadd.f32 0.0, %v1830
      %v1832 = vpop.f32.mrf.mxu0
      %1833 = vmatmul.bf16.gmra.mxu0 %v913
      %v1834 = vpop.f32.mrf.mxu0
      %v1835 = vadd.f32 0.0, %v1834
      %v1836 = vpop.f32.mrf.mxu0
      %v1837 = vadd.f32 0.0, %v1836
      %1838 = vmatmul.bf16.gmra.mxu0 %v914
      %v1839 = vpop.f32.mrf.mxu0
      %v1840 = vadd.f32 0.0, %v1839
      %v1841 = vpop.f32.mrf.mxu0
      %1842 = vmatmul.bf16.gmra.mxu0 %v915
      %v1843 = vpop.f32.mrf.mxu0
      %v1844 = vadd.f32 0.0, %v1843
      %v1845 = vpop.f32.mrf.mxu0
      %v1846 = vadd.f32 0.0, %v1845
      %1847 = vmatmul.bf16.gmra.mxu0 %v916
      %v1848 = vpop.f32.mrf.mxu0
      %v1849 = vadd.f32 0.0, %v1848
      %v1850 = vpop.f32.mrf.mxu0
      %1851 = vmatmul.bf16.gmra.mxu0 %v917
      %v1852 = vpop.f32.mrf.mxu0
      %v1853 = vadd.f32 0.0, %v1852
      %v1854 = vpop.f32.mrf.mxu0
      %v1855 = vadd.f32 0.0, %v1854
      %1856 = vmatmul.bf16.gmra.mxu0 %v918
      %v1857 = vpop.f32.mrf.mxu0
      %v1858 = vadd.f32 0.0, %v1857
      %v1859 = vpop.f32.mrf.mxu0
      %1860 = vmatmul.bf16.gmra.mxu0 %v919
      %v1861 = vpop.f32.mrf.mxu0
      %v1862 = vadd.f32 0.0, %v1861
      %v1863 = vpop.f32.mrf.mxu0
      %v1864 = vadd.f32 0.0, %v1863
      %1865 = vmatmul.bf16.gmra.mxu0 %v920
      %v1866 = vpop.f32.mrf.mxu0
      %v1867 = vadd.f32 0.0, %v1866
      %v1868 = vpop.f32.mrf.mxu0
      %1869 = vmatmul.bf16.gmra.mxu0 %v921
      %v1870 = vpop.f32.mrf.mxu0
      %v1871 = vadd.f32 0.0, %v1870
      %v1872 = vpop.f32.mrf.mxu0
      %v1873 = vadd.f32 0.0, %v1872
      %1874 = vmatmul.bf16.gmra.mxu0 %v922
      %v1875 = vpop.f32.mrf.mxu0
      %v1876 = vadd.f32 0.0, %v1875
      %v1877 = vpop.f32.mrf.mxu0
      %1878 = vmatmul.bf16.gmra.mxu0 %v923
      %v1879 = vpop.f32.mrf.mxu0
      %v1880 = vadd.f32 0.0, %v1879
      %v1881 = vpop.f32.mrf.mxu0
      %v1882 = vadd.f32 0.0, %v1881
      %1883 = vmatmul.bf16.gmra.mxu0 %v924
      %v1884 = vpop.f32.mrf.mxu0
      %v1885 = vadd.f32 0.0, %v1884
      %v1886 = vpop.f32.mrf.mxu0
      %1887 = vmatmul.bf16.gmra.mxu0 %v925
      %v1888 = vpop.f32.mrf.mxu0
      %v1889 = vadd.f32 0.0, %v1888
      %v1890 = vpop.f32.mrf.mxu0
      %v1891 = vadd.f32 0.0, %v1890
      %1892 = vmatmul.bf16.gmra.mxu0 %v926
      %v1893 = vpop.f32.mrf.mxu0
      %v1894 = vadd.f32 0.0, %v1893
      %v1895 = vpop.f32.mrf.mxu0
      %1896 = vmatmul.bf16.gmra.mxu0 %v927
      %v1897 = vpop.f32.mrf.mxu0
      %v1898 = vadd.f32 0.0, %v1897
      %v1899 = vpop.f32.mrf.mxu0
      %v1900 = vadd.f32 0.0, %v1899
      %1901 = vmatmul.bf16.gmra.mxu0 %v928
      %v1902 = vpop.f32.mrf.mxu0
      %v1903 = vadd.f32 0.0, %v1902
      %v1904 = vpop.f32.mrf.mxu0
      %1905 = vmatmul.bf16.gmra.mxu0 %v929
      %v1906 = vpop.f32.mrf.mxu0
      %v1907 = vadd.f32 0.0, %v1906
      %v1908 = vpop.f32.mrf.mxu0
      %v1909 = vadd.f32 0.0, %v1908
      %1910 = vmatmul.bf16.gmra.mxu0 %v930
      %v1911 = vpop.f32.mrf.mxu0
      %v1912 = vadd.f32 0.0, %v1911
      %v1913 = vpop.f32.mrf.mxu0
      %1914 = vmatmul.bf16.gmra.mxu0 %v931
      %v1915 = vpop.f32.mrf.mxu0
      %v1916 = vadd.f32 0.0, %v1915
      %v1917 = vpop.f32.mrf.mxu0
      %v1918 = vadd.f32 0.0, %v1917
      %1919 = vmatmul.bf16.gmra.mxu0 %v932
      %v1920 = vpop.f32.mrf.mxu0
      %v1921 = vadd.f32 0.0, %v1920
      %v1922 = vpop.f32.mrf.mxu0
      %1923 = vmatmul.bf16.gmra.mxu0 %v933
      %v1924 = vpop.f32.mrf.mxu0
      %v1925 = vadd.f32 0.0, %v1924
      %v1926 = vpop.f32.mrf.mxu0
      %v1927 = vadd.f32 0.0, %v1926
      %1928 = vmatmul.bf16.gmra.mxu0 %v934
      %v1929 = vpop.f32.mrf.mxu0
      %v1930 = vadd.f32 0.0, %v1929
      %v1931 = vpop.f32.mrf.mxu0
      %1932 = vmatmul.bf16.gmra.mxu0 %v935
      %v1933 = vpop.f32.mrf.mxu0
      %v1934 = vadd.f32 0.0, %v1933
      %v1935 = vpop.f32.mrf.mxu0
      %v1936 = vadd.f32 0.0, %v1935
      %1937 = vmatmul.bf16.gmra.mxu0 %v936
      %v1938 = vpop.f32.mrf.mxu0
      %v1939 = vadd.f32 0.0, %v1938
      %v1940 = vpop.f32.mrf.mxu0
      %1941 = vdwg.mxu0
      %1942 = vmatpush.bf16.msra.mxu0 %v1756
      %1943 = vmatpush.bf16.msra.mxu0 %v1755
      %1944 = vmatpush.bf16.msra.mxu0 %v1754
      %1945 = vmatpush.bf16.msra.mxu0 %v1753
      %1946 = vmatpush.bf16.msra.mxu0 %v1752
      %1947 = vmatpush.bf16.msra.mxu0 %v1751
      %1948 = vmatpush.bf16.msra.mxu0 %v1750
      %1949 = vmatpush.bf16.msra.mxu0 %v1749
      %1950 = vmatmul.bf16.gmra.mxu0 %v907
      %v1951 = vpop.f32.mrf.mxu0
      %v1952 = vadd.f32 %v1799, %v1951
      %v1953 = vpop.f32.mrf.mxu0
      %v1954 = vadd.f32 %v1801, %v1953
      %1955 = vmatmul.bf16.gmra.mxu0 %v908
      %v1956 = vpop.f32.mrf.mxu0
      %v1957 = vadd.f32 %v1804, %v1956
      %v1958 = vpop.f32.mrf.mxu0
      %1959 = vmatmul.bf16.gmra.mxu0 %v909
      %v1960 = vpop.f32.mrf.mxu0
      %v1961 = vadd.f32 %v1808, %v1960
      %v1962 = vpop.f32.mrf.mxu0
      %v1963 = vadd.f32 %v1810, %v1962
      %1964 = vmatmul.bf16.gmra.mxu0 %v910
      %v1965 = vpop.f32.mrf.mxu0
      %v1966 = vadd.f32 %v1813, %v1965
      %v1967 = vpop.f32.mrf.mxu0
      %1968 = vmatmul.bf16.gmra.mxu0 %v911
      %v1969 = vpop.f32.mrf.mxu0
      %v1970 = vadd.f32 %v1817, %v1969
      %v1971 = vpop.f32.mrf.mxu0
      %v1972 = vadd.f32 %v1819, %v1971
      %1973 = vmatmul.bf16.gmra.mxu0 %v912
      %v1974 = vpop.f32.mrf.mxu0
      %v1975 = vadd.f32 %v1822, %v1974
      %v1976 = vpop.f32.mrf.mxu0
      %1977 = vmatmul.bf16.gmra.mxu0 %v913
      %v1978 = vpop.f32.mrf.mxu0
      %v1979 = vadd.f32 %v1826, %v1978
      %v1980 = vpop.f32.mrf.mxu0
      %v1981 = vadd.f32 %v1828, %v1980
      %1982 = vmatmul.bf16.gmra.mxu0 %v914
      %v1983 = vpop.f32.mrf.mxu0
      %v1984 = vadd.f32 %v1831, %v1983
      %v1985 = vpop.f32.mrf.mxu0
      %1986 = vmatmul.bf16.gmra.mxu0 %v915
      %v1987 = vpop.f32.mrf.mxu0
      %v1988 = vadd.f32 %v1835, %v1987
      %v1989 = vpop.f32.mrf.mxu0
      %v1990 = vadd.f32 %v1837, %v1989
      %1991 = vmatmul.bf16.gmra.mxu0 %v916
      %v1992 = vpop.f32.mrf.mxu0
      %v1993 = vadd.f32 %v1840, %v1992
      %v1994 = vpop.f32.mrf.mxu0
      %1995 = vmatmul.bf16.gmra.mxu0 %v917
      %v1996 = vpop.f32.mrf.mxu0
      %v1997 = vadd.f32 %v1844, %v1996
      %v1998 = vpop.f32.mrf.mxu0
      %v1999 = vadd.f32 %v1846, %v1998
      %2000 = vmatmul.bf16.gmra.mxu0 %v918
      %v2001 = vpop.f32.mrf.mxu0
      %v2002 = vadd.f32 %v1849, %v2001
      %v2003 = vpop.f32.mrf.mxu0
      %2004 = vmatmul.bf16.gmra.mxu0 %v919
      %v2005 = vpop.f32.mrf.mxu0
      %v2006 = vadd.f32 %v1853, %v2005
      %v2007 = vpop.f32.mrf.mxu0
      %v2008 = vadd.f32 %v1855, %v2007
      %2009 = vmatmul.bf16.gmra.mxu0 %v920
      %v2010 = vpop.f32.mrf.mxu0
      %v2011 = vadd.f32 %v1858, %v2010
      %v2012 = vpop.f32.mrf.mxu0
      %2013 = vmatmul.bf16.gmra.mxu0 %v921
      %v2014 = vpop.f32.mrf.mxu0
      %v2015 = vadd.f32 %v1862, %v2014
      %v2016 = vpop.f32.mrf.mxu0
      %v2017 = vadd.f32 %v1864, %v2016
      %2018 = vmatmul.bf16.gmra.mxu0 %v922
      %v2019 = vpop.f32.mrf.mxu0
      %v2020 = vadd.f32 %v1867, %v2019
      %v2021 = vpop.f32.mrf.mxu0
      %2022 = vmatmul.bf16.gmra.mxu0 %v923
      %v2023 = vpop.f32.mrf.mxu0
      %v2024 = vadd.f32 %v1871, %v2023
      %v2025 = vpop.f32.mrf.mxu0
      %v2026 = vadd.f32 %v1873, %v2025
      %2027 = vmatmul.bf16.gmra.mxu0 %v924
      %v2028 = vpop.f32.mrf.mxu0
      %v2029 = vadd.f32 %v1876, %v2028
      %v2030 = vpop.f32.mrf.mxu0
      %2031 = vmatmul.bf16.gmra.mxu0 %v925
      %v2032 = vpop.f32.mrf.mxu0
      %v2033 = vadd.f32 %v1880, %v2032
      %v2034 = vpop.f32.mrf.mxu0
      %v2035 = vadd.f32 %v1882, %v2034
      %2036 = vmatmul.bf16.gmra.mxu0 %v926
      %v2037 = vpop.f32.mrf.mxu0
      %v2038 = vadd.f32 %v1885, %v2037
      %v2039 = vpop.f32.mrf.mxu0
      %2040 = vmatmul.bf16.gmra.mxu0 %v927
      %v2041 = vpop.f32.mrf.mxu0
      %v2042 = vadd.f32 %v1889, %v2041
      %v2043 = vpop.f32.mrf.mxu0
      %v2044 = vadd.f32 %v1891, %v2043
      %2045 = vmatmul.bf16.gmra.mxu0 %v928
      %v2046 = vpop.f32.mrf.mxu0
      %v2047 = vadd.f32 %v1894, %v2046
      %v2048 = vpop.f32.mrf.mxu0
      %2049 = vmatmul.bf16.gmra.mxu0 %v929
      %v2050 = vpop.f32.mrf.mxu0
      %v2051 = vadd.f32 %v1898, %v2050
      %v2052 = vpop.f32.mrf.mxu0
      %v2053 = vadd.f32 %v1900, %v2052
      %2054 = vmatmul.bf16.gmra.mxu0 %v930
      %v2055 = vpop.f32.mrf.mxu0
      %v2056 = vadd.f32 %v1903, %v2055
      %v2057 = vpop.f32.mrf.mxu0
      %2058 = vmatmul.bf16.gmra.mxu0 %v931
      %v2059 = vpop.f32.mrf.mxu0
      %v2060 = vadd.f32 %v1907, %v2059
      %v2061 = vpop.f32.mrf.mxu0
      %v2062 = vadd.f32 %v1909, %v2061
      %2063 = vmatmul.bf16.gmra.mxu0 %v932
      %v2064 = vpop.f32.mrf.mxu0
      %v2065 = vadd.f32 %v1912, %v2064
      %v2066 = vpop.f32.mrf.mxu0
      %2067 = vmatmul.bf16.gmra.mxu0 %v933
      %v2068 = vpop.f32.mrf.mxu0
      %v2069 = vadd.f32 %v1916, %v2068
      %v2070 = vpop.f32.mrf.mxu0
      %v2071 = vadd.f32 %v1918, %v2070
      %2072 = vmatmul.bf16.gmra.mxu0 %v934
      %v2073 = vpop.f32.mrf.mxu0
      %v2074 = vadd.f32 %v1921, %v2073
      %v2075 = vpop.f32.mrf.mxu0
      %2076 = vmatmul.bf16.gmra.mxu0 %v935
      %v2077 = vpop.f32.mrf.mxu0
      %v2078 = vadd.f32 %v1925, %v2077
      %v2079 = vpop.f32.mrf.mxu0
      %v2080 = vadd.f32 %v1927, %v2079
      %2081 = vmatmul.bf16.gmra.mxu0 %v936
      %v2082 = vpop.f32.mrf.mxu0
      %v2083 = vadd.f32 %v1930, %v2082
      %v2084 = vpop.f32.mrf.mxu0
      %2085 = vmatmul.bf16.gmra.mxu0 %v977
      %v2086 = vpop.f32.mrf.mxu0
      %v2087 = vadd.f32 %v1934, %v2086
      %v2088 = vpop.f32.mrf.mxu0
      %v2089 = vadd.f32 %v1936, %v2088
      %2090 = vmatmul.bf16.gmra.mxu0 %v978
      %v2091 = vpop.f32.mrf.mxu0
      %v2092 = vadd.f32 %v1939, %v2091
      %v2093 = vpop.f32.mrf.mxu0
      %2094 = vdwg.mxu0
      %2095 = vmatpush.bf16.msra.mxu0 %v1764
      %2096 = vmatpush.bf16.msra.mxu0 %v1763
      %2097 = vmatpush.bf16.msra.mxu0 %v1762
      %2098 = vmatpush.bf16.msra.mxu0 %v1761
      %2099 = vmatpush.bf16.msra.mxu0 %v1760
      %2100 = vmatpush.bf16.msra.mxu0 %v1759
      %2101 = vmatpush.bf16.msra.mxu0 %v1758
      %2102 = vmatpush.bf16.msra.mxu0 %v1757
      %2103 = vmatmul.bf16.gmra.mxu0 %v909
      %v2104 = vpop.f32.mrf.mxu0
      %v2105 = vadd.f32 %v1952, %v2104
      %v2106 = vpop.f32.mrf.mxu0
      %v2107 = vadd.f32 %v1954, %v2106
      %2108 = vmatmul.bf16.gmra.mxu0 %v910
      %v2109 = vpop.f32.mrf.mxu0
      %v2110 = vadd.f32 %v1957, %v2109
      %v2111 = vpop.f32.mrf.mxu0
      %2112 = vmatmul.bf16.gmra.mxu0 %v911
      %v2113 = vpop.f32.mrf.mxu0
      %v2114 = vadd.f32 %v1961, %v2113
      %v2115 = vpop.f32.mrf.mxu0
      %v2116 = vadd.f32 %v1963, %v2115
      %2117 = vmatmul.bf16.gmra.mxu0 %v912
      %v2118 = vpop.f32.mrf.mxu0
      %v2119 = vadd.f32 %v1966, %v2118
      %v2120 = vpop.f32.mrf.mxu0
      %2121 = vmatmul.bf16.gmra.mxu0 %v913
      %v2122 = vpop.f32.mrf.mxu0
      %v2123 = vadd.f32 %v1970, %v2122
      %v2124 = vpop.f32.mrf.mxu0
      %v2125 = vadd.f32 %v1972, %v2124
      %2126 = vmatmul.bf16.gmra.mxu0 %v914
      %v2127 = vpop.f32.mrf.mxu0
      %v2128 = vadd.f32 %v1975, %v2127
      %v2129 = vpop.f32.mrf.mxu0
      %2130 = vmatmul.bf16.gmra.mxu0 %v915
      %v2131 = vpop.f32.mrf.mxu0
      %v2132 = vadd.f32 %v1979, %v2131
      %v2133 = vpop.f32.mrf.mxu0
      %v2134 = vadd.f32 %v1981, %v2133
      %2135 = vmatmul.bf16.gmra.mxu0 %v916
      %v2136 = vpop.f32.mrf.mxu0
      %v2137 = vadd.f32 %v1984, %v2136
      %v2138 = vpop.f32.mrf.mxu0
      %2139 = vmatmul.bf16.gmra.mxu0 %v917
      %v2140 = vpop.f32.mrf.mxu0
      %v2141 = vadd.f32 %v1988, %v2140
      %v2142 = vpop.f32.mrf.mxu0
      %v2143 = vadd.f32 %v1990, %v2142
      %2144 = vmatmul.bf16.gmra.mxu0 %v918
      %v2145 = vpop.f32.mrf.mxu0
      %v2146 = vadd.f32 %v1993, %v2145
      %v2147 = vpop.f32.mrf.mxu0
      %2148 = vmatmul.bf16.gmra.mxu0 %v919
      %v2149 = vpop.f32.mrf.mxu0
      %v2150 = vadd.f32 %v1997, %v2149
      %v2151 = vpop.f32.mrf.mxu0
      %v2152 = vadd.f32 %v1999, %v2151
      %2153 = vmatmul.bf16.gmra.mxu0 %v920
      %v2154 = vpop.f32.mrf.mxu0
      %v2155 = vadd.f32 %v2002, %v2154
      %v2156 = vpop.f32.mrf.mxu0
      %2157 = vmatmul.bf16.gmra.mxu0 %v921
      %v2158 = vpop.f32.mrf.mxu0
      %v2159 = vadd.f32 %v2006, %v2158
      %v2160 = vpop.f32.mrf.mxu0
      %v2161 = vadd.f32 %v2008, %v2160
      %2162 = vmatmul.bf16.gmra.mxu0 %v922
      %v2163 = vpop.f32.mrf.mxu0
      %v2164 = vadd.f32 %v2011, %v2163
      %v2165 = vpop.f32.mrf.mxu0
      %2166 = vmatmul.bf16.gmra.mxu0 %v923
      %v2167 = vpop.f32.mrf.mxu0
      %v2168 = vadd.f32 %v2015, %v2167
      %v2169 = vpop.f32.mrf.mxu0
      %v2170 = vadd.f32 %v2017, %v2169
      %2171 = vmatmul.bf16.gmra.mxu0 %v924
      %v2172 = vpop.f32.mrf.mxu0
      %v2173 = vadd.f32 %v2020, %v2172
      %v2174 = vpop.f32.mrf.mxu0
      %2175 = vmatmul.bf16.gmra.mxu0 %v925
      %v2176 = vpop.f32.mrf.mxu0
      %v2177 = vadd.f32 %v2024, %v2176
      %v2178 = vpop.f32.mrf.mxu0
      %v2179 = vadd.f32 %v2026, %v2178
      %2180 = vmatmul.bf16.gmra.mxu0 %v926
      %v2181 = vpop.f32.mrf.mxu0
      %v2182 = vadd.f32 %v2029, %v2181
      %v2183 = vpop.f32.mrf.mxu0
      %2184 = vmatmul.bf16.gmra.mxu0 %v927
      %v2185 = vpop.f32.mrf.mxu0
      %v2186 = vadd.f32 %v2033, %v2185
      %v2187 = vpop.f32.mrf.mxu0
      %v2188 = vadd.f32 %v2035, %v2187
      %2189 = vmatmul.bf16.gmra.mxu0 %v928
      %v2190 = vpop.f32.mrf.mxu0
      %v2191 = vadd.f32 %v2038, %v2190
      %v2192 = vpop.f32.mrf.mxu0
      %2193 = vmatmul.bf16.gmra.mxu0 %v929
      %v2194 = vpop.f32.mrf.mxu0
      %v2195 = vadd.f32 %v2042, %v2194
      %v2196 = vpop.f32.mrf.mxu0
      %v2197 = vadd.f32 %v2044, %v2196
      %2198 = vmatmul.bf16.gmra.mxu0 %v930
      %v2199 = vpop.f32.mrf.mxu0
      %v2200 = vadd.f32 %v2047, %v2199
      %v2201 = vpop.f32.mrf.mxu0
      %2202 = vmatmul.bf16.gmra.mxu0 %v931
      %v2203 = vpop.f32.mrf.mxu0
      %v2204 = vadd.f32 %v2051, %v2203
      %v2205 = vpop.f32.mrf.mxu0
      %v2206 = vadd.f32 %v2053, %v2205
      %2207 = vmatmul.bf16.gmra.mxu0 %v932
      %v2208 = vpop.f32.mrf.mxu0
      %v2209 = vadd.f32 %v2056, %v2208
      %v2210 = vpop.f32.mrf.mxu0
      %2211 = vmatmul.bf16.gmra.mxu0 %v933
      %v2212 = vpop.f32.mrf.mxu0
      %v2213 = vadd.f32 %v2060, %v2212
      %v2214 = vpop.f32.mrf.mxu0
      %v2215 = vadd.f32 %v2062, %v2214
      %2216 = vmatmul.bf16.gmra.mxu0 %v934
      %v2217 = vpop.f32.mrf.mxu0
      %v2218 = vadd.f32 %v2065, %v2217
      %v2219 = vpop.f32.mrf.mxu0
      %2220 = vmatmul.bf16.gmra.mxu0 %v935
      %v2221 = vpop.f32.mrf.mxu0
      %v2222 = vadd.f32 %v2069, %v2221
      %v2223 = vpop.f32.mrf.mxu0
      %v2224 = vadd.f32 %v2071, %v2223
      %2225 = vmatmul.bf16.gmra.mxu0 %v936
      %v2226 = vpop.f32.mrf.mxu0
      %v2227 = vadd.f32 %v2074, %v2226
      %v2228 = vpop.f32.mrf.mxu0
      %2229 = vmatmul.bf16.gmra.mxu0 %v977
      %v2230 = vpop.f32.mrf.mxu0
      %v2231 = vadd.f32 %v2078, %v2230
      %v2232 = vpop.f32.mrf.mxu0
      %v2233 = vadd.f32 %v2080, %v2232
      %2234 = vmatmul.bf16.gmra.mxu0 %v978
      %v2235 = vpop.f32.mrf.mxu0
      %v2236 = vadd.f32 %v2083, %v2235
      %v2237 = vpop.f32.mrf.mxu0
      %2238 = vmatmul.bf16.gmra.mxu0 %v989
      %v2239 = vpop.f32.mrf.mxu0
      %v2240 = vadd.f32 %v2087, %v2239
      %v2241 = vpop.f32.mrf.mxu0
      %v2242 = vadd.f32 %v2089, %v2241
      %2243 = vmatmul.bf16.gmra.mxu0 %v990
      %v2244 = vpop.f32.mrf.mxu0
      %v2245 = vadd.f32 %v2092, %v2244
      %v2246 = vpop.f32.mrf.mxu0
      %2247 = vdwg.mxu0
      %vm2296 = vcmask 1046528
      %v2297 = vrot.slane %v2105, 1
      %v2298 = vrot.slane %v2107, 1
      %v2299 = vsel %vm2296, %v2297, %v2298
      %v2300 = vrot.slane %v2110, 1
      %v2301 = vsel %vm2296, %v2298, %v2300
      %v2302 = vrot.slane %v2114, 1
      %v2303 = vrot.slane %v2116, 1
      %v2304 = vsel %vm2296, %v2302, %v2303
      %v2305 = vrot.slane %v2119, 1
      %v2306 = vsel %vm2296, %v2303, %v2305
      %v2307 = vrot.slane %v2123, 1
      %v2308 = vrot.slane %v2125, 1
      %v2309 = vsel %vm2296, %v2307, %v2308
      %v2310 = vrot.slane %v2128, 1
      %v2311 = vsel %vm2296, %v2308, %v2310
      %v2312 = vrot.slane %v2132, 1
      %v2313 = vrot.slane %v2134, 1
      %v2314 = vsel %vm2296, %v2312, %v2313
      %v2315 = vrot.slane %v2137, 1
      %v2316 = vsel %vm2296, %v2313, %v2315
      %v2317 = vrot.slane %v2141, 1
      %v2318 = vrot.slane %v2143, 1
      %v2319 = vsel %vm2296, %v2317, %v2318
      %v2320 = vrot.slane %v2146, 1
      %v2321 = vsel %vm2296, %v2318, %v2320
      %v2322 = vrot.slane %v2150, 1
      %v2323 = vrot.slane %v2152, 1
      %v2324 = vsel %vm2296, %v2322, %v2323
      %v2325 = vrot.slane %v2155, 1
      %v2326 = vsel %vm2296, %v2323, %v2325
      %v2327 = vrot.slane %v2159, 1
      %v2328 = vrot.slane %v2161, 1
      %v2329 = vsel %vm2296, %v2327, %v2328
      %v2330 = vrot.slane %v2164, 1
      %v2331 = vsel %vm2296, %v2328, %v2330
      %v2332 = vrot.slane %v2168, 1
      %v2333 = vrot.slane %v2170, 1
      %v2334 = vsel %vm2296, %v2332, %v2333
      %v2335 = vrot.slane %v2173, 1
      %v2336 = vsel %vm2296, %v2333, %v2335
      %v2337 = vrot.slane %v2177, 1
      %v2338 = vrot.slane %v2179, 1
      %v2339 = vsel %vm2296, %v2337, %v2338
      %v2340 = vrot.slane %v2182, 1
      %v2341 = vsel %vm2296, %v2338, %v2340
      %v2342 = vrot.slane %v2186, 1
      %v2343 = vrot.slane %v2188, 1
      %v2344 = vsel %vm2296, %v2342, %v2343
      %v2345 = vrot.slane %v2191, 1
      %v2346 = vsel %vm2296, %v2343, %v2345
      %v2347 = vrot.slane %v2195, 1
      %v2348 = vrot.slane %v2197, 1
      %v2349 = vsel %vm2296, %v2347, %v2348
      %v2350 = vrot.slane %v2200, 1
      %v2351 = vsel %vm2296, %v2348, %v2350
      %v2352 = vrot.slane %v2204, 1
      %v2353 = vrot.slane %v2206, 1
      %v2354 = vsel %vm2296, %v2352, %v2353
      %v2355 = vrot.slane %v2209, 1
      %v2356 = vsel %vm2296, %v2353, %v2355
      %v2357 = vrot.slane %v2213, 1
      %v2358 = vrot.slane %v2215, 1
      %v2359 = vsel %vm2296, %v2357, %v2358
      %v2360 = vrot.slane %v2218, 1
      %v2361 = vsel %vm2296, %v2358, %v2360
      %v2362 = vrot.slane %v2222, 1
      %v2363 = vrot.slane %v2224, 1
      %v2364 = vsel %vm2296, %v2362, %v2363
      %v2365 = vrot.slane %v2227, 1
      %v2366 = vsel %vm2296, %v2363, %v2365
      %v2367 = vrot.slane %v2231, 1
      %v2368 = vrot.slane %v2233, 1
      %v2369 = vsel %vm2296, %v2367, %v2368
      %v2370 = vrot.slane %v2236, 1
      %v2371 = vsel %vm2296, %v2368, %v2370
      %v2372 = vrot.slane %v2240, 1
      %v2373 = vrot.slane %v2242, 1
      %v2374 = vsel %vm2296, %v2372, %v2373
      %v2375 = vrot.slane %v2245, 1
      %v2376 = vsel %vm2296, %v2373, %v2375
      %v2409 = vadd.f32 %v1469, %v2299
      %v2410 = vadd.f32 %v1471, %v2301
      %v2411 = vadd.f32 %v1477, %v2304
      %v2412 = vadd.f32 %v1479, %v2306
      %v2413 = vadd.f32 %v1485, %v2309
      %v2414 = vadd.f32 %v1487, %v2311
      %v2415 = vadd.f32 %v1493, %v2314
      %v2416 = vadd.f32 %v1495, %v2316
      %v2417 = vadd.f32 %v1501, %v2319
      %v2418 = vadd.f32 %v1503, %v2321
      %v2419 = vadd.f32 %v1509, %v2324
      %v2420 = vadd.f32 %v1511, %v2326
      %v2421 = vadd.f32 %v1517, %v2329
      %v2422 = vadd.f32 %v1519, %v2331
      %v2423 = vadd.f32 %v1525, %v2334
      %v2424 = vadd.f32 %v1527, %v2336
      %v2425 = vadd.f32 %v1533, %v2339
      %v2426 = vadd.f32 %v1535, %v2341
      %v2427 = vadd.f32 %v1541, %v2344
      %v2428 = vadd.f32 %v1543, %v2346
      %v2429 = vadd.f32 %v1549, %v2349
      %v2430 = vadd.f32 %v1551, %v2351
      %v2431 = vadd.f32 %v1557, %v2354
      %v2432 = vadd.f32 %v1559, %v2356
      %v2433 = vadd.f32 %v1565, %v2359
      %v2434 = vadd.f32 %v1567, %v2361
      %v2435 = vadd.f32 %v1573, %v2364
      %v2436 = vadd.f32 %v1575, %v2366
      %v2437 = vadd.f32 %v1581, %v2369
      %v2438 = vadd.f32 %v1583, %v2371
      %v2439 = vadd.f32 %v1589, %v2374
      %v2440 = vadd.f32 %v1591, %v2376
      %s2441 = scalar_lea.vmem %s1, 384
      %v2442 = vld [vmem:[%s2441] sm:$0xf]
      %v2443 = vld [vmem:[%s2441 + $0x4] sm:$0xf]
      %v2444 = vld [vmem:[%s2441 + $0x8] sm:$0xf]
      %v2445 = vld [vmem:[%s2441 + $0xc] sm:$0xf]
      %v2446 = vld [vmem:[%s2441 + $0x10] sm:$0xf]
      %v2447 = vld [vmem:[%s2441 + $0x14] sm:$0xf]
      %v2448 = vld [vmem:[%s2441 + $0x18] sm:$0xf]
      %v2449 = vld [vmem:[%s2441 + $0x1c] sm:$0xf]
      %v2450 = vld [vmem:[%s2441 + $0x20] sm:$0xf]
      %v2451 = vld [vmem:[%s2441 + $0x24] sm:$0xf]
      %v2452 = vld [vmem:[%s2441 + $0x28] sm:$0xf]
      %v2453 = vld [vmem:[%s2441 + $0x2c] sm:$0xf]
      %v2454 = vld [vmem:[%s2441 + $0x30] sm:$0xf]
      %v2455 = vld [vmem:[%s2441 + $0x34] sm:$0xf]
      %v2456 = vld [vmem:[%s2441 + $0x38] sm:$0xf]
      %v2457 = vld [vmem:[%s2441 + $0x3c] sm:$0xf]
      %v2458 = vld [vmem:[%s2441 + $0x40] sm:$0xf]
      %v2459 = vld [vmem:[%s2441 + $0x44] sm:$0xf]
      %v2460 = vld [vmem:[%s2441 + $0x48] sm:$0xf]
      %v2461 = vld [vmem:[%s2441 + $0x4c] sm:$0xf]
      %v2462 = vld [vmem:[%s2441 + $0x50] sm:$0xf]
      %v2463 = vld [vmem:[%s2441 + $0x54] sm:$0xf]
      %v2464 = vld [vmem:[%s2441 + $0x58] sm:$0xf]
      %v2465 = vld [vmem:[%s2441 + $0x5c] sm:$0xf]
      %v2466 = vld [vmem:[%s2441 + $0x60] sm:$0xf]
      %v2467 = vld [vmem:[%s2441 + $0x64] sm:$0xf]
      %v2468 = vld [vmem:[%s2441 + $0x68] sm:$0xf]
      %v2469 = vld [vmem:[%s2441 + $0x6c] sm:$0xf]
      %v2470 = vld [vmem:[%s2441 + $0x70] sm:$0xf]
      %v2471 = vld [vmem:[%s2441 + $0x74] sm:$0xf]
      %v2472 = vld [vmem:[%s2441 + $0x78] sm:$0xf]
      %v2473 = vld [vmem:[%s2441 + $0x7c] sm:$0xf]
      %v2474 = vld [vmem:[%s2441 + $0x80] sm:$0xf]
      %v2475 = vld [vmem:[%s2441 + $0x84] sm:$0xf]
      %v2476 = vld [vmem:[%s2441 + $0x88] sm:$0xf]
      %v2477 = vld [vmem:[%s2441 + $0x8c] sm:$0xf]
      %v2478 = vld [vmem:[%s2441 + $0x90] sm:$0xf]
      %v2479 = vld [vmem:[%s2441 + $0x94] sm:$0xf]
      %v2480 = vld [vmem:[%s2441 + $0x98] sm:$0xf]
      %v2481 = vld [vmem:[%s2441 + $0x9c] sm:$0xf]
      %v2482 = vld [vmem:[%s2441 + $0xa0] sm:$0xf]
      %v2483 = vld [vmem:[%s2441 + $0xa4] sm:$0xf]
      %v2484 = vld [vmem:[%s2441 + $0xa8] sm:$0xf]
      %v2485 = vld [vmem:[%s2441 + $0xac] sm:$0xf]
      %v2486 = vld [vmem:[%s2441 + $0xb0] sm:$0xf]
      %v2487 = vld [vmem:[%s2441 + $0xb4] sm:$0xf]
      %v2488 = vld [vmem:[%s2441 + $0xb8] sm:$0xf]
      %v2489 = vld [vmem:[%s2441 + $0xbc] sm:$0xf]
      %v2538 = vunpack.c.l.b16 %v2442
      %v2539 = vunpack.c.l.b16 %v2443
      %v2540 = vunpack.c.l.b16 %v2444
      %v2541 = vunpack.c.l.b16 %v2445
      %v2542 = vunpack.c.l.b16 %v2446
      %v2543 = vunpack.c.l.b16 %v2447
      %v2544 = vunpack.c.l.b16 %v2448
      %v2545 = vunpack.c.l.b16 %v2449
      %v2546 = vunpack.c.l.b16 %v2450
      %v2547 = vunpack.c.l.b16 %v2451
      %v2548 = vunpack.c.l.b16 %v2452
      %v2549 = vunpack.c.l.b16 %v2453
      %v2550 = vunpack.c.l.b16 %v2454
      %v2551 = vunpack.c.l.b16 %v2455
      %v2552 = vunpack.c.l.b16 %v2456
      %v2553 = vunpack.c.l.b16 %v2457
      %v2554 = vunpack.c.l.b16 %v2458
      %v2555 = vunpack.c.l.b16 %v2459
      %v2556 = vunpack.c.l.b16 %v2460
      %v2557 = vunpack.c.l.b16 %v2461
      %v2558 = vunpack.c.l.b16 %v2462
      %v2559 = vunpack.c.l.b16 %v2463
      %v2560 = vunpack.c.l.b16 %v2464
      %v2561 = vunpack.c.l.b16 %v2465
      %v2562 = vunpack.c.l.b16 %v2466
      %v2563 = vunpack.c.l.b16 %v2467
      %v2564 = vunpack.c.l.b16 %v2468
      %v2565 = vunpack.c.l.b16 %v2469
      %v2566 = vunpack.c.l.b16 %v2470
      %v2567 = vunpack.c.l.b16 %v2471
      %v2568 = vunpack.c.l.b16 %v2472
      %v2569 = vunpack.c.l.b16 %v2473
      %v2570 = vunpack.c.l.b16 %v2474
      %v2571 = vunpack.c.l.b16 %v2475
      %v2572 = vunpack.c.l.b16 %v2476
      %v2573 = vunpack.c.l.b16 %v2477
      %v2574 = vunpack.c.l.b16 %v2478
      %v2575 = vunpack.c.l.b16 %v2479
      %v2576 = vunpack.c.l.b16 %v2480
      %v2577 = vunpack.c.l.b16 %v2481
      %v2578 = vunpack.c.l.b16 %v2482
      %v2579 = vunpack.c.l.b16 %v2483
      %v2580 = vunpack.c.l.b16 %v2484
      %v2581 = vunpack.c.l.b16 %v2485
      %v2582 = vunpack.c.l.b16 %v2486
      %v2583 = vunpack.c.l.b16 %v2487
      %v2584 = vunpack.c.l.b16 %v2488
      %v2585 = vunpack.c.l.b16 %v2489
      %v2586 = vpack.c.b16 %v2539, %v2538
      %v2587 = vpack.c.b16 %v2541, %v2540
      %v2588 = vpack.c.b16 %v2543, %v2542
      %v2589 = vpack.c.b16 %v2545, %v2544
      %v2590 = vpack.c.b16 %v2547, %v2546
      %v2591 = vpack.c.b16 %v2549, %v2548
      %v2592 = vpack.c.b16 %v2551, %v2550
      %v2593 = vpack.c.b16 %v2553, %v2552
      %v2594 = vpack.c.b16 %v2555, %v2554
      %v2595 = vpack.c.b16 %v2557, %v2556
      %v2596 = vpack.c.b16 %v2559, %v2558
      %v2597 = vpack.c.b16 %v2561, %v2560
      %v2598 = vpack.c.b16 %v2563, %v2562
      %v2599 = vpack.c.b16 %v2565, %v2564
      %v2600 = vpack.c.b16 %v2567, %v2566
      %v2601 = vpack.c.b16 %v2569, %v2568
      %v2602 = vpack.c.b16 %v2571, %v2570
      %v2603 = vpack.c.b16 %v2573, %v2572
      %v2604 = vpack.c.b16 %v2575, %v2574
      %v2605 = vpack.c.b16 %v2577, %v2576
      %v2606 = vpack.c.b16 %v2579, %v2578
      %v2607 = vpack.c.b16 %v2581, %v2580
      %v2608 = vpack.c.b16 %v2583, %v2582
      %v2609 = vpack.c.b16 %v2585, %v2584
      %2634 = vmatpush.bf16.msra.mxu0 %v2593
      %2635 = vmatpush.bf16.msra.mxu0 %v2592
      %2636 = vmatpush.bf16.msra.mxu0 %v2591
      %2637 = vmatpush.bf16.msra.mxu0 %v2590
      %2638 = vmatpush.bf16.msra.mxu0 %v2589
      %2639 = vmatpush.bf16.msra.mxu0 %v2588
      %2640 = vmatpush.bf16.msra.mxu0 %v2587
      %2641 = vmatpush.bf16.msra.mxu0 %v2586
      %2642 = vmatmul.bf16.gmra.mxu0 %v905
      %v2643 = vpop.f32.mrf.mxu0
      %v2644 = vadd.f32 0.0, %v2643
      %v2645 = vpop.f32.mrf.mxu0
      %v2646 = vadd.f32 0.0, %v2645
      %2647 = vmatmul.bf16.gmra.mxu0 %v906
      %v2648 = vpop.f32.mrf.mxu0
      %v2649 = vadd.f32 0.0, %v2648
      %v2650 = vpop.f32.mrf.mxu0
      %2651 = vmatmul.bf16.gmra.mxu0 %v907
      %v2652 = vpop.f32.mrf.mxu0
      %v2653 = vadd.f32 0.0, %v2652
      %v2654 = vpop.f32.mrf.mxu0
      %v2655 = vadd.f32 0.0, %v2654
      %2656 = vmatmul.bf16.gmra.mxu0 %v908
      %v2657 = vpop.f32.mrf.mxu0
      %v2658 = vadd.f32 0.0, %v2657
      %v2659 = vpop.f32.mrf.mxu0
      %2660 = vmatmul.bf16.gmra.mxu0 %v909
      %v2661 = vpop.f32.mrf.mxu0
      %v2662 = vadd.f32 0.0, %v2661
      %v2663 = vpop.f32.mrf.mxu0
      %v2664 = vadd.f32 0.0, %v2663
      %2665 = vmatmul.bf16.gmra.mxu0 %v910
      %v2666 = vpop.f32.mrf.mxu0
      %v2667 = vadd.f32 0.0, %v2666
      %v2668 = vpop.f32.mrf.mxu0
      %2669 = vmatmul.bf16.gmra.mxu0 %v911
      %v2670 = vpop.f32.mrf.mxu0
      %v2671 = vadd.f32 0.0, %v2670
      %v2672 = vpop.f32.mrf.mxu0
      %v2673 = vadd.f32 0.0, %v2672
      %2674 = vmatmul.bf16.gmra.mxu0 %v912
      %v2675 = vpop.f32.mrf.mxu0
      %v2676 = vadd.f32 0.0, %v2675
      %v2677 = vpop.f32.mrf.mxu0
      %2678 = vmatmul.bf16.gmra.mxu0 %v913
      %v2679 = vpop.f32.mrf.mxu0
      %v2680 = vadd.f32 0.0, %v2679
      %v2681 = vpop.f32.mrf.mxu0
      %v2682 = vadd.f32 0.0, %v2681
      %2683 = vmatmul.bf16.gmra.mxu0 %v914
      %v2684 = vpop.f32.mrf.mxu0
      %v2685 = vadd.f32 0.0, %v2684
      %v2686 = vpop.f32.mrf.mxu0
      %2687 = vmatmul.bf16.gmra.mxu0 %v915
      %v2688 = vpop.f32.mrf.mxu0
      %v2689 = vadd.f32 0.0, %v2688
      %v2690 = vpop.f32.mrf.mxu0
      %v2691 = vadd.f32 0.0, %v2690
      %2692 = vmatmul.bf16.gmra.mxu0 %v916
      %v2693 = vpop.f32.mrf.mxu0
      %v2694 = vadd.f32 0.0, %v2693
      %v2695 = vpop.f32.mrf.mxu0
      %2696 = vmatmul.bf16.gmra.mxu0 %v917
      %v2697 = vpop.f32.mrf.mxu0
      %v2698 = vadd.f32 0.0, %v2697
      %v2699 = vpop.f32.mrf.mxu0
      %v2700 = vadd.f32 0.0, %v2699
      %2701 = vmatmul.bf16.gmra.mxu0 %v918
      %v2702 = vpop.f32.mrf.mxu0
      %v2703 = vadd.f32 0.0, %v2702
      %v2704 = vpop.f32.mrf.mxu0
      %2705 = vmatmul.bf16.gmra.mxu0 %v919
      %v2706 = vpop.f32.mrf.mxu0
      %v2707 = vadd.f32 0.0, %v2706
      %v2708 = vpop.f32.mrf.mxu0
      %v2709 = vadd.f32 0.0, %v2708
      %2710 = vmatmul.bf16.gmra.mxu0 %v920
      %v2711 = vpop.f32.mrf.mxu0
      %v2712 = vadd.f32 0.0, %v2711
      %v2713 = vpop.f32.mrf.mxu0
      %2714 = vmatmul.bf16.gmra.mxu0 %v921
      %v2715 = vpop.f32.mrf.mxu0
      %v2716 = vadd.f32 0.0, %v2715
      %v2717 = vpop.f32.mrf.mxu0
      %v2718 = vadd.f32 0.0, %v2717
      %2719 = vmatmul.bf16.gmra.mxu0 %v922
      %v2720 = vpop.f32.mrf.mxu0
      %v2721 = vadd.f32 0.0, %v2720
      %v2722 = vpop.f32.mrf.mxu0
      %2723 = vmatmul.bf16.gmra.mxu0 %v923
      %v2724 = vpop.f32.mrf.mxu0
      %v2725 = vadd.f32 0.0, %v2724
      %v2726 = vpop.f32.mrf.mxu0
      %v2727 = vadd.f32 0.0, %v2726
      %2728 = vmatmul.bf16.gmra.mxu0 %v924
      %v2729 = vpop.f32.mrf.mxu0
      %v2730 = vadd.f32 0.0, %v2729
      %v2731 = vpop.f32.mrf.mxu0
      %2732 = vmatmul.bf16.gmra.mxu0 %v925
      %v2733 = vpop.f32.mrf.mxu0
      %v2734 = vadd.f32 0.0, %v2733
      %v2735 = vpop.f32.mrf.mxu0
      %v2736 = vadd.f32 0.0, %v2735
      %2737 = vmatmul.bf16.gmra.mxu0 %v926
      %v2738 = vpop.f32.mrf.mxu0
      %v2739 = vadd.f32 0.0, %v2738
      %v2740 = vpop.f32.mrf.mxu0
      %2741 = vmatmul.bf16.gmra.mxu0 %v927
      %v2742 = vpop.f32.mrf.mxu0
      %v2743 = vadd.f32 0.0, %v2742
      %v2744 = vpop.f32.mrf.mxu0
      %v2745 = vadd.f32 0.0, %v2744
      %2746 = vmatmul.bf16.gmra.mxu0 %v928
      %v2747 = vpop.f32.mrf.mxu0
      %v2748 = vadd.f32 0.0, %v2747
      %v2749 = vpop.f32.mrf.mxu0
      %2750 = vmatmul.bf16.gmra.mxu0 %v929
      %v2751 = vpop.f32.mrf.mxu0
      %v2752 = vadd.f32 0.0, %v2751
      %v2753 = vpop.f32.mrf.mxu0
      %v2754 = vadd.f32 0.0, %v2753
      %2755 = vmatmul.bf16.gmra.mxu0 %v930
      %v2756 = vpop.f32.mrf.mxu0
      %v2757 = vadd.f32 0.0, %v2756
      %v2758 = vpop.f32.mrf.mxu0
      %2759 = vmatmul.bf16.gmra.mxu0 %v931
      %v2760 = vpop.f32.mrf.mxu0
      %v2761 = vadd.f32 0.0, %v2760
      %v2762 = vpop.f32.mrf.mxu0
      %v2763 = vadd.f32 0.0, %v2762
      %2764 = vmatmul.bf16.gmra.mxu0 %v932
      %v2765 = vpop.f32.mrf.mxu0
      %v2766 = vadd.f32 0.0, %v2765
      %v2767 = vpop.f32.mrf.mxu0
      %2768 = vmatmul.bf16.gmra.mxu0 %v933
      %v2769 = vpop.f32.mrf.mxu0
      %v2770 = vadd.f32 0.0, %v2769
      %v2771 = vpop.f32.mrf.mxu0
      %v2772 = vadd.f32 0.0, %v2771
      %2773 = vmatmul.bf16.gmra.mxu0 %v934
      %v2774 = vpop.f32.mrf.mxu0
      %v2775 = vadd.f32 0.0, %v2774
      %v2776 = vpop.f32.mrf.mxu0
      %2777 = vmatmul.bf16.gmra.mxu0 %v935
      %v2778 = vpop.f32.mrf.mxu0
      %v2779 = vadd.f32 0.0, %v2778
      %v2780 = vpop.f32.mrf.mxu0
      %v2781 = vadd.f32 0.0, %v2780
      %2782 = vmatmul.bf16.gmra.mxu0 %v936
      %v2783 = vpop.f32.mrf.mxu0
      %v2784 = vadd.f32 0.0, %v2783
      %v2785 = vpop.f32.mrf.mxu0
      %2786 = vdwg.mxu0
      %2787 = vmatpush.bf16.msra.mxu0 %v2601
      %2788 = vmatpush.bf16.msra.mxu0 %v2600
      %2789 = vmatpush.bf16.msra.mxu0 %v2599
      %2790 = vmatpush.bf16.msra.mxu0 %v2598
      %2791 = vmatpush.bf16.msra.mxu0 %v2597
      %2792 = vmatpush.bf16.msra.mxu0 %v2596
      %2793 = vmatpush.bf16.msra.mxu0 %v2595
      %2794 = vmatpush.bf16.msra.mxu0 %v2594
      %2795 = vmatmul.bf16.gmra.mxu0 %v907
      %v2796 = vpop.f32.mrf.mxu0
      %v2797 = vadd.f32 %v2644, %v2796
      %v2798 = vpop.f32.mrf.mxu0
      %v2799 = vadd.f32 %v2646, %v2798
      %2800 = vmatmul.bf16.gmra.mxu0 %v908
      %v2801 = vpop.f32.mrf.mxu0
      %v2802 = vadd.f32 %v2649, %v2801
      %v2803 = vpop.f32.mrf.mxu0
      %2804 = vmatmul.bf16.gmra.mxu0 %v909
      %v2805 = vpop.f32.mrf.mxu0
      %v2806 = vadd.f32 %v2653, %v2805
      %v2807 = vpop.f32.mrf.mxu0
      %v2808 = vadd.f32 %v2655, %v2807
      %2809 = vmatmul.bf16.gmra.mxu0 %v910
      %v2810 = vpop.f32.mrf.mxu0
      %v2811 = vadd.f32 %v2658, %v2810
      %v2812 = vpop.f32.mrf.mxu0
      %2813 = vmatmul.bf16.gmra.mxu0 %v911
      %v2814 = vpop.f32.mrf.mxu0
      %v2815 = vadd.f32 %v2662, %v2814
      %v2816 = vpop.f32.mrf.mxu0
      %v2817 = vadd.f32 %v2664, %v2816
      %2818 = vmatmul.bf16.gmra.mxu0 %v912
      %v2819 = vpop.f32.mrf.mxu0
      %v2820 = vadd.f32 %v2667, %v2819
      %v2821 = vpop.f32.mrf.mxu0
      %2822 = vmatmul.bf16.gmra.mxu0 %v913
      %v2823 = vpop.f32.mrf.mxu0
      %v2824 = vadd.f32 %v2671, %v2823
      %v2825 = vpop.f32.mrf.mxu0
      %v2826 = vadd.f32 %v2673, %v2825
      %2827 = vmatmul.bf16.gmra.mxu0 %v914
      %v2828 = vpop.f32.mrf.mxu0
      %v2829 = vadd.f32 %v2676, %v2828
      %v2830 = vpop.f32.mrf.mxu0
      %2831 = vmatmul.bf16.gmra.mxu0 %v915
      %v2832 = vpop.f32.mrf.mxu0
      %v2833 = vadd.f32 %v2680, %v2832
      %v2834 = vpop.f32.mrf.mxu0
      %v2835 = vadd.f32 %v2682, %v2834
      %2836 = vmatmul.bf16.gmra.mxu0 %v916
      %v2837 = vpop.f32.mrf.mxu0
      %v2838 = vadd.f32 %v2685, %v2837
      %v2839 = vpop.f32.mrf.mxu0
      %2840 = vmatmul.bf16.gmra.mxu0 %v917
      %v2841 = vpop.f32.mrf.mxu0
      %v2842 = vadd.f32 %v2689, %v2841
      %v2843 = vpop.f32.mrf.mxu0
      %v2844 = vadd.f32 %v2691, %v2843
      %2845 = vmatmul.bf16.gmra.mxu0 %v918
      %v2846 = vpop.f32.mrf.mxu0
      %v2847 = vadd.f32 %v2694, %v2846
      %v2848 = vpop.f32.mrf.mxu0
      %2849 = vmatmul.bf16.gmra.mxu0 %v919
      %v2850 = vpop.f32.mrf.mxu0
      %v2851 = vadd.f32 %v2698, %v2850
      %v2852 = vpop.f32.mrf.mxu0
      %v2853 = vadd.f32 %v2700, %v2852
      %2854 = vmatmul.bf16.gmra.mxu0 %v920
      %v2855 = vpop.f32.mrf.mxu0
      %v2856 = vadd.f32 %v2703, %v2855
      %v2857 = vpop.f32.mrf.mxu0
      %2858 = vmatmul.bf16.gmra.mxu0 %v921
      %v2859 = vpop.f32.mrf.mxu0
      %v2860 = vadd.f32 %v2707, %v2859
      %v2861 = vpop.f32.mrf.mxu0
      %v2862 = vadd.f32 %v2709, %v2861
      %2863 = vmatmul.bf16.gmra.mxu0 %v922
      %v2864 = vpop.f32.mrf.mxu0
      %v2865 = vadd.f32 %v2712, %v2864
      %v2866 = vpop.f32.mrf.mxu0
      %2867 = vmatmul.bf16.gmra.mxu0 %v923
      %v2868 = vpop.f32.mrf.mxu0
      %v2869 = vadd.f32 %v2716, %v2868
      %v2870 = vpop.f32.mrf.mxu0
      %v2871 = vadd.f32 %v2718, %v2870
      %2872 = vmatmul.bf16.gmra.mxu0 %v924
      %v2873 = vpop.f32.mrf.mxu0
      %v2874 = vadd.f32 %v2721, %v2873
      %v2875 = vpop.f32.mrf.mxu0
      %2876 = vmatmul.bf16.gmra.mxu0 %v925
      %v2877 = vpop.f32.mrf.mxu0
      %v2878 = vadd.f32 %v2725, %v2877
      %v2879 = vpop.f32.mrf.mxu0
      %v2880 = vadd.f32 %v2727, %v2879
      %2881 = vmatmul.bf16.gmra.mxu0 %v926
      %v2882 = vpop.f32.mrf.mxu0
      %v2883 = vadd.f32 %v2730, %v2882
      %v2884 = vpop.f32.mrf.mxu0
      %2885 = vmatmul.bf16.gmra.mxu0 %v927
      %v2886 = vpop.f32.mrf.mxu0
      %v2887 = vadd.f32 %v2734, %v2886
      %v2888 = vpop.f32.mrf.mxu0
      %v2889 = vadd.f32 %v2736, %v2888
      %2890 = vmatmul.bf16.gmra.mxu0 %v928
      %v2891 = vpop.f32.mrf.mxu0
      %v2892 = vadd.f32 %v2739, %v2891
      %v2893 = vpop.f32.mrf.mxu0
      %2894 = vmatmul.bf16.gmra.mxu0 %v929
      %v2895 = vpop.f32.mrf.mxu0
      %v2896 = vadd.f32 %v2743, %v2895
      %v2897 = vpop.f32.mrf.mxu0
      %v2898 = vadd.f32 %v2745, %v2897
      %2899 = vmatmul.bf16.gmra.mxu0 %v930
      %v2900 = vpop.f32.mrf.mxu0
      %v2901 = vadd.f32 %v2748, %v2900
      %v2902 = vpop.f32.mrf.mxu0
      %2903 = vmatmul.bf16.gmra.mxu0 %v931
      %v2904 = vpop.f32.mrf.mxu0
      %v2905 = vadd.f32 %v2752, %v2904
      %v2906 = vpop.f32.mrf.mxu0
      %v2907 = vadd.f32 %v2754, %v2906
      %2908 = vmatmul.bf16.gmra.mxu0 %v932
      %v2909 = vpop.f32.mrf.mxu0
      %v2910 = vadd.f32 %v2757, %v2909
      %v2911 = vpop.f32.mrf.mxu0
      %2912 = vmatmul.bf16.gmra.mxu0 %v933
      %v2913 = vpop.f32.mrf.mxu0
      %v2914 = vadd.f32 %v2761, %v2913
      %v2915 = vpop.f32.mrf.mxu0
      %v2916 = vadd.f32 %v2763, %v2915
      %2917 = vmatmul.bf16.gmra.mxu0 %v934
      %v2918 = vpop.f32.mrf.mxu0
      %v2919 = vadd.f32 %v2766, %v2918
      %v2920 = vpop.f32.mrf.mxu0
      %2921 = vmatmul.bf16.gmra.mxu0 %v935
      %v2922 = vpop.f32.mrf.mxu0
      %v2923 = vadd.f32 %v2770, %v2922
      %v2924 = vpop.f32.mrf.mxu0
      %v2925 = vadd.f32 %v2772, %v2924
      %2926 = vmatmul.bf16.gmra.mxu0 %v936
      %v2927 = vpop.f32.mrf.mxu0
      %v2928 = vadd.f32 %v2775, %v2927
      %v2929 = vpop.f32.mrf.mxu0
      %2930 = vmatmul.bf16.gmra.mxu0 %v977
      %v2931 = vpop.f32.mrf.mxu0
      %v2932 = vadd.f32 %v2779, %v2931
      %v2933 = vpop.f32.mrf.mxu0
      %v2934 = vadd.f32 %v2781, %v2933
      %2935 = vmatmul.bf16.gmra.mxu0 %v978
      %v2936 = vpop.f32.mrf.mxu0
      %v2937 = vadd.f32 %v2784, %v2936
      %v2938 = vpop.f32.mrf.mxu0
      %2939 = vdwg.mxu0
      %2940 = vmatpush.bf16.msra.mxu0 %v2609
      %2941 = vmatpush.bf16.msra.mxu0 %v2608
      %2942 = vmatpush.bf16.msra.mxu0 %v2607
      %2943 = vmatpush.bf16.msra.mxu0 %v2606
      %2944 = vmatpush.bf16.msra.mxu0 %v2605
      %2945 = vmatpush.bf16.msra.mxu0 %v2604
      %2946 = vmatpush.bf16.msra.mxu0 %v2603
      %2947 = vmatpush.bf16.msra.mxu0 %v2602
      %2948 = vmatmul.bf16.gmra.mxu0 %v909
      %v2949 = vpop.f32.mrf.mxu0
      %v2950 = vadd.f32 %v2797, %v2949
      %v2951 = vpop.f32.mrf.mxu0
      %v2952 = vadd.f32 %v2799, %v2951
      %2953 = vmatmul.bf16.gmra.mxu0 %v910
      %v2954 = vpop.f32.mrf.mxu0
      %v2955 = vadd.f32 %v2802, %v2954
      %v2956 = vpop.f32.mrf.mxu0
      %2957 = vmatmul.bf16.gmra.mxu0 %v911
      %v2958 = vpop.f32.mrf.mxu0
      %v2959 = vadd.f32 %v2806, %v2958
      %v2960 = vpop.f32.mrf.mxu0
      %v2961 = vadd.f32 %v2808, %v2960
      %2962 = vmatmul.bf16.gmra.mxu0 %v912
      %v2963 = vpop.f32.mrf.mxu0
      %v2964 = vadd.f32 %v2811, %v2963
      %v2965 = vpop.f32.mrf.mxu0
      %2966 = vmatmul.bf16.gmra.mxu0 %v913
      %v2967 = vpop.f32.mrf.mxu0
      %v2968 = vadd.f32 %v2815, %v2967
      %v2969 = vpop.f32.mrf.mxu0
      %v2970 = vadd.f32 %v2817, %v2969
      %2971 = vmatmul.bf16.gmra.mxu0 %v914
      %v2972 = vpop.f32.mrf.mxu0
      %v2973 = vadd.f32 %v2820, %v2972
      %v2974 = vpop.f32.mrf.mxu0
      %2975 = vmatmul.bf16.gmra.mxu0 %v915
      %v2976 = vpop.f32.mrf.mxu0
      %v2977 = vadd.f32 %v2824, %v2976
      %v2978 = vpop.f32.mrf.mxu0
      %v2979 = vadd.f32 %v2826, %v2978
      %2980 = vmatmul.bf16.gmra.mxu0 %v916
      %v2981 = vpop.f32.mrf.mxu0
      %v2982 = vadd.f32 %v2829, %v2981
      %v2983 = vpop.f32.mrf.mxu0
      %2984 = vmatmul.bf16.gmra.mxu0 %v917
      %v2985 = vpop.f32.mrf.mxu0
      %v2986 = vadd.f32 %v2833, %v2985
      %v2987 = vpop.f32.mrf.mxu0
      %v2988 = vadd.f32 %v2835, %v2987
      %2989 = vmatmul.bf16.gmra.mxu0 %v918
      %v2990 = vpop.f32.mrf.mxu0
      %v2991 = vadd.f32 %v2838, %v2990
      %v2992 = vpop.f32.mrf.mxu0
      %2993 = vmatmul.bf16.gmra.mxu0 %v919
      %v2994 = vpop.f32.mrf.mxu0
      %v2995 = vadd.f32 %v2842, %v2994
      %v2996 = vpop.f32.mrf.mxu0
      %v2997 = vadd.f32 %v2844, %v2996
      %2998 = vmatmul.bf16.gmra.mxu0 %v920
      %v2999 = vpop.f32.mrf.mxu0
      %v3000 = vadd.f32 %v2847, %v2999
      %v3001 = vpop.f32.mrf.mxu0
      %3002 = vmatmul.bf16.gmra.mxu0 %v921
      %v3003 = vpop.f32.mrf.mxu0
      %v3004 = vadd.f32 %v2851, %v3003
      %v3005 = vpop.f32.mrf.mxu0
      %v3006 = vadd.f32 %v2853, %v3005
      %3007 = vmatmul.bf16.gmra.mxu0 %v922
      %v3008 = vpop.f32.mrf.mxu0
      %v3009 = vadd.f32 %v2856, %v3008
      %v3010 = vpop.f32.mrf.mxu0
      %3011 = vmatmul.bf16.gmra.mxu0 %v923
      %v3012 = vpop.f32.mrf.mxu0
      %v3013 = vadd.f32 %v2860, %v3012
      %v3014 = vpop.f32.mrf.mxu0
      %v3015 = vadd.f32 %v2862, %v3014
      %3016 = vmatmul.bf16.gmra.mxu0 %v924
      %v3017 = vpop.f32.mrf.mxu0
      %v3018 = vadd.f32 %v2865, %v3017
      %v3019 = vpop.f32.mrf.mxu0
      %3020 = vmatmul.bf16.gmra.mxu0 %v925
      %v3021 = vpop.f32.mrf.mxu0
      %v3022 = vadd.f32 %v2869, %v3021
      %v3023 = vpop.f32.mrf.mxu0
      %v3024 = vadd.f32 %v2871, %v3023
      %3025 = vmatmul.bf16.gmra.mxu0 %v926
      %v3026 = vpop.f32.mrf.mxu0
      %v3027 = vadd.f32 %v2874, %v3026
      %v3028 = vpop.f32.mrf.mxu0
      %3029 = vmatmul.bf16.gmra.mxu0 %v927
      %v3030 = vpop.f32.mrf.mxu0
      %v3031 = vadd.f32 %v2878, %v3030
      %v3032 = vpop.f32.mrf.mxu0
      %v3033 = vadd.f32 %v2880, %v3032
      %3034 = vmatmul.bf16.gmra.mxu0 %v928
      %v3035 = vpop.f32.mrf.mxu0
      %v3036 = vadd.f32 %v2883, %v3035
      %v3037 = vpop.f32.mrf.mxu0
      %3038 = vmatmul.bf16.gmra.mxu0 %v929
      %v3039 = vpop.f32.mrf.mxu0
      %v3040 = vadd.f32 %v2887, %v3039
      %v3041 = vpop.f32.mrf.mxu0
      %v3042 = vadd.f32 %v2889, %v3041
      %3043 = vmatmul.bf16.gmra.mxu0 %v930
      %v3044 = vpop.f32.mrf.mxu0
      %v3045 = vadd.f32 %v2892, %v3044
      %v3046 = vpop.f32.mrf.mxu0
      %3047 = vmatmul.bf16.gmra.mxu0 %v931
      %v3048 = vpop.f32.mrf.mxu0
      %v3049 = vadd.f32 %v2896, %v3048
      %v3050 = vpop.f32.mrf.mxu0
      %v3051 = vadd.f32 %v2898, %v3050
      %3052 = vmatmul.bf16.gmra.mxu0 %v932
      %v3053 = vpop.f32.mrf.mxu0
      %v3054 = vadd.f32 %v2901, %v3053
      %v3055 = vpop.f32.mrf.mxu0
      %3056 = vmatmul.bf16.gmra.mxu0 %v933
      %v3057 = vpop.f32.mrf.mxu0
      %v3058 = vadd.f32 %v2905, %v3057
      %v3059 = vpop.f32.mrf.mxu0
      %v3060 = vadd.f32 %v2907, %v3059
      %3061 = vmatmul.bf16.gmra.mxu0 %v934
      %v3062 = vpop.f32.mrf.mxu0
      %v3063 = vadd.f32 %v2910, %v3062
      %v3064 = vpop.f32.mrf.mxu0
      %3065 = vmatmul.bf16.gmra.mxu0 %v935
      %v3066 = vpop.f32.mrf.mxu0
      %v3067 = vadd.f32 %v2914, %v3066
      %v3068 = vpop.f32.mrf.mxu0
      %v3069 = vadd.f32 %v2916, %v3068
      %3070 = vmatmul.bf16.gmra.mxu0 %v936
      %v3071 = vpop.f32.mrf.mxu0
      %v3072 = vadd.f32 %v2919, %v3071
      %v3073 = vpop.f32.mrf.mxu0
      %3074 = vmatmul.bf16.gmra.mxu0 %v977
      %v3075 = vpop.f32.mrf.mxu0
      %v3076 = vadd.f32 %v2923, %v3075
      %v3077 = vpop.f32.mrf.mxu0
      %v3078 = vadd.f32 %v2925, %v3077
      %3079 = vmatmul.bf16.gmra.mxu0 %v978
      %v3080 = vpop.f32.mrf.mxu0
      %v3081 = vadd.f32 %v2928, %v3080
      %v3082 = vpop.f32.mrf.mxu0
      %3083 = vmatmul.bf16.gmra.mxu0 %v989
      %v3084 = vpop.f32.mrf.mxu0
      %v3085 = vadd.f32 %v2932, %v3084
      %v3086 = vpop.f32.mrf.mxu0
      %v3087 = vadd.f32 %v2934, %v3086
      %3088 = vmatmul.bf16.gmra.mxu0 %v990
      %v3089 = vpop.f32.mrf.mxu0
      %v3090 = vadd.f32 %v2937, %v3089
      %v3091 = vpop.f32.mrf.mxu0
      %3092 = vdwg.mxu0
      %vm3141 = vcmask 1045504
      %v3142 = vrot.slane %v2950, 2
      %v3143 = vrot.slane %v2952, 2
      %v3144 = vsel %vm3141, %v3142, %v3143
      %v3145 = vrot.slane %v2955, 2
      %v3146 = vsel %vm3141, %v3143, %v3145
      %v3147 = vrot.slane %v2959, 2
      %v3148 = vrot.slane %v2961, 2
      %v3149 = vsel %vm3141, %v3147, %v3148
      %v3150 = vrot.slane %v2964, 2
      %v3151 = vsel %vm3141, %v3148, %v3150
      %v3152 = vrot.slane %v2968, 2
      %v3153 = vrot.slane %v2970, 2
      %v3154 = vsel %vm3141, %v3152, %v3153
      %v3155 = vrot.slane %v2973, 2
      %v3156 = vsel %vm3141, %v3153, %v3155
      %v3157 = vrot.slane %v2977, 2
      %v3158 = vrot.slane %v2979, 2
      %v3159 = vsel %vm3141, %v3157, %v3158
      %v3160 = vrot.slane %v2982, 2
      %v3161 = vsel %vm3141, %v3158, %v3160
      %v3162 = vrot.slane %v2986, 2
      %v3163 = vrot.slane %v2988, 2
      %v3164 = vsel %vm3141, %v3162, %v3163
      %v3165 = vrot.slane %v2991, 2
      %v3166 = vsel %vm3141, %v3163, %v3165
      %v3167 = vrot.slane %v2995, 2
      %v3168 = vrot.slane %v2997, 2
      %v3169 = vsel %vm3141, %v3167, %v3168
      %v3170 = vrot.slane %v3000, 2
      %v3171 = vsel %vm3141, %v3168, %v3170
      %v3172 = vrot.slane %v3004, 2
      %v3173 = vrot.slane %v3006, 2
      %v3174 = vsel %vm3141, %v3172, %v3173
      %v3175 = vrot.slane %v3009, 2
      %v3176 = vsel %vm3141, %v3173, %v3175
      %v3177 = vrot.slane %v3013, 2
      %v3178 = vrot.slane %v3015, 2
      %v3179 = vsel %vm3141, %v3177, %v3178
      %v3180 = vrot.slane %v3018, 2
      %v3181 = vsel %vm3141, %v3178, %v3180
      %v3182 = vrot.slane %v3022, 2
      %v3183 = vrot.slane %v3024, 2
      %v3184 = vsel %vm3141, %v3182, %v3183
      %v3185 = vrot.slane %v3027, 2
      %v3186 = vsel %vm3141, %v3183, %v3185
      %v3187 = vrot.slane %v3031, 2
      %v3188 = vrot.slane %v3033, 2
      %v3189 = vsel %vm3141, %v3187, %v3188
      %v3190 = vrot.slane %v3036, 2
      %v3191 = vsel %vm3141, %v3188, %v3190
      %v3192 = vrot.slane %v3040, 2
      %v3193 = vrot.slane %v3042, 2
      %v3194 = vsel %vm3141, %v3192, %v3193
      %v3195 = vrot.slane %v3045, 2
      %v3196 = vsel %vm3141, %v3193, %v3195
      %v3197 = vrot.slane %v3049, 2
      %v3198 = vrot.slane %v3051, 2
      %v3199 = vsel %vm3141, %v3197, %v3198
      %v3200 = vrot.slane %v3054, 2
      %v3201 = vsel %vm3141, %v3198, %v3200
      %v3202 = vrot.slane %v3058, 2
      %v3203 = vrot.slane %v3060, 2
      %v3204 = vsel %vm3141, %v3202, %v3203
      %v3205 = vrot.slane %v3063, 2
      %v3206 = vsel %vm3141, %v3203, %v3205
      %v3207 = vrot.slane %v3067, 2
      %v3208 = vrot.slane %v3069, 2
      %v3209 = vsel %vm3141, %v3207, %v3208
      %v3210 = vrot.slane %v3072, 2
      %v3211 = vsel %vm3141, %v3208, %v3210
      %v3212 = vrot.slane %v3076, 2
      %v3213 = vrot.slane %v3078, 2
      %v3214 = vsel %vm3141, %v3212, %v3213
      %v3215 = vrot.slane %v3081, 2
      %v3216 = vsel %vm3141, %v3213, %v3215
      %v3217 = vrot.slane %v3085, 2
      %v3218 = vrot.slane %v3087, 2
      %v3219 = vsel %vm3141, %v3217, %v3218
      %v3220 = vrot.slane %v3090, 2
      %v3221 = vsel %vm3141, %v3218, %v3220
      %v3254 = vadd.f32 %v2409, %v3144
      %v3255 = vadd.f32 %v2410, %v3146
      %v3256 = vadd.f32 %v2411, %v3149
      %v3257 = vadd.f32 %v2412, %v3151
      %v3258 = vadd.f32 %v2413, %v3154
      %v3259 = vadd.f32 %v2414, %v3156
      %v3260 = vadd.f32 %v2415, %v3159
      %v3261 = vadd.f32 %v2416, %v3161
      %v3262 = vadd.f32 %v2417, %v3164
      %v3263 = vadd.f32 %v2418, %v3166
      %v3264 = vadd.f32 %v2419, %v3169
      %v3265 = vadd.f32 %v2420, %v3171
      %v3266 = vadd.f32 %v2421, %v3174
      %v3267 = vadd.f32 %v2422, %v3176
      %v3268 = vadd.f32 %v2423, %v3179
      %v3269 = vadd.f32 %v2424, %v3181
      %v3270 = vadd.f32 %v2425, %v3184
      %v3271 = vadd.f32 %v2426, %v3186
      %v3272 = vadd.f32 %v2427, %v3189
      %v3273 = vadd.f32 %v2428, %v3191
      %v3274 = vadd.f32 %v2429, %v3194
      %v3275 = vadd.f32 %v2430, %v3196
      %v3276 = vadd.f32 %v2431, %v3199
      %v3277 = vadd.f32 %v2432, %v3201
      %v3278 = vadd.f32 %v2433, %v3204
      %v3279 = vadd.f32 %v2434, %v3206
      %v3280 = vadd.f32 %v2435, %v3209
      %v3281 = vadd.f32 %v2436, %v3211
      %v3282 = vadd.f32 %v2437, %v3214
      %v3283 = vadd.f32 %v2438, %v3216
      %v3284 = vadd.f32 %v2439, %v3219
      %v3285 = vadd.f32 %v2440, %v3221
      %v3286 = vadd.f32 %v3254, %v3255
      %v3287 = vadd.f32 %v3286, %v3256
      %v3288 = vadd.f32 %v3287, %v3257
      %v3289 = vadd.f32 %v3288, %v3258
      %v3290 = vadd.f32 %v3289, %v3259
      %v3291 = vadd.f32 %v3290, %v3260
      %v3292 = vadd.f32 %v3291, %v3261
      %v3293 = vadd.f32 %v3292, %v3262
      %v3294 = vadd.f32 %v3293, %v3263
      %v3295 = vadd.f32 %v3294, %v3264
      %v3296 = vadd.f32 %v3295, %v3265
      %v3297 = vadd.f32 %v3296, %v3266
      %v3298 = vadd.f32 %v3297, %v3267
      %v3299 = vadd.f32 %v3298, %v3268
      %v3300 = vadd.f32 %v3299, %v3269
      %v3301 = vadd.f32 %v3300, %v3270
      %v3302 = vadd.f32 %v3301, %v3271
      %v3303 = vadd.f32 %v3302, %v3272
      %v3304 = vadd.f32 %v3303, %v3273
      %v3305 = vadd.f32 %v3304, %v3274
      %v3306 = vadd.f32 %v3305, %v3275
      %v3307 = vadd.f32 %v3306, %v3276
      %v3308 = vadd.f32 %v3307, %v3277
      %v3309 = vadd.f32 %v3308, %v3278
      %v3310 = vadd.f32 %v3309, %v3279
      %v3311 = vadd.f32 %v3310, %v3280
      %v3312 = vadd.f32 %v3311, %v3281
      %v3313 = vadd.f32 %v3312, %v3282
      %v3314 = vadd.f32 %v3313, %v3283
      %v3315 = vadd.f32 %v3314, %v3284
      %v3316 = vadd.f32 %v3315, %v3285
      %v3317 = vrot.slane %v3316, 4
      %v3318 = vadd.f32 %v3316, %v3317
      %v3319 = vrot.slane %v3318, 2
      %v3320 = vadd.f32 %v3318, %v3319
      %v3321 = vrot.slane %v3320, 1
      %v3322 = vadd.f32 %v3320, %v3321
      %v3323 = vmul.f32 %v3254, %v3254
      %v3324 = vmul.f32 %v3255, %v3255
      %v3325 = vmul.f32 %v3256, %v3256
      %v3326 = vmul.f32 %v3257, %v3257
      %v3327 = vmul.f32 %v3258, %v3258
      %v3328 = vmul.f32 %v3259, %v3259
      %v3329 = vmul.f32 %v3260, %v3260
      %v3330 = vmul.f32 %v3261, %v3261
      %v3331 = vmul.f32 %v3262, %v3262
      %v3332 = vmul.f32 %v3263, %v3263
      %v3333 = vmul.f32 %v3264, %v3264
      %v3334 = vmul.f32 %v3265, %v3265
      %v3335 = vmul.f32 %v3266, %v3266
      %v3336 = vmul.f32 %v3267, %v3267
      %v3337 = vmul.f32 %v3268, %v3268
      %v3338 = vmul.f32 %v3269, %v3269
      %v3339 = vmul.f32 %v3270, %v3270
      %v3340 = vmul.f32 %v3271, %v3271
      %v3341 = vmul.f32 %v3272, %v3272
      %v3342 = vmul.f32 %v3273, %v3273
      %v3343 = vmul.f32 %v3274, %v3274
      %v3344 = vmul.f32 %v3275, %v3275
      %v3345 = vmul.f32 %v3276, %v3276
      %v3346 = vmul.f32 %v3277, %v3277
      %v3347 = vmul.f32 %v3278, %v3278
      %v3348 = vmul.f32 %v3279, %v3279
      %v3349 = vmul.f32 %v3280, %v3280
      %v3350 = vmul.f32 %v3281, %v3281
      %v3351 = vmul.f32 %v3282, %v3282
      %v3352 = vmul.f32 %v3283, %v3283
      %v3353 = vmul.f32 %v3284, %v3284
      %v3354 = vmul.f32 %v3285, %v3285
      %v3355 = vadd.f32 %v3323, %v3324
      %v3356 = vadd.f32 %v3355, %v3325
      %v3357 = vadd.f32 %v3356, %v3326
      %v3358 = vadd.f32 %v3357, %v3327
      %v3359 = vadd.f32 %v3358, %v3328
      %v3360 = vadd.f32 %v3359, %v3329
      %v3361 = vadd.f32 %v3360, %v3330
      %v3362 = vadd.f32 %v3361, %v3331
      %v3363 = vadd.f32 %v3362, %v3332
      %v3364 = vadd.f32 %v3363, %v3333
      %v3365 = vadd.f32 %v3364, %v3334
      %v3366 = vadd.f32 %v3365, %v3335
      %v3367 = vadd.f32 %v3366, %v3336
      %v3368 = vadd.f32 %v3367, %v3337
      %v3369 = vadd.f32 %v3368, %v3338
      %v3370 = vadd.f32 %v3369, %v3339
      %v3371 = vadd.f32 %v3370, %v3340
      %v3372 = vadd.f32 %v3371, %v3341
      %v3373 = vadd.f32 %v3372, %v3342
      %v3374 = vadd.f32 %v3373, %v3343
      %v3375 = vadd.f32 %v3374, %v3344
      %v3376 = vadd.f32 %v3375, %v3345
      %v3377 = vadd.f32 %v3376, %v3346
      %v3378 = vadd.f32 %v3377, %v3347
      %v3379 = vadd.f32 %v3378, %v3348
      %v3380 = vadd.f32 %v3379, %v3349
      %v3381 = vadd.f32 %v3380, %v3350
      %v3382 = vadd.f32 %v3381, %v3351
      %v3383 = vadd.f32 %v3382, %v3352
      %v3384 = vadd.f32 %v3383, %v3353
      %v3385 = vadd.f32 %v3384, %v3354
      %v3386 = vrot.slane %v3385, 4
      %v3387 = vadd.f32 %v3385, %v3386
      %v3388 = vrot.slane %v3387, 2
      %v3389 = vadd.f32 %v3387, %v3388
      %v3390 = vrot.slane %v3389, 1
      %v3391 = vadd.f32 %v3389, %v3390
      %vm3392 = vcmask 1040384
      %v3393 = vsel %vm3392, %v3322, %v3391
      %3394 = vst [vmem:[%s235] sm:$0x3] %v3393
      %v3395 = vpack.c.bf16 %v3254, %v3254
      %v3396 = vpack.c.bf16 %v3255, %v3255
      %v3397 = vpack.c.bf16 %v3256, %v3256
      %v3398 = vpack.c.bf16 %v3257, %v3257
      %v3399 = vpack.c.bf16 %v3258, %v3258
      %v3400 = vpack.c.bf16 %v3259, %v3259
      %v3401 = vpack.c.bf16 %v3260, %v3260
      %v3402 = vpack.c.bf16 %v3261, %v3261
      %v3403 = vpack.c.bf16 %v3262, %v3262
      %v3404 = vpack.c.bf16 %v3263, %v3263
      %v3405 = vpack.c.bf16 %v3264, %v3264
      %v3406 = vpack.c.bf16 %v3265, %v3265
      %v3407 = vpack.c.bf16 %v3266, %v3266
      %v3408 = vpack.c.bf16 %v3267, %v3267
      %v3409 = vpack.c.bf16 %v3268, %v3268
      %v3410 = vpack.c.bf16 %v3269, %v3269
      %v3411 = vpack.c.bf16 %v3270, %v3270
      %v3412 = vpack.c.bf16 %v3271, %v3271
      %v3413 = vpack.c.bf16 %v3272, %v3272
      %v3414 = vpack.c.bf16 %v3273, %v3273
      %v3415 = vpack.c.bf16 %v3274, %v3274
      %v3416 = vpack.c.bf16 %v3275, %v3275
      %v3417 = vpack.c.bf16 %v3276, %v3276
      %v3418 = vpack.c.bf16 %v3277, %v3277
      %v3419 = vpack.c.bf16 %v3278, %v3278
      %v3420 = vpack.c.bf16 %v3279, %v3279
      %v3421 = vpack.c.bf16 %v3280, %v3280
      %v3422 = vpack.c.bf16 %v3281, %v3281
      %v3423 = vpack.c.bf16 %v3282, %v3282
      %v3424 = vpack.c.bf16 %v3283, %v3283
      %v3425 = vpack.c.bf16 %v3284, %v3284
      %v3426 = vpack.c.bf16 %v3285, %v3285
      %3427 = vst [vmem:[%s231] sm:$0xf] %v3395
      %3428 = vst [vmem:[%s231 + $0x4] sm:$0xf] %v3396
      %3429 = vst [vmem:[%s231 + $0x8] sm:$0xf] %v3397
      %3430 = vst [vmem:[%s231 + $0xc] sm:$0xf] %v3398
      %3431 = vst [vmem:[%s231 + $0x10] sm:$0xf] %v3399
      %3432 = vst [vmem:[%s231 + $0x14] sm:$0xf] %v3400
      %3433 = vst [vmem:[%s231 + $0x18] sm:$0xf] %v3401
      %3434 = vst [vmem:[%s231 + $0x1c] sm:$0xf] %v3402
      %3435 = vst [vmem:[%s231 + $0x20] sm:$0xf] %v3403
      %3436 = vst [vmem:[%s231 + $0x24] sm:$0xf] %v3404
      %3437 = vst [vmem:[%s231 + $0x28] sm:$0xf] %v3405
      %3438 = vst [vmem:[%s231 + $0x2c] sm:$0xf] %v3406
      %3439 = vst [vmem:[%s231 + $0x30] sm:$0xf] %v3407
      %3440 = vst [vmem:[%s231 + $0x34] sm:$0xf] %v3408
      %3441 = vst [vmem:[%s231 + $0x38] sm:$0xf] %v3409
      %3442 = vst [vmem:[%s231 + $0x3c] sm:$0xf] %v3410
      %3443 = vst [vmem:[%s231 + $0x40] sm:$0xf] %v3411
      %3444 = vst [vmem:[%s231 + $0x44] sm:$0xf] %v3412
      %3445 = vst [vmem:[%s231 + $0x48] sm:$0xf] %v3413
      %3446 = vst [vmem:[%s231 + $0x4c] sm:$0xf] %v3414
      %3447 = vst [vmem:[%s231 + $0x50] sm:$0xf] %v3415
      %3448 = vst [vmem:[%s231 + $0x54] sm:$0xf] %v3416
      %3449 = vst [vmem:[%s231 + $0x58] sm:$0xf] %v3417
      %3450 = vst [vmem:[%s231 + $0x5c] sm:$0xf] %v3418
      %3451 = vst [vmem:[%s231 + $0x60] sm:$0xf] %v3419
      %3452 = vst [vmem:[%s231 + $0x64] sm:$0xf] %v3420
      %3453 = vst [vmem:[%s231 + $0x68] sm:$0xf] %v3421
      %3454 = vst [vmem:[%s231 + $0x6c] sm:$0xf] %v3422
      %3455 = vst [vmem:[%s231 + $0x70] sm:$0xf] %v3423
      %3456 = vst [vmem:[%s231 + $0x74] sm:$0xf] %v3424
      %3457 = vst [vmem:[%s231 + $0x78] sm:$0xf] %v3425
      %3458 = vst [vmem:[%s231 + $0x7c] sm:$0xf] %v3426
      %p3459 = scmp.lt.s32.totalorder %s17, 1
      %s3460 = scalar_select %p3459, %s17, 1
      %s3461 = smul.addr %s3460, 32
      %s3462 = smul.addr %s3461, 4
      %s3463 = scalar_lea.vmem %s4, %s3462
      %p3464 = scmp.lt.s32.totalorder %s17, 1
      %s3465 = scalar_select %p3464, %s17, 1
      %s3466 = smul.addr %s3465, 2
      %s3467 = scalar_lea.vmem %s5, %s3466
      // Predicated region
      $region37: #{basic_block_forward.4} parent=35 // pred_check
        %p3468 = pneg %p124
      $region38: #{basic_block_forward.4} parent=35 // pred_check_branch
        %3470 = sbr.rel (%p3468) target = $region40
      $region39: #{basic_block_forward.4} parent=35 // pred_region
        _
      $region40: #{basic_block_forward.4} parent=35 // pred_fallthru
        _
      // Predicated region
      $region41: #{basic_block_forward.4} parent=35 // pred_check
        %p3471 = pneg %p150
      $region42: #{basic_block_forward.4} parent=35 // pred_check_branch
        %3473 = sbr.rel (%p3471) target = $region44
      $region43: #{basic_block_forward.4} parent=35 // pred_region
        _
      $region44: #{basic_block_forward.4} parent=35 // pred_fallthru
        _
    $region36: #{basic_block_forward.4} parent=5 // pred_fallthru
      _
    %p3474 = scmp.le.s32.totalorder 2, %s12
    // Predicated region
    $region45: #{basic_block_forward.4} parent=5 // pred_check
      %p3475 = pneg %p3474
    $region46: #{basic_block_forward.4} parent=5 // pred_check_branch
      %3477 = sbr.rel (%p3475) target = $region48
    $region47: #{basic_block_forward.4} parent=5 // pred_region
      %s3478 = ssub.s32 %s12, 2
      // Predicated region
      $region49: #{basic_block_forward.4} parent=47 // pred_check
        %p3479 = pneg %p130
      $region50: #{basic_block_forward.4} parent=47 // pred_check_branch
        %3481 = sbr.rel (%p3479) target = $region52
      $region51: #{basic_block_forward.4} parent=47 // pred_region
        %p3482 = scmp.lt.s32.totalorder %s18, 1
        %s3483 = scalar_select %p3482, %s18, 1
        %s3484 = smul.addr %s3483, 32
        %s3485 = smul.addr %s3484, 4
        %s3486 = scalar_lea.vmem %s4, %s3485
      $region52: #{basic_block_forward.4} parent=47 // pred_fallthru
        _
      // Predicated region
      $region53: #{basic_block_forward.4} parent=47 // pred_check
        %p3487 = pneg %p156
      $region54: #{basic_block_forward.4} parent=47 // pred_check_branch
        %3489 = sbr.rel (%p3487) target = $region56
      $region55: #{basic_block_forward.4} parent=47 // pred_region
        %p3490 = scmp.lt.s32.totalorder %s18, 1
        %s3491 = scalar_select %p3490, %s18, 1
        %s3492 = smul.addr %s3491, 2
        %s3493 = scalar_lea.vmem %s5, %s3492
      $region56: #{basic_block_forward.4} parent=47 // pred_fallthru
        _
    $region48: #{basic_block_forward.4} parent=5 // pred_fallthru
      _
  $region6: #{basic_block_forward.4} parent=0 // loop_footer
    %s16 = sadd.s32 1, %s12
  $region7: #{basic_block_forward.4} parent=0 // loop_footer_branch
    %11 = sbr.rel target = $region3
  $region8: #{basic_block_forward.4} parent=0 // loop_exit
    _

</llo_original>
